<compile_context>
chip_gen: v5e
topology: v5e:2x2
jax: 0.10.0
libtpu: 0.0.40
codegen_flags: <defaults>
</compile_context>

<pallas_src>
import functools

import jax
import jax.numpy as jnp
from jax.experimental import pallas as pl
from jax.experimental.pallas import tpu as pltpu

NEG_SLOPE = 0.2       # GATv2Conv default negative_slope
BN_EPS = 1e-5         # BatchNorm1d default eps
MASK_NEG = -1e30      # additive mask for non-edges
W_COLS = 64           # lane width of packed weight slab (>= max Hn*Cn = 54)
P_COLS = 64           # lane width of packed misc-param slab


# --------------------------- fused kernel ---------------------------
def fused_encoder_kernel(x_ref, adj_ref, w_ref, p_ref, out_ref, *, layers):
    """All 4 [GATv2Conv + folded BatchNorm (+ELU)] layers in one VMEM-resident kernel.

    layers: static tuple of (fp, hn, cn, concat, elu, wl_off, wr_off, p_off)
      w_ref rows [wl_off:wl_off+fp, :hn*cn]  = lin_l weight (bf16), same for wr_off
      p_ref rows p_off+0..4 = bl, br, att_flat, scale, shift (f32)
    """
    adj = adj_ref[...]                                   # (N, N) f32
    edge = adj > 0.0
    mask_add = jnp.where(edge, 0.0, MASK_NEG).astype(jnp.float32)   # hoisted, shared

    act = x_ref[...]                                     # (N, F0) f32, flat layout

    for (fp, hn, cn, concat, elu, wl_off, wr_off, po) in layers:
        fn = hn * cn
        out_dim = fn if concat else cn

        # static slices of the packed parameter slabs (free: views of VMEM refs)
        wl = w_ref[wl_off:wl_off + fp, 0:fn]             # (fp, fn) bf16
        wr = w_ref[wr_off:wr_off + fp, 0:fn]             # (fp, fn) bf16
        bl = p_ref[po + 0:po + 1, 0:fn]                  # (1, fn) f32
        br = p_ref[po + 1:po + 2, 0:fn]
        att = p_ref[po + 2:po + 3, 0:fn]                 # (1, fn) head-concatenated a_h
        scale = p_ref[po + 3:po + 4, 0:out_dim]          # (1, out_dim) folded bias+BN
        shift = p_ref[po + 4:po + 5, 0:out_dim]

        # ---- projections: one flat bf16 MXU matmul per side, f32 accumulation ----
        a_bf = act.astype(jnp.bfloat16)
        xl = jnp.dot(a_bf, wl, preferred_element_type=jnp.float32) + bl   # (N, fn)
        xr = jnp.dot(a_bf, wr, preferred_element_type=jnp.float32) + br   # (N, fn)

        # ---- attention logits, flat channel layout: (N_dst, N_src, fn) ----
        g = xl[None, :, :] + xr[:, None, :]
        g = jnp.where(g > 0, g, NEG_SLOPE * g)            # leaky_relu, f32
        gatt = g * att[None]                              # fold att once for all heads

        # ---- per-head masked softmax + aggregation (hn in {3,5}, static unroll) ----
        xl_bf = xl.astype(jnp.bfloat16)
        head_outs = []
        for h in range(hn):
            lo, hi = h * cn, (h + 1) * cn
            score = jnp.sum(gatt[:, :, lo:hi], axis=-1)   # (N_dst, N_src) f32
            s = score + mask_add
            s = s - jnp.max(s, axis=-1, keepdims=True)
            pexp = jnp.exp(s)
            pexp = jnp.where(edge, pexp, 0.0)             # explicit mask (no underflow games)
            alpha = pexp * pl.reciprocal(
                jnp.sum(pexp, axis=-1, keepdims=True), approx=True)
            head_outs.append(
                jnp.dot(alpha.astype(jnp.bfloat16), xl_bf[:, lo:hi],
                        preferred_element_type=jnp.float32))             # (N, cn)

        if concat:
            o = jnp.concatenate(head_outs, axis=-1)       # (N, fn)  -- flat, next layer input
        else:
            o = sum(head_outs) * (1.0 / hn)               # mean over heads -> (N, cn)

        o = o * scale + shift                             # folded GAT bias + BatchNorm (eval)
        if elu:
            o = jnp.where(o > 0, o, jnp.exp(o) - 1.0)     # ELU (after bn1 only)
        act = o

    out_ref[...] = act.astype(out_ref.dtype)


def encoder_forward(x, adj, w_buf, p_buf, layers, out_dim):
    n = x.shape[0]
    vmem = pl.BlockSpec(memory_space=pltpu.MemorySpace.VMEM)
    kernel = functools.partial(fused_encoder_kernel, layers=layers)
    return pl.pallas_call(
        kernel,
        out_shape=jax.ShapeDtypeStruct((n, out_dim), jnp.float32),
        in_specs=[vmem, vmem, vmem, vmem],
        out_specs=vmem,
    )(x, adj, w_buf, p_buf)


# --------------------------- wrapper-side packing (free, one-time) ---------------------------
def build_layout(cfgs):
    """Static packing layout: 16-row-aligned bf16 weight blocks, 8-row f32 param blocks."""
    layers = []
    w_rows = 0
    p_rows = 0
    for (fp, cn, hn, concat, elu) in cfgs:
        blk = -(-fp // 16) * 16
        wl_off, wr_off = w_rows, w_rows + blk
        w_rows += 2 * blk
        p_off = p_rows
        p_rows += 8
        layers.append((fp, hn, cn, concat, elu, wl_off, wr_off, p_off))
    return tuple(layers), w_rows, p_rows


def pack_params(params_flat, layers, w_rows, p_rows):
    w_buf = jnp.zeros((w_rows, W_COLS), jnp.float32)
    p_buf = jnp.zeros((p_rows, P_COLS), jnp.float32)
    for p, (fp, hn, cn, concat, _elu, wl_off, wr_off, po) in zip(params_flat, layers):
        fn = hn * cn
        out_dim = fn if concat else cn
        w_buf = w_buf.at[wl_off:wl_off + fp, :fn].set(p["wl"])
        w_buf = w_buf.at[wr_off:wr_off + fp, :fn].set(p["wr"])
        scale = p["gamma"] * jax.lax.rsqrt(p["var"] + BN_EPS)          # (1, out_dim)
        shift = p["beta"] + (p["bias"] - p["mean"]) * scale            # folds GAT bias + BN
        p_buf = p_buf.at[po + 0, :fn].set(p["bl"][0])
        p_buf = p_buf.at[po + 1, :fn].set(p["br"][0])
        p_buf = p_buf.at[po + 2, :fn].set(p["att"].reshape(-1))
        p_buf = p_buf.at[po + 3, :out_dim].set(scale[0])
        p_buf = p_buf.at[po + 4, :out_dim].set(shift[0])
    return w_buf.astype(jnp.bfloat16), p_buf


# --------------------------- pure-JAX f32 reference (module semantics) ---------------------------
def gatv2_layer_ref(x, p, adj, *, heads, out_ch, concat, apply_elu):
    xl = x @ p["wl"] + p["bl"]
    xr = x @ p["wr"] + p["br"]
    outs = []
    for h in range(heads):
        xl_h = xl[:, h * out_ch:(h + 1) * out_ch]
        xr_h = xr[:, h * out_ch:(h + 1) * out_ch]
        g = xl_h[None, :, :] + xr_h[:, None, :]
        g = jnp.where(g > 0, g, NEG_SLOPE * g)
        score = jnp.sum(g * p["att"][h][None, None, :], axis=-1)
        score = jnp.where(adj > 0, score, -1e30)
        score = score - jnp.max(score, axis=1, keepdims=True)
        pe = jnp.where(adj > 0, jnp.exp(score), 0.0)
        alpha = pe / jnp.sum(pe, axis=1, keepdims=True)
        outs.append(alpha @ xl_h)
    o = jnp.concatenate(outs, -1) if concat else sum(outs) / float(heads)
    o = o + p["bias"]
    o = (o - p["mean"]) * (p["gamma"] * jax.lax.rsqrt(p["var"] + BN_EPS)) + p["beta"]
    if apply_elu:
        o = jnp.where(o > 0, o, jnp.exp(o) - 1.0)
    return o


# --------------------------- deterministic parameter construction ---------------------------
def glorot(key, shape):
    fan_in, fan_out = shape
    lim = (6.0 / (fan_in + fan_out)) ** 0.5
    return jax.random.uniform(key, shape, jnp.float32, -lim, lim)


def init_layer(key, fin, c, heads, concat):
    ks = jax.random.split(key, 9)
    out_dim = heads * c if concat else c
    return dict(
        wl=glorot(ks[0], (fin, heads * c)),
        bl=0.05 * jax.random.normal(ks[1], (1, heads * c), jnp.float32),
        wr=glorot(ks[2], (fin, heads * c)),
        br=0.05 * jax.random.normal(ks[3], (1, heads * c), jnp.float32),
        # moderate attention scale keeps logits well-conditioned for the bf16-vs-f32 check
        att=0.25 * glorot(ks[4], (heads, c)),
        bias=0.05 * jax.random.normal(ks[5], (1, out_dim), jnp.float32),
        gamma=1.0 + 0.1 * jax.random.normal(ks[6], (1, out_dim), jnp.float32),
        beta=0.1 * jax.random.normal(ks[7], (1, out_dim), jnp.float32),
        mean=0.1 * jax.random.normal(ks[8], (1, out_dim), jnp.float32),
        var=1.0 + 0.1 * jax.random.uniform(jax.random.fold_in(key, 99), (1, out_dim), jnp.float32),
    )


if __name__ == "__main__":
    key = jax.random.PRNGKey(0)
    N, FIN, E = 12, 22, 36
    k_x, k_src, k_dst, k_p = jax.random.split(key, 4)

    x = jax.random.normal(k_x, (N, FIN), jnp.float32)
    src = jax.random.randint(k_src, (E,), 0, N)
    dst = jax.random.randint(k_dst, (E,), 0, N)
    edge_index = jnp.stack([src, dst])                 # (2, E), row0=src, row1=dst

    # dense adjacency: adj[dst, src] = 1; add self-loops (GATv2Conv add_self_loops=True)
    adj = jnp.zeros((N, N), jnp.float32).at[edge_index[1], edge_index[0]].set(1.0)
    adj = adj * (1.0 - jnp.eye(N, dtype=jnp.float32)) + jnp.eye(N, dtype=jnp.float32)

    # (fin, out_ch, heads, concat, apply_elu) — mirrors conv1..conv4 / bn1..bn4
    cfgs = [
        (22, 18, 3, True, True),    # conv1 + bn1 + ELU
        (54, 16, 3, True, False),   # conv2 + bn2
        (48, 14, 3, True, False),   # conv3 + bn3
        (42, 10, 5, False, False),  # conv4 (concat=False, mean over 5 heads) + bn4
    ]
    keys = jax.random.split(k_p, len(cfgs))
    params_flat = [init_layer(k, fin, c, h, cc) for k, (fin, c, h, cc, _) in zip(keys, cfgs)]

    # pack everything into two flat slabs (bf16 weights + f32 biases/att/scale/shift)
    layers, w_rows, p_rows = build_layout(cfgs)
    w_buf, p_buf = pack_params(params_flat, layers, w_rows, p_rows)

    # single fused Pallas forward
    h_pl = encoder_forward(x, adj, w_buf, p_buf, layers, out_dim=10)
    h_pl = jax.block_until_ready(h_pl)

    # pure f32 reference forward (module semantics, unfused)
    h_ref = x
    for (fin, c, hd, cc, elu), p in zip(cfgs, params_flat):
        h_ref = gatv2_layer_ref(h_ref, p, adj, heads=hd, out_ch=c, concat=cc, apply_elu=elu)
    h_ref = jax.block_until_ready(h_ref)

    assert h_pl.shape == (N, 10), h_pl.shape
    assert bool(jnp.all(jnp.isfinite(h_pl)))
    # bf16 MXU operands (per perf review) => looser-than-f32 tolerance vs the f32 reference
    max_diff = float(jnp.max(jnp.abs(h_pl - h_ref)))
    assert bool(jnp.allclose(h_pl, h_ref, atol=1e-1, rtol=1e-1)), f"mismatch, max_diff={max_diff}"
    print("KERNEL_OK")
</pallas_src>

<mosaic_0001>
module attributes {stable_mosaic.version = 11 : i64} {
  func.func @fused_encoder_kernel(%arg0: memref<12x22xf32, #tpu.memory_space<vmem>>, %arg1: memref<12x12xf32, #tpu.memory_space<vmem>>, %arg2: memref<384x64xbf16, #tpu.memory_space<vmem>>, %arg3: memref<32x64xf32, #tpu.memory_space<vmem>>, %arg4: memref<12x10xf32, #tpu.memory_space<vmem>>) attributes {dimension_semantics = [], scalar_prefetch = 0 : i64, scratch_operands = 0 : i64, tpu.core_type = #tpu.core_type<tc>} {
    %c0 = arith.constant 0 : index
    %c0_0 = arith.constant 0 : index
    %0 = vector.load %arg1[%c0, %c0_0] : memref<12x12xf32, #tpu.memory_space<vmem>>, vector<12x12xf32>
    %cst = arith.constant 0.000000e+00 : f32
    %1 = vector.broadcast %cst : f32 to vector<12x12xf32>
    %2 = arith.cmpf ogt, %0, %1 : vector<12x12xf32>
    %cst_1 = arith.constant 0.000000e+00 : f32
    %cst_2 = arith.constant -1.000000e+30 : f32
    %3 = vector.broadcast %cst_1 : f32 to vector<12x12xf32>
    %4 = vector.broadcast %cst_2 : f32 to vector<12x12xf32>
    %5 = arith.select %2, %3, %4 : vector<12x12xi1>, vector<12x12xf32>
    %c0_3 = arith.constant 0 : index
    %c0_4 = arith.constant 0 : index
    %6 = vector.load %arg0[%c0_3, %c0_4] : memref<12x22xf32, #tpu.memory_space<vmem>>, vector<12x22xf32>
    %c0_5 = arith.constant 0 : index
    %c0_6 = arith.constant 0 : index
    %7 = vector.load %arg2[%c0_5, %c0_6] : memref<384x64xbf16, #tpu.memory_space<vmem>>, vector<22x54xbf16>
    %c32 = arith.constant 32 : index
    %c0_7 = arith.constant 0 : index
    %8 = vector.load %arg2[%c32, %c0_7] : memref<384x64xbf16, #tpu.memory_space<vmem>>, vector<22x54xbf16>
    %c0_8 = arith.constant 0 : index
    %c0_9 = arith.constant 0 : index
    %9 = vector.load %arg3[%c0_8, %c0_9] : memref<32x64xf32, #tpu.memory_space<vmem>>, vector<1x54xf32>
    %c1 = arith.constant 1 : index
    %c0_10 = arith.constant 0 : index
    %10 = vector.load %arg3[%c1, %c0_10] : memref<32x64xf32, #tpu.memory_space<vmem>>, vector<1x54xf32>
    %c2 = arith.constant 2 : index
    %c0_11 = arith.constant 0 : index
    %11 = vector.load %arg3[%c2, %c0_11] : memref<32x64xf32, #tpu.memory_space<vmem>>, vector<1x54xf32>
    %c3 = arith.constant 3 : index
    %c0_12 = arith.constant 0 : index
    %12 = vector.load %arg3[%c3, %c0_12] : memref<32x64xf32, #tpu.memory_space<vmem>>, vector<1x54xf32>
    %c4 = arith.constant 4 : index
    %c0_13 = arith.constant 0 : index
    %13 = vector.load %arg3[%c4, %c0_13] : memref<32x64xf32, #tpu.memory_space<vmem>>, vector<1x54xf32>
    %14 = arith.truncf %6 : vector<12x22xf32> to vector<12x22xbf16>
    %cst_14 = arith.constant dense<0.000000e+00> : vector<12x54xf32>
    %15 = tpu.matmul %14, %7, %cst_14 {dimension_numbers = #tpu.dot_dimension_numbers<[1], [0], [0], [1], [0, 0, 1, 1], [], []>} : vector<12x22xbf16>, vector<22x54xbf16>, vector<12x54xf32> -> vector<12x54xf32>
    %16 = vector.broadcast %9 : vector<1x54xf32> to vector<12x54xf32>
    %17 = arith.addf %15, %16 : vector<12x54xf32>
    %cst_15 = arith.constant dense<0.000000e+00> : vector<12x54xf32>
    %18 = tpu.matmul %14, %8, %cst_15 {dimension_numbers = #tpu.dot_dimension_numbers<[1], [0], [0], [1], [0, 0, 1, 1], [], []>} : vector<12x22xbf16>, vector<22x54xbf16>, vector<12x54xf32> -> vector<12x54xf32>
    %19 = vector.broadcast %10 : vector<1x54xf32> to vector<12x54xf32>
    %20 = arith.addf %18, %19 : vector<12x54xf32>
    %21 = vector.shape_cast %17 : vector<12x54xf32> to vector<1x12x54xf32>
    %22 = vector.shape_cast %20 : vector<12x54xf32> to vector<12x1x54xf32>
    %23 = vector.broadcast %21 : vector<1x12x54xf32> to vector<12x12x54xf32>
    %24 = vector.broadcast %22 : vector<12x1x54xf32> to vector<12x12x54xf32>
    %25 = arith.addf %23, %24 : vector<12x12x54xf32>
    %cst_16 = arith.constant 0.000000e+00 : f32
    %26 = vector.broadcast %cst_16 : f32 to vector<12x12x54xf32>
    %27 = arith.cmpf ogt, %25, %26 : vector<12x12x54xf32>
    %cst_17 = arith.constant 2.000000e-01 : f32
    %28 = vector.broadcast %cst_17 : f32 to vector<12x12x54xf32>
    %29 = arith.mulf %28, %25 : vector<12x12x54xf32>
    %30 = arith.select %27, %25, %29 : vector<12x12x54xi1>, vector<12x12x54xf32>
    %31 = vector.shape_cast %11 : vector<1x54xf32> to vector<1x1x54xf32>
    %32 = vector.broadcast %31 : vector<1x1x54xf32> to vector<12x12x54xf32>
    %33 = arith.mulf %30, %32 : vector<12x12x54xf32>
    %34 = arith.truncf %17 : vector<12x54xf32> to vector<12x54xbf16>
    %35 = vector.extract_strided_slice %33 {offsets = [0, 0, 0], sizes = [12, 12, 18], strides = [1, 1, 1]} : vector<12x12x54xf32> to vector<12x12x18xf32>
    %cst_18 = arith.constant dense<0.000000e+00> : vector<12x12xf32>
    %36 = vector.multi_reduction <add>, %35, %cst_18 [2] : vector<12x12x18xf32> to vector<12x12xf32>
    %37 = arith.addf %36, %5 : vector<12x12xf32>
    %cst_19 = arith.constant dense<0xFF800000> : vector<12xf32>
    %38 = vector.multi_reduction <maximumf>, %37, %cst_19 [1] : vector<12x12xf32> to vector<12xf32>
    %39 = vector.shape_cast %38 : vector<12xf32> to vector<12x1xf32>
    %40 = vector.broadcast %39 : vector<12x1xf32> to vector<12x12xf32>
    %41 = arith.subf %37, %40 : vector<12x12xf32>
    %42 = math.exp %41 : vector<12x12xf32>
    %cst_20 = arith.constant 0.000000e+00 : f32
    %43 = vector.broadcast %cst_20 : f32 to vector<12x12xf32>
    %44 = arith.select %2, %42, %43 : vector<12x12xi1>, vector<12x12xf32>
    %cst_21 = arith.constant dense<0.000000e+00> : vector<12xf32>
    %45 = vector.multi_reduction <add>, %44, %cst_21 [1] : vector<12x12xf32> to vector<12xf32>
    %46 = vector.shape_cast %45 : vector<12xf32> to vector<12x1xf32>
    %47 = tpu.reciprocal %46 {approx = true} : vector<12x1xf32> -> vector<12x1xf32>
    %48 = vector.broadcast %47 : vector<12x1xf32> to vector<12x12xf32>
    %49 = arith.mulf %44, %48 : vector<12x12xf32>
    %50 = arith.truncf %49 : vector<12x12xf32> to vector<12x12xbf16>
    %51 = vector.extract_strided_slice %34 {offsets = [0, 0], sizes = [12, 18], strides = [1, 1]} : vector<12x54xbf16> to vector<12x18xbf16>
    %cst_22 = arith.constant dense<0.000000e+00> : vector<12x18xf32>
    %52 = tpu.matmul %50, %51, %cst_22 {dimension_numbers = #tpu.dot_dimension_numbers<[1], [0], [0], [1], [0, 0, 1, 1], [], []>} : vector<12x12xbf16>, vector<12x18xbf16>, vector<12x18xf32> -> vector<12x18xf32>
    %53 = vector.extract_strided_slice %33 {offsets = [0, 0, 18], sizes = [12, 12, 18], strides = [1, 1, 1]} : vector<12x12x54xf32> to vector<12x12x18xf32>
    %cst_23 = arith.constant dense<0.000000e+00> : vector<12x12xf32>
    %54 = vector.multi_reduction <add>, %53, %cst_23 [2] : vector<12x12x18xf32> to vector<12x12xf32>
    %55 = arith.addf %54, %5 : vector<12x12xf32>
    %cst_24 = arith.constant dense<0xFF800000> : vector<12xf32>
    %56 = vector.multi_reduction <maximumf>, %55, %cst_24 [1] : vector<12x12xf32> to vector<12xf32>
    %57 = vector.shape_cast %56 : vector<12xf32> to vector<12x1xf32>
    %58 = vector.broadcast %57 : vector<12x1xf32> to vector<12x12xf32>
    %59 = arith.subf %55, %58 : vector<12x12xf32>
    %60 = math.exp %59 : vector<12x12xf32>
    %cst_25 = arith.constant 0.000000e+00 : f32
    %61 = vector.broadcast %cst_25 : f32 to vector<12x12xf32>
    %62 = arith.select %2, %60, %61 : vector<12x12xi1>, vector<12x12xf32>
    %cst_26 = arith.constant dense<0.000000e+00> : vector<12xf32>
    %63 = vector.multi_reduction <add>, %62, %cst_26 [1] : vector<12x12xf32> to vector<12xf32>
    %64 = vector.shape_cast %63 : vector<12xf32> to vector<12x1xf32>
    %65 = tpu.reciprocal %64 {approx = true} : vector<12x1xf32> -> vector<12x1xf32>
    %66 = vector.broadcast %65 : vector<12x1xf32> to vector<12x12xf32>
    %67 = arith.mulf %62, %66 : vector<12x12xf32>
    %68 = arith.truncf %67 : vector<12x12xf32> to vector<12x12xbf16>
    %69 = vector.extract_strided_slice %34 {offsets = [0, 18], sizes = [12, 18], strides = [1, 1]} : vector<12x54xbf16> to vector<12x18xbf16>
    %cst_27 = arith.constant dense<0.000000e+00> : vector<12x18xf32>
    %70 = tpu.matmul %68, %69, %cst_27 {dimension_numbers = #tpu.dot_dimension_numbers<[1], [0], [0], [1], [0, 0, 1, 1], [], []>} : vector<12x12xbf16>, vector<12x18xbf16>, vector<12x18xf32> -> vector<12x18xf32>
    %71 = vector.extract_strided_slice %33 {offsets = [0, 0, 36], sizes = [12, 12, 18], strides = [1, 1, 1]} : vector<12x12x54xf32> to vector<12x12x18xf32>
    %cst_28 = arith.constant dense<0.000000e+00> : vector<12x12xf32>
    %72 = vector.multi_reduction <add>, %71, %cst_28 [2] : vector<12x12x18xf32> to vector<12x12xf32>
    %73 = arith.addf %72, %5 : vector<12x12xf32>
    %cst_29 = arith.constant dense<0xFF800000> : vector<12xf32>
    %74 = vector.multi_reduction <maximumf>, %73, %cst_29 [1] : vector<12x12xf32> to vector<12xf32>
    %75 = vector.shape_cast %74 : vector<12xf32> to vector<12x1xf32>
    %76 = vector.broadcast %75 : vector<12x1xf32> to vector<12x12xf32>
    %77 = arith.subf %73, %76 : vector<12x12xf32>
    %78 = math.exp %77 : vector<12x12xf32>
    %cst_30 = arith.constant 0.000000e+00 : f32
    %79 = vector.broadcast %cst_30 : f32 to vector<12x12xf32>
    %80 = arith.select %2, %78, %79 : vector<12x12xi1>, vector<12x12xf32>
    %cst_31 = arith.constant dense<0.000000e+00> : vector<12xf32>
    %81 = vector.multi_reduction <add>, %80, %cst_31 [1] : vector<12x12xf32> to vector<12xf32>
    %82 = vector.shape_cast %81 : vector<12xf32> to vector<12x1xf32>
    %83 = tpu.reciprocal %82 {approx = true} : vector<12x1xf32> -> vector<12x1xf32>
    %84 = vector.broadcast %83 : vector<12x1xf32> to vector<12x12xf32>
    %85 = arith.mulf %80, %84 : vector<12x12xf32>
    %86 = arith.truncf %85 : vector<12x12xf32> to vector<12x12xbf16>
    %87 = vector.extract_strided_slice %34 {offsets = [0, 36], sizes = [12, 18], strides = [1, 1]} : vector<12x54xbf16> to vector<12x18xbf16>
    %cst_32 = arith.constant dense<0.000000e+00> : vector<12x18xf32>
    %88 = tpu.matmul %86, %87, %cst_32 {dimension_numbers = #tpu.dot_dimension_numbers<[1], [0], [0], [1], [0, 0, 1, 1], [], []>} : vector<12x12xbf16>, vector<12x18xbf16>, vector<12x18xf32> -> vector<12x18xf32>
    %89 = tpu.concatenate %52, %70, %88 in 1 : vector<12x18xf32>, vector<12x18xf32>, vector<12x18xf32> -> vector<12x54xf32>
    %90 = vector.broadcast %12 : vector<1x54xf32> to vector<12x54xf32>
    %91 = arith.mulf %89, %90 : vector<12x54xf32>
    %92 = vector.broadcast %13 : vector<1x54xf32> to vector<12x54xf32>
    %93 = arith.addf %91, %92 : vector<12x54xf32>
    %cst_33 = arith.constant 0.000000e+00 : f32
    %94 = vector.broadcast %cst_33 : f32 to vector<12x54xf32>
    %95 = arith.cmpf ogt, %93, %94 : vector<12x54xf32>
    %96 = math.exp %93 : vector<12x54xf32>
    %cst_34 = arith.constant 1.000000e+00 : f32
    %97 = vector.broadcast %cst_34 : f32 to vector<12x54xf32>
    %98 = arith.subf %96, %97 : vector<12x54xf32>
    %99 = arith.select %95, %93, %98 : vector<12x54xi1>, vector<12x54xf32>
    %c64 = arith.constant 64 : index
    %c0_35 = arith.constant 0 : index
    %100 = vector.load %arg2[%c64, %c0_35] : memref<384x64xbf16, #tpu.memory_space<vmem>>, vector<54x48xbf16>
    %c128 = arith.constant 128 : index
    %c0_36 = arith.constant 0 : index
    %101 = vector.load %arg2[%c128, %c0_36] : memref<384x64xbf16, #tpu.memory_space<vmem>>, vector<54x48xbf16>
    %c8 = arith.constant 8 : index
    %c0_37 = arith.constant 0 : index
    %102 = vector.load %arg3[%c8, %c0_37] : memref<32x64xf32, #tpu.memory_space<vmem>>, vector<1x48xf32>
    %c9 = arith.constant 9 : index
    %c0_38 = arith.constant 0 : index
    %103 = vector.load %arg3[%c9, %c0_38] : memref<32x64xf32, #tpu.memory_space<vmem>>, vector<1x48xf32>
    %c10 = arith.constant 10 : index
    %c0_39 = arith.constant 0 : index
    %104 = vector.load %arg3[%c10, %c0_39] : memref<32x64xf32, #tpu.memory_space<vmem>>, vector<1x48xf32>
    %c11 = arith.constant 11 : index
    %c0_40 = arith.constant 0 : index
    %105 = vector.load %arg3[%c11, %c0_40] : memref<32x64xf32, #tpu.memory_space<vmem>>, vector<1x48xf32>
    %c12 = arith.constant 12 : index
    %c0_41 = arith.constant 0 : index
    %106 = vector.load %arg3[%c12, %c0_41] : memref<32x64xf32, #tpu.memory_space<vmem>>, vector<1x48xf32>
    %107 = arith.truncf %99 : vector<12x54xf32> to vector<12x54xbf16>
    %cst_42 = arith.constant dense<0.000000e+00> : vector<12x48xf32>
    %108 = tpu.matmul %107, %100, %cst_42 {dimension_numbers = #tpu.dot_dimension_numbers<[1], [0], [0], [1], [0, 0, 1, 1], [], []>} : vector<12x54xbf16>, vector<54x48xbf16>, vector<12x48xf32> -> vector<12x48xf32>
    %109 = vector.broadcast %102 : vector<1x48xf32> to vector<12x48xf32>
    %110 = arith.addf %108, %109 : vector<12x48xf32>
    %cst_43 = arith.constant dense<0.000000e+00> : vector<12x48xf32>
    %111 = tpu.matmul %107, %101, %cst_43 {dimension_numbers = #tpu.dot_dimension_numbers<[1], [0], [0], [1], [0, 0, 1, 1], [], []>} : vector<12x54xbf16>, vector<54x48xbf16>, vector<12x48xf32> -> vector<12x48xf32>
    %112 = vector.broadcast %103 : vector<1x48xf32> to vector<12x48xf32>
    %113 = arith.addf %111, %112 : vector<12x48xf32>
    %114 = vector.shape_cast %110 : vector<12x48xf32> to vector<1x12x48xf32>
    %115 = vector.shape_cast %113 : vector<12x48xf32> to vector<12x1x48xf32>
    %116 = vector.broadcast %114 : vector<1x12x48xf32> to vector<12x12x48xf32>
    %117 = vector.broadcast %115 : vector<12x1x48xf32> to vector<12x12x48xf32>
    %118 = arith.addf %116, %117 : vector<12x12x48xf32>
    %cst_44 = arith.constant 0.000000e+00 : f32
    %119 = vector.broadcast %cst_44 : f32 to vector<12x12x48xf32>
    %120 = arith.cmpf ogt, %118, %119 : vector<12x12x48xf32>
    %cst_45 = arith.constant 2.000000e-01 : f32
    %121 = vector.broadcast %cst_45 : f32 to vector<12x12x48xf32>
    %122 = arith.mulf %121, %118 : vector<12x12x48xf32>
    %123 = arith.select %120, %118, %122 : vector<12x12x48xi1>, vector<12x12x48xf32>
    %124 = vector.shape_cast %104 : vector<1x48xf32> to vector<1x1x48xf32>
    %125 = vector.broadcast %124 : vector<1x1x48xf32> to vector<12x12x48xf32>
    %126 = arith.mulf %123, %125 : vector<12x12x48xf32>
    %127 = arith.truncf %110 : vector<12x48xf32> to vector<12x48xbf16>
    %128 = vector.extract_strided_slice %126 {offsets = [0, 0, 0], sizes = [12, 12, 16], strides = [1, 1, 1]} : vector<12x12x48xf32> to vector<12x12x16xf32>
    %cst_46 = arith.constant dense<0.000000e+00> : vector<12x12xf32>
    %129 = vector.multi_reduction <add>, %128, %cst_46 [2] : vector<12x12x16xf32> to vector<12x12xf32>
    %130 = arith.addf %129, %5 : vector<12x12xf32>
    %cst_47 = arith.constant dense<0xFF800000> : vector<12xf32>
    %131 = vector.multi_reduction <maximumf>, %130, %cst_47 [1] : vector<12x12xf32> to vector<12xf32>
    %132 = vector.shape_cast %131 : vector<12xf32> to vector<12x1xf32>
    %133 = vector.broadcast %132 : vector<12x1xf32> to vector<12x12xf32>
    %134 = arith.subf %130, %133 : vector<12x12xf32>
    %135 = math.exp %134 : vector<12x12xf32>
    %cst_48 = arith.constant 0.000000e+00 : f32
    %136 = vector.broadcast %cst_48 : f32 to vector<12x12xf32>
    %137 = arith.select %2, %135, %136 : vector<12x12xi1>, vector<12x12xf32>
    %cst_49 = arith.constant dense<0.000000e+00> : vector<12xf32>
    %138 = vector.multi_reduction <add>, %137, %cst_49 [1] : vector<12x12xf32> to vector<12xf32>
    %139 = vector.shape_cast %138 : vector<12xf32> to vector<12x1xf32>
    %140 = tpu.reciprocal %139 {approx = true} : vector<12x1xf32> -> vector<12x1xf32>
    %141 = vector.broadcast %140 : vector<12x1xf32> to vector<12x12xf32>
    %142 = arith.mulf %137, %141 : vector<12x12xf32>
    %143 = arith.truncf %142 : vector<12x12xf32> to vector<12x12xbf16>
    %144 = vector.extract_strided_slice %127 {offsets = [0, 0], sizes = [12, 16], strides = [1, 1]} : vector<12x48xbf16> to vector<12x16xbf16>
    %cst_50 = arith.constant dense<0.000000e+00> : vector<12x16xf32>
    %145 = tpu.matmul %143, %144, %cst_50 {dimension_numbers = #tpu.dot_dimension_numbers<[1], [0], [0], [1], [0, 0, 1, 1], [], []>} : vector<12x12xbf16>, vector<12x16xbf16>, vector<12x16xf32> -> vector<12x16xf32>
    %146 = vector.extract_strided_slice %126 {offsets = [0, 0, 16], sizes = [12, 12, 16], strides = [1, 1, 1]} : vector<12x12x48xf32> to vector<12x12x16xf32>
    %cst_51 = arith.constant dense<0.000000e+00> : vector<12x12xf32>
    %147 = vector.multi_reduction <add>, %146, %cst_51 [2] : vector<12x12x16xf32> to vector<12x12xf32>
    %148 = arith.addf %147, %5 : vector<12x12xf32>
    %cst_52 = arith.constant dense<0xFF800000> : vector<12xf32>
    %149 = vector.multi_reduction <maximumf>, %148, %cst_52 [1] : vector<12x12xf32> to vector<12xf32>
    %150 = vector.shape_cast %149 : vector<12xf32> to vector<12x1xf32>
    %151 = vector.broadcast %150 : vector<12x1xf32> to vector<12x12xf32>
    %152 = arith.subf %148, %151 : vector<12x12xf32>
    %153 = math.exp %152 : vector<12x12xf32>
    %cst_53 = arith.constant 0.000000e+00 : f32
    %154 = vector.broadcast %cst_53 : f32 to vector<12x12xf32>
    %155 = arith.select %2, %153, %154 : vector<12x12xi1>, vector<12x12xf32>
    %cst_54 = arith.constant dense<0.000000e+00> : vector<12xf32>
    %156 = vector.multi_reduction <add>, %155, %cst_54 [1] : vector<12x12xf32> to vector<12xf32>
    %157 = vector.shape_cast %156 : vector<12xf32> to vector<12x1xf32>
    %158 = tpu.reciprocal %157 {approx = true} : vector<12x1xf32> -> vector<12x1xf32>
    %159 = vector.broadcast %158 : vector<12x1xf32> to vector<12x12xf32>
    %160 = arith.mulf %155, %159 : vector<12x12xf32>
    %161 = arith.truncf %160 : vector<12x12xf32> to vector<12x12xbf16>
    %162 = vector.extract_strided_slice %127 {offsets = [0, 16], sizes = [12, 16], strides = [1, 1]} : vector<12x48xbf16> to vector<12x16xbf16>
    %cst_55 = arith.constant dense<0.000000e+00> : vector<12x16xf32>
    %163 = tpu.matmul %161, %162, %cst_55 {dimension_numbers = #tpu.dot_dimension_numbers<[1], [0], [0], [1], [0, 0, 1, 1], [], []>} : vector<12x12xbf16>, vector<12x16xbf16>, vector<12x16xf32> -> vector<12x16xf32>
    %164 = vector.extract_strided_slice %126 {offsets = [0, 0, 32], sizes = [12, 12, 16], strides = [1, 1, 1]} : vector<12x12x48xf32> to vector<12x12x16xf32>
    %cst_56 = arith.constant dense<0.000000e+00> : vector<12x12xf32>
    %165 = vector.multi_reduction <add>, %164, %cst_56 [2] : vector<12x12x16xf32> to vector<12x12xf32>
    %166 = arith.addf %165, %5 : vector<12x12xf32>
    %cst_57 = arith.constant dense<0xFF800000> : vector<12xf32>
    %167 = vector.multi_reduction <maximumf>, %166, %cst_57 [1] : vector<12x12xf32> to vector<12xf32>
    %168 = vector.shape_cast %167 : vector<12xf32> to vector<12x1xf32>
    %169 = vector.broadcast %168 : vector<12x1xf32> to vector<12x12xf32>
    %170 = arith.subf %166, %169 : vector<12x12xf32>
    %171 = math.exp %170 : vector<12x12xf32>
    %cst_58 = arith.constant 0.000000e+00 : f32
    %172 = vector.broadcast %cst_58 : f32 to vector<12x12xf32>
    %173 = arith.select %2, %171, %172 : vector<12x12xi1>, vector<12x12xf32>
    %cst_59 = arith.constant dense<0.000000e+00> : vector<12xf32>
    %174 = vector.multi_reduction <add>, %173, %cst_59 [1] : vector<12x12xf32> to vector<12xf32>
    %175 = vector.shape_cast %174 : vector<12xf32> to vector<12x1xf32>
    %176 = tpu.reciprocal %175 {approx = true} : vector<12x1xf32> -> vector<12x1xf32>
    %177 = vector.broadcast %176 : vector<12x1xf32> to vector<12x12xf32>
    %178 = arith.mulf %173, %177 : vector<12x12xf32>
    %179 = arith.truncf %178 : vector<12x12xf32> to vector<12x12xbf16>
    %180 = vector.extract_strided_slice %127 {offsets = [0, 32], sizes = [12, 16], strides = [1, 1]} : vector<12x48xbf16> to vector<12x16xbf16>
    %cst_60 = arith.constant dense<0.000000e+00> : vector<12x16xf32>
    %181 = tpu.matmul %179, %180, %cst_60 {dimension_numbers = #tpu.dot_dimension_numbers<[1], [0], [0], [1], [0, 0, 1, 1], [], []>} : vector<12x12xbf16>, vector<12x16xbf16>, vector<12x16xf32> -> vector<12x16xf32>
    %182 = tpu.concatenate %145, %163, %181 in 1 : vector<12x16xf32>, vector<12x16xf32>, vector<12x16xf32> -> vector<12x48xf32>
    %183 = vector.broadcast %105 : vector<1x48xf32> to vector<12x48xf32>
    %184 = arith.mulf %182, %183 : vector<12x48xf32>
    %185 = vector.broadcast %106 : vector<1x48xf32> to vector<12x48xf32>
    %186 = arith.addf %184, %185 : vector<12x48xf32>
    %c192 = arith.constant 192 : index
    %c0_61 = arith.constant 0 : index
    %187 = vector.load %arg2[%c192, %c0_61] : memref<384x64xbf16, #tpu.memory_space<vmem>>, vector<48x42xbf16>
    %c240 = arith.constant 240 : index
    %c0_62 = arith.constant 0 : index
    %188 = vector.load %arg2[%c240, %c0_62] : memref<384x64xbf16, #tpu.memory_space<vmem>>, vector<48x42xbf16>
    %c16 = arith.constant 16 : index
    %c0_63 = arith.constant 0 : index
    %189 = vector.load %arg3[%c16, %c0_63] : memref<32x64xf32, #tpu.memory_space<vmem>>, vector<1x42xf32>
    %c17 = arith.constant 17 : index
    %c0_64 = arith.constant 0 : index
    %190 = vector.load %arg3[%c17, %c0_64] : memref<32x64xf32, #tpu.memory_space<vmem>>, vector<1x42xf32>
    %c18 = arith.constant 18 : index
    %c0_65 = arith.constant 0 : index
    %191 = vector.load %arg3[%c18, %c0_65] : memref<32x64xf32, #tpu.memory_space<vmem>>, vector<1x42xf32>
    %c19 = arith.constant 19 : index
    %c0_66 = arith.constant 0 : index
    %192 = vector.load %arg3[%c19, %c0_66] : memref<32x64xf32, #tpu.memory_space<vmem>>, vector<1x42xf32>
    %c20 = arith.constant 20 : index
    %c0_67 = arith.constant 0 : index
    %193 = vector.load %arg3[%c20, %c0_67] : memref<32x64xf32, #tpu.memory_space<vmem>>, vector<1x42xf32>
    %194 = arith.truncf %186 : vector<12x48xf32> to vector<12x48xbf16>
    %cst_68 = arith.constant dense<0.000000e+00> : vector<12x42xf32>
    %195 = tpu.matmul %194, %187, %cst_68 {dimension_numbers = #tpu.dot_dimension_numbers<[1], [0], [0], [1], [0, 0, 1, 1], [], []>} : vector<12x48xbf16>, vector<48x42xbf16>, vector<12x42xf32> -> vector<12x42xf32>
    %196 = vector.broadcast %189 : vector<1x42xf32> to vector<12x42xf32>
    %197 = arith.addf %195, %196 : vector<12x42xf32>
    %cst_69 = arith.constant dense<0.000000e+00> : vector<12x42xf32>
    %198 = tpu.matmul %194, %188, %cst_69 {dimension_numbers = #tpu.dot_dimension_numbers<[1], [0], [0], [1], [0, 0, 1, 1], [], []>} : vector<12x48xbf16>, vector<48x42xbf16>, vector<12x42xf32> -> vector<12x42xf32>
    %199 = vector.broadcast %190 : vector<1x42xf32> to vector<12x42xf32>
    %200 = arith.addf %198, %199 : vector<12x42xf32>
    %201 = vector.shape_cast %197 : vector<12x42xf32> to vector<1x12x42xf32>
    %202 = vector.shape_cast %200 : vector<12x42xf32> to vector<12x1x42xf32>
    %203 = vector.broadcast %201 : vector<1x12x42xf32> to vector<12x12x42xf32>
    %204 = vector.broadcast %202 : vector<12x1x42xf32> to vector<12x12x42xf32>
    %205 = arith.addf %203, %204 : vector<12x12x42xf32>
    %cst_70 = arith.constant 0.000000e+00 : f32
    %206 = vector.broadcast %cst_70 : f32 to vector<12x12x42xf32>
    %207 = arith.cmpf ogt, %205, %206 : vector<12x12x42xf32>
    %cst_71 = arith.constant 2.000000e-01 : f32
    %208 = vector.broadcast %cst_71 : f32 to vector<12x12x42xf32>
    %209 = arith.mulf %208, %205 : vector<12x12x42xf32>
    %210 = arith.select %207, %205, %209 : vector<12x12x42xi1>, vector<12x12x42xf32>
    %211 = vector.shape_cast %191 : vector<1x42xf32> to vector<1x1x42xf32>
    %212 = vector.broadcast %211 : vector<1x1x42xf32> to vector<12x12x42xf32>
    %213 = arith.mulf %210, %212 : vector<12x12x42xf32>
    %214 = arith.truncf %197 : vector<12x42xf32> to vector<12x42xbf16>
    %215 = vector.extract_strided_slice %213 {offsets = [0, 0, 0], sizes = [12, 12, 14], strides = [1, 1, 1]} : vector<12x12x42xf32> to vector<12x12x14xf32>
    %cst_72 = arith.constant dense<0.000000e+00> : vector<12x12xf32>
    %216 = vector.multi_reduction <add>, %215, %cst_72 [2] : vector<12x12x14xf32> to vector<12x12xf32>
    %217 = arith.addf %216, %5 : vector<12x12xf32>
    %cst_73 = arith.constant dense<0xFF800000> : vector<12xf32>
    %218 = vector.multi_reduction <maximumf>, %217, %cst_73 [1] : vector<12x12xf32> to vector<12xf32>
    %219 = vector.shape_cast %218 : vector<12xf32> to vector<12x1xf32>
    %220 = vector.broadcast %219 : vector<12x1xf32> to vector<12x12xf32>
    %221 = arith.subf %217, %220 : vector<12x12xf32>
    %222 = math.exp %221 : vector<12x12xf32>
    %cst_74 = arith.constant 0.000000e+00 : f32
    %223 = vector.broadcast %cst_74 : f32 to vector<12x12xf32>
    %224 = arith.select %2, %222, %223 : vector<12x12xi1>, vector<12x12xf32>
    %cst_75 = arith.constant dense<0.000000e+00> : vector<12xf32>
    %225 = vector.multi_reduction <add>, %224, %cst_75 [1] : vector<12x12xf32> to vector<12xf32>
    %226 = vector.shape_cast %225 : vector<12xf32> to vector<12x1xf32>
    %227 = tpu.reciprocal %226 {approx = true} : vector<12x1xf32> -> vector<12x1xf32>
    %228 = vector.broadcast %227 : vector<12x1xf32> to vector<12x12xf32>
    %229 = arith.mulf %224, %228 : vector<12x12xf32>
    %230 = arith.truncf %229 : vector<12x12xf32> to vector<12x12xbf16>
    %231 = vector.extract_strided_slice %214 {offsets = [0, 0], sizes = [12, 14], strides = [1, 1]} : vector<12x42xbf16> to vector<12x14xbf16>
    %cst_76 = arith.constant dense<0.000000e+00> : vector<12x14xf32>
    %232 = tpu.matmul %230, %231, %cst_76 {dimension_numbers = #tpu.dot_dimension_numbers<[1], [0], [0], [1], [0, 0, 1, 1], [], []>} : vector<12x12xbf16>, vector<12x14xbf16>, vector<12x14xf32> -> vector<12x14xf32>
    %233 = vector.extract_strided_slice %213 {offsets = [0, 0, 14], sizes = [12, 12, 14], strides = [1, 1, 1]} : vector<12x12x42xf32> to vector<12x12x14xf32>
    %cst_77 = arith.constant dense<0.000000e+00> : vector<12x12xf32>
    %234 = vector.multi_reduction <add>, %233, %cst_77 [2] : vector<12x12x14xf32> to vector<12x12xf32>
    %235 = arith.addf %234, %5 : vector<12x12xf32>
    %cst_78 = arith.constant dense<0xFF800000> : vector<12xf32>
    %236 = vector.multi_reduction <maximumf>, %235, %cst_78 [1] : vector<12x12xf32> to vector<12xf32>
    %237 = vector.shape_cast %236 : vector<12xf32> to vector<12x1xf32>
    %238 = vector.broadcast %237 : vector<12x1xf32> to vector<12x12xf32>
    %239 = arith.subf %235, %238 : vector<12x12xf32>
    %240 = math.exp %239 : vector<12x12xf32>
    %cst_79 = arith.constant 0.000000e+00 : f32
    %241 = vector.broadcast %cst_79 : f32 to vector<12x12xf32>
    %242 = arith.select %2, %240, %241 : vector<12x12xi1>, vector<12x12xf32>
    %cst_80 = arith.constant dense<0.000000e+00> : vector<12xf32>
    %243 = vector.multi_reduction <add>, %242, %cst_80 [1] : vector<12x12xf32> to vector<12xf32>
    %244 = vector.shape_cast %243 : vector<12xf32> to vector<12x1xf32>
    %245 = tpu.reciprocal %244 {approx = true} : vector<12x1xf32> -> vector<12x1xf32>
    %246 = vector.broadcast %245 : vector<12x1xf32> to vector<12x12xf32>
    %247 = arith.mulf %242, %246 : vector<12x12xf32>
    %248 = arith.truncf %247 : vector<12x12xf32> to vector<12x12xbf16>
    %249 = vector.extract_strided_slice %214 {offsets = [0, 14], sizes = [12, 14], strides = [1, 1]} : vector<12x42xbf16> to vector<12x14xbf16>
    %cst_81 = arith.constant dense<0.000000e+00> : vector<12x14xf32>
    %250 = tpu.matmul %248, %249, %cst_81 {dimension_numbers = #tpu.dot_dimension_numbers<[1], [0], [0], [1], [0, 0, 1, 1], [], []>} : vector<12x12xbf16>, vector<12x14xbf16>, vector<12x14xf32> -> vector<12x14xf32>
    %251 = vector.extract_strided_slice %213 {offsets = [0, 0, 28], sizes = [12, 12, 14], strides = [1, 1, 1]} : vector<12x12x42xf32> to vector<12x12x14xf32>
    %cst_82 = arith.constant dense<0.000000e+00> : vector<12x12xf32>
    %252 = vector.multi_reduction <add>, %251, %cst_82 [2] : vector<12x12x14xf32> to vector<12x12xf32>
    %253 = arith.addf %252, %5 : vector<12x12xf32>
    %cst_83 = arith.constant dense<0xFF800000> : vector<12xf32>
    %254 = vector.multi_reduction <maximumf>, %253, %cst_83 [1] : vector<12x12xf32> to vector<12xf32>
    %255 = vector.shape_cast %254 : vector<12xf32> to vector<12x1xf32>
    %256 = vector.broadcast %255 : vector<12x1xf32> to vector<12x12xf32>
    %257 = arith.subf %253, %256 : vector<12x12xf32>
    %258 = math.exp %257 : vector<12x12xf32>
    %cst_84 = arith.constant 0.000000e+00 : f32
    %259 = vector.broadcast %cst_84 : f32 to vector<12x12xf32>
    %260 = arith.select %2, %258, %259 : vector<12x12xi1>, vector<12x12xf32>
    %cst_85 = arith.constant dense<0.000000e+00> : vector<12xf32>
    %261 = vector.multi_reduction <add>, %260, %cst_85 [1] : vector<12x12xf32> to vector<12xf32>
    %262 = vector.shape_cast %261 : vector<12xf32> to vector<12x1xf32>
    %263 = tpu.reciprocal %262 {approx = true} : vector<12x1xf32> -> vector<12x1xf32>
    %264 = vector.broadcast %263 : vector<12x1xf32> to vector<12x12xf32>
    %265 = arith.mulf %260, %264 : vector<12x12xf32>
    %266 = arith.truncf %265 : vector<12x12xf32> to vector<12x12xbf16>
    %267 = vector.extract_strided_slice %214 {offsets = [0, 28], sizes = [12, 14], strides = [1, 1]} : vector<12x42xbf16> to vector<12x14xbf16>
    %cst_86 = arith.constant dense<0.000000e+00> : vector<12x14xf32>
    %268 = tpu.matmul %266, %267, %cst_86 {dimension_numbers = #tpu.dot_dimension_numbers<[1], [0], [0], [1], [0, 0, 1, 1], [], []>} : vector<12x12xbf16>, vector<12x14xbf16>, vector<12x14xf32> -> vector<12x14xf32>
    %269 = tpu.concatenate %232, %250, %268 in 1 : vector<12x14xf32>, vector<12x14xf32>, vector<12x14xf32> -> vector<12x42xf32>
    %270 = vector.broadcast %192 : vector<1x42xf32> to vector<12x42xf32>
    %271 = arith.mulf %269, %270 : vector<12x42xf32>
    %272 = vector.broadcast %193 : vector<1x42xf32> to vector<12x42xf32>
    %273 = arith.addf %271, %272 : vector<12x42xf32>
    %c288 = arith.constant 288 : index
    %c0_87 = arith.constant 0 : index
    %274 = vector.load %arg2[%c288, %c0_87] : memref<384x64xbf16, #tpu.memory_space<vmem>>, vector<42x50xbf16>
    %c336 = arith.constant 336 : index
    %c0_88 = arith.constant 0 : index
    %275 = vector.load %arg2[%c336, %c0_88] : memref<384x64xbf16, #tpu.memory_space<vmem>>, vector<42x50xbf16>
    %c24 = arith.constant 24 : index
    %c0_89 = arith.constant 0 : index
    %276 = vector.load %arg3[%c24, %c0_89] : memref<32x64xf32, #tpu.memory_space<vmem>>, vector<1x50xf32>
    %c25 = arith.constant 25 : index
    %c0_90 = arith.constant 0 : index
    %277 = vector.load %arg3[%c25, %c0_90] : memref<32x64xf32, #tpu.memory_space<vmem>>, vector<1x50xf32>
    %c26 = arith.constant 26 : index
    %c0_91 = arith.constant 0 : index
    %278 = vector.load %arg3[%c26, %c0_91] : memref<32x64xf32, #tpu.memory_space<vmem>>, vector<1x50xf32>
    %c27 = arith.constant 27 : index
    %c0_92 = arith.constant 0 : index
    %279 = vector.load %arg3[%c27, %c0_92] : memref<32x64xf32, #tpu.memory_space<vmem>>, vector<1x10xf32>
    %c28 = arith.constant 28 : index
    %c0_93 = arith.constant 0 : index
    %280 = vector.load %arg3[%c28, %c0_93] : memref<32x64xf32, #tpu.memory_space<vmem>>, vector<1x10xf32>
    %281 = arith.truncf %273 : vector<12x42xf32> to vector<12x42xbf16>
    %cst_94 = arith.constant dense<0.000000e+00> : vector<12x50xf32>
    %282 = tpu.matmul %281, %274, %cst_94 {dimension_numbers = #tpu.dot_dimension_numbers<[1], [0], [0], [1], [0, 0, 1, 1], [], []>} : vector<12x42xbf16>, vector<42x50xbf16>, vector<12x50xf32> -> vector<12x50xf32>
    %283 = vector.broadcast %276 : vector<1x50xf32> to vector<12x50xf32>
    %284 = arith.addf %282, %283 : vector<12x50xf32>
    %cst_95 = arith.constant dense<0.000000e+00> : vector<12x50xf32>
    %285 = tpu.matmul %281, %275, %cst_95 {dimension_numbers = #tpu.dot_dimension_numbers<[1], [0], [0], [1], [0, 0, 1, 1], [], []>} : vector<12x42xbf16>, vector<42x50xbf16>, vector<12x50xf32> -> vector<12x50xf32>
    %286 = vector.broadcast %277 : vector<1x50xf32> to vector<12x50xf32>
    %287 = arith.addf %285, %286 : vector<12x50xf32>
    %288 = vector.shape_cast %284 : vector<12x50xf32> to vector<1x12x50xf32>
    %289 = vector.shape_cast %287 : vector<12x50xf32> to vector<12x1x50xf32>
    %290 = vector.broadcast %288 : vector<1x12x50xf32> to vector<12x12x50xf32>
    %291 = vector.broadcast %289 : vector<12x1x50xf32> to vector<12x12x50xf32>
    %292 = arith.addf %290, %291 : vector<12x12x50xf32>
    %cst_96 = arith.constant 0.000000e+00 : f32
    %293 = vector.broadcast %cst_96 : f32 to vector<12x12x50xf32>
    %294 = arith.cmpf ogt, %292, %293 : vector<12x12x50xf32>
    %cst_97 = arith.constant 2.000000e-01 : f32
    %295 = vector.broadcast %cst_97 : f32 to vector<12x12x50xf32>
    %296 = arith.mulf %295, %292 : vector<12x12x50xf32>
    %297 = arith.select %294, %292, %296 : vector<12x12x50xi1>, vector<12x12x50xf32>
    %298 = vector.shape_cast %278 : vector<1x50xf32> to vector<1x1x50xf32>
    %299 = vector.broadcast %298 : vector<1x1x50xf32> to vector<12x12x50xf32>
    %300 = arith.mulf %297, %299 : vector<12x12x50xf32>
    %301 = arith.truncf %284 : vector<12x50xf32> to vector<12x50xbf16>
    %302 = vector.extract_strided_slice %300 {offsets = [0, 0, 0], sizes = [12, 12, 10], strides = [1, 1, 1]} : vector<12x12x50xf32> to vector<12x12x10xf32>
    %cst_98 = arith.constant dense<0.000000e+00> : vector<12x12xf32>
    %303 = vector.multi_reduction <add>, %302, %cst_98 [2] : vector<12x12x10xf32> to vector<12x12xf32>
    %304 = arith.addf %303, %5 : vector<12x12xf32>
    %cst_99 = arith.constant dense<0xFF800000> : vector<12xf32>
    %305 = vector.multi_reduction <maximumf>, %304, %cst_99 [1] : vector<12x12xf32> to vector<12xf32>
    %306 = vector.shape_cast %305 : vector<12xf32> to vector<12x1xf32>
    %307 = vector.broadcast %306 : vector<12x1xf32> to vector<12x12xf32>
    %308 = arith.subf %304, %307 : vector<12x12xf32>
    %309 = math.exp %308 : vector<12x12xf32>
    %cst_100 = arith.constant 0.000000e+00 : f32
    %310 = vector.broadcast %cst_100 : f32 to vector<12x12xf32>
    %311 = arith.select %2, %309, %310 : vector<12x12xi1>, vector<12x12xf32>
    %cst_101 = arith.constant dense<0.000000e+00> : vector<12xf32>
    %312 = vector.multi_reduction <add>, %311, %cst_101 [1] : vector<12x12xf32> to vector<12xf32>
    %313 = vector.shape_cast %312 : vector<12xf32> to vector<12x1xf32>
    %314 = tpu.reciprocal %313 {approx = true} : vector<12x1xf32> -> vector<12x1xf32>
    %315 = vector.broadcast %314 : vector<12x1xf32> to vector<12x12xf32>
    %316 = arith.mulf %311, %315 : vector<12x12xf32>
    %317 = arith.truncf %316 : vector<12x12xf32> to vector<12x12xbf16>
    %318 = vector.extract_strided_slice %301 {offsets = [0, 0], sizes = [12, 10], strides = [1, 1]} : vector<12x50xbf16> to vector<12x10xbf16>
    %cst_102 = arith.constant dense<0.000000e+00> : vector<12x10xf32>
    %319 = tpu.matmul %317, %318, %cst_102 {dimension_numbers = #tpu.dot_dimension_numbers<[1], [0], [0], [1], [0, 0, 1, 1], [], []>} : vector<12x12xbf16>, vector<12x10xbf16>, vector<12x10xf32> -> vector<12x10xf32>
    %320 = vector.extract_strided_slice %300 {offsets = [0, 0, 10], sizes = [12, 12, 10], strides = [1, 1, 1]} : vector<12x12x50xf32> to vector<12x12x10xf32>
    %cst_103 = arith.constant dense<0.000000e+00> : vector<12x12xf32>
    %321 = vector.multi_reduction <add>, %320, %cst_103 [2] : vector<12x12x10xf32> to vector<12x12xf32>
    %322 = arith.addf %321, %5 : vector<12x12xf32>
    %cst_104 = arith.constant dense<0xFF800000> : vector<12xf32>
    %323 = vector.multi_reduction <maximumf>, %322, %cst_104 [1] : vector<12x12xf32> to vector<12xf32>
    %324 = vector.shape_cast %323 : vector<12xf32> to vector<12x1xf32>
    %325 = vector.broadcast %324 : vector<12x1xf32> to vector<12x12xf32>
    %326 = arith.subf %322, %325 : vector<12x12xf32>
    %327 = math.exp %326 : vector<12x12xf32>
    %cst_105 = arith.constant 0.000000e+00 : f32
    %328 = vector.broadcast %cst_105 : f32 to vector<12x12xf32>
    %329 = arith.select %2, %327, %328 : vector<12x12xi1>, vector<12x12xf32>
    %cst_106 = arith.constant dense<0.000000e+00> : vector<12xf32>
    %330 = vector.multi_reduction <add>, %329, %cst_106 [1] : vector<12x12xf32> to vector<12xf32>
    %331 = vector.shape_cast %330 : vector<12xf32> to vector<12x1xf32>
    %332 = tpu.reciprocal %331 {approx = true} : vector<12x1xf32> -> vector<12x1xf32>
    %333 = vector.broadcast %332 : vector<12x1xf32> to vector<12x12xf32>
    %334 = arith.mulf %329, %333 : vector<12x12xf32>
    %335 = arith.truncf %334 : vector<12x12xf32> to vector<12x12xbf16>
    %336 = vector.extract_strided_slice %301 {offsets = [0, 10], sizes = [12, 10], strides = [1, 1]} : vector<12x50xbf16> to vector<12x10xbf16>
    %cst_107 = arith.constant dense<0.000000e+00> : vector<12x10xf32>
    %337 = tpu.matmul %335, %336, %cst_107 {dimension_numbers = #tpu.dot_dimension_numbers<[1], [0], [0], [1], [0, 0, 1, 1], [], []>} : vector<12x12xbf16>, vector<12x10xbf16>, vector<12x10xf32> -> vector<12x10xf32>
    %338 = vector.extract_strided_slice %300 {offsets = [0, 0, 20], sizes = [12, 12, 10], strides = [1, 1, 1]} : vector<12x12x50xf32> to vector<12x12x10xf32>
    %cst_108 = arith.constant dense<0.000000e+00> : vector<12x12xf32>
    %339 = vector.multi_reduction <add>, %338, %cst_108 [2] : vector<12x12x10xf32> to vector<12x12xf32>
    %340 = arith.addf %339, %5 : vector<12x12xf32>
    %cst_109 = arith.constant dense<0xFF800000> : vector<12xf32>
    %341 = vector.multi_reduction <maximumf>, %340, %cst_109 [1] : vector<12x12xf32> to vector<12xf32>
    %342 = vector.shape_cast %341 : vector<12xf32> to vector<12x1xf32>
    %343 = vector.broadcast %342 : vector<12x1xf32> to vector<12x12xf32>
    %344 = arith.subf %340, %343 : vector<12x12xf32>
    %345 = math.exp %344 : vector<12x12xf32>
    %cst_110 = arith.constant 0.000000e+00 : f32
    %346 = vector.broadcast %cst_110 : f32 to vector<12x12xf32>
    %347 = arith.select %2, %345, %346 : vector<12x12xi1>, vector<12x12xf32>
    %cst_111 = arith.constant dense<0.000000e+00> : vector<12xf32>
    %348 = vector.multi_reduction <add>, %347, %cst_111 [1] : vector<12x12xf32> to vector<12xf32>
    %349 = vector.shape_cast %348 : vector<12xf32> to vector<12x1xf32>
    %350 = tpu.reciprocal %349 {approx = true} : vector<12x1xf32> -> vector<12x1xf32>
    %351 = vector.broadcast %350 : vector<12x1xf32> to vector<12x12xf32>
    %352 = arith.mulf %347, %351 : vector<12x12xf32>
    %353 = arith.truncf %352 : vector<12x12xf32> to vector<12x12xbf16>
    %354 = vector.extract_strided_slice %301 {offsets = [0, 20], sizes = [12, 10], strides = [1, 1]} : vector<12x50xbf16> to vector<12x10xbf16>
    %cst_112 = arith.constant dense<0.000000e+00> : vector<12x10xf32>
    %355 = tpu.matmul %353, %354, %cst_112 {dimension_numbers = #tpu.dot_dimension_numbers<[1], [0], [0], [1], [0, 0, 1, 1], [], []>} : vector<12x12xbf16>, vector<12x10xbf16>, vector<12x10xf32> -> vector<12x10xf32>
    %356 = vector.extract_strided_slice %300 {offsets = [0, 0, 30], sizes = [12, 12, 10], strides = [1, 1, 1]} : vector<12x12x50xf32> to vector<12x12x10xf32>
    %cst_113 = arith.constant dense<0.000000e+00> : vector<12x12xf32>
    %357 = vector.multi_reduction <add>, %356, %cst_113 [2] : vector<12x12x10xf32> to vector<12x12xf32>
    %358 = arith.addf %357, %5 : vector<12x12xf32>
    %cst_114 = arith.constant dense<0xFF800000> : vector<12xf32>
    %359 = vector.multi_reduction <maximumf>, %358, %cst_114 [1] : vector<12x12xf32> to vector<12xf32>
    %360 = vector.shape_cast %359 : vector<12xf32> to vector<12x1xf32>
    %361 = vector.broadcast %360 : vector<12x1xf32> to vector<12x12xf32>
    %362 = arith.subf %358, %361 : vector<12x12xf32>
    %363 = math.exp %362 : vector<12x12xf32>
    %cst_115 = arith.constant 0.000000e+00 : f32
    %364 = vector.broadcast %cst_115 : f32 to vector<12x12xf32>
    %365 = arith.select %2, %363, %364 : vector<12x12xi1>, vector<12x12xf32>
    %cst_116 = arith.constant dense<0.000000e+00> : vector<12xf32>
    %366 = vector.multi_reduction <add>, %365, %cst_116 [1] : vector<12x12xf32> to vector<12xf32>
    %367 = vector.shape_cast %366 : vector<12xf32> to vector<12x1xf32>
    %368 = tpu.reciprocal %367 {approx = true} : vector<12x1xf32> -> vector<12x1xf32>
    %369 = vector.broadcast %368 : vector<12x1xf32> to vector<12x12xf32>
    %370 = arith.mulf %365, %369 : vector<12x12xf32>
    %371 = arith.truncf %370 : vector<12x12xf32> to vector<12x12xbf16>
    %372 = vector.extract_strided_slice %301 {offsets = [0, 30], sizes = [12, 10], strides = [1, 1]} : vector<12x50xbf16> to vector<12x10xbf16>
    %cst_117 = arith.constant dense<0.000000e+00> : vector<12x10xf32>
    %373 = tpu.matmul %371, %372, %cst_117 {dimension_numbers = #tpu.dot_dimension_numbers<[1], [0], [0], [1], [0, 0, 1, 1], [], []>} : vector<12x12xbf16>, vector<12x10xbf16>, vector<12x10xf32> -> vector<12x10xf32>
    %374 = vector.extract_strided_slice %300 {offsets = [0, 0, 40], sizes = [12, 12, 10], strides = [1, 1, 1]} : vector<12x12x50xf32> to vector<12x12x10xf32>
    %cst_118 = arith.constant dense<0.000000e+00> : vector<12x12xf32>
    %375 = vector.multi_reduction <add>, %374, %cst_118 [2] : vector<12x12x10xf32> to vector<12x12xf32>
    %376 = arith.addf %375, %5 : vector<12x12xf32>
    %cst_119 = arith.constant dense<0xFF800000> : vector<12xf32>
    %377 = vector.multi_reduction <maximumf>, %376, %cst_119 [1] : vector<12x12xf32> to vector<12xf32>
    %378 = vector.shape_cast %377 : vector<12xf32> to vector<12x1xf32>
    %379 = vector.broadcast %378 : vector<12x1xf32> to vector<12x12xf32>
    %380 = arith.subf %376, %379 : vector<12x12xf32>
    %381 = math.exp %380 : vector<12x12xf32>
    %cst_120 = arith.constant 0.000000e+00 : f32
    %382 = vector.broadcast %cst_120 : f32 to vector<12x12xf32>
    %383 = arith.select %2, %381, %382 : vector<12x12xi1>, vector<12x12xf32>
    %cst_121 = arith.constant dense<0.000000e+00> : vector<12xf32>
    %384 = vector.multi_reduction <add>, %383, %cst_121 [1] : vector<12x12xf32> to vector<12xf32>
    %385 = vector.shape_cast %384 : vector<12xf32> to vector<12x1xf32>
    %386 = tpu.reciprocal %385 {approx = true} : vector<12x1xf32> -> vector<12x1xf32>
    %387 = vector.broadcast %386 : vector<12x1xf32> to vector<12x12xf32>
    %388 = arith.mulf %383, %387 : vector<12x12xf32>
    %389 = arith.truncf %388 : vector<12x12xf32> to vector<12x12xbf16>
    %390 = vector.extract_strided_slice %301 {offsets = [0, 40], sizes = [12, 10], strides = [1, 1]} : vector<12x50xbf16> to vector<12x10xbf16>
    %cst_122 = arith.constant dense<0.000000e+00> : vector<12x10xf32>
    %391 = tpu.matmul %389, %390, %cst_122 {dimension_numbers = #tpu.dot_dimension_numbers<[1], [0], [0], [1], [0, 0, 1, 1], [], []>} : vector<12x12xbf16>, vector<12x10xbf16>, vector<12x10xf32> -> vector<12x10xf32>
    %cst_123 = arith.constant 0.000000e+00 : f32
    %392 = vector.broadcast %cst_123 : f32 to vector<12x10xf32>
    %393 = arith.addf %392, %319 : vector<12x10xf32>
    %394 = arith.addf %393, %337 : vector<12x10xf32>
    %395 = arith.addf %394, %355 : vector<12x10xf32>
    %396 = arith.addf %395, %373 : vector<12x10xf32>
    %397 = arith.addf %396, %391 : vector<12x10xf32>
    %cst_124 = arith.constant 2.000000e-01 : f32
    %398 = vector.broadcast %cst_124 : f32 to vector<12x10xf32>
    %399 = arith.mulf %397, %398 : vector<12x10xf32>
    %400 = vector.broadcast %279 : vector<1x10xf32> to vector<12x10xf32>
    %401 = arith.mulf %399, %400 : vector<12x10xf32>
    %402 = vector.broadcast %280 : vector<1x10xf32> to vector<12x10xf32>
    %403 = arith.addf %401, %402 : vector<12x10xf32>
    %c0_125 = arith.constant 0 : index
    %c0_126 = arith.constant 0 : index
    %404 = vector.load %arg4[%c0_125, %c0_126] : memref<12x10xf32, #tpu.memory_space<vmem>>, vector<12x10xf32>
    tpu.vector_store %arg4[%c0_125, %c0_126], %403 {strides = array<i32>} : memref<12x10xf32, #tpu.memory_space<vmem>>, vector<12x10xf32>,
    return
  }
}

</mosaic_0001>

<llo_original>
// kernel: tpu_custom_call.1
$region0: #{tpu_custom_call.1}
  #allocation0 [shape = 'u32[]', space=smem, size = 0x4, offset = 0x4, fixed_abs, tag = 'smem constant byte address 0x4 - core index']
  #allocation1 [shape = 'u32[72,128]{1,0:T(1,128)}', space=vmem, size = 0x9000, scoped, tag = 'internal scratch']
  %s0 = inlined_call_operand.vmem [shape: f32[12,22], index: 0, kind: input, shape index: {}]
  %s1 = inlined_call_operand.vmem [shape: f32[12,12], index: 1, kind: input, shape index: {}]
  %s2 = inlined_call_operand.vmem [shape: bf16[384,64], index: 2, kind: input, shape index: {}]
  %s3 = inlined_call_operand.vmem [shape: f32[32,64], index: 3, kind: input, shape index: {}]
  %s4 = inlined_call_operand.hbm [shape: f32[12,10], index: 4, kind: output, shape index: {}]
  %s5 = sld [smem:[#allocation0]]
  $region26: #{tpu_custom_call.1} parent=0
    _
  %s7 = ssub.s32 1, %s5
  %s8 = scalar_select 0, %s7, %s5
  $region1: #{tpu_custom_call.1} parent=0
    #allocation2 [shape = 'u8[8192]{0}', space=vmem, size = 0x2000, scoped, tag = 'output window, operand 0, single buffered']
    #allocation3 [shape = 's32[1]{0}', space=sflag, size = 0x4, scoped, tag = 'scoped memory for tpu_custom_call.1']
    %9 = vsyncpa [#allocation3], 0
    // Predicated region
    $region2: #{tpu_custom_call.1} parent=1 // pred_check
      _
    $region3: #{tpu_custom_call.1} parent=1 // pred_check_branch
      %11 = sbr.rel (0) target = $region5
    $region4: #{tpu_custom_call.1} parent=1 // pred_region
      _
    $region5: #{tpu_custom_call.1} parent=1 // pred_fallthru
      _
    // Predicated region
    $region6: #{tpu_custom_call.1} parent=1 // pred_check
      _
    $region7: #{tpu_custom_call.1} parent=1 // pred_check_branch
      %13 = sbr.rel (0) target = $region9
    $region8: #{tpu_custom_call.1} parent=1 // pred_region
      _
    $region9: #{tpu_custom_call.1} parent=1 // pred_fallthru
      _
    // Predicated region
    $region10: #{tpu_custom_call.1} parent=1 // pred_check
      _
    $region11: #{tpu_custom_call.1} parent=1 // pred_check_branch
      %15 = sbr.rel (0) target = $region13
    $region12: #{tpu_custom_call.1} parent=1 // pred_region
      _
    $region13: #{tpu_custom_call.1} parent=1 // pred_fallthru
      _
    // Predicated region
    $region14: #{tpu_custom_call.1} parent=1 // pred_check
      _
    $region15: #{tpu_custom_call.1} parent=1 // pred_check_branch
      %17 = sbr.rel (0) target = $region17
    $region16: #{tpu_custom_call.1} parent=1 // pred_region
      _
    $region17: #{tpu_custom_call.1} parent=1 // pred_fallthru
      _
    %v19 = vld [vmem:[%s1] sm:$0xff]
    %v20 = vld [vmem:[%s1 + $0x8] sm:$0xf]
    %vm21 = vcmp.gt.f32.partialorder %v19, 0.0
    %vm22 = vcmp.gt.f32.partialorder %v20, 0.0
    %v23 = vsel %vm21, 0.0, -1e+30
    %v24 = vsel %vm22, 0.0, -1e+30
    %v25 = vld [vmem:[%s0] sm:$0xff]
    %v26 = vld [vmem:[%s0 + $0x8] sm:$0xf]
    %v27 = vld [vmem:[%s2] sm:$0xf]
    %v28 = vld [vmem:[%s2 + $0x4] sm:$0xf]
    %v29 = vld [vmem:[%s2 + $0x8] sm:$0x7]
    %v30 = vld [vmem:[%s2 + $0x10] sm:$0xf]
    %v31 = vld [vmem:[%s2 + $0x14] sm:$0xf]
    %v32 = vld [vmem:[%s2 + $0x18] sm:$0x7]
    %v33 = vld [vmem:[%s3] sm:$0x1]
    %v34 = vld [vmem:[%s3 + $0x1] sm:$0x1]
    %v35 = vld [vmem:[%s3 + $0x2] sm:$0x1]
    %v36 = vld [vmem:[%s3 + $0x3] sm:$0x1]
    %v37 = vld [vmem:[%s3 + $0x4] sm:$0x1]
    %v38 = vpack.c.bf16 %v26, %v25
    %v39 = vperm.slane %v33, 0
    %v43 = vunpack.c.l.b16 %v27
    %v44 = vunpack.c.l.b16 %v28
    %v45 = vunpack.c.l.b16 %v29
    %v46 = vpack.c.b16 %v44, %v43
    %v47 = vpack.c.b16 %v45, %v45
    %vm49 = vcmask 179200
    %v51 = vsel %vm49, %v38, 0
    %vm53 = vcmask 1042432
    %v55 = vsel %vm53, %v47, 0
    %57 = vmatpush.bf16.msra.mxu0 0
    %58 = vmatpush.bf16.msra.mxu0 0
    %59 = vmatpush.bf16.msra.mxu0 0
    %60 = vmatpush.bf16.msra.mxu0 0
    %61 = vmatpush.bf16.msra.mxu0 0
    %62 = vmatpush.bf16.msra.mxu0 0
    %63 = vmatpush.bf16.msra.mxu0 %v55
    %64 = vmatpush.bf16.msra.mxu0 %v46
    %65 = vmatmul.bf16.gmra.mxu0 %v51
    %v66 = vpop.f32.mrf.mxu0
    %v67 = vadd.f32 %v39, %v66
    %v68 = vpop.f32.mrf.mxu0
    %v69 = vadd.f32 %v39, %v68
    %70 = vdwg.mxu0
    %v71 = vperm.slane %v34, 0
    %v75 = vunpack.c.l.b16 %v30
    %v76 = vunpack.c.l.b16 %v31
    %v77 = vunpack.c.l.b16 %v32
    %v78 = vpack.c.b16 %v76, %v75
    %v79 = vpack.c.b16 %v77, %v77
    %v82 = vsel %vm53, %v79, 0
    %84 = vmatpush.bf16.msra.mxu0 0
    %85 = vmatpush.bf16.msra.mxu0 0
    %86 = vmatpush.bf16.msra.mxu0 0
    %87 = vmatpush.bf16.msra.mxu0 0
    %88 = vmatpush.bf16.msra.mxu0 0
    %89 = vmatpush.bf16.msra.mxu0 0
    %90 = vmatpush.bf16.msra.mxu0 %v82
    %91 = vmatpush.bf16.msra.mxu0 %v78
    %92 = vmatmul.bf16.gmra.mxu0 %v51
    %v93 = vpop.f32.mrf.mxu0
    %v94 = vadd.f32 %v71, %v93
    %v95 = vpop.f32.mrf.mxu0
    %v96 = vadd.f32 %v71, %v95
    %97 = vdwg.mxu0
    %v100 = vrot.slane %v94, 1
    %v101 = vrot.slane %v94, 2
    %v102 = vrot.slane %v94, 3
    %v103 = vrot.slane %v94, 4
    %v104 = vrot.slane %v94, 5
    %v105 = vrot.slane %v94, 6
    %v106 = vrot.slane %v94, 7
    %v107 = vrot.slane %v96, 1
    %v108 = vrot.slane %v96, 2
    %v109 = vrot.slane %v96, 3
    %v110 = vperm.slane %v94, 0
    %v111 = vperm.slane %v100, 0
    %v112 = vperm.slane %v101, 0
    %v113 = vperm.slane %v102, 0
    %v114 = vperm.slane %v103, 0
    %v115 = vperm.slane %v104, 0
    %v116 = vperm.slane %v105, 0
    %v117 = vperm.slane %v106, 0
    %v118 = vperm.slane %v96, 0
    %v119 = vperm.slane %v107, 0
    %v120 = vperm.slane %v108, 0
    %v121 = vperm.slane %v109, 0
    %v134 = vadd.f32 %v67, %v110
    %v135 = vadd.f32 %v69, %v110
    %v136 = vadd.f32 %v67, %v111
    %v137 = vadd.f32 %v69, %v111
    %v138 = vadd.f32 %v67, %v112
    %v139 = vadd.f32 %v69, %v112
    %v140 = vadd.f32 %v67, %v113
    %v141 = vadd.f32 %v69, %v113
    %v142 = vadd.f32 %v67, %v114
    %v143 = vadd.f32 %v69, %v114
    %v144 = vadd.f32 %v67, %v115
    %v145 = vadd.f32 %v69, %v115
    %v146 = vadd.f32 %v67, %v116
    %v147 = vadd.f32 %v69, %v116
    %v148 = vadd.f32 %v67, %v117
    %v149 = vadd.f32 %v69, %v117
    %v150 = vadd.f32 %v67, %v118
    %v151 = vadd.f32 %v69, %v118
    %v152 = vadd.f32 %v67, %v119
    %v153 = vadd.f32 %v69, %v119
    %v154 = vadd.f32 %v67, %v120
    %v155 = vadd.f32 %v69, %v120
    %v156 = vadd.f32 %v67, %v121
    %v157 = vadd.f32 %v69, %v121
    %vm158 = vcmp.gt.f32.partialorder %v134, 0.0
    %vm159 = vcmp.gt.f32.partialorder %v135, 0.0
    %vm160 = vcmp.gt.f32.partialorder %v136, 0.0
    %vm161 = vcmp.gt.f32.partialorder %v137, 0.0
    %vm162 = vcmp.gt.f32.partialorder %v138, 0.0
    %vm163 = vcmp.gt.f32.partialorder %v139, 0.0
    %vm164 = vcmp.gt.f32.partialorder %v140, 0.0
    %vm165 = vcmp.gt.f32.partialorder %v141, 0.0
    %vm166 = vcmp.gt.f32.partialorder %v142, 0.0
    %vm167 = vcmp.gt.f32.partialorder %v143, 0.0
    %vm168 = vcmp.gt.f32.partialorder %v144, 0.0
    %vm169 = vcmp.gt.f32.partialorder %v145, 0.0
    %vm170 = vcmp.gt.f32.partialorder %v146, 0.0
    %vm171 = vcmp.gt.f32.partialorder %v147, 0.0
    %vm172 = vcmp.gt.f32.partialorder %v148, 0.0
    %vm173 = vcmp.gt.f32.partialorder %v149, 0.0
    %vm174 = vcmp.gt.f32.partialorder %v150, 0.0
    %vm175 = vcmp.gt.f32.partialorder %v151, 0.0
    %vm176 = vcmp.gt.f32.partialorder %v152, 0.0
    %vm177 = vcmp.gt.f32.partialorder %v153, 0.0
    %vm178 = vcmp.gt.f32.partialorder %v154, 0.0
    %vm179 = vcmp.gt.f32.partialorder %v155, 0.0
    %vm180 = vcmp.gt.f32.partialorder %v156, 0.0
    %vm181 = vcmp.gt.f32.partialorder %v157, 0.0
    %v182 = vmul.f32 %v134, 0.2
    %v183 = vmul.f32 %v135, 0.2
    %v184 = vmul.f32 %v136, 0.2
    %v185 = vmul.f32 %v137, 0.2
    %v186 = vmul.f32 %v138, 0.2
    %v187 = vmul.f32 %v139, 0.2
    %v188 = vmul.f32 %v140, 0.2
    %v189 = vmul.f32 %v141, 0.2
    %v190 = vmul.f32 %v142, 0.2
    %v191 = vmul.f32 %v143, 0.2
    %v192 = vmul.f32 %v144, 0.2
    %v193 = vmul.f32 %v145, 0.2
    %v194 = vmul.f32 %v146, 0.2
    %v195 = vmul.f32 %v147, 0.2
    %v196 = vmul.f32 %v148, 0.2
    %v197 = vmul.f32 %v149, 0.2
    %v198 = vmul.f32 %v150, 0.2
    %v199 = vmul.f32 %v151, 0.2
    %v200 = vmul.f32 %v152, 0.2
    %v201 = vmul.f32 %v153, 0.2
    %v202 = vmul.f32 %v154, 0.2
    %v203 = vmul.f32 %v155, 0.2
    %v204 = vmul.f32 %v156, 0.2
    %v205 = vmul.f32 %v157, 0.2
    %v206 = vsel %vm158, %v134, %v182
    %v207 = vsel %vm159, %v135, %v183
    %v208 = vsel %vm160, %v136, %v184
    %v209 = vsel %vm161, %v137, %v185
    %v210 = vsel %vm162, %v138, %v186
    %v211 = vsel %vm163, %v139, %v187
    %v212 = vsel %vm164, %v140, %v188
    %v213 = vsel %vm165, %v141, %v189
    %v214 = vsel %vm166, %v142, %v190
    %v215 = vsel %vm167, %v143, %v191
    %v216 = vsel %vm168, %v144, %v192
    %v217 = vsel %vm169, %v145, %v193
    %v218 = vsel %vm170, %v146, %v194
    %v219 = vsel %vm171, %v147, %v195
    %v220 = vsel %vm172, %v148, %v196
    %v221 = vsel %vm173, %v149, %v197
    %v222 = vsel %vm174, %v150, %v198
    %v223 = vsel %vm175, %v151, %v199
    %v224 = vsel %vm176, %v152, %v200
    %v225 = vsel %vm177, %v153, %v201
    %v226 = vsel %vm178, %v154, %v202
    %v227 = vsel %vm179, %v155, %v203
    %v228 = vsel %vm180, %v156, %v204
    %v229 = vsel %vm181, %v157, %v205
    %v230 = vperm.slane %v35, 0
    %v231 = vmul.f32 %v206, %v230
    %v232 = vmul.f32 %v207, %v230
    %v233 = vmul.f32 %v208, %v230
    %v234 = vmul.f32 %v209, %v230
    %v235 = vmul.f32 %v210, %v230
    %v236 = vmul.f32 %v211, %v230
    %v237 = vmul.f32 %v212, %v230
    %v238 = vmul.f32 %v213, %v230
    %v239 = vmul.f32 %v214, %v230
    %v240 = vmul.f32 %v215, %v230
    %v241 = vmul.f32 %v216, %v230
    %v242 = vmul.f32 %v217, %v230
    %v243 = vmul.f32 %v218, %v230
    %v244 = vmul.f32 %v219, %v230
    %v245 = vmul.f32 %v220, %v230
    %v246 = vmul.f32 %v221, %v230
    %v247 = vmul.f32 %v222, %v230
    %v248 = vmul.f32 %v223, %v230
    %v249 = vmul.f32 %v224, %v230
    %v250 = vmul.f32 %v225, %v230
    %v251 = vmul.f32 %v226, %v230
    %v252 = vmul.f32 %v227, %v230
    %v253 = vmul.f32 %v228, %v230
    %v254 = vmul.f32 %v229, %v230
    %v255 = vpack.c.bf16 %v67, %v67
    %v256 = vpack.c.bf16 %v69, %v69
    %vm257 = vcmask 146432
    %v258 = vsel %vm257, %v231, 0.0
    %259 = vadd.xlane.f32.xlu0 %v258
    %v260 = vpop.xlane.xlu0 %259
    %vm261 = vcmask 142336
    %v262 = vsel %vm261, %v232, 0.0
    %263 = vadd.xlane.f32.xlu0 %v262
    %v264 = vpop.xlane.xlu0 %263
    %v265 = vsel %vm257, %v233, 0.0
    %266 = vadd.xlane.f32.xlu0 %v265
    %v267 = vpop.xlane.xlu0 %266
    %v268 = vsel %vm261, %v234, 0.0
    %269 = vadd.xlane.f32.xlu0 %v268
    %v270 = vpop.xlane.xlu0 %269
    %v271 = vsel %vm257, %v235, 0.0
    %272 = vadd.xlane.f32.xlu0 %v271
    %v273 = vpop.xlane.xlu0 %272
    %v274 = vsel %vm261, %v236, 0.0
    %275 = vadd.xlane.f32.xlu0 %v274
    %v276 = vpop.xlane.xlu0 %275
    %v277 = vsel %vm257, %v237, 0.0
    %278 = vadd.xlane.f32.xlu0 %v277
    %v279 = vpop.xlane.xlu0 %278
    %v280 = vsel %vm261, %v238, 0.0
    %281 = vadd.xlane.f32.xlu0 %v280
    %v282 = vpop.xlane.xlu0 %281
    %v283 = vsel %vm257, %v239, 0.0
    %284 = vadd.xlane.f32.xlu0 %v283
    %v285 = vpop.xlane.xlu0 %284
    %v286 = vsel %vm261, %v240, 0.0
    %287 = vadd.xlane.f32.xlu0 %v286
    %v288 = vpop.xlane.xlu0 %287
    %v289 = vsel %vm257, %v241, 0.0
    %290 = vadd.xlane.f32.xlu0 %v289
    %v291 = vpop.xlane.xlu0 %290
    %v292 = vsel %vm261, %v242, 0.0
    %293 = vadd.xlane.f32.xlu0 %v292
    %v294 = vpop.xlane.xlu0 %293
    %v295 = vsel %vm257, %v243, 0.0
    %296 = vadd.xlane.f32.xlu0 %v295
    %v297 = vpop.xlane.xlu0 %296
    %v298 = vsel %vm261, %v244, 0.0
    %299 = vadd.xlane.f32.xlu0 %v298
    %v300 = vpop.xlane.xlu0 %299
    %v301 = vsel %vm257, %v245, 0.0
    %302 = vadd.xlane.f32.xlu0 %v301
    %v303 = vpop.xlane.xlu0 %302
    %v304 = vsel %vm261, %v246, 0.0
    %305 = vadd.xlane.f32.xlu0 %v304
    %v306 = vpop.xlane.xlu0 %305
    %v307 = vsel %vm257, %v247, 0.0
    %308 = vadd.xlane.f32.xlu0 %v307
    %v309 = vpop.xlane.xlu0 %308
    %v310 = vsel %vm261, %v248, 0.0
    %311 = vadd.xlane.f32.xlu0 %v310
    %v312 = vpop.xlane.xlu0 %311
    %v313 = vsel %vm257, %v249, 0.0
    %314 = vadd.xlane.f32.xlu0 %v313
    %v315 = vpop.xlane.xlu0 %314
    %v316 = vsel %vm261, %v250, 0.0
    %317 = vadd.xlane.f32.xlu0 %v316
    %v318 = vpop.xlane.xlu0 %317
    %v319 = vsel %vm257, %v251, 0.0
    %320 = vadd.xlane.f32.xlu0 %v319
    %v321 = vpop.xlane.xlu0 %320
    %v322 = vsel %vm261, %v252, 0.0
    %323 = vadd.xlane.f32.xlu0 %v322
    %v324 = vpop.xlane.xlu0 %323
    %v325 = vsel %vm257, %v253, 0.0
    %326 = vadd.xlane.f32.xlu0 %v325
    %v327 = vpop.xlane.xlu0 %326
    %v328 = vsel %vm261, %v254, 0.0
    %329 = vadd.xlane.f32.xlu0 %v328
    %v330 = vpop.xlane.xlu0 %329
    %v333 = vperm.slane %v23, 0
    %v334 = vlaneseq
    %v335 = vshrl.u32 %v334, 7
    %337 = vset.pattern.permute.xlu0 %v335
    %338 = vperm.xlu0 %337, %v333
    %v339 = vpop.permute.xlu0 %338
    %v340 = vlaneseq
    %v341 = vshrl.u32 %v340, 7
    %v342 = vadd.s32 %v341, 8
    %343 = vset.pattern.permute.xlu0 %v342
    %344 = vperm.xlu0 %343, %v333
    %v345 = vpop.permute.xlu0 %344
    %v346 = vperm.slane %v23, 1
    %v347 = vlaneseq
    %v348 = vshrl.u32 %v347, 7
    %350 = vset.pattern.permute.xlu0 %v348
    %351 = vperm.xlu0 %350, %v346
    %v352 = vpop.permute.xlu0 %351
    %v353 = vlaneseq
    %v354 = vshrl.u32 %v353, 7
    %v355 = vadd.s32 %v354, 8
    %356 = vset.pattern.permute.xlu0 %v355
    %357 = vperm.xlu0 %356, %v346
    %v358 = vpop.permute.xlu0 %357
    %v359 = vperm.slane %v23, 2
    %v360 = vlaneseq
    %v361 = vshrl.u32 %v360, 7
    %363 = vset.pattern.permute.xlu0 %v361
    %364 = vperm.xlu0 %363, %v359
    %v365 = vpop.permute.xlu0 %364
    %v366 = vlaneseq
    %v367 = vshrl.u32 %v366, 7
    %v368 = vadd.s32 %v367, 8
    %369 = vset.pattern.permute.xlu0 %v368
    %370 = vperm.xlu0 %369, %v359
    %v371 = vpop.permute.xlu0 %370
    %v372 = vperm.slane %v23, 3
    %v373 = vlaneseq
    %v374 = vshrl.u32 %v373, 7
    %376 = vset.pattern.permute.xlu0 %v374
    %377 = vperm.xlu0 %376, %v372
    %v378 = vpop.permute.xlu0 %377
    %v379 = vlaneseq
    %v380 = vshrl.u32 %v379, 7
    %v381 = vadd.s32 %v380, 8
    %382 = vset.pattern.permute.xlu0 %v381
    %383 = vperm.xlu0 %382, %v372
    %v384 = vpop.permute.xlu0 %383
    %v385 = vperm.slane %v23, 4
    %v386 = vlaneseq
    %v387 = vshrl.u32 %v386, 7
    %389 = vset.pattern.permute.xlu0 %v387
    %390 = vperm.xlu0 %389, %v385
    %v391 = vpop.permute.xlu0 %390
    %v392 = vlaneseq
    %v393 = vshrl.u32 %v392, 7
    %v394 = vadd.s32 %v393, 8
    %395 = vset.pattern.permute.xlu0 %v394
    %396 = vperm.xlu0 %395, %v385
    %v397 = vpop.permute.xlu0 %396
    %v398 = vperm.slane %v23, 5
    %v399 = vlaneseq
    %v400 = vshrl.u32 %v399, 7
    %402 = vset.pattern.permute.xlu0 %v400
    %403 = vperm.xlu0 %402, %v398
    %v404 = vpop.permute.xlu0 %403
    %v405 = vlaneseq
    %v406 = vshrl.u32 %v405, 7
    %v407 = vadd.s32 %v406, 8
    %408 = vset.pattern.permute.xlu0 %v407
    %409 = vperm.xlu0 %408, %v398
    %v410 = vpop.permute.xlu0 %409
    %v411 = vperm.slane %v23, 6
    %v412 = vlaneseq
    %v413 = vshrl.u32 %v412, 7
    %415 = vset.pattern.permute.xlu0 %v413
    %416 = vperm.xlu0 %415, %v411
    %v417 = vpop.permute.xlu0 %416
    %v418 = vlaneseq
    %v419 = vshrl.u32 %v418, 7
    %v420 = vadd.s32 %v419, 8
    %421 = vset.pattern.permute.xlu0 %v420
    %422 = vperm.xlu0 %421, %v411
    %v423 = vpop.permute.xlu0 %422
    %v424 = vperm.slane %v23, 7
    %v425 = vlaneseq
    %v426 = vshrl.u32 %v425, 7
    %428 = vset.pattern.permute.xlu0 %v426
    %429 = vperm.xlu0 %428, %v424
    %v430 = vpop.permute.xlu0 %429
    %v431 = vlaneseq
    %v432 = vshrl.u32 %v431, 7
    %v433 = vadd.s32 %v432, 8
    %434 = vset.pattern.permute.xlu0 %v433
    %435 = vperm.xlu0 %434, %v424
    %v436 = vpop.permute.xlu0 %435
    %v437 = vperm.slane %v24, 0
    %v438 = vlaneseq
    %v439 = vshrl.u32 %v438, 7
    %441 = vset.pattern.permute.xlu0 %v439
    %442 = vperm.xlu0 %441, %v437
    %v443 = vpop.permute.xlu0 %442
    %v444 = vlaneseq
    %v445 = vshrl.u32 %v444, 7
    %v446 = vadd.s32 %v445, 8
    %447 = vset.pattern.permute.xlu0 %v446
    %448 = vperm.xlu0 %447, %v437
    %v449 = vpop.permute.xlu0 %448
    %v450 = vperm.slane %v24, 1
    %v451 = vlaneseq
    %v452 = vshrl.u32 %v451, 7
    %454 = vset.pattern.permute.xlu0 %v452
    %455 = vperm.xlu0 %454, %v450
    %v456 = vpop.permute.xlu0 %455
    %v457 = vlaneseq
    %v458 = vshrl.u32 %v457, 7
    %v459 = vadd.s32 %v458, 8
    %460 = vset.pattern.permute.xlu0 %v459
    %461 = vperm.xlu0 %460, %v450
    %v462 = vpop.permute.xlu0 %461
    %v463 = vperm.slane %v24, 2
    %v464 = vlaneseq
    %v465 = vshrl.u32 %v464, 7
    %467 = vset.pattern.permute.xlu0 %v465
    %468 = vperm.xlu0 %467, %v463
    %v469 = vpop.permute.xlu0 %468
    %v470 = vlaneseq
    %v471 = vshrl.u32 %v470, 7
    %v472 = vadd.s32 %v471, 8
    %473 = vset.pattern.permute.xlu0 %v472
    %474 = vperm.xlu0 %473, %v463
    %v475 = vpop.permute.xlu0 %474
    %v476 = vperm.slane %v24, 3
    %v477 = vlaneseq
    %v478 = vshrl.u32 %v477, 7
    %480 = vset.pattern.permute.xlu0 %v478
    %481 = vperm.xlu0 %480, %v476
    %v482 = vpop.permute.xlu0 %481
    %v483 = vlaneseq
    %v484 = vshrl.u32 %v483, 7
    %v485 = vadd.s32 %v484, 8
    %486 = vset.pattern.permute.xlu0 %v485
    %487 = vperm.xlu0 %486, %v476
    %v488 = vpop.permute.xlu0 %487
    %v513 = vadd.f32 %v260, %v339
    %v514 = vadd.f32 %v264, %v345
    %v515 = vadd.f32 %v267, %v352
    %v516 = vadd.f32 %v270, %v358
    %v517 = vadd.f32 %v273, %v365
    %v518 = vadd.f32 %v276, %v371
    %v519 = vadd.f32 %v279, %v378
    %v520 = vadd.f32 %v282, %v384
    %v521 = vadd.f32 %v285, %v391
    %v522 = vadd.f32 %v288, %v397
    %v523 = vadd.f32 %v291, %v404
    %v524 = vadd.f32 %v294, %v410
    %v525 = vadd.f32 %v297, %v417
    %v526 = vadd.f32 %v300, %v423
    %v527 = vadd.f32 %v303, %v430
    %v528 = vadd.f32 %v306, %v436
    %v529 = vadd.f32 %v309, %v443
    %v530 = vadd.f32 %v312, %v449
    %v531 = vadd.f32 %v315, %v456
    %v532 = vadd.f32 %v318, %v462
    %v533 = vadd.f32 %v321, %v469
    %v534 = vadd.f32 %v324, %v475
    %v535 = vadd.f32 %v327, %v482
    %v536 = vadd.f32 %v330, %v488
    %561 = vset.pattern.permute.xlu0 0
    %562 = vperm.xlu0 %561, %v513
    %v563 = vpop.permute.xlu0 %562
    %564 = vset.pattern.permute.xlu0 0
    %565 = vperm.xlu0 %564, %v514
    %v566 = vpop.permute.xlu0 %565
    %567 = vset.pattern.permute.xlu0 0
    %568 = vperm.xlu0 %567, %v515
    %v569 = vpop.permute.xlu0 %568
    %570 = vset.pattern.permute.xlu0 0
    %571 = vperm.xlu0 %570, %v516
    %v572 = vpop.permute.xlu0 %571
    %573 = vset.pattern.permute.xlu0 0
    %574 = vperm.xlu0 %573, %v517
    %v575 = vpop.permute.xlu0 %574
    %576 = vset.pattern.permute.xlu0 0
    %577 = vperm.xlu0 %576, %v518
    %v578 = vpop.permute.xlu0 %577
    %579 = vset.pattern.permute.xlu0 0
    %580 = vperm.xlu0 %579, %v519
    %v581 = vpop.permute.xlu0 %580
    %582 = vset.pattern.permute.xlu0 0
    %583 = vperm.xlu0 %582, %v520
    %v584 = vpop.permute.xlu0 %583
    %585 = vset.pattern.permute.xlu0 0
    %586 = vperm.xlu0 %585, %v521
    %v587 = vpop.permute.xlu0 %586
    %588 = vset.pattern.permute.xlu0 0
    %589 = vperm.xlu0 %588, %v522
    %v590 = vpop.permute.xlu0 %589
    %591 = vset.pattern.permute.xlu0 0
    %592 = vperm.xlu0 %591, %v523
    %v593 = vpop.permute.xlu0 %592
    %594 = vset.pattern.permute.xlu0 0
    %595 = vperm.xlu0 %594, %v524
    %v596 = vpop.permute.xlu0 %595
    %597 = vset.pattern.permute.xlu0 0
    %598 = vperm.xlu0 %597, %v525
    %v599 = vpop.permute.xlu0 %598
    %600 = vset.pattern.permute.xlu0 0
    %601 = vperm.xlu0 %600, %v526
    %v602 = vpop.permute.xlu0 %601
    %603 = vset.pattern.permute.xlu0 0
    %604 = vperm.xlu0 %603, %v527
    %v605 = vpop.permute.xlu0 %604
    %606 = vset.pattern.permute.xlu0 0
    %607 = vperm.xlu0 %606, %v528
    %v608 = vpop.permute.xlu0 %607
    %609 = vset.pattern.permute.xlu0 0
    %610 = vperm.xlu0 %609, %v529
    %v611 = vpop.permute.xlu0 %610
    %612 = vset.pattern.permute.xlu0 0
    %613 = vperm.xlu0 %612, %v530
    %v614 = vpop.permute.xlu0 %613
    %615 = vset.pattern.permute.xlu0 0
    %616 = vperm.xlu0 %615, %v531
    %v617 = vpop.permute.xlu0 %616
    %618 = vset.pattern.permute.xlu0 0
    %619 = vperm.xlu0 %618, %v532
    %v620 = vpop.permute.xlu0 %619
    %621 = vset.pattern.permute.xlu0 0
    %622 = vperm.xlu0 %621, %v533
    %v623 = vpop.permute.xlu0 %622
    %624 = vset.pattern.permute.xlu0 0
    %625 = vperm.xlu0 %624, %v534
    %v626 = vpop.permute.xlu0 %625
    %627 = vset.pattern.permute.xlu0 0
    %628 = vperm.xlu0 %627, %v535
    %v629 = vpop.permute.xlu0 %628
    %630 = vset.pattern.permute.xlu0 0
    %631 = vperm.xlu0 %630, %v536
    %v632 = vpop.permute.xlu0 %631
    %v633 = vlaneseq
    %v634 = vand.u32 %v633, 127
    %v635 = vperm.slane %v563, %v634
    %v636 = vadd.s32 %v634, 4294967288
    %v637 = vperm.slane %v566, %v636
    %vm638 = vcmask 130112
    %v639 = vsel %vm638, %v637, %v635
    %v640 = vperm.slane %v569, %v634
    %v641 = vperm.slane %v572, %v636
    %v642 = vsel %vm638, %v641, %v640
    %v643 = vperm.slane %v575, %v634
    %v644 = vperm.slane %v578, %v636
    %v645 = vsel %vm638, %v644, %v643
    %v646 = vperm.slane %v581, %v634
    %v647 = vperm.slane %v584, %v636
    %v648 = vsel %vm638, %v647, %v646
    %v649 = vperm.slane %v587, %v634
    %v650 = vperm.slane %v590, %v636
    %v651 = vsel %vm638, %v650, %v649
    %v652 = vperm.slane %v593, %v634
    %v653 = vperm.slane %v596, %v636
    %v654 = vsel %vm638, %v653, %v652
    %v655 = vperm.slane %v599, %v634
    %v656 = vperm.slane %v602, %v636
    %v657 = vsel %vm638, %v656, %v655
    %v658 = vperm.slane %v605, %v634
    %v659 = vperm.slane %v608, %v636
    %v660 = vsel %vm638, %v659, %v658
    %v661 = vperm.slane %v611, %v634
    %v662 = vperm.slane %v614, %v636
    %v663 = vsel %vm638, %v662, %v661
    %v664 = vperm.slane %v617, %v634
    %v665 = vperm.slane %v620, %v636
    %v666 = vsel %vm638, %v665, %v664
    %v667 = vperm.slane %v623, %v634
    %v668 = vperm.slane %v626, %v636
    %v669 = vsel %vm638, %v668, %v667
    %v670 = vperm.slane %v629, %v634
    %v671 = vperm.slane %v632, %v636
    %v672 = vsel %vm638, %v671, %v670
    %vm673 = vcmask 1041409
    %v674 = vsel %vm673, %v642, %v639
    %vm675 = vcmask 1042434
    %v676 = vsel %vm675, %v645, %v674
    %vm677 = vcmask 1043459
    %v678 = vsel %vm677, %v648, %v676
    %vm679 = vcmask 1044484
    %v680 = vsel %vm679, %v651, %v678
    %vm681 = vcmask 1045509
    %v682 = vsel %vm681, %v654, %v680
    %vm683 = vcmask 1046534
    %v684 = vsel %vm683, %v657, %v682
    %vm685 = vcmask 1047559
    %v686 = vsel %vm685, %v660, %v684
    %v687 = vsel %vm673, %v666, %v663
    %v688 = vsel %vm675, %v669, %v687
    %v689 = vsel %vm677, %v672, %v688
    %vm692 = vcmask 97280
    %v693 = vsel %vm692, %v686, -inf
    %694 = vmax.xlane.f32.xlu0 %v693
    %v695 = vpop.xlane.xlu0 %694
    %vm696 = vcmask 93184
    %v697 = vsel %vm696, %v689, -inf
    %698 = vmax.xlane.f32.xlu0 %v697
    %v699 = vpop.xlane.xlu0 %698
    %v702 = vperm.slane %v695, 0
    %v703 = vperm.slane %v695, 1
    %v704 = vperm.slane %v695, 2
    %v705 = vperm.slane %v695, 3
    %v706 = vperm.slane %v695, 4
    %v707 = vperm.slane %v695, 5
    %v708 = vperm.slane %v695, 6
    %v709 = vperm.slane %v695, 7
    %v710 = vperm.slane %v699, 0
    %v711 = vperm.slane %v699, 1
    %v712 = vperm.slane %v699, 2
    %v713 = vperm.slane %v699, 3
    %v726 = vsub.f32 %v513, %v702
    %v727 = vsub.f32 %v514, %v702
    %v728 = vsub.f32 %v515, %v703
    %v729 = vsub.f32 %v516, %v703
    %v730 = vsub.f32 %v517, %v704
    %v731 = vsub.f32 %v518, %v704
    %v732 = vsub.f32 %v519, %v705
    %v733 = vsub.f32 %v520, %v705
    %v734 = vsub.f32 %v521, %v706
    %v735 = vsub.f32 %v522, %v706
    %v736 = vsub.f32 %v523, %v707
    %v737 = vsub.f32 %v524, %v707
    %v738 = vsub.f32 %v525, %v708
    %v739 = vsub.f32 %v526, %v708
    %v740 = vsub.f32 %v527, %v709
    %v741 = vsub.f32 %v528, %v709
    %v742 = vsub.f32 %v529, %v710
    %v743 = vsub.f32 %v530, %v710
    %v744 = vsub.f32 %v531, %v711
    %v745 = vsub.f32 %v532, %v711
    %v746 = vsub.f32 %v533, %v712
    %v747 = vsub.f32 %v534, %v712
    %v748 = vsub.f32 %v535, %v713
    %v749 = vsub.f32 %v536, %v713
    %v750 = vmul.f32 %v726, 1.442695
    %v751 = vpow.pop %v750
    %v752 = vmul.f32 %v727, 1.442695
    %v753 = vpow.pop %v752
    %v754 = vmul.f32 %v728, 1.442695
    %v755 = vpow.pop %v754
    %v756 = vmul.f32 %v729, 1.442695
    %v757 = vpow.pop %v756
    %v758 = vmul.f32 %v730, 1.442695
    %v759 = vpow.pop %v758
    %v760 = vmul.f32 %v731, 1.442695
    %v761 = vpow.pop %v760
    %v762 = vmul.f32 %v732, 1.442695
    %v763 = vpow.pop %v762
    %v764 = vmul.f32 %v733, 1.442695
    %v765 = vpow.pop %v764
    %v766 = vmul.f32 %v734, 1.442695
    %v767 = vpow.pop %v766
    %v768 = vmul.f32 %v735, 1.442695
    %v769 = vpow.pop %v768
    %v770 = vmul.f32 %v736, 1.442695
    %v771 = vpow.pop %v770
    %v772 = vmul.f32 %v737, 1.442695
    %v773 = vpow.pop %v772
    %v774 = vmul.f32 %v738, 1.442695
    %v775 = vpow.pop %v774
    %v776 = vmul.f32 %v739, 1.442695
    %v777 = vpow.pop %v776
    %v778 = vmul.f32 %v740, 1.442695
    %v779 = vpow.pop %v778
    %v780 = vmul.f32 %v741, 1.442695
    %v781 = vpow.pop %v780
    %v782 = vmul.f32 %v742, 1.442695
    %v783 = vpow.pop %v782
    %v784 = vmul.f32 %v743, 1.442695
    %v785 = vpow.pop %v784
    %v786 = vmul.f32 %v744, 1.442695
    %v787 = vpow.pop %v786
    %v788 = vmul.f32 %v745, 1.442695
    %v789 = vpow.pop %v788
    %v790 = vmul.f32 %v746, 1.442695
    %v791 = vpow.pop %v790
    %v792 = vmul.f32 %v747, 1.442695
    %v793 = vpow.pop %v792
    %v794 = vmul.f32 %v748, 1.442695
    %v795 = vpow.pop %v794
    %v796 = vmul.f32 %v749, 1.442695
    %v797 = vpow.pop %v796
    %822 = vset.pattern.permute.xlu0 0
    %823 = vperm.xlu0 %822, %v751
    %v824 = vpop.permute.xlu0 %823
    %825 = vset.pattern.permute.xlu0 0
    %826 = vperm.xlu0 %825, %v753
    %v827 = vpop.permute.xlu0 %826
    %828 = vset.pattern.permute.xlu0 0
    %829 = vperm.xlu0 %828, %v755
    %v830 = vpop.permute.xlu0 %829
    %831 = vset.pattern.permute.xlu0 0
    %832 = vperm.xlu0 %831, %v757
    %v833 = vpop.permute.xlu0 %832
    %834 = vset.pattern.permute.xlu0 0
    %835 = vperm.xlu0 %834, %v759
    %v836 = vpop.permute.xlu0 %835
    %837 = vset.pattern.permute.xlu0 0
    %838 = vperm.xlu0 %837, %v761
    %v839 = vpop.permute.xlu0 %838
    %840 = vset.pattern.permute.xlu0 0
    %841 = vperm.xlu0 %840, %v763
    %v842 = vpop.permute.xlu0 %841
    %843 = vset.pattern.permute.xlu0 0
    %844 = vperm.xlu0 %843, %v765
    %v845 = vpop.permute.xlu0 %844
    %846 = vset.pattern.permute.xlu0 0
    %847 = vperm.xlu0 %846, %v767
    %v848 = vpop.permute.xlu0 %847
    %849 = vset.pattern.permute.xlu0 0
    %850 = vperm.xlu0 %849, %v769
    %v851 = vpop.permute.xlu0 %850
    %852 = vset.pattern.permute.xlu0 0
    %853 = vperm.xlu0 %852, %v771
    %v854 = vpop.permute.xlu0 %853
    %855 = vset.pattern.permute.xlu0 0
    %856 = vperm.xlu0 %855, %v773
    %v857 = vpop.permute.xlu0 %856
    %858 = vset.pattern.permute.xlu0 0
    %859 = vperm.xlu0 %858, %v775
    %v860 = vpop.permute.xlu0 %859
    %861 = vset.pattern.permute.xlu0 0
    %862 = vperm.xlu0 %861, %v777
    %v863 = vpop.permute.xlu0 %862
    %864 = vset.pattern.permute.xlu0 0
    %865 = vperm.xlu0 %864, %v779
    %v866 = vpop.permute.xlu0 %865
    %867 = vset.pattern.permute.xlu0 0
    %868 = vperm.xlu0 %867, %v781
    %v869 = vpop.permute.xlu0 %868
    %870 = vset.pattern.permute.xlu0 0
    %871 = vperm.xlu0 %870, %v783
    %v872 = vpop.permute.xlu0 %871
    %873 = vset.pattern.permute.xlu0 0
    %874 = vperm.xlu0 %873, %v785
    %v875 = vpop.permute.xlu0 %874
    %876 = vset.pattern.permute.xlu0 0
    %877 = vperm.xlu0 %876, %v787
    %v878 = vpop.permute.xlu0 %877
    %879 = vset.pattern.permute.xlu0 0
    %880 = vperm.xlu0 %879, %v789
    %v881 = vpop.permute.xlu0 %880
    %882 = vset.pattern.permute.xlu0 0
    %883 = vperm.xlu0 %882, %v791
    %v884 = vpop.permute.xlu0 %883
    %885 = vset.pattern.permute.xlu0 0
    %886 = vperm.xlu0 %885, %v793
    %v887 = vpop.permute.xlu0 %886
    %888 = vset.pattern.permute.xlu0 0
    %889 = vperm.xlu0 %888, %v795
    %v890 = vpop.permute.xlu0 %889
    %891 = vset.pattern.permute.xlu0 0
    %892 = vperm.xlu0 %891, %v797
    %v893 = vpop.permute.xlu0 %892
    %v894 = vperm.slane %v824, %v634
    %v895 = vperm.slane %v827, %v636
    %v896 = vsel %vm638, %v895, %v894
    %v897 = vperm.slane %v830, %v634
    %v898 = vperm.slane %v833, %v636
    %v899 = vsel %vm638, %v898, %v897
    %v900 = vperm.slane %v836, %v634
    %v901 = vperm.slane %v839, %v636
    %v902 = vsel %vm638, %v901, %v900
    %v903 = vperm.slane %v842, %v634
    %v904 = vperm.slane %v845, %v636
    %v905 = vsel %vm638, %v904, %v903
    %v906 = vperm.slane %v848, %v634
    %v907 = vperm.slane %v851, %v636
    %v908 = vsel %vm638, %v907, %v906
    %v909 = vperm.slane %v854, %v634
    %v910 = vperm.slane %v857, %v636
    %v911 = vsel %vm638, %v910, %v909
    %v912 = vperm.slane %v860, %v634
    %v913 = vperm.slane %v863, %v636
    %v914 = vsel %vm638, %v913, %v912
    %v915 = vperm.slane %v866, %v634
    %v916 = vperm.slane %v869, %v636
    %v917 = vsel %vm638, %v916, %v915
    %v918 = vperm.slane %v872, %v634
    %v919 = vperm.slane %v875, %v636
    %v920 = vsel %vm638, %v919, %v918
    %v921 = vperm.slane %v878, %v634
    %v922 = vperm.slane %v881, %v636
    %v923 = vsel %vm638, %v922, %v921
    %v924 = vperm.slane %v884, %v634
    %v925 = vperm.slane %v887, %v636
    %v926 = vsel %vm638, %v925, %v924
    %v927 = vperm.slane %v890, %v634
    %v928 = vperm.slane %v893, %v636
    %v929 = vsel %vm638, %v928, %v927
    %v930 = vsel %vm673, %v899, %v896
    %v931 = vsel %vm675, %v902, %v930
    %v932 = vsel %vm677, %v905, %v931
    %v933 = vsel %vm679, %v908, %v932
    %v934 = vsel %vm681, %v911, %v933
    %v935 = vsel %vm683, %v914, %v934
    %v936 = vsel %vm685, %v917, %v935
    %v937 = vsel %vm673, %v923, %v920
    %v938 = vsel %vm675, %v926, %v937
    %v939 = vsel %vm677, %v929, %v938
    %v942 = vsel %vm21, %v936, 0.0
    %v943 = vsel %vm22, %v939, 0.0
    %v944 = vsel %vm692, %v942, 0.0
    %945 = vadd.xlane.f32.xlu0 %v944
    %v946 = vpop.xlane.xlu0 %945
    %v947 = vsel %vm696, %v943, 0.0
    %948 = vadd.xlane.f32.xlu0 %v947
    %v949 = vpop.xlane.xlu0 %948
    %v950 = vrcp.pop %v946
    %v951 = vrcp.pop %v949
    %v952 = vmul.f32 %v942, %v950
    %v953 = vmul.f32 %v943, %v951
    %v954 = vpack.c.bf16 %v953, %v952
    %v957 = vunpack.c.l.b16 %v255
    %v958 = vunpack.c.l.b16 %v256
    %v959 = vpack.c.b16 %v958, %v957
    %v961 = vsel %vm692, %v954, 0
    %vm963 = vcmask 1045504
    %v965 = vsel %vm963, %v959, 0
    %967 = vmatpush.bf16.msra.mxu0 0
    %968 = vmatpush.bf16.msra.mxu0 0
    %969 = vmatpush.bf16.msra.mxu0 0
    %970 = vmatpush.bf16.msra.mxu0 0
    %971 = vmatpush.bf16.msra.mxu0 0
    %972 = vmatpush.bf16.msra.mxu0 0
    %973 = vmatpush.bf16.msra.mxu0 0
    %974 = vmatpush.bf16.msra.mxu0 %v965
    %975 = vmatmul.bf16.gmra.mxu0 %v961
    %v976 = vpop.f32.mrf.mxu0
    %v977 = vadd.f32 0.0, %v976
    %v978 = vpop.f32.mrf.mxu0
    %v979 = vadd.f32 0.0, %v978
    %980 = vdwg.mxu0
    %1005 = vrot.lane.b32.xlu0 %v231, 110
    %v1006 = vpop.permute.xlu0 %1005
    %1007 = vrot.lane.b32.xlu0 %v232, 110
    %v1008 = vpop.permute.xlu0 %1007
    %1009 = vrot.lane.b32.xlu0 %v233, 110
    %v1010 = vpop.permute.xlu0 %1009
    %1011 = vrot.lane.b32.xlu0 %v234, 110
    %v1012 = vpop.permute.xlu0 %1011
    %1013 = vrot.lane.b32.xlu0 %v235, 110
    %v1014 = vpop.permute.xlu0 %1013
    %1015 = vrot.lane.b32.xlu0 %v236, 110
    %v1016 = vpop.permute.xlu0 %1015
    %1017 = vrot.lane.b32.xlu0 %v237, 110
    %v1018 = vpop.permute.xlu0 %1017
    %1019 = vrot.lane.b32.xlu0 %v238, 110
    %v1020 = vpop.permute.xlu0 %1019
    %1021 = vrot.lane.b32.xlu0 %v239, 110
    %v1022 = vpop.permute.xlu0 %1021
    %1023 = vrot.lane.b32.xlu0 %v240, 110
    %v1024 = vpop.permute.xlu0 %1023
    %1025 = vrot.lane.b32.xlu0 %v241, 110
    %v1026 = vpop.permute.xlu0 %1025
    %1027 = vrot.lane.b32.xlu0 %v242, 110
    %v1028 = vpop.permute.xlu0 %1027
    %1029 = vrot.lane.b32.xlu0 %v243, 110
    %v1030 = vpop.permute.xlu0 %1029
    %1031 = vrot.lane.b32.xlu0 %v244, 110
    %v1032 = vpop.permute.xlu0 %1031
    %1033 = vrot.lane.b32.xlu0 %v245, 110
    %v1034 = vpop.permute.xlu0 %1033
    %1035 = vrot.lane.b32.xlu0 %v246, 110
    %v1036 = vpop.permute.xlu0 %1035
    %1037 = vrot.lane.b32.xlu0 %v247, 110
    %v1038 = vpop.permute.xlu0 %1037
    %1039 = vrot.lane.b32.xlu0 %v248, 110
    %v1040 = vpop.permute.xlu0 %1039
    %1041 = vrot.lane.b32.xlu0 %v249, 110
    %v1042 = vpop.permute.xlu0 %1041
    %1043 = vrot.lane.b32.xlu0 %v250, 110
    %v1044 = vpop.permute.xlu0 %1043
    %1045 = vrot.lane.b32.xlu0 %v251, 110
    %v1046 = vpop.permute.xlu0 %1045
    %1047 = vrot.lane.b32.xlu0 %v252, 110
    %v1048 = vpop.permute.xlu0 %1047
    %1049 = vrot.lane.b32.xlu0 %v253, 110
    %v1050 = vpop.permute.xlu0 %1049
    %1051 = vrot.lane.b32.xlu0 %v254, 110
    %v1052 = vpop.permute.xlu0 %1051
    %v1077 = vsel %vm257, %v1006, 0.0
    %1078 = vadd.xlane.f32.xlu0 %v1077
    %v1079 = vpop.xlane.xlu0 %1078
    %v1080 = vsel %vm261, %v1008, 0.0
    %1081 = vadd.xlane.f32.xlu0 %v1080
    %v1082 = vpop.xlane.xlu0 %1081
    %v1083 = vsel %vm257, %v1010, 0.0
    %1084 = vadd.xlane.f32.xlu0 %v1083
    %v1085 = vpop.xlane.xlu0 %1084
    %v1086 = vsel %vm261, %v1012, 0.0
    %1087 = vadd.xlane.f32.xlu0 %v1086
    %v1088 = vpop.xlane.xlu0 %1087
    %v1089 = vsel %vm257, %v1014, 0.0
    %1090 = vadd.xlane.f32.xlu0 %v1089
    %v1091 = vpop.xlane.xlu0 %1090
    %v1092 = vsel %vm261, %v1016, 0.0
    %1093 = vadd.xlane.f32.xlu0 %v1092
    %v1094 = vpop.xlane.xlu0 %1093
    %v1095 = vsel %vm257, %v1018, 0.0
    %1096 = vadd.xlane.f32.xlu0 %v1095
    %v1097 = vpop.xlane.xlu0 %1096
    %v1098 = vsel %vm261, %v1020, 0.0
    %1099 = vadd.xlane.f32.xlu0 %v1098
    %v1100 = vpop.xlane.xlu0 %1099
    %v1101 = vsel %vm257, %v1022, 0.0
    %1102 = vadd.xlane.f32.xlu0 %v1101
    %v1103 = vpop.xlane.xlu0 %1102
    %v1104 = vsel %vm261, %v1024, 0.0
    %1105 = vadd.xlane.f32.xlu0 %v1104
    %v1106 = vpop.xlane.xlu0 %1105
    %v1107 = vsel %vm257, %v1026, 0.0
    %1108 = vadd.xlane.f32.xlu0 %v1107
    %v1109 = vpop.xlane.xlu0 %1108
    %v1110 = vsel %vm261, %v1028, 0.0
    %1111 = vadd.xlane.f32.xlu0 %v1110
    %v1112 = vpop.xlane.xlu0 %1111
    %v1113 = vsel %vm257, %v1030, 0.0
    %1114 = vadd.xlane.f32.xlu0 %v1113
    %v1115 = vpop.xlane.xlu0 %1114
    %v1116 = vsel %vm261, %v1032, 0.0
    %1117 = vadd.xlane.f32.xlu0 %v1116
    %v1118 = vpop.xlane.xlu0 %1117
    %v1119 = vsel %vm257, %v1034, 0.0
    %1120 = vadd.xlane.f32.xlu0 %v1119
    %v1121 = vpop.xlane.xlu0 %1120
    %v1122 = vsel %vm261, %v1036, 0.0
    %1123 = vadd.xlane.f32.xlu0 %v1122
    %v1124 = vpop.xlane.xlu0 %1123
    %v1125 = vsel %vm257, %v1038, 0.0
    %1126 = vadd.xlane.f32.xlu0 %v1125
    %v1127 = vpop.xlane.xlu0 %1126
    %v1128 = vsel %vm261, %v1040, 0.0
    %1129 = vadd.xlane.f32.xlu0 %v1128
    %v1130 = vpop.xlane.xlu0 %1129
    %v1131 = vsel %vm257, %v1042, 0.0
    %1132 = vadd.xlane.f32.xlu0 %v1131
    %v1133 = vpop.xlane.xlu0 %1132
    %v1134 = vsel %vm261, %v1044, 0.0
    %1135 = vadd.xlane.f32.xlu0 %v1134
    %v1136 = vpop.xlane.xlu0 %1135
    %v1137 = vsel %vm257, %v1046, 0.0
    %1138 = vadd.xlane.f32.xlu0 %v1137
    %v1139 = vpop.xlane.xlu0 %1138
    %v1140 = vsel %vm261, %v1048, 0.0
    %1141 = vadd.xlane.f32.xlu0 %v1140
    %v1142 = vpop.xlane.xlu0 %1141
    %v1143 = vsel %vm257, %v1050, 0.0
    %1144 = vadd.xlane.f32.xlu0 %v1143
    %v1145 = vpop.xlane.xlu0 %1144
    %v1146 = vsel %vm261, %v1052, 0.0
    %1147 = vadd.xlane.f32.xlu0 %v1146
    %v1148 = vpop.xlane.xlu0 %1147
    %v1149 = vadd.f32 %v1079, %v339
    %v1150 = vadd.f32 %v1082, %v345
    %v1151 = vadd.f32 %v1085, %v352
    %v1152 = vadd.f32 %v1088, %v358
    %v1153 = vadd.f32 %v1091, %v365
    %v1154 = vadd.f32 %v1094, %v371
    %v1155 = vadd.f32 %v1097, %v378
    %v1156 = vadd.f32 %v1100, %v384
    %v1157 = vadd.f32 %v1103, %v391
    %v1158 = vadd.f32 %v1106, %v397
    %v1159 = vadd.f32 %v1109, %v404
    %v1160 = vadd.f32 %v1112, %v410
    %v1161 = vadd.f32 %v1115, %v417
    %v1162 = vadd.f32 %v1118, %v423
    %v1163 = vadd.f32 %v1121, %v430
    %v1164 = vadd.f32 %v1124, %v436
    %v1165 = vadd.f32 %v1127, %v443
    %v1166 = vadd.f32 %v1130, %v449
    %v1167 = vadd.f32 %v1133, %v456
    %v1168 = vadd.f32 %v1136, %v462
    %v1169 = vadd.f32 %v1139, %v469
    %v1170 = vadd.f32 %v1142, %v475
    %v1171 = vadd.f32 %v1145, %v482
    %v1172 = vadd.f32 %v1148, %v488
    %1197 = vset.pattern.permute.xlu0 0
    %1198 = vperm.xlu0 %1197, %v1149
    %v1199 = vpop.permute.xlu0 %1198
    %1200 = vset.pattern.permute.xlu0 0
    %1201 = vperm.xlu0 %1200, %v1150
    %v1202 = vpop.permute.xlu0 %1201
    %1203 = vset.pattern.permute.xlu0 0
    %1204 = vperm.xlu0 %1203, %v1151
    %v1205 = vpop.permute.xlu0 %1204
    %1206 = vset.pattern.permute.xlu0 0
    %1207 = vperm.xlu0 %1206, %v1152
    %v1208 = vpop.permute.xlu0 %1207
    %1209 = vset.pattern.permute.xlu0 0
    %1210 = vperm.xlu0 %1209, %v1153
    %v1211 = vpop.permute.xlu0 %1210
    %1212 = vset.pattern.permute.xlu0 0
    %1213 = vperm.xlu0 %1212, %v1154
    %v1214 = vpop.permute.xlu0 %1213
    %1215 = vset.pattern.permute.xlu0 0
    %1216 = vperm.xlu0 %1215, %v1155
    %v1217 = vpop.permute.xlu0 %1216
    %1218 = vset.pattern.permute.xlu0 0
    %1219 = vperm.xlu0 %1218, %v1156
    %v1220 = vpop.permute.xlu0 %1219
    %1221 = vset.pattern.permute.xlu0 0
    %1222 = vperm.xlu0 %1221, %v1157
    %v1223 = vpop.permute.xlu0 %1222
    %1224 = vset.pattern.permute.xlu0 0
    %1225 = vperm.xlu0 %1224, %v1158
    %v1226 = vpop.permute.xlu0 %1225
    %1227 = vset.pattern.permute.xlu0 0
    %1228 = vperm.xlu0 %1227, %v1159
    %v1229 = vpop.permute.xlu0 %1228
    %1230 = vset.pattern.permute.xlu0 0
    %1231 = vperm.xlu0 %1230, %v1160
    %v1232 = vpop.permute.xlu0 %1231
    %1233 = vset.pattern.permute.xlu0 0
    %1234 = vperm.xlu0 %1233, %v1161
    %v1235 = vpop.permute.xlu0 %1234
    %1236 = vset.pattern.permute.xlu0 0
    %1237 = vperm.xlu0 %1236, %v1162
    %v1238 = vpop.permute.xlu0 %1237
    %1239 = vset.pattern.permute.xlu0 0
    %1240 = vperm.xlu0 %1239, %v1163
    %v1241 = vpop.permute.xlu0 %1240
    %1242 = vset.pattern.permute.xlu0 0
    %1243 = vperm.xlu0 %1242, %v1164
    %v1244 = vpop.permute.xlu0 %1243
    %1245 = vset.pattern.permute.xlu0 0
    %1246 = vperm.xlu0 %1245, %v1165
    %v1247 = vpop.permute.xlu0 %1246
    %1248 = vset.pattern.permute.xlu0 0
    %1249 = vperm.xlu0 %1248, %v1166
    %v1250 = vpop.permute.xlu0 %1249
    %1251 = vset.pattern.permute.xlu0 0
    %1252 = vperm.xlu0 %1251, %v1167
    %v1253 = vpop.permute.xlu0 %1252
    %1254 = vset.pattern.permute.xlu0 0
    %1255 = vperm.xlu0 %1254, %v1168
    %v1256 = vpop.permute.xlu0 %1255
    %1257 = vset.pattern.permute.xlu0 0
    %1258 = vperm.xlu0 %1257, %v1169
    %v1259 = vpop.permute.xlu0 %1258
    %1260 = vset.pattern.permute.xlu0 0
    %1261 = vperm.xlu0 %1260, %v1170
    %v1262 = vpop.permute.xlu0 %1261
    %1263 = vset.pattern.permute.xlu0 0
    %1264 = vperm.xlu0 %1263, %v1171
    %v1265 = vpop.permute.xlu0 %1264
    %1266 = vset.pattern.permute.xlu0 0
    %1267 = vperm.xlu0 %1266, %v1172
    %v1268 = vpop.permute.xlu0 %1267
    %v1269 = vperm.slane %v1199, %v634
    %v1270 = vperm.slane %v1202, %v636
    %v1271 = vsel %vm638, %v1270, %v1269
    %v1272 = vperm.slane %v1205, %v634
    %v1273 = vperm.slane %v1208, %v636
    %v1274 = vsel %vm638, %v1273, %v1272
    %v1275 = vperm.slane %v1211, %v634
    %v1276 = vperm.slane %v1214, %v636
    %v1277 = vsel %vm638, %v1276, %v1275
    %v1278 = vperm.slane %v1217, %v634
    %v1279 = vperm.slane %v1220, %v636
    %v1280 = vsel %vm638, %v1279, %v1278
    %v1281 = vperm.slane %v1223, %v634
    %v1282 = vperm.slane %v1226, %v636
    %v1283 = vsel %vm638, %v1282, %v1281
    %v1284 = vperm.slane %v1229, %v634
    %v1285 = vperm.slane %v1232, %v636
    %v1286 = vsel %vm638, %v1285, %v1284
    %v1287 = vperm.slane %v1235, %v634
    %v1288 = vperm.slane %v1238, %v636
    %v1289 = vsel %vm638, %v1288, %v1287
    %v1290 = vperm.slane %v1241, %v634
    %v1291 = vperm.slane %v1244, %v636
    %v1292 = vsel %vm638, %v1291, %v1290
    %v1293 = vperm.slane %v1247, %v634
    %v1294 = vperm.slane %v1250, %v636
    %v1295 = vsel %vm638, %v1294, %v1293
    %v1296 = vperm.slane %v1253, %v634
    %v1297 = vperm.slane %v1256, %v636
    %v1298 = vsel %vm638, %v1297, %v1296
    %v1299 = vperm.slane %v1259, %v634
    %v1300 = vperm.slane %v1262, %v636
    %v1301 = vsel %vm638, %v1300, %v1299
    %v1302 = vperm.slane %v1265, %v634
    %v1303 = vperm.slane %v1268, %v636
    %v1304 = vsel %vm638, %v1303, %v1302
    %v1305 = vsel %vm673, %v1274, %v1271
    %v1306 = vsel %vm675, %v1277, %v1305
    %v1307 = vsel %vm677, %v1280, %v1306
    %v1308 = vsel %vm679, %v1283, %v1307
    %v1309 = vsel %vm681, %v1286, %v1308
    %v1310 = vsel %vm683, %v1289, %v1309
    %v1311 = vsel %vm685, %v1292, %v1310
    %v1312 = vsel %vm673, %v1298, %v1295
    %v1313 = vsel %vm675, %v1301, %v1312
    %v1314 = vsel %vm677, %v1304, %v1313
    %v1317 = vsel %vm692, %v1311, -inf
    %1318 = vmax.xlane.f32.xlu0 %v1317
    %v1319 = vpop.xlane.xlu0 %1318
    %v1320 = vsel %vm696, %v1314, -inf
    %1321 = vmax.xlane.f32.xlu0 %v1320
    %v1322 = vpop.xlane.xlu0 %1321
    %v1325 = vperm.slane %v1319, 0
    %v1326 = vperm.slane %v1319, 1
    %v1327 = vperm.slane %v1319, 2
    %v1328 = vperm.slane %v1319, 3
    %v1329 = vperm.slane %v1319, 4
    %v1330 = vperm.slane %v1319, 5
    %v1331 = vperm.slane %v1319, 6
    %v1332 = vperm.slane %v1319, 7
    %v1333 = vperm.slane %v1322, 0
    %v1334 = vperm.slane %v1322, 1
    %v1335 = vperm.slane %v1322, 2
    %v1336 = vperm.slane %v1322, 3
    %v1349 = vsub.f32 %v1149, %v1325
    %v1350 = vsub.f32 %v1150, %v1325
    %v1351 = vsub.f32 %v1151, %v1326
    %v1352 = vsub.f32 %v1152, %v1326
    %v1353 = vsub.f32 %v1153, %v1327
    %v1354 = vsub.f32 %v1154, %v1327
    %v1355 = vsub.f32 %v1155, %v1328
    %v1356 = vsub.f32 %v1156, %v1328
    %v1357 = vsub.f32 %v1157, %v1329
    %v1358 = vsub.f32 %v1158, %v1329
    %v1359 = vsub.f32 %v1159, %v1330
    %v1360 = vsub.f32 %v1160, %v1330
    %v1361 = vsub.f32 %v1161, %v1331
    %v1362 = vsub.f32 %v1162, %v1331
    %v1363 = vsub.f32 %v1163, %v1332
    %v1364 = vsub.f32 %v1164, %v1332
    %v1365 = vsub.f32 %v1165, %v1333
    %v1366 = vsub.f32 %v1166, %v1333
    %v1367 = vsub.f32 %v1167, %v1334
    %v1368 = vsub.f32 %v1168, %v1334
    %v1369 = vsub.f32 %v1169, %v1335
    %v1370 = vsub.f32 %v1170, %v1335
    %v1371 = vsub.f32 %v1171, %v1336
    %v1372 = vsub.f32 %v1172, %v1336
    %v1373 = vmul.f32 %v1349, 1.442695
    %v1374 = vpow.pop %v1373
    %v1375 = vmul.f32 %v1350, 1.442695
    %v1376 = vpow.pop %v1375
    %v1377 = vmul.f32 %v1351, 1.442695
    %v1378 = vpow.pop %v1377
    %v1379 = vmul.f32 %v1352, 1.442695
    %v1380 = vpow.pop %v1379
    %v1381 = vmul.f32 %v1353, 1.442695
    %v1382 = vpow.pop %v1381
    %v1383 = vmul.f32 %v1354, 1.442695
    %v1384 = vpow.pop %v1383
    %v1385 = vmul.f32 %v1355, 1.442695
    %v1386 = vpow.pop %v1385
    %v1387 = vmul.f32 %v1356, 1.442695
    %v1388 = vpow.pop %v1387
    %v1389 = vmul.f32 %v1357, 1.442695
    %v1390 = vpow.pop %v1389
    %v1391 = vmul.f32 %v1358, 1.442695
    %v1392 = vpow.pop %v1391
    %v1393 = vmul.f32 %v1359, 1.442695
    %v1394 = vpow.pop %v1393
    %v1395 = vmul.f32 %v1360, 1.442695
    %v1396 = vpow.pop %v1395
    %v1397 = vmul.f32 %v1361, 1.442695
    %v1398 = vpow.pop %v1397
    %v1399 = vmul.f32 %v1362, 1.442695
    %v1400 = vpow.pop %v1399
    %v1401 = vmul.f32 %v1363, 1.442695
    %v1402 = vpow.pop %v1401
    %v1403 = vmul.f32 %v1364, 1.442695
    %v1404 = vpow.pop %v1403
    %v1405 = vmul.f32 %v1365, 1.442695
    %v1406 = vpow.pop %v1405
    %v1407 = vmul.f32 %v1366, 1.442695
    %v1408 = vpow.pop %v1407
    %v1409 = vmul.f32 %v1367, 1.442695
    %v1410 = vpow.pop %v1409
    %v1411 = vmul.f32 %v1368, 1.442695
    %v1412 = vpow.pop %v1411
    %v1413 = vmul.f32 %v1369, 1.442695
    %v1414 = vpow.pop %v1413
    %v1415 = vmul.f32 %v1370, 1.442695
    %v1416 = vpow.pop %v1415
    %v1417 = vmul.f32 %v1371, 1.442695
    %v1418 = vpow.pop %v1417
    %v1419 = vmul.f32 %v1372, 1.442695
    %v1420 = vpow.pop %v1419
    %1445 = vset.pattern.permute.xlu0 0
    %1446 = vperm.xlu0 %1445, %v1374
    %v1447 = vpop.permute.xlu0 %1446
    %1448 = vset.pattern.permute.xlu0 0
    %1449 = vperm.xlu0 %1448, %v1376
    %v1450 = vpop.permute.xlu0 %1449
    %1451 = vset.pattern.permute.xlu0 0
    %1452 = vperm.xlu0 %1451, %v1378
    %v1453 = vpop.permute.xlu0 %1452
    %1454 = vset.pattern.permute.xlu0 0
    %1455 = vperm.xlu0 %1454, %v1380
    %v1456 = vpop.permute.xlu0 %1455
    %1457 = vset.pattern.permute.xlu0 0
    %1458 = vperm.xlu0 %1457, %v1382
    %v1459 = vpop.permute.xlu0 %1458
    %1460 = vset.pattern.permute.xlu0 0
    %1461 = vperm.xlu0 %1460, %v1384
    %v1462 = vpop.permute.xlu0 %1461
    %1463 = vset.pattern.permute.xlu0 0
    %1464 = vperm.xlu0 %1463, %v1386
    %v1465 = vpop.permute.xlu0 %1464
    %1466 = vset.pattern.permute.xlu0 0
    %1467 = vperm.xlu0 %1466, %v1388
    %v1468 = vpop.permute.xlu0 %1467
    %1469 = vset.pattern.permute.xlu0 0
    %1470 = vperm.xlu0 %1469, %v1390
    %v1471 = vpop.permute.xlu0 %1470
    %1472 = vset.pattern.permute.xlu0 0
    %1473 = vperm.xlu0 %1472, %v1392
    %v1474 = vpop.permute.xlu0 %1473
    %1475 = vset.pattern.permute.xlu0 0
    %1476 = vperm.xlu0 %1475, %v1394
    %v1477 = vpop.permute.xlu0 %1476
    %1478 = vset.pattern.permute.xlu0 0
    %1479 = vperm.xlu0 %1478, %v1396
    %v1480 = vpop.permute.xlu0 %1479
    %1481 = vset.pattern.permute.xlu0 0
    %1482 = vperm.xlu0 %1481, %v1398
    %v1483 = vpop.permute.xlu0 %1482
    %1484 = vset.pattern.permute.xlu0 0
    %1485 = vperm.xlu0 %1484, %v1400
    %v1486 = vpop.permute.xlu0 %1485
    %1487 = vset.pattern.permute.xlu0 0
    %1488 = vperm.xlu0 %1487, %v1402
    %v1489 = vpop.permute.xlu0 %1488
    %1490 = vset.pattern.permute.xlu0 0
    %1491 = vperm.xlu0 %1490, %v1404
    %v1492 = vpop.permute.xlu0 %1491
    %1493 = vset.pattern.permute.xlu0 0
    %1494 = vperm.xlu0 %1493, %v1406
    %v1495 = vpop.permute.xlu0 %1494
    %1496 = vset.pattern.permute.xlu0 0
    %1497 = vperm.xlu0 %1496, %v1408
    %v1498 = vpop.permute.xlu0 %1497
    %1499 = vset.pattern.permute.xlu0 0
    %1500 = vperm.xlu0 %1499, %v1410
    %v1501 = vpop.permute.xlu0 %1500
    %1502 = vset.pattern.permute.xlu0 0
    %1503 = vperm.xlu0 %1502, %v1412
    %v1504 = vpop.permute.xlu0 %1503
    %1505 = vset.pattern.permute.xlu0 0
    %1506 = vperm.xlu0 %1505, %v1414
    %v1507 = vpop.permute.xlu0 %1506
    %1508 = vset.pattern.permute.xlu0 0
    %1509 = vperm.xlu0 %1508, %v1416
    %v1510 = vpop.permute.xlu0 %1509
    %1511 = vset.pattern.permute.xlu0 0
    %1512 = vperm.xlu0 %1511, %v1418
    %v1513 = vpop.permute.xlu0 %1512
    %1514 = vset.pattern.permute.xlu0 0
    %1515 = vperm.xlu0 %1514, %v1420
    %v1516 = vpop.permute.xlu0 %1515
    %v1517 = vperm.slane %v1447, %v634
    %v1518 = vperm.slane %v1450, %v636
    %v1519 = vsel %vm638, %v1518, %v1517
    %v1520 = vperm.slane %v1453, %v634
    %v1521 = vperm.slane %v1456, %v636
    %v1522 = vsel %vm638, %v1521, %v1520
    %v1523 = vperm.slane %v1459, %v634
    %v1524 = vperm.slane %v1462, %v636
    %v1525 = vsel %vm638, %v1524, %v1523
    %v1526 = vperm.slane %v1465, %v634
    %v1527 = vperm.slane %v1468, %v636
    %v1528 = vsel %vm638, %v1527, %v1526
    %v1529 = vperm.slane %v1471, %v634
    %v1530 = vperm.slane %v1474, %v636
    %v1531 = vsel %vm638, %v1530, %v1529
    %v1532 = vperm.slane %v1477, %v634
    %v1533 = vperm.slane %v1480, %v636
    %v1534 = vsel %vm638, %v1533, %v1532
    %v1535 = vperm.slane %v1483, %v634
    %v1536 = vperm.slane %v1486, %v636
    %v1537 = vsel %vm638, %v1536, %v1535
    %v1538 = vperm.slane %v1489, %v634
    %v1539 = vperm.slane %v1492, %v636
    %v1540 = vsel %vm638, %v1539, %v1538
    %v1541 = vperm.slane %v1495, %v634
    %v1542 = vperm.slane %v1498, %v636
    %v1543 = vsel %vm638, %v1542, %v1541
    %v1544 = vperm.slane %v1501, %v634
    %v1545 = vperm.slane %v1504, %v636
    %v1546 = vsel %vm638, %v1545, %v1544
    %v1547 = vperm.slane %v1507, %v634
    %v1548 = vperm.slane %v1510, %v636
    %v1549 = vsel %vm638, %v1548, %v1547
    %v1550 = vperm.slane %v1513, %v634
    %v1551 = vperm.slane %v1516, %v636
    %v1552 = vsel %vm638, %v1551, %v1550
    %v1553 = vsel %vm673, %v1522, %v1519
    %v1554 = vsel %vm675, %v1525, %v1553
    %v1555 = vsel %vm677, %v1528, %v1554
    %v1556 = vsel %vm679, %v1531, %v1555
    %v1557 = vsel %vm681, %v1534, %v1556
    %v1558 = vsel %vm683, %v1537, %v1557
    %v1559 = vsel %vm685, %v1540, %v1558
    %v1560 = vsel %vm673, %v1546, %v1543
    %v1561 = vsel %vm675, %v1549, %v1560
    %v1562 = vsel %vm677, %v1552, %v1561
    %v1565 = vsel %vm21, %v1559, 0.0
    %v1566 = vsel %vm22, %v1562, 0.0
    %v1567 = vsel %vm692, %v1565, 0.0
    %1568 = vadd.xlane.f32.xlu0 %v1567
    %v1569 = vpop.xlane.xlu0 %1568
    %v1570 = vsel %vm696, %v1566, 0.0
    %1571 = vadd.xlane.f32.xlu0 %v1570
    %v1572 = vpop.xlane.xlu0 %1571
    %v1573 = vrcp.pop %v1569
    %v1574 = vrcp.pop %v1572
    %v1575 = vmul.f32 %v1565, %v1573
    %v1576 = vmul.f32 %v1566, %v1574
    %v1577 = vpack.c.bf16 %v1576, %v1575
    %1578 = vrot.lane.b32.xlu0 %v959, 110
    %v1579 = vpop.permute.xlu0 %1578
    %v1581 = vsel %vm692, %v1577, 0
    %v1584 = vsel %vm963, %v1579, 0
    %1586 = vmatpush.bf16.msra.mxu0 0
    %1587 = vmatpush.bf16.msra.mxu0 0
    %1588 = vmatpush.bf16.msra.mxu0 0
    %1589 = vmatpush.bf16.msra.mxu0 0
    %1590 = vmatpush.bf16.msra.mxu0 0
    %1591 = vmatpush.bf16.msra.mxu0 0
    %1592 = vmatpush.bf16.msra.mxu0 0
    %1593 = vmatpush.bf16.msra.mxu0 %v1584
    %1594 = vmatmul.bf16.gmra.mxu0 %v1581
    %v1595 = vpop.f32.mrf.mxu0
    %v1596 = vadd.f32 0.0, %v1595
    %v1597 = vpop.f32.mrf.mxu0
    %v1598 = vadd.f32 0.0, %v1597
    %1599 = vdwg.mxu0
    %1600 = vrot.lane.b32.xlu0 %v231, 92
    %v1601 = vpop.permute.xlu0 %1600
    %1602 = vrot.lane.b32.xlu0 %v232, 92
    %v1603 = vpop.permute.xlu0 %1602
    %1604 = vrot.lane.b32.xlu0 %v233, 92
    %v1605 = vpop.permute.xlu0 %1604
    %1606 = vrot.lane.b32.xlu0 %v234, 92
    %v1607 = vpop.permute.xlu0 %1606
    %1608 = vrot.lane.b32.xlu0 %v235, 92
    %v1609 = vpop.permute.xlu0 %1608
    %1610 = vrot.lane.b32.xlu0 %v236, 92
    %v1611 = vpop.permute.xlu0 %1610
    %1612 = vrot.lane.b32.xlu0 %v237, 92
    %v1613 = vpop.permute.xlu0 %1612
    %1614 = vrot.lane.b32.xlu0 %v238, 92
    %v1615 = vpop.permute.xlu0 %1614
    %1616 = vrot.lane.b32.xlu0 %v239, 92
    %v1617 = vpop.permute.xlu0 %1616
    %1618 = vrot.lane.b32.xlu0 %v240, 92
    %v1619 = vpop.permute.xlu0 %1618
    %1620 = vrot.lane.b32.xlu0 %v241, 92
    %v1621 = vpop.permute.xlu0 %1620
    %1622 = vrot.lane.b32.xlu0 %v242, 92
    %v1623 = vpop.permute.xlu0 %1622
    %1624 = vrot.lane.b32.xlu0 %v243, 92
    %v1625 = vpop.permute.xlu0 %1624
    %1626 = vrot.lane.b32.xlu0 %v244, 92
    %v1627 = vpop.permute.xlu0 %1626
    %1628 = vrot.lane.b32.xlu0 %v245, 92
    %v1629 = vpop.permute.xlu0 %1628
    %1630 = vrot.lane.b32.xlu0 %v246, 92
    %v1631 = vpop.permute.xlu0 %1630
    %1632 = vrot.lane.b32.xlu0 %v247, 92
    %v1633 = vpop.permute.xlu0 %1632
    %1634 = vrot.lane.b32.xlu0 %v248, 92
    %v1635 = vpop.permute.xlu0 %1634
    %1636 = vrot.lane.b32.xlu0 %v249, 92
    %v1637 = vpop.permute.xlu0 %1636
    %1638 = vrot.lane.b32.xlu0 %v250, 92
    %v1639 = vpop.permute.xlu0 %1638
    %1640 = vrot.lane.b32.xlu0 %v251, 92
    %v1641 = vpop.permute.xlu0 %1640
    %1642 = vrot.lane.b32.xlu0 %v252, 92
    %v1643 = vpop.permute.xlu0 %1642
    %1644 = vrot.lane.b32.xlu0 %v253, 92
    %v1645 = vpop.permute.xlu0 %1644
    %1646 = vrot.lane.b32.xlu0 %v254, 92
    %v1647 = vpop.permute.xlu0 %1646
    %v1672 = vsel %vm257, %v1601, 0.0
    %1673 = vadd.xlane.f32.xlu0 %v1672
    %v1674 = vpop.xlane.xlu0 %1673
    %v1675 = vsel %vm261, %v1603, 0.0
    %1676 = vadd.xlane.f32.xlu0 %v1675
    %v1677 = vpop.xlane.xlu0 %1676
    %v1678 = vsel %vm257, %v1605, 0.0
    %1679 = vadd.xlane.f32.xlu0 %v1678
    %v1680 = vpop.xlane.xlu0 %1679
    %v1681 = vsel %vm261, %v1607, 0.0
    %1682 = vadd.xlane.f32.xlu0 %v1681
    %v1683 = vpop.xlane.xlu0 %1682
    %v1684 = vsel %vm257, %v1609, 0.0
    %1685 = vadd.xlane.f32.xlu0 %v1684
    %v1686 = vpop.xlane.xlu0 %1685
    %v1687 = vsel %vm261, %v1611, 0.0
    %1688 = vadd.xlane.f32.xlu0 %v1687
    %v1689 = vpop.xlane.xlu0 %1688
    %v1690 = vsel %vm257, %v1613, 0.0
    %1691 = vadd.xlane.f32.xlu0 %v1690
    %v1692 = vpop.xlane.xlu0 %1691
    %v1693 = vsel %vm261, %v1615, 0.0
    %1694 = vadd.xlane.f32.xlu0 %v1693
    %v1695 = vpop.xlane.xlu0 %1694
    %v1696 = vsel %vm257, %v1617, 0.0
    %1697 = vadd.xlane.f32.xlu0 %v1696
    %v1698 = vpop.xlane.xlu0 %1697
    %v1699 = vsel %vm261, %v1619, 0.0
    %1700 = vadd.xlane.f32.xlu0 %v1699
    %v1701 = vpop.xlane.xlu0 %1700
    %v1702 = vsel %vm257, %v1621, 0.0
    %1703 = vadd.xlane.f32.xlu0 %v1702
    %v1704 = vpop.xlane.xlu0 %1703
    %v1705 = vsel %vm261, %v1623, 0.0
    %1706 = vadd.xlane.f32.xlu0 %v1705
    %v1707 = vpop.xlane.xlu0 %1706
    %v1708 = vsel %vm257, %v1625, 0.0
    %1709 = vadd.xlane.f32.xlu0 %v1708
    %v1710 = vpop.xlane.xlu0 %1709
    %v1711 = vsel %vm261, %v1627, 0.0
    %1712 = vadd.xlane.f32.xlu0 %v1711
    %v1713 = vpop.xlane.xlu0 %1712
    %v1714 = vsel %vm257, %v1629, 0.0
    %1715 = vadd.xlane.f32.xlu0 %v1714
    %v1716 = vpop.xlane.xlu0 %1715
    %v1717 = vsel %vm261, %v1631, 0.0
    %1718 = vadd.xlane.f32.xlu0 %v1717
    %v1719 = vpop.xlane.xlu0 %1718
    %v1720 = vsel %vm257, %v1633, 0.0
    %1721 = vadd.xlane.f32.xlu0 %v1720
    %v1722 = vpop.xlane.xlu0 %1721
    %v1723 = vsel %vm261, %v1635, 0.0
    %1724 = vadd.xlane.f32.xlu0 %v1723
    %v1725 = vpop.xlane.xlu0 %1724
    %v1726 = vsel %vm257, %v1637, 0.0
    %1727 = vadd.xlane.f32.xlu0 %v1726
    %v1728 = vpop.xlane.xlu0 %1727
    %v1729 = vsel %vm261, %v1639, 0.0
    %1730 = vadd.xlane.f32.xlu0 %v1729
    %v1731 = vpop.xlane.xlu0 %1730
    %v1732 = vsel %vm257, %v1641, 0.0
    %1733 = vadd.xlane.f32.xlu0 %v1732
    %v1734 = vpop.xlane.xlu0 %1733
    %v1735 = vsel %vm261, %v1643, 0.0
    %1736 = vadd.xlane.f32.xlu0 %v1735
    %v1737 = vpop.xlane.xlu0 %1736
    %v1738 = vsel %vm257, %v1645, 0.0
    %1739 = vadd.xlane.f32.xlu0 %v1738
    %v1740 = vpop.xlane.xlu0 %1739
    %v1741 = vsel %vm261, %v1647, 0.0
    %1742 = vadd.xlane.f32.xlu0 %v1741
    %v1743 = vpop.xlane.xlu0 %1742
    %v1744 = vadd.f32 %v1674, %v339
    %v1745 = vadd.f32 %v1677, %v345
    %v1746 = vadd.f32 %v1680, %v352
    %v1747 = vadd.f32 %v1683, %v358
    %v1748 = vadd.f32 %v1686, %v365
    %v1749 = vadd.f32 %v1689, %v371
    %v1750 = vadd.f32 %v1692, %v378
    %v1751 = vadd.f32 %v1695, %v384
    %v1752 = vadd.f32 %v1698, %v391
    %v1753 = vadd.f32 %v1701, %v397
    %v1754 = vadd.f32 %v1704, %v404
    %v1755 = vadd.f32 %v1707, %v410
    %v1756 = vadd.f32 %v1710, %v417
    %v1757 = vadd.f32 %v1713, %v423
    %v1758 = vadd.f32 %v1716, %v430
    %v1759 = vadd.f32 %v1719, %v436
    %v1760 = vadd.f32 %v1722, %v443
    %v1761 = vadd.f32 %v1725, %v449
    %v1762 = vadd.f32 %v1728, %v456
    %v1763 = vadd.f32 %v1731, %v462
    %v1764 = vadd.f32 %v1734, %v469
    %v1765 = vadd.f32 %v1737, %v475
    %v1766 = vadd.f32 %v1740, %v482
    %v1767 = vadd.f32 %v1743, %v488
    %1792 = vset.pattern.permute.xlu0 0
    %1793 = vperm.xlu0 %1792, %v1744
    %v1794 = vpop.permute.xlu0 %1793
    %1795 = vset.pattern.permute.xlu0 0
    %1796 = vperm.xlu0 %1795, %v1745
    %v1797 = vpop.permute.xlu0 %1796
    %1798 = vset.pattern.permute.xlu0 0
    %1799 = vperm.xlu0 %1798, %v1746
    %v1800 = vpop.permute.xlu0 %1799
    %1801 = vset.pattern.permute.xlu0 0
    %1802 = vperm.xlu0 %1801, %v1747
    %v1803 = vpop.permute.xlu0 %1802
    %1804 = vset.pattern.permute.xlu0 0
    %1805 = vperm.xlu0 %1804, %v1748
    %v1806 = vpop.permute.xlu0 %1805
    %1807 = vset.pattern.permute.xlu0 0
    %1808 = vperm.xlu0 %1807, %v1749
    %v1809 = vpop.permute.xlu0 %1808
    %1810 = vset.pattern.permute.xlu0 0
    %1811 = vperm.xlu0 %1810, %v1750
    %v1812 = vpop.permute.xlu0 %1811
    %1813 = vset.pattern.permute.xlu0 0
    %1814 = vperm.xlu0 %1813, %v1751
    %v1815 = vpop.permute.xlu0 %1814
    %1816 = vset.pattern.permute.xlu0 0
    %1817 = vperm.xlu0 %1816, %v1752
    %v1818 = vpop.permute.xlu0 %1817
    %1819 = vset.pattern.permute.xlu0 0
    %1820 = vperm.xlu0 %1819, %v1753
    %v1821 = vpop.permute.xlu0 %1820
    %1822 = vset.pattern.permute.xlu0 0
    %1823 = vperm.xlu0 %1822, %v1754
    %v1824 = vpop.permute.xlu0 %1823
    %1825 = vset.pattern.permute.xlu0 0
    %1826 = vperm.xlu0 %1825, %v1755
    %v1827 = vpop.permute.xlu0 %1826
    %1828 = vset.pattern.permute.xlu0 0
    %1829 = vperm.xlu0 %1828, %v1756
    %v1830 = vpop.permute.xlu0 %1829
    %1831 = vset.pattern.permute.xlu0 0
    %1832 = vperm.xlu0 %1831, %v1757
    %v1833 = vpop.permute.xlu0 %1832
    %1834 = vset.pattern.permute.xlu0 0
    %1835 = vperm.xlu0 %1834, %v1758
    %v1836 = vpop.permute.xlu0 %1835
    %1837 = vset.pattern.permute.xlu0 0
    %1838 = vperm.xlu0 %1837, %v1759
    %v1839 = vpop.permute.xlu0 %1838
    %1840 = vset.pattern.permute.xlu0 0
    %1841 = vperm.xlu0 %1840, %v1760
    %v1842 = vpop.permute.xlu0 %1841
    %1843 = vset.pattern.permute.xlu0 0
    %1844 = vperm.xlu0 %1843, %v1761
    %v1845 = vpop.permute.xlu0 %1844
    %1846 = vset.pattern.permute.xlu0 0
    %1847 = vperm.xlu0 %1846, %v1762
    %v1848 = vpop.permute.xlu0 %1847
    %1849 = vset.pattern.permute.xlu0 0
    %1850 = vperm.xlu0 %1849, %v1763
    %v1851 = vpop.permute.xlu0 %1850
    %1852 = vset.pattern.permute.xlu0 0
    %1853 = vperm.xlu0 %1852, %v1764
    %v1854 = vpop.permute.xlu0 %1853
    %1855 = vset.pattern.permute.xlu0 0
    %1856 = vperm.xlu0 %1855, %v1765
    %v1857 = vpop.permute.xlu0 %1856
    %1858 = vset.pattern.permute.xlu0 0
    %1859 = vperm.xlu0 %1858, %v1766
    %v1860 = vpop.permute.xlu0 %1859
    %1861 = vset.pattern.permute.xlu0 0
    %1862 = vperm.xlu0 %1861, %v1767
    %v1863 = vpop.permute.xlu0 %1862
    %v1864 = vperm.slane %v1794, %v634
    %v1865 = vperm.slane %v1797, %v636
    %v1866 = vsel %vm638, %v1865, %v1864
    %v1867 = vperm.slane %v1800, %v634
    %v1868 = vperm.slane %v1803, %v636
    %v1869 = vsel %vm638, %v1868, %v1867
    %v1870 = vperm.slane %v1806, %v634
    %v1871 = vperm.slane %v1809, %v636
    %v1872 = vsel %vm638, %v1871, %v1870
    %v1873 = vperm.slane %v1812, %v634
    %v1874 = vperm.slane %v1815, %v636
    %v1875 = vsel %vm638, %v1874, %v1873
    %v1876 = vperm.slane %v1818, %v634
    %v1877 = vperm.slane %v1821, %v636
    %v1878 = vsel %vm638, %v1877, %v1876
    %v1879 = vperm.slane %v1824, %v634
    %v1880 = vperm.slane %v1827, %v636
    %v1881 = vsel %vm638, %v1880, %v1879
    %v1882 = vperm.slane %v1830, %v634
    %v1883 = vperm.slane %v1833, %v636
    %v1884 = vsel %vm638, %v1883, %v1882
    %v1885 = vperm.slane %v1836, %v634
    %v1886 = vperm.slane %v1839, %v636
    %v1887 = vsel %vm638, %v1886, %v1885
    %v1888 = vperm.slane %v1842, %v634
    %v1889 = vperm.slane %v1845, %v636
    %v1890 = vsel %vm638, %v1889, %v1888
    %v1891 = vperm.slane %v1848, %v634
    %v1892 = vperm.slane %v1851, %v636
    %v1893 = vsel %vm638, %v1892, %v1891
    %v1894 = vperm.slane %v1854, %v634
    %v1895 = vperm.slane %v1857, %v636
    %v1896 = vsel %vm638, %v1895, %v1894
    %v1897 = vperm.slane %v1860, %v634
    %v1898 = vperm.slane %v1863, %v636
    %v1899 = vsel %vm638, %v1898, %v1897
    %v1900 = vsel %vm673, %v1869, %v1866
    %v1901 = vsel %vm675, %v1872, %v1900
    %v1902 = vsel %vm677, %v1875, %v1901
    %v1903 = vsel %vm679, %v1878, %v1902
    %v1904 = vsel %vm681, %v1881, %v1903
    %v1905 = vsel %vm683, %v1884, %v1904
    %v1906 = vsel %vm685, %v1887, %v1905
    %v1907 = vsel %vm673, %v1893, %v1890
    %v1908 = vsel %vm675, %v1896, %v1907
    %v1909 = vsel %vm677, %v1899, %v1908
    %v1912 = vsel %vm692, %v1906, -inf
    %1913 = vmax.xlane.f32.xlu0 %v1912
    %v1914 = vpop.xlane.xlu0 %1913
    %v1915 = vsel %vm696, %v1909, -inf
    %1916 = vmax.xlane.f32.xlu0 %v1915
    %v1917 = vpop.xlane.xlu0 %1916
    %v1920 = vperm.slane %v1914, 0
    %v1921 = vperm.slane %v1914, 1
    %v1922 = vperm.slane %v1914, 2
    %v1923 = vperm.slane %v1914, 3
    %v1924 = vperm.slane %v1914, 4
    %v1925 = vperm.slane %v1914, 5
    %v1926 = vperm.slane %v1914, 6
    %v1927 = vperm.slane %v1914, 7
    %v1928 = vperm.slane %v1917, 0
    %v1929 = vperm.slane %v1917, 1
    %v1930 = vperm.slane %v1917, 2
    %v1931 = vperm.slane %v1917, 3
    %v1944 = vsub.f32 %v1744, %v1920
    %v1945 = vsub.f32 %v1745, %v1920
    %v1946 = vsub.f32 %v1746, %v1921
    %v1947 = vsub.f32 %v1747, %v1921
    %v1948 = vsub.f32 %v1748, %v1922
    %v1949 = vsub.f32 %v1749, %v1922
    %v1950 = vsub.f32 %v1750, %v1923
    %v1951 = vsub.f32 %v1751, %v1923
    %v1952 = vsub.f32 %v1752, %v1924
    %v1953 = vsub.f32 %v1753, %v1924
    %v1954 = vsub.f32 %v1754, %v1925
    %v1955 = vsub.f32 %v1755, %v1925
    %v1956 = vsub.f32 %v1756, %v1926
    %v1957 = vsub.f32 %v1757, %v1926
    %v1958 = vsub.f32 %v1758, %v1927
    %v1959 = vsub.f32 %v1759, %v1927
    %v1960 = vsub.f32 %v1760, %v1928
    %v1961 = vsub.f32 %v1761, %v1928
    %v1962 = vsub.f32 %v1762, %v1929
    %v1963 = vsub.f32 %v1763, %v1929
    %v1964 = vsub.f32 %v1764, %v1930
    %v1965 = vsub.f32 %v1765, %v1930
    %v1966 = vsub.f32 %v1766, %v1931
    %v1967 = vsub.f32 %v1767, %v1931
    %v1968 = vmul.f32 %v1944, 1.442695
    %v1969 = vpow.pop %v1968
    %v1970 = vmul.f32 %v1945, 1.442695
    %v1971 = vpow.pop %v1970
    %v1972 = vmul.f32 %v1946, 1.442695
    %v1973 = vpow.pop %v1972
    %v1974 = vmul.f32 %v1947, 1.442695
    %v1975 = vpow.pop %v1974
    %v1976 = vmul.f32 %v1948, 1.442695
    %v1977 = vpow.pop %v1976
    %v1978 = vmul.f32 %v1949, 1.442695
    %v1979 = vpow.pop %v1978
    %v1980 = vmul.f32 %v1950, 1.442695
    %v1981 = vpow.pop %v1980
    %v1982 = vmul.f32 %v1951, 1.442695
    %v1983 = vpow.pop %v1982
    %v1984 = vmul.f32 %v1952, 1.442695
    %v1985 = vpow.pop %v1984
    %v1986 = vmul.f32 %v1953, 1.442695
    %v1987 = vpow.pop %v1986
    %v1988 = vmul.f32 %v1954, 1.442695
    %v1989 = vpow.pop %v1988
    %v1990 = vmul.f32 %v1955, 1.442695
    %v1991 = vpow.pop %v1990
    %v1992 = vmul.f32 %v1956, 1.442695
    %v1993 = vpow.pop %v1992
    %v1994 = vmul.f32 %v1957, 1.442695
    %v1995 = vpow.pop %v1994
    %v1996 = vmul.f32 %v1958, 1.442695
    %v1997 = vpow.pop %v1996
    %v1998 = vmul.f32 %v1959, 1.442695
    %v1999 = vpow.pop %v1998
    %v2000 = vmul.f32 %v1960, 1.442695
    %v2001 = vpow.pop %v2000
    %v2002 = vmul.f32 %v1961, 1.442695
    %v2003 = vpow.pop %v2002
    %v2004 = vmul.f32 %v1962, 1.442695
    %v2005 = vpow.pop %v2004
    %v2006 = vmul.f32 %v1963, 1.442695
    %v2007 = vpow.pop %v2006
    %v2008 = vmul.f32 %v1964, 1.442695
    %v2009 = vpow.pop %v2008
    %v2010 = vmul.f32 %v1965, 1.442695
    %v2011 = vpow.pop %v2010
    %v2012 = vmul.f32 %v1966, 1.442695
    %v2013 = vpow.pop %v2012
    %v2014 = vmul.f32 %v1967, 1.442695
    %v2015 = vpow.pop %v2014
    %2040 = vset.pattern.permute.xlu0 0
    %2041 = vperm.xlu0 %2040, %v1969
    %v2042 = vpop.permute.xlu0 %2041
    %2043 = vset.pattern.permute.xlu0 0
    %2044 = vperm.xlu0 %2043, %v1971
    %v2045 = vpop.permute.xlu0 %2044
    %2046 = vset.pattern.permute.xlu0 0
    %2047 = vperm.xlu0 %2046, %v1973
    %v2048 = vpop.permute.xlu0 %2047
    %2049 = vset.pattern.permute.xlu0 0
    %2050 = vperm.xlu0 %2049, %v1975
    %v2051 = vpop.permute.xlu0 %2050
    %2052 = vset.pattern.permute.xlu0 0
    %2053 = vperm.xlu0 %2052, %v1977
    %v2054 = vpop.permute.xlu0 %2053
    %2055 = vset.pattern.permute.xlu0 0
    %2056 = vperm.xlu0 %2055, %v1979
    %v2057 = vpop.permute.xlu0 %2056
    %2058 = vset.pattern.permute.xlu0 0
    %2059 = vperm.xlu0 %2058, %v1981
    %v2060 = vpop.permute.xlu0 %2059
    %2061 = vset.pattern.permute.xlu0 0
    %2062 = vperm.xlu0 %2061, %v1983
    %v2063 = vpop.permute.xlu0 %2062
    %2064 = vset.pattern.permute.xlu0 0
    %2065 = vperm.xlu0 %2064, %v1985
    %v2066 = vpop.permute.xlu0 %2065
    %2067 = vset.pattern.permute.xlu0 0
    %2068 = vperm.xlu0 %2067, %v1987
    %v2069 = vpop.permute.xlu0 %2068
    %2070 = vset.pattern.permute.xlu0 0
    %2071 = vperm.xlu0 %2070, %v1989
    %v2072 = vpop.permute.xlu0 %2071
    %2073 = vset.pattern.permute.xlu0 0
    %2074 = vperm.xlu0 %2073, %v1991
    %v2075 = vpop.permute.xlu0 %2074
    %2076 = vset.pattern.permute.xlu0 0
    %2077 = vperm.xlu0 %2076, %v1993
    %v2078 = vpop.permute.xlu0 %2077
    %2079 = vset.pattern.permute.xlu0 0
    %2080 = vperm.xlu0 %2079, %v1995
    %v2081 = vpop.permute.xlu0 %2080
    %2082 = vset.pattern.permute.xlu0 0
    %2083 = vperm.xlu0 %2082, %v1997
    %v2084 = vpop.permute.xlu0 %2083
    %2085 = vset.pattern.permute.xlu0 0
    %2086 = vperm.xlu0 %2085, %v1999
    %v2087 = vpop.permute.xlu0 %2086
    %2088 = vset.pattern.permute.xlu0 0
    %2089 = vperm.xlu0 %2088, %v2001
    %v2090 = vpop.permute.xlu0 %2089
    %2091 = vset.pattern.permute.xlu0 0
    %2092 = vperm.xlu0 %2091, %v2003
    %v2093 = vpop.permute.xlu0 %2092
    %2094 = vset.pattern.permute.xlu0 0
    %2095 = vperm.xlu0 %2094, %v2005
    %v2096 = vpop.permute.xlu0 %2095
    %2097 = vset.pattern.permute.xlu0 0
    %2098 = vperm.xlu0 %2097, %v2007
    %v2099 = vpop.permute.xlu0 %2098
    %2100 = vset.pattern.permute.xlu0 0
    %2101 = vperm.xlu0 %2100, %v2009
    %v2102 = vpop.permute.xlu0 %2101
    %2103 = vset.pattern.permute.xlu0 0
    %2104 = vperm.xlu0 %2103, %v2011
    %v2105 = vpop.permute.xlu0 %2104
    %2106 = vset.pattern.permute.xlu0 0
    %2107 = vperm.xlu0 %2106, %v2013
    %v2108 = vpop.permute.xlu0 %2107
    %2109 = vset.pattern.permute.xlu0 0
    %2110 = vperm.xlu0 %2109, %v2015
    %v2111 = vpop.permute.xlu0 %2110
    %v2112 = vperm.slane %v2042, %v634
    %v2113 = vperm.slane %v2045, %v636
    %v2114 = vsel %vm638, %v2113, %v2112
    %v2115 = vperm.slane %v2048, %v634
    %v2116 = vperm.slane %v2051, %v636
    %v2117 = vsel %vm638, %v2116, %v2115
    %v2118 = vperm.slane %v2054, %v634
    %v2119 = vperm.slane %v2057, %v636
    %v2120 = vsel %vm638, %v2119, %v2118
    %v2121 = vperm.slane %v2060, %v634
    %v2122 = vperm.slane %v2063, %v636
    %v2123 = vsel %vm638, %v2122, %v2121
    %v2124 = vperm.slane %v2066, %v634
    %v2125 = vperm.slane %v2069, %v636
    %v2126 = vsel %vm638, %v2125, %v2124
    %v2127 = vperm.slane %v2072, %v634
    %v2128 = vperm.slane %v2075, %v636
    %v2129 = vsel %vm638, %v2128, %v2127
    %v2130 = vperm.slane %v2078, %v634
    %v2131 = vperm.slane %v2081, %v636
    %v2132 = vsel %vm638, %v2131, %v2130
    %v2133 = vperm.slane %v2084, %v634
    %v2134 = vperm.slane %v2087, %v636
    %v2135 = vsel %vm638, %v2134, %v2133
    %v2136 = vperm.slane %v2090, %v634
    %v2137 = vperm.slane %v2093, %v636
    %v2138 = vsel %vm638, %v2137, %v2136
    %v2139 = vperm.slane %v2096, %v634
    %v2140 = vperm.slane %v2099, %v636
    %v2141 = vsel %vm638, %v2140, %v2139
    %v2142 = vperm.slane %v2102, %v634
    %v2143 = vperm.slane %v2105, %v636
    %v2144 = vsel %vm638, %v2143, %v2142
    %v2145 = vperm.slane %v2108, %v634
    %v2146 = vperm.slane %v2111, %v636
    %v2147 = vsel %vm638, %v2146, %v2145
    %v2148 = vsel %vm673, %v2117, %v2114
    %v2149 = vsel %vm675, %v2120, %v2148
    %v2150 = vsel %vm677, %v2123, %v2149
    %v2151 = vsel %vm679, %v2126, %v2150
    %v2152 = vsel %vm681, %v2129, %v2151
    %v2153 = vsel %vm683, %v2132, %v2152
    %v2154 = vsel %vm685, %v2135, %v2153
    %v2155 = vsel %vm673, %v2141, %v2138
    %v2156 = vsel %vm675, %v2144, %v2155
    %v2157 = vsel %vm677, %v2147, %v2156
    %v2160 = vsel %vm21, %v2154, 0.0
    %v2161 = vsel %vm22, %v2157, 0.0
    %v2162 = vsel %vm692, %v2160, 0.0
    %2163 = vadd.xlane.f32.xlu0 %v2162
    %v2164 = vpop.xlane.xlu0 %2163
    %v2165 = vsel %vm696, %v2161, 0.0
    %2166 = vadd.xlane.f32.xlu0 %v2165
    %v2167 = vpop.xlane.xlu0 %2166
    %v2168 = vrcp.pop %v2164
    %v2169 = vrcp.pop %v2167
    %v2170 = vmul.f32 %v2160, %v2168
    %v2171 = vmul.f32 %v2161, %v2169
    %v2172 = vpack.c.bf16 %v2171, %v2170
    %2173 = vrot.lane.b32.xlu0 %v959, 92
    %v2174 = vpop.permute.xlu0 %2173
    %v2176 = vsel %vm692, %v2172, 0
    %v2179 = vsel %vm963, %v2174, 0
    %2181 = vmatpush.bf16.msra.mxu0 0
    %2182 = vmatpush.bf16.msra.mxu0 0
    %2183 = vmatpush.bf16.msra.mxu0 0
    %2184 = vmatpush.bf16.msra.mxu0 0
    %2185 = vmatpush.bf16.msra.mxu0 0
    %2186 = vmatpush.bf16.msra.mxu0 0
    %2187 = vmatpush.bf16.msra.mxu0 0
    %2188 = vmatpush.bf16.msra.mxu0 %v2179
    %2189 = vmatmul.bf16.gmra.mxu0 %v2176
    %v2190 = vpop.f32.mrf.mxu0
    %v2191 = vadd.f32 0.0, %v2190
    %v2192 = vpop.f32.mrf.mxu0
    %v2193 = vadd.f32 0.0, %v2192
    %2194 = vdwg.mxu0
    %2197 = vrot.lane.b32.xlu0 %v1596, 18
    %v2198 = vpop.permute.xlu0 %2197
    %2199 = vrot.lane.b32.xlu0 %v1598, 18
    %v2200 = vpop.permute.xlu0 %2199
    %2205 = vrot.lane.b32.xlu0 %v2191, 36
    %v2206 = vpop.permute.xlu0 %2205
    %2207 = vrot.lane.b32.xlu0 %v2193, 36
    %v2208 = vpop.permute.xlu0 %2207
    %v2211 = vsel %vm257, %v977, %v2198
    %v2212 = vsel %vm257, %v979, %v2200
    %vm2213 = vcmask 293888
    %v2214 = vsel %vm2213, %v2211, %v2206
    %v2215 = vsel %vm2213, %v2212, %v2208
    %v2216 = vperm.slane %v36, 0
    %v2217 = vmul.f32 %v2214, %v2216
    %v2218 = vmul.f32 %v2215, %v2216
    %v2219 = vperm.slane %v37, 0
    %v2220 = vadd.f32 %v2217, %v2219
    %v2221 = vadd.f32 %v2218, %v2219
    %vm2222 = vcmp.gt.f32.partialorder %v2220, 0.0
    %vm2223 = vcmp.gt.f32.partialorder %v2221, 0.0
    %v2224 = vmul.f32 %v2220, 1.442695
    %v2225 = vpow.pop %v2224
    %v2226 = vmul.f32 %v2221, 1.442695
    %v2227 = vpow.pop %v2226
    %v2228 = vsub.f32 %v2225, 1.0
    %v2229 = vsub.f32 %v2227, 1.0
    %v2230 = vsel %vm2222, %v2220, %v2228
    %v2231 = vsel %vm2223, %v2221, %v2229
    %v2232 = vld [vmem:[%s2 + $0x20] sm:$0xf]
    %v2233 = vld [vmem:[%s2 + $0x24] sm:$0xf]
    %v2234 = vld [vmem:[%s2 + $0x28] sm:$0xf]
    %v2235 = vld [vmem:[%s2 + $0x2c] sm:$0xf]
    %v2236 = vld [vmem:[%s2 + $0x30] sm:$0xf]
    %v2237 = vld [vmem:[%s2 + $0x34] sm:$0xf]
    %v2238 = vld [vmem:[%s2 + $0x38] sm:$0x7]
    %v2239 = vld [vmem:[%s2 + $0x40] sm:$0xf]
    %v2240 = vld [vmem:[%s2 + $0x44] sm:$0xf]
    %v2241 = vld [vmem:[%s2 + $0x48] sm:$0xf]
    %v2242 = vld [vmem:[%s2 + $0x4c] sm:$0xf]
    %v2243 = vld [vmem:[%s2 + $0x50] sm:$0xf]
    %v2244 = vld [vmem:[%s2 + $0x54] sm:$0xf]
    %v2245 = vld [vmem:[%s2 + $0x58] sm:$0x7]
    %v2246 = vld [vmem:[%s3 + $0x8] sm:$0x1]
    %v2247 = vld [vmem:[%s3 + $0x9] sm:$0x1]
    %v2248 = vld [vmem:[%s3 + $0xa] sm:$0x1]
    %v2249 = vld [vmem:[%s3 + $0xb] sm:$0x1]
    %v2250 = vld [vmem:[%s3 + $0xc] sm:$0x1]
    %v2251 = vpack.c.bf16 %v2231, %v2230
    %v2252 = vperm.slane %v2246, 0
    %v2260 = vunpack.c.l.b16 %v2232
    %v2261 = vunpack.c.l.b16 %v2233
    %v2262 = vunpack.c.l.b16 %v2234
    %v2263 = vunpack.c.l.b16 %v2235
    %v2264 = vunpack.c.l.b16 %v2236
    %v2265 = vunpack.c.l.b16 %v2237
    %v2266 = vunpack.c.l.b16 %v2238
    %v2267 = vpack.c.b16 %v2261, %v2260
    %v2268 = vpack.c.b16 %v2263, %v2262
    %v2269 = vpack.c.b16 %v2265, %v2264
    %v2270 = vpack.c.b16 %v2266, %v2266
    %vm2274 = vcmask 441344
    %v2276 = vsel %vm2274, %v2251, 0
    %v2279 = vsel %vm53, %v2270, 0
    %2281 = vmatpush.bf16.msra.mxu0 0
    %2282 = vmatpush.bf16.msra.mxu0 0
    %2283 = vmatpush.bf16.msra.mxu0 0
    %2284 = vmatpush.bf16.msra.mxu0 0
    %2285 = vmatpush.bf16.msra.mxu0 %v2279
    %2286 = vmatpush.bf16.msra.mxu0 %v2269
    %2287 = vmatpush.bf16.msra.mxu0 %v2268
    %2288 = vmatpush.bf16.msra.mxu0 %v2267
    %2289 = vmatmul.bf16.gmra.mxu0 %v2276
    %v2290 = vpop.f32.mrf.mxu0
    %v2291 = vadd.f32 %v2252, %v2290
    %v2292 = vpop.f32.mrf.mxu0
    %v2293 = vadd.f32 %v2252, %v2292
    %2294 = vdwg.mxu0
    %v2295 = vperm.slane %v2247, 0
    %v2303 = vunpack.c.l.b16 %v2239
    %v2304 = vunpack.c.l.b16 %v2240
    %v2305 = vunpack.c.l.b16 %v2241
    %v2306 = vunpack.c.l.b16 %v2242
    %v2307 = vunpack.c.l.b16 %v2243
    %v2308 = vunpack.c.l.b16 %v2244
    %v2309 = vunpack.c.l.b16 %v2245
    %v2310 = vpack.c.b16 %v2304, %v2303
    %v2311 = vpack.c.b16 %v2306, %v2305
    %v2312 = vpack.c.b16 %v2308, %v2307
    %v2313 = vpack.c.b16 %v2309, %v2309
    %v2318 = vsel %vm53, %v2313, 0
    %2320 = vmatpush.bf16.msra.mxu0 0
    %2321 = vmatpush.bf16.msra.mxu0 0
    %2322 = vmatpush.bf16.msra.mxu0 0
    %2323 = vmatpush.bf16.msra.mxu0 0
    %2324 = vmatpush.bf16.msra.mxu0 %v2318
    %2325 = vmatpush.bf16.msra.mxu0 %v2312
    %2326 = vmatpush.bf16.msra.mxu0 %v2311
    %2327 = vmatpush.bf16.msra.mxu0 %v2310
    %2328 = vmatmul.bf16.gmra.mxu0 %v2276
    %v2329 = vpop.f32.mrf.mxu0
    %v2330 = vadd.f32 %v2295, %v2329
    %v2331 = vpop.f32.mrf.mxu0
    %v2332 = vadd.f32 %v2295, %v2331
    %2333 = vdwg.mxu0
    %v2336 = vrot.slane %v2330, 1
    %v2337 = vrot.slane %v2330, 2
    %v2338 = vrot.slane %v2330, 3
    %v2339 = vrot.slane %v2330, 4
    %v2340 = vrot.slane %v2330, 5
    %v2341 = vrot.slane %v2330, 6
    %v2342 = vrot.slane %v2330, 7
    %v2343 = vrot.slane %v2332, 1
    %v2344 = vrot.slane %v2332, 2
    %v2345 = vrot.slane %v2332, 3
    %v2346 = vperm.slane %v2330, 0
    %v2347 = vperm.slane %v2336, 0
    %v2348 = vperm.slane %v2337, 0
    %v2349 = vperm.slane %v2338, 0
    %v2350 = vperm.slane %v2339, 0
    %v2351 = vperm.slane %v2340, 0
    %v2352 = vperm.slane %v2341, 0
    %v2353 = vperm.slane %v2342, 0
    %v2354 = vperm.slane %v2332, 0
    %v2355 = vperm.slane %v2343, 0
    %v2356 = vperm.slane %v2344, 0
    %v2357 = vperm.slane %v2345, 0
    %v2370 = vadd.f32 %v2291, %v2346
    %v2371 = vadd.f32 %v2293, %v2346
    %v2372 = vadd.f32 %v2291, %v2347
    %v2373 = vadd.f32 %v2293, %v2347
    %v2374 = vadd.f32 %v2291, %v2348
    %v2375 = vadd.f32 %v2293, %v2348
    %v2376 = vadd.f32 %v2291, %v2349
    %v2377 = vadd.f32 %v2293, %v2349
    %v2378 = vadd.f32 %v2291, %v2350
    %v2379 = vadd.f32 %v2293, %v2350
    %v2380 = vadd.f32 %v2291, %v2351
    %v2381 = vadd.f32 %v2293, %v2351
    %v2382 = vadd.f32 %v2291, %v2352
    %v2383 = vadd.f32 %v2293, %v2352
    %v2384 = vadd.f32 %v2291, %v2353
    %v2385 = vadd.f32 %v2293, %v2353
    %v2386 = vadd.f32 %v2291, %v2354
    %v2387 = vadd.f32 %v2293, %v2354
    %v2388 = vadd.f32 %v2291, %v2355
    %v2389 = vadd.f32 %v2293, %v2355
    %v2390 = vadd.f32 %v2291, %v2356
    %v2391 = vadd.f32 %v2293, %v2356
    %v2392 = vadd.f32 %v2291, %v2357
    %v2393 = vadd.f32 %v2293, %v2357
    %vm2394 = vcmp.gt.f32.partialorder %v2370, 0.0
    %vm2395 = vcmp.gt.f32.partialorder %v2371, 0.0
    %vm2396 = vcmp.gt.f32.partialorder %v2372, 0.0
    %vm2397 = vcmp.gt.f32.partialorder %v2373, 0.0
    %vm2398 = vcmp.gt.f32.partialorder %v2374, 0.0
    %vm2399 = vcmp.gt.f32.partialorder %v2375, 0.0
    %vm2400 = vcmp.gt.f32.partialorder %v2376, 0.0
    %vm2401 = vcmp.gt.f32.partialorder %v2377, 0.0
    %vm2402 = vcmp.gt.f32.partialorder %v2378, 0.0
    %vm2403 = vcmp.gt.f32.partialorder %v2379, 0.0
    %vm2404 = vcmp.gt.f32.partialorder %v2380, 0.0
    %vm2405 = vcmp.gt.f32.partialorder %v2381, 0.0
    %vm2406 = vcmp.gt.f32.partialorder %v2382, 0.0
    %vm2407 = vcmp.gt.f32.partialorder %v2383, 0.0
    %vm2408 = vcmp.gt.f32.partialorder %v2384, 0.0
    %vm2409 = vcmp.gt.f32.partialorder %v2385, 0.0
    %vm2410 = vcmp.gt.f32.partialorder %v2386, 0.0
    %vm2411 = vcmp.gt.f32.partialorder %v2387, 0.0
    %vm2412 = vcmp.gt.f32.partialorder %v2388, 0.0
    %vm2413 = vcmp.gt.f32.partialorder %v2389, 0.0
    %vm2414 = vcmp.gt.f32.partialorder %v2390, 0.0
    %vm2415 = vcmp.gt.f32.partialorder %v2391, 0.0
    %vm2416 = vcmp.gt.f32.partialorder %v2392, 0.0
    %vm2417 = vcmp.gt.f32.partialorder %v2393, 0.0
    %v2418 = vmul.f32 %v2370, 0.2
    %v2419 = vmul.f32 %v2371, 0.2
    %v2420 = vmul.f32 %v2372, 0.2
    %v2421 = vmul.f32 %v2373, 0.2
    %v2422 = vmul.f32 %v2374, 0.2
    %v2423 = vmul.f32 %v2375, 0.2
    %v2424 = vmul.f32 %v2376, 0.2
    %v2425 = vmul.f32 %v2377, 0.2
    %v2426 = vmul.f32 %v2378, 0.2
    %v2427 = vmul.f32 %v2379, 0.2
    %v2428 = vmul.f32 %v2380, 0.2
    %v2429 = vmul.f32 %v2381, 0.2
    %v2430 = vmul.f32 %v2382, 0.2
    %v2431 = vmul.f32 %v2383, 0.2
    %v2432 = vmul.f32 %v2384, 0.2
    %v2433 = vmul.f32 %v2385, 0.2
    %v2434 = vmul.f32 %v2386, 0.2
    %v2435 = vmul.f32 %v2387, 0.2
    %v2436 = vmul.f32 %v2388, 0.2
    %v2437 = vmul.f32 %v2389, 0.2
    %v2438 = vmul.f32 %v2390, 0.2
    %v2439 = vmul.f32 %v2391, 0.2
    %v2440 = vmul.f32 %v2392, 0.2
    %v2441 = vmul.f32 %v2393, 0.2
    %v2442 = vsel %vm2394, %v2370, %v2418
    %v2443 = vsel %vm2395, %v2371, %v2419
    %v2444 = vsel %vm2396, %v2372, %v2420
    %v2445 = vsel %vm2397, %v2373, %v2421
    %v2446 = vsel %vm2398, %v2374, %v2422
    %v2447 = vsel %vm2399, %v2375, %v2423
    %v2448 = vsel %vm2400, %v2376, %v2424
    %v2449 = vsel %vm2401, %v2377, %v2425
    %v2450 = vsel %vm2402, %v2378, %v2426
    %v2451 = vsel %vm2403, %v2379, %v2427
    %v2452 = vsel %vm2404, %v2380, %v2428
    %v2453 = vsel %vm2405, %v2381, %v2429
    %v2454 = vsel %vm2406, %v2382, %v2430
    %v2455 = vsel %vm2407, %v2383, %v2431
    %v2456 = vsel %vm2408, %v2384, %v2432
    %v2457 = vsel %vm2409, %v2385, %v2433
    %v2458 = vsel %vm2410, %v2386, %v2434
    %v2459 = vsel %vm2411, %v2387, %v2435
    %v2460 = vsel %vm2412, %v2388, %v2436
    %v2461 = vsel %vm2413, %v2389, %v2437
    %v2462 = vsel %vm2414, %v2390, %v2438
    %v2463 = vsel %vm2415, %v2391, %v2439
    %v2464 = vsel %vm2416, %v2392, %v2440
    %v2465 = vsel %vm2417, %v2393, %v2441
    %v2466 = vperm.slane %v2248, 0
    %v2467 = vmul.f32 %v2442, %v2466
    %v2468 = vmul.f32 %v2443, %v2466
    %v2469 = vmul.f32 %v2444, %v2466
    %v2470 = vmul.f32 %v2445, %v2466
    %v2471 = vmul.f32 %v2446, %v2466
    %v2472 = vmul.f32 %v2447, %v2466
    %v2473 = vmul.f32 %v2448, %v2466
    %v2474 = vmul.f32 %v2449, %v2466
    %v2475 = vmul.f32 %v2450, %v2466
    %v2476 = vmul.f32 %v2451, %v2466
    %v2477 = vmul.f32 %v2452, %v2466
    %v2478 = vmul.f32 %v2453, %v2466
    %v2479 = vmul.f32 %v2454, %v2466
    %v2480 = vmul.f32 %v2455, %v2466
    %v2481 = vmul.f32 %v2456, %v2466
    %v2482 = vmul.f32 %v2457, %v2466
    %v2483 = vmul.f32 %v2458, %v2466
    %v2484 = vmul.f32 %v2459, %v2466
    %v2485 = vmul.f32 %v2460, %v2466
    %v2486 = vmul.f32 %v2461, %v2466
    %v2487 = vmul.f32 %v2462, %v2466
    %v2488 = vmul.f32 %v2463, %v2466
    %v2489 = vmul.f32 %v2464, %v2466
    %v2490 = vmul.f32 %v2465, %v2466
    %v2491 = vpack.c.bf16 %v2291, %v2291
    %v2492 = vpack.c.bf16 %v2293, %v2293
    %vm2493 = vcmask 130048
    %v2494 = vsel %vm2493, %v2467, 0.0
    %2495 = vadd.xlane.f32.xlu0 %v2494
    %v2496 = vpop.xlane.xlu0 %2495
    %vm2497 = vcmask 125952
    %v2498 = vsel %vm2497, %v2468, 0.0
    %2499 = vadd.xlane.f32.xlu0 %v2498
    %v2500 = vpop.xlane.xlu0 %2499
    %v2501 = vsel %vm2493, %v2469, 0.0
    %2502 = vadd.xlane.f32.xlu0 %v2501
    %v2503 = vpop.xlane.xlu0 %2502
    %v2504 = vsel %vm2497, %v2470, 0.0
    %2505 = vadd.xlane.f32.xlu0 %v2504
    %v2506 = vpop.xlane.xlu0 %2505
    %v2507 = vsel %vm2493, %v2471, 0.0
    %2508 = vadd.xlane.f32.xlu0 %v2507
    %v2509 = vpop.xlane.xlu0 %2508
    %v2510 = vsel %vm2497, %v2472, 0.0
    %2511 = vadd.xlane.f32.xlu0 %v2510
    %v2512 = vpop.xlane.xlu0 %2511
    %v2513 = vsel %vm2493, %v2473, 0.0
    %2514 = vadd.xlane.f32.xlu0 %v2513
    %v2515 = vpop.xlane.xlu0 %2514
    %v2516 = vsel %vm2497, %v2474, 0.0
    %2517 = vadd.xlane.f32.xlu0 %v2516
    %v2518 = vpop.xlane.xlu0 %2517
    %v2519 = vsel %vm2493, %v2475, 0.0
    %2520 = vadd.xlane.f32.xlu0 %v2519
    %v2521 = vpop.xlane.xlu0 %2520
    %v2522 = vsel %vm2497, %v2476, 0.0
    %2523 = vadd.xlane.f32.xlu0 %v2522
    %v2524 = vpop.xlane.xlu0 %2523
    %v2525 = vsel %vm2493, %v2477, 0.0
    %2526 = vadd.xlane.f32.xlu0 %v2525
    %v2527 = vpop.xlane.xlu0 %2526
    %v2528 = vsel %vm2497, %v2478, 0.0
    %2529 = vadd.xlane.f32.xlu0 %v2528
    %v2530 = vpop.xlane.xlu0 %2529
    %v2531 = vsel %vm2493, %v2479, 0.0
    %2532 = vadd.xlane.f32.xlu0 %v2531
    %v2533 = vpop.xlane.xlu0 %2532
    %v2534 = vsel %vm2497, %v2480, 0.0
    %2535 = vadd.xlane.f32.xlu0 %v2534
    %v2536 = vpop.xlane.xlu0 %2535
    %v2537 = vsel %vm2493, %v2481, 0.0
    %2538 = vadd.xlane.f32.xlu0 %v2537
    %v2539 = vpop.xlane.xlu0 %2538
    %v2540 = vsel %vm2497, %v2482, 0.0
    %2541 = vadd.xlane.f32.xlu0 %v2540
    %v2542 = vpop.xlane.xlu0 %2541
    %v2543 = vsel %vm2493, %v2483, 0.0
    %2544 = vadd.xlane.f32.xlu0 %v2543
    %v2545 = vpop.xlane.xlu0 %2544
    %v2546 = vsel %vm2497, %v2484, 0.0
    %2547 = vadd.xlane.f32.xlu0 %v2546
    %v2548 = vpop.xlane.xlu0 %2547
    %v2549 = vsel %vm2493, %v2485, 0.0
    %2550 = vadd.xlane.f32.xlu0 %v2549
    %v2551 = vpop.xlane.xlu0 %2550
    %v2552 = vsel %vm2497, %v2486, 0.0
    %2553 = vadd.xlane.f32.xlu0 %v2552
    %v2554 = vpop.xlane.xlu0 %2553
    %v2555 = vsel %vm2493, %v2487, 0.0
    %2556 = vadd.xlane.f32.xlu0 %v2555
    %v2557 = vpop.xlane.xlu0 %2556
    %v2558 = vsel %vm2497, %v2488, 0.0
    %2559 = vadd.xlane.f32.xlu0 %v2558
    %v2560 = vpop.xlane.xlu0 %2559
    %v2561 = vsel %vm2493, %v2489, 0.0
    %2562 = vadd.xlane.f32.xlu0 %v2561
    %v2563 = vpop.xlane.xlu0 %2562
    %v2564 = vsel %vm2497, %v2490, 0.0
    %2565 = vadd.xlane.f32.xlu0 %v2564
    %v2566 = vpop.xlane.xlu0 %2565
    %v2567 = vadd.f32 %v2496, %v339
    %v2568 = vadd.f32 %v2500, %v345
    %v2569 = vadd.f32 %v2503, %v352
    %v2570 = vadd.f32 %v2506, %v358
    %v2571 = vadd.f32 %v2509, %v365
    %v2572 = vadd.f32 %v2512, %v371
    %v2573 = vadd.f32 %v2515, %v378
    %v2574 = vadd.f32 %v2518, %v384
    %v2575 = vadd.f32 %v2521, %v391
    %v2576 = vadd.f32 %v2524, %v397
    %v2577 = vadd.f32 %v2527, %v404
    %v2578 = vadd.f32 %v2530, %v410
    %v2579 = vadd.f32 %v2533, %v417
    %v2580 = vadd.f32 %v2536, %v423
    %v2581 = vadd.f32 %v2539, %v430
    %v2582 = vadd.f32 %v2542, %v436
    %v2583 = vadd.f32 %v2545, %v443
    %v2584 = vadd.f32 %v2548, %v449
    %v2585 = vadd.f32 %v2551, %v456
    %v2586 = vadd.f32 %v2554, %v462
    %v2587 = vadd.f32 %v2557, %v469
    %v2588 = vadd.f32 %v2560, %v475
    %v2589 = vadd.f32 %v2563, %v482
    %v2590 = vadd.f32 %v2566, %v488
    %2615 = vset.pattern.permute.xlu0 0
    %2616 = vperm.xlu0 %2615, %v2567
    %v2617 = vpop.permute.xlu0 %2616
    %2618 = vset.pattern.permute.xlu0 0
    %2619 = vperm.xlu0 %2618, %v2568
    %v2620 = vpop.permute.xlu0 %2619
    %2621 = vset.pattern.permute.xlu0 0
    %2622 = vperm.xlu0 %2621, %v2569
    %v2623 = vpop.permute.xlu0 %2622
    %2624 = vset.pattern.permute.xlu0 0
    %2625 = vperm.xlu0 %2624, %v2570
    %v2626 = vpop.permute.xlu0 %2625
    %2627 = vset.pattern.permute.xlu0 0
    %2628 = vperm.xlu0 %2627, %v2571
    %v2629 = vpop.permute.xlu0 %2628
    %2630 = vset.pattern.permute.xlu0 0
    %2631 = vperm.xlu0 %2630, %v2572
    %v2632 = vpop.permute.xlu0 %2631
    %2633 = vset.pattern.permute.xlu0 0
    %2634 = vperm.xlu0 %2633, %v2573
    %v2635 = vpop.permute.xlu0 %2634
    %2636 = vset.pattern.permute.xlu0 0
    %2637 = vperm.xlu0 %2636, %v2574
    %v2638 = vpop.permute.xlu0 %2637
    %2639 = vset.pattern.permute.xlu0 0
    %2640 = vperm.xlu0 %2639, %v2575
    %v2641 = vpop.permute.xlu0 %2640
    %2642 = vset.pattern.permute.xlu0 0
    %2643 = vperm.xlu0 %2642, %v2576
    %v2644 = vpop.permute.xlu0 %2643
    %2645 = vset.pattern.permute.xlu0 0
    %2646 = vperm.xlu0 %2645, %v2577
    %v2647 = vpop.permute.xlu0 %2646
    %2648 = vset.pattern.permute.xlu0 0
    %2649 = vperm.xlu0 %2648, %v2578
    %v2650 = vpop.permute.xlu0 %2649
    %2651 = vset.pattern.permute.xlu0 0
    %2652 = vperm.xlu0 %2651, %v2579
    %v2653 = vpop.permute.xlu0 %2652
    %2654 = vset.pattern.permute.xlu0 0
    %2655 = vperm.xlu0 %2654, %v2580
    %v2656 = vpop.permute.xlu0 %2655
    %2657 = vset.pattern.permute.xlu0 0
    %2658 = vperm.xlu0 %2657, %v2581
    %v2659 = vpop.permute.xlu0 %2658
    %2660 = vset.pattern.permute.xlu0 0
    %2661 = vperm.xlu0 %2660, %v2582
    %v2662 = vpop.permute.xlu0 %2661
    %2663 = vset.pattern.permute.xlu0 0
    %2664 = vperm.xlu0 %2663, %v2583
    %v2665 = vpop.permute.xlu0 %2664
    %2666 = vset.pattern.permute.xlu0 0
    %2667 = vperm.xlu0 %2666, %v2584
    %v2668 = vpop.permute.xlu0 %2667
    %2669 = vset.pattern.permute.xlu0 0
    %2670 = vperm.xlu0 %2669, %v2585
    %v2671 = vpop.permute.xlu0 %2670
    %2672 = vset.pattern.permute.xlu0 0
    %2673 = vperm.xlu0 %2672, %v2586
    %v2674 = vpop.permute.xlu0 %2673
    %2675 = vset.pattern.permute.xlu0 0
    %2676 = vperm.xlu0 %2675, %v2587
    %v2677 = vpop.permute.xlu0 %2676
    %2678 = vset.pattern.permute.xlu0 0
    %2679 = vperm.xlu0 %2678, %v2588
    %v2680 = vpop.permute.xlu0 %2679
    %2681 = vset.pattern.permute.xlu0 0
    %2682 = vperm.xlu0 %2681, %v2589
    %v2683 = vpop.permute.xlu0 %2682
    %2684 = vset.pattern.permute.xlu0 0
    %2685 = vperm.xlu0 %2684, %v2590
    %v2686 = vpop.permute.xlu0 %2685
    %v2687 = vperm.slane %v2617, %v634
    %v2688 = vperm.slane %v2620, %v636
    %v2689 = vsel %vm638, %v2688, %v2687
    %v2690 = vperm.slane %v2623, %v634
    %v2691 = vperm.slane %v2626, %v636
    %v2692 = vsel %vm638, %v2691, %v2690
    %v2693 = vperm.slane %v2629, %v634
    %v2694 = vperm.slane %v2632, %v636
    %v2695 = vsel %vm638, %v2694, %v2693
    %v2696 = vperm.slane %v2635, %v634
    %v2697 = vperm.slane %v2638, %v636
    %v2698 = vsel %vm638, %v2697, %v2696
    %v2699 = vperm.slane %v2641, %v634
    %v2700 = vperm.slane %v2644, %v636
    %v2701 = vsel %vm638, %v2700, %v2699
    %v2702 = vperm.slane %v2647, %v634
    %v2703 = vperm.slane %v2650, %v636
    %v2704 = vsel %vm638, %v2703, %v2702
    %v2705 = vperm.slane %v2653, %v634
    %v2706 = vperm.slane %v2656, %v636
    %v2707 = vsel %vm638, %v2706, %v2705
    %v2708 = vperm.slane %v2659, %v634
    %v2709 = vperm.slane %v2662, %v636
    %v2710 = vsel %vm638, %v2709, %v2708
    %v2711 = vperm.slane %v2665, %v634
    %v2712 = vperm.slane %v2668, %v636
    %v2713 = vsel %vm638, %v2712, %v2711
    %v2714 = vperm.slane %v2671, %v634
    %v2715 = vperm.slane %v2674, %v636
    %v2716 = vsel %vm638, %v2715, %v2714
    %v2717 = vperm.slane %v2677, %v634
    %v2718 = vperm.slane %v2680, %v636
    %v2719 = vsel %vm638, %v2718, %v2717
    %v2720 = vperm.slane %v2683, %v634
    %v2721 = vperm.slane %v2686, %v636
    %v2722 = vsel %vm638, %v2721, %v2720
    %v2723 = vsel %vm673, %v2692, %v2689
    %v2724 = vsel %vm675, %v2695, %v2723
    %v2725 = vsel %vm677, %v2698, %v2724
    %v2726 = vsel %vm679, %v2701, %v2725
    %v2727 = vsel %vm681, %v2704, %v2726
    %v2728 = vsel %vm683, %v2707, %v2727
    %v2729 = vsel %vm685, %v2710, %v2728
    %v2730 = vsel %vm673, %v2716, %v2713
    %v2731 = vsel %vm675, %v2719, %v2730
    %v2732 = vsel %vm677, %v2722, %v2731
    %v2735 = vsel %vm692, %v2729, -inf
    %2736 = vmax.xlane.f32.xlu0 %v2735
    %v2737 = vpop.xlane.xlu0 %2736
    %v2738 = vsel %vm696, %v2732, -inf
    %2739 = vmax.xlane.f32.xlu0 %v2738
    %v2740 = vpop.xlane.xlu0 %2739
    %v2743 = vperm.slane %v2737, 0
    %v2744 = vperm.slane %v2737, 1
    %v2745 = vperm.slane %v2737, 2
    %v2746 = vperm.slane %v2737, 3
    %v2747 = vperm.slane %v2737, 4
    %v2748 = vperm.slane %v2737, 5
    %v2749 = vperm.slane %v2737, 6
    %v2750 = vperm.slane %v2737, 7
    %v2751 = vperm.slane %v2740, 0
    %v2752 = vperm.slane %v2740, 1
    %v2753 = vperm.slane %v2740, 2
    %v2754 = vperm.slane %v2740, 3
    %v2767 = vsub.f32 %v2567, %v2743
    %v2768 = vsub.f32 %v2568, %v2743
    %v2769 = vsub.f32 %v2569, %v2744
    %v2770 = vsub.f32 %v2570, %v2744
    %v2771 = vsub.f32 %v2571, %v2745
    %v2772 = vsub.f32 %v2572, %v2745
    %v2773 = vsub.f32 %v2573, %v2746
    %v2774 = vsub.f32 %v2574, %v2746
    %v2775 = vsub.f32 %v2575, %v2747
    %v2776 = vsub.f32 %v2576, %v2747
    %v2777 = vsub.f32 %v2577, %v2748
    %v2778 = vsub.f32 %v2578, %v2748
    %v2779 = vsub.f32 %v2579, %v2749
    %v2780 = vsub.f32 %v2580, %v2749
    %v2781 = vsub.f32 %v2581, %v2750
    %v2782 = vsub.f32 %v2582, %v2750
    %v2783 = vsub.f32 %v2583, %v2751
    %v2784 = vsub.f32 %v2584, %v2751
    %v2785 = vsub.f32 %v2585, %v2752
    %v2786 = vsub.f32 %v2586, %v2752
    %v2787 = vsub.f32 %v2587, %v2753
    %v2788 = vsub.f32 %v2588, %v2753
    %v2789 = vsub.f32 %v2589, %v2754
    %v2790 = vsub.f32 %v2590, %v2754
    %v2791 = vmul.f32 %v2767, 1.442695
    %v2792 = vpow.pop %v2791
    %v2793 = vmul.f32 %v2768, 1.442695
    %v2794 = vpow.pop %v2793
    %v2795 = vmul.f32 %v2769, 1.442695
    %v2796 = vpow.pop %v2795
    %v2797 = vmul.f32 %v2770, 1.442695
    %v2798 = vpow.pop %v2797
    %v2799 = vmul.f32 %v2771, 1.442695
    %v2800 = vpow.pop %v2799
    %v2801 = vmul.f32 %v2772, 1.442695
    %v2802 = vpow.pop %v2801
    %v2803 = vmul.f32 %v2773, 1.442695
    %v2804 = vpow.pop %v2803
    %v2805 = vmul.f32 %v2774, 1.442695
    %v2806 = vpow.pop %v2805
    %v2807 = vmul.f32 %v2775, 1.442695
    %v2808 = vpow.pop %v2807
    %v2809 = vmul.f32 %v2776, 1.442695
    %v2810 = vpow.pop %v2809
    %v2811 = vmul.f32 %v2777, 1.442695
    %v2812 = vpow.pop %v2811
    %v2813 = vmul.f32 %v2778, 1.442695
    %v2814 = vpow.pop %v2813
    %v2815 = vmul.f32 %v2779, 1.442695
    %v2816 = vpow.pop %v2815
    %v2817 = vmul.f32 %v2780, 1.442695
    %v2818 = vpow.pop %v2817
    %v2819 = vmul.f32 %v2781, 1.442695
    %v2820 = vpow.pop %v2819
    %v2821 = vmul.f32 %v2782, 1.442695
    %v2822 = vpow.pop %v2821
    %v2823 = vmul.f32 %v2783, 1.442695
    %v2824 = vpow.pop %v2823
    %v2825 = vmul.f32 %v2784, 1.442695
    %v2826 = vpow.pop %v2825
    %v2827 = vmul.f32 %v2785, 1.442695
    %v2828 = vpow.pop %v2827
    %v2829 = vmul.f32 %v2786, 1.442695
    %v2830 = vpow.pop %v2829
    %v2831 = vmul.f32 %v2787, 1.442695
    %v2832 = vpow.pop %v2831
    %v2833 = vmul.f32 %v2788, 1.442695
    %v2834 = vpow.pop %v2833
    %v2835 = vmul.f32 %v2789, 1.442695
    %v2836 = vpow.pop %v2835
    %v2837 = vmul.f32 %v2790, 1.442695
    %v2838 = vpow.pop %v2837
    %2863 = vset.pattern.permute.xlu0 0
    %2864 = vperm.xlu0 %2863, %v2792
    %v2865 = vpop.permute.xlu0 %2864
    %2866 = vset.pattern.permute.xlu0 0
    %2867 = vperm.xlu0 %2866, %v2794
    %v2868 = vpop.permute.xlu0 %2867
    %2869 = vset.pattern.permute.xlu0 0
    %2870 = vperm.xlu0 %2869, %v2796
    %v2871 = vpop.permute.xlu0 %2870
    %2872 = vset.pattern.permute.xlu0 0
    %2873 = vperm.xlu0 %2872, %v2798
    %v2874 = vpop.permute.xlu0 %2873
    %2875 = vset.pattern.permute.xlu0 0
    %2876 = vperm.xlu0 %2875, %v2800
    %v2877 = vpop.permute.xlu0 %2876
    %2878 = vset.pattern.permute.xlu0 0
    %2879 = vperm.xlu0 %2878, %v2802
    %v2880 = vpop.permute.xlu0 %2879
    %2881 = vset.pattern.permute.xlu0 0
    %2882 = vperm.xlu0 %2881, %v2804
    %v2883 = vpop.permute.xlu0 %2882
    %2884 = vset.pattern.permute.xlu0 0
    %2885 = vperm.xlu0 %2884, %v2806
    %v2886 = vpop.permute.xlu0 %2885
    %2887 = vset.pattern.permute.xlu0 0
    %2888 = vperm.xlu0 %2887, %v2808
    %v2889 = vpop.permute.xlu0 %2888
    %2890 = vset.pattern.permute.xlu0 0
    %2891 = vperm.xlu0 %2890, %v2810
    %v2892 = vpop.permute.xlu0 %2891
    %2893 = vset.pattern.permute.xlu0 0
    %2894 = vperm.xlu0 %2893, %v2812
    %v2895 = vpop.permute.xlu0 %2894
    %2896 = vset.pattern.permute.xlu0 0
    %2897 = vperm.xlu0 %2896, %v2814
    %v2898 = vpop.permute.xlu0 %2897
    %2899 = vset.pattern.permute.xlu0 0
    %2900 = vperm.xlu0 %2899, %v2816
    %v2901 = vpop.permute.xlu0 %2900
    %2902 = vset.pattern.permute.xlu0 0
    %2903 = vperm.xlu0 %2902, %v2818
    %v2904 = vpop.permute.xlu0 %2903
    %2905 = vset.pattern.permute.xlu0 0
    %2906 = vperm.xlu0 %2905, %v2820
    %v2907 = vpop.permute.xlu0 %2906
    %2908 = vset.pattern.permute.xlu0 0
    %2909 = vperm.xlu0 %2908, %v2822
    %v2910 = vpop.permute.xlu0 %2909
    %2911 = vset.pattern.permute.xlu0 0
    %2912 = vperm.xlu0 %2911, %v2824
    %v2913 = vpop.permute.xlu0 %2912
    %2914 = vset.pattern.permute.xlu0 0
    %2915 = vperm.xlu0 %2914, %v2826
    %v2916 = vpop.permute.xlu0 %2915
    %2917 = vset.pattern.permute.xlu0 0
    %2918 = vperm.xlu0 %2917, %v2828
    %v2919 = vpop.permute.xlu0 %2918
    %2920 = vset.pattern.permute.xlu0 0
    %2921 = vperm.xlu0 %2920, %v2830
    %v2922 = vpop.permute.xlu0 %2921
    %2923 = vset.pattern.permute.xlu0 0
    %2924 = vperm.xlu0 %2923, %v2832
    %v2925 = vpop.permute.xlu0 %2924
    %2926 = vset.pattern.permute.xlu0 0
    %2927 = vperm.xlu0 %2926, %v2834
    %v2928 = vpop.permute.xlu0 %2927
    %2929 = vset.pattern.permute.xlu0 0
    %2930 = vperm.xlu0 %2929, %v2836
    %v2931 = vpop.permute.xlu0 %2930
    %2932 = vset.pattern.permute.xlu0 0
    %2933 = vperm.xlu0 %2932, %v2838
    %v2934 = vpop.permute.xlu0 %2933
    %v2935 = vperm.slane %v2865, %v634
    %v2936 = vperm.slane %v2868, %v636
    %v2937 = vsel %vm638, %v2936, %v2935
    %v2938 = vperm.slane %v2871, %v634
    %v2939 = vperm.slane %v2874, %v636
    %v2940 = vsel %vm638, %v2939, %v2938
    %v2941 = vperm.slane %v2877, %v634
    %v2942 = vperm.slane %v2880, %v636
    %v2943 = vsel %vm638, %v2942, %v2941
    %v2944 = vperm.slane %v2883, %v634
    %v2945 = vperm.slane %v2886, %v636
    %v2946 = vsel %vm638, %v2945, %v2944
    %v2947 = vperm.slane %v2889, %v634
    %v2948 = vperm.slane %v2892, %v636
    %v2949 = vsel %vm638, %v2948, %v2947
    %v2950 = vperm.slane %v2895, %v634
    %v2951 = vperm.slane %v2898, %v636
    %v2952 = vsel %vm638, %v2951, %v2950
    %v2953 = vperm.slane %v2901, %v634
    %v2954 = vperm.slane %v2904, %v636
    %v2955 = vsel %vm638, %v2954, %v2953
    %v2956 = vperm.slane %v2907, %v634
    %v2957 = vperm.slane %v2910, %v636
    %v2958 = vsel %vm638, %v2957, %v2956
    %v2959 = vperm.slane %v2913, %v634
    %v2960 = vperm.slane %v2916, %v636
    %v2961 = vsel %vm638, %v2960, %v2959
    %v2962 = vperm.slane %v2919, %v634
    %v2963 = vperm.slane %v2922, %v636
    %v2964 = vsel %vm638, %v2963, %v2962
    %v2965 = vperm.slane %v2925, %v634
    %v2966 = vperm.slane %v2928, %v636
    %v2967 = vsel %vm638, %v2966, %v2965
    %v2968 = vperm.slane %v2931, %v634
    %v2969 = vperm.slane %v2934, %v636
    %v2970 = vsel %vm638, %v2969, %v2968
    %v2971 = vsel %vm673, %v2940, %v2937
    %v2972 = vsel %vm675, %v2943, %v2971
    %v2973 = vsel %vm677, %v2946, %v2972
    %v2974 = vsel %vm679, %v2949, %v2973
    %v2975 = vsel %vm681, %v2952, %v2974
    %v2976 = vsel %vm683, %v2955, %v2975
    %v2977 = vsel %vm685, %v2958, %v2976
    %v2978 = vsel %vm673, %v2964, %v2961
    %v2979 = vsel %vm675, %v2967, %v2978
    %v2980 = vsel %vm677, %v2970, %v2979
    %v2983 = vsel %vm21, %v2977, 0.0
    %v2984 = vsel %vm22, %v2980, 0.0
    %v2985 = vsel %vm692, %v2983, 0.0
    %2986 = vadd.xlane.f32.xlu0 %v2985
    %v2987 = vpop.xlane.xlu0 %2986
    %v2988 = vsel %vm696, %v2984, 0.0
    %2989 = vadd.xlane.f32.xlu0 %v2988
    %v2990 = vpop.xlane.xlu0 %2989
    %v2991 = vrcp.pop %v2987
    %v2992 = vrcp.pop %v2990
    %v2993 = vmul.f32 %v2983, %v2991
    %v2994 = vmul.f32 %v2984, %v2992
    %v2995 = vpack.c.bf16 %v2994, %v2993
    %v2998 = vunpack.c.l.b16 %v2491
    %v2999 = vunpack.c.l.b16 %v2492
    %v3000 = vpack.c.b16 %v2999, %v2998
    %v3002 = vsel %vm692, %v2995, 0
    %v3005 = vsel %vm963, %v3000, 0
    %3007 = vmatpush.bf16.msra.mxu0 0
    %3008 = vmatpush.bf16.msra.mxu0 0
    %3009 = vmatpush.bf16.msra.mxu0 0
    %3010 = vmatpush.bf16.msra.mxu0 0
    %3011 = vmatpush.bf16.msra.mxu0 0
    %3012 = vmatpush.bf16.msra.mxu0 0
    %3013 = vmatpush.bf16.msra.mxu0 0
    %3014 = vmatpush.bf16.msra.mxu0 %v3005
    %3015 = vmatmul.bf16.gmra.mxu0 %v3002
    %v3016 = vpop.f32.mrf.mxu0
    %v3017 = vadd.f32 0.0, %v3016
    %v3018 = vpop.f32.mrf.mxu0
    %v3019 = vadd.f32 0.0, %v3018
    %3020 = vdwg.mxu0
    %3045 = vrot.lane.b32.xlu0 %v2467, 112
    %v3046 = vpop.permute.xlu0 %3045
    %3047 = vrot.lane.b32.xlu0 %v2468, 112
    %v3048 = vpop.permute.xlu0 %3047
    %3049 = vrot.lane.b32.xlu0 %v2469, 112
    %v3050 = vpop.permute.xlu0 %3049
    %3051 = vrot.lane.b32.xlu0 %v2470, 112
    %v3052 = vpop.permute.xlu0 %3051
    %3053 = vrot.lane.b32.xlu0 %v2471, 112
    %v3054 = vpop.permute.xlu0 %3053
    %3055 = vrot.lane.b32.xlu0 %v2472, 112
    %v3056 = vpop.permute.xlu0 %3055
    %3057 = vrot.lane.b32.xlu0 %v2473, 112
    %v3058 = vpop.permute.xlu0 %3057
    %3059 = vrot.lane.b32.xlu0 %v2474, 112
    %v3060 = vpop.permute.xlu0 %3059
    %3061 = vrot.lane.b32.xlu0 %v2475, 112
    %v3062 = vpop.permute.xlu0 %3061
    %3063 = vrot.lane.b32.xlu0 %v2476, 112
    %v3064 = vpop.permute.xlu0 %3063
    %3065 = vrot.lane.b32.xlu0 %v2477, 112
    %v3066 = vpop.permute.xlu0 %3065
    %3067 = vrot.lane.b32.xlu0 %v2478, 112
    %v3068 = vpop.permute.xlu0 %3067
    %3069 = vrot.lane.b32.xlu0 %v2479, 112
    %v3070 = vpop.permute.xlu0 %3069
    %3071 = vrot.lane.b32.xlu0 %v2480, 112
    %v3072 = vpop.permute.xlu0 %3071
    %3073 = vrot.lane.b32.xlu0 %v2481, 112
    %v3074 = vpop.permute.xlu0 %3073
    %3075 = vrot.lane.b32.xlu0 %v2482, 112
    %v3076 = vpop.permute.xlu0 %3075
    %3077 = vrot.lane.b32.xlu0 %v2483, 112
    %v3078 = vpop.permute.xlu0 %3077
    %3079 = vrot.lane.b32.xlu0 %v2484, 112
    %v3080 = vpop.permute.xlu0 %3079
    %3081 = vrot.lane.b32.xlu0 %v2485, 112
    %v3082 = vpop.permute.xlu0 %3081
    %3083 = vrot.lane.b32.xlu0 %v2486, 112
    %v3084 = vpop.permute.xlu0 %3083
    %3085 = vrot.lane.b32.xlu0 %v2487, 112
    %v3086 = vpop.permute.xlu0 %3085
    %3087 = vrot.lane.b32.xlu0 %v2488, 112
    %v3088 = vpop.permute.xlu0 %3087
    %3089 = vrot.lane.b32.xlu0 %v2489, 112
    %v3090 = vpop.permute.xlu0 %3089
    %3091 = vrot.lane.b32.xlu0 %v2490, 112
    %v3092 = vpop.permute.xlu0 %3091
    %v3117 = vsel %vm2493, %v3046, 0.0
    %3118 = vadd.xlane.f32.xlu0 %v3117
    %v3119 = vpop.xlane.xlu0 %3118
    %v3120 = vsel %vm2497, %v3048, 0.0
    %3121 = vadd.xlane.f32.xlu0 %v3120
    %v3122 = vpop.xlane.xlu0 %3121
    %v3123 = vsel %vm2493, %v3050, 0.0
    %3124 = vadd.xlane.f32.xlu0 %v3123
    %v3125 = vpop.xlane.xlu0 %3124
    %v3126 = vsel %vm2497, %v3052, 0.0
    %3127 = vadd.xlane.f32.xlu0 %v3126
    %v3128 = vpop.xlane.xlu0 %3127
    %v3129 = vsel %vm2493, %v3054, 0.0
    %3130 = vadd.xlane.f32.xlu0 %v3129
    %v3131 = vpop.xlane.xlu0 %3130
    %v3132 = vsel %vm2497, %v3056, 0.0
    %3133 = vadd.xlane.f32.xlu0 %v3132
    %v3134 = vpop.xlane.xlu0 %3133
    %v3135 = vsel %vm2493, %v3058, 0.0
    %3136 = vadd.xlane.f32.xlu0 %v3135
    %v3137 = vpop.xlane.xlu0 %3136
    %v3138 = vsel %vm2497, %v3060, 0.0
    %3139 = vadd.xlane.f32.xlu0 %v3138
    %v3140 = vpop.xlane.xlu0 %3139
    %v3141 = vsel %vm2493, %v3062, 0.0
    %3142 = vadd.xlane.f32.xlu0 %v3141
    %v3143 = vpop.xlane.xlu0 %3142
    %v3144 = vsel %vm2497, %v3064, 0.0
    %3145 = vadd.xlane.f32.xlu0 %v3144
    %v3146 = vpop.xlane.xlu0 %3145
    %v3147 = vsel %vm2493, %v3066, 0.0
    %3148 = vadd.xlane.f32.xlu0 %v3147
    %v3149 = vpop.xlane.xlu0 %3148
    %v3150 = vsel %vm2497, %v3068, 0.0
    %3151 = vadd.xlane.f32.xlu0 %v3150
    %v3152 = vpop.xlane.xlu0 %3151
    %v3153 = vsel %vm2493, %v3070, 0.0
    %3154 = vadd.xlane.f32.xlu0 %v3153
    %v3155 = vpop.xlane.xlu0 %3154
    %v3156 = vsel %vm2497, %v3072, 0.0
    %3157 = vadd.xlane.f32.xlu0 %v3156
    %v3158 = vpop.xlane.xlu0 %3157
    %v3159 = vsel %vm2493, %v3074, 0.0
    %3160 = vadd.xlane.f32.xlu0 %v3159
    %v3161 = vpop.xlane.xlu0 %3160
    %v3162 = vsel %vm2497, %v3076, 0.0
    %3163 = vadd.xlane.f32.xlu0 %v3162
    %v3164 = vpop.xlane.xlu0 %3163
    %v3165 = vsel %vm2493, %v3078, 0.0
    %3166 = vadd.xlane.f32.xlu0 %v3165
    %v3167 = vpop.xlane.xlu0 %3166
    %v3168 = vsel %vm2497, %v3080, 0.0
    %3169 = vadd.xlane.f32.xlu0 %v3168
    %v3170 = vpop.xlane.xlu0 %3169
    %v3171 = vsel %vm2493, %v3082, 0.0
    %3172 = vadd.xlane.f32.xlu0 %v3171
    %v3173 = vpop.xlane.xlu0 %3172
    %v3174 = vsel %vm2497, %v3084, 0.0
    %3175 = vadd.xlane.f32.xlu0 %v3174
    %v3176 = vpop.xlane.xlu0 %3175
    %v3177 = vsel %vm2493, %v3086, 0.0
    %3178 = vadd.xlane.f32.xlu0 %v3177
    %v3179 = vpop.xlane.xlu0 %3178
    %v3180 = vsel %vm2497, %v3088, 0.0
    %3181 = vadd.xlane.f32.xlu0 %v3180
    %v3182 = vpop.xlane.xlu0 %3181
    %v3183 = vsel %vm2493, %v3090, 0.0
    %3184 = vadd.xlane.f32.xlu0 %v3183
    %v3185 = vpop.xlane.xlu0 %3184
    %v3186 = vsel %vm2497, %v3092, 0.0
    %3187 = vadd.xlane.f32.xlu0 %v3186
    %v3188 = vpop.xlane.xlu0 %3187
    %v3189 = vadd.f32 %v3119, %v339
    %v3190 = vadd.f32 %v3122, %v345
    %v3191 = vadd.f32 %v3125, %v352
    %v3192 = vadd.f32 %v3128, %v358
    %v3193 = vadd.f32 %v3131, %v365
    %v3194 = vadd.f32 %v3134, %v371
    %v3195 = vadd.f32 %v3137, %v378
    %v3196 = vadd.f32 %v3140, %v384
    %v3197 = vadd.f32 %v3143, %v391
    %v3198 = vadd.f32 %v3146, %v397
    %v3199 = vadd.f32 %v3149, %v404
    %v3200 = vadd.f32 %v3152, %v410
    %v3201 = vadd.f32 %v3155, %v417
    %v3202 = vadd.f32 %v3158, %v423
    %v3203 = vadd.f32 %v3161, %v430
    %v3204 = vadd.f32 %v3164, %v436
    %v3205 = vadd.f32 %v3167, %v443
    %v3206 = vadd.f32 %v3170, %v449
    %v3207 = vadd.f32 %v3173, %v456
    %v3208 = vadd.f32 %v3176, %v462
    %v3209 = vadd.f32 %v3179, %v469
    %v3210 = vadd.f32 %v3182, %v475
    %v3211 = vadd.f32 %v3185, %v482
    %v3212 = vadd.f32 %v3188, %v488
    %3237 = vset.pattern.permute.xlu0 0
    %3238 = vperm.xlu0 %3237, %v3189
    %v3239 = vpop.permute.xlu0 %3238
    %3240 = vset.pattern.permute.xlu0 0
    %3241 = vperm.xlu0 %3240, %v3190
    %v3242 = vpop.permute.xlu0 %3241
    %3243 = vset.pattern.permute.xlu0 0
    %3244 = vperm.xlu0 %3243, %v3191
    %v3245 = vpop.permute.xlu0 %3244
    %3246 = vset.pattern.permute.xlu0 0
    %3247 = vperm.xlu0 %3246, %v3192
    %v3248 = vpop.permute.xlu0 %3247
    %3249 = vset.pattern.permute.xlu0 0
    %3250 = vperm.xlu0 %3249, %v3193
    %v3251 = vpop.permute.xlu0 %3250
    %3252 = vset.pattern.permute.xlu0 0
    %3253 = vperm.xlu0 %3252, %v3194
    %v3254 = vpop.permute.xlu0 %3253
    %3255 = vset.pattern.permute.xlu0 0
    %3256 = vperm.xlu0 %3255, %v3195
    %v3257 = vpop.permute.xlu0 %3256
    %3258 = vset.pattern.permute.xlu0 0
    %3259 = vperm.xlu0 %3258, %v3196
    %v3260 = vpop.permute.xlu0 %3259
    %3261 = vset.pattern.permute.xlu0 0
    %3262 = vperm.xlu0 %3261, %v3197
    %v3263 = vpop.permute.xlu0 %3262
    %3264 = vset.pattern.permute.xlu0 0
    %3265 = vperm.xlu0 %3264, %v3198
    %v3266 = vpop.permute.xlu0 %3265
    %3267 = vset.pattern.permute.xlu0 0
    %3268 = vperm.xlu0 %3267, %v3199
    %v3269 = vpop.permute.xlu0 %3268
    %3270 = vset.pattern.permute.xlu0 0
    %3271 = vperm.xlu0 %3270, %v3200
    %v3272 = vpop.permute.xlu0 %3271
    %3273 = vset.pattern.permute.xlu0 0
    %3274 = vperm.xlu0 %3273, %v3201
    %v3275 = vpop.permute.xlu0 %3274
    %3276 = vset.pattern.permute.xlu0 0
    %3277 = vperm.xlu0 %3276, %v3202
    %v3278 = vpop.permute.xlu0 %3277
    %3279 = vset.pattern.permute.xlu0 0
    %3280 = vperm.xlu0 %3279, %v3203
    %v3281 = vpop.permute.xlu0 %3280
    %3282 = vset.pattern.permute.xlu0 0
    %3283 = vperm.xlu0 %3282, %v3204
    %v3284 = vpop.permute.xlu0 %3283
    %3285 = vset.pattern.permute.xlu0 0
    %3286 = vperm.xlu0 %3285, %v3205
    %v3287 = vpop.permute.xlu0 %3286
    %3288 = vset.pattern.permute.xlu0 0
    %3289 = vperm.xlu0 %3288, %v3206
    %v3290 = vpop.permute.xlu0 %3289
    %3291 = vset.pattern.permute.xlu0 0
    %3292 = vperm.xlu0 %3291, %v3207
    %v3293 = vpop.permute.xlu0 %3292
    %3294 = vset.pattern.permute.xlu0 0
    %3295 = vperm.xlu0 %3294, %v3208
    %v3296 = vpop.permute.xlu0 %3295
    %3297 = vset.pattern.permute.xlu0 0
    %3298 = vperm.xlu0 %3297, %v3209
    %v3299 = vpop.permute.xlu0 %3298
    %3300 = vset.pattern.permute.xlu0 0
    %3301 = vperm.xlu0 %3300, %v3210
    %v3302 = vpop.permute.xlu0 %3301
    %3303 = vset.pattern.permute.xlu0 0
    %3304 = vperm.xlu0 %3303, %v3211
    %v3305 = vpop.permute.xlu0 %3304
    %3306 = vset.pattern.permute.xlu0 0
    %3307 = vperm.xlu0 %3306, %v3212
    %v3308 = vpop.permute.xlu0 %3307
    %v3309 = vperm.slane %v3239, %v634
    %v3310 = vperm.slane %v3242, %v636
    %v3311 = vsel %vm638, %v3310, %v3309
    %v3312 = vperm.slane %v3245, %v634
    %v3313 = vperm.slane %v3248, %v636
    %v3314 = vsel %vm638, %v3313, %v3312
    %v3315 = vperm.slane %v3251, %v634
    %v3316 = vperm.slane %v3254, %v636
    %v3317 = vsel %vm638, %v3316, %v3315
    %v3318 = vperm.slane %v3257, %v634
    %v3319 = vperm.slane %v3260, %v636
    %v3320 = vsel %vm638, %v3319, %v3318
    %v3321 = vperm.slane %v3263, %v634
    %v3322 = vperm.slane %v3266, %v636
    %v3323 = vsel %vm638, %v3322, %v3321
    %v3324 = vperm.slane %v3269, %v634
    %v3325 = vperm.slane %v3272, %v636
    %v3326 = vsel %vm638, %v3325, %v3324
    %v3327 = vperm.slane %v3275, %v634
    %v3328 = vperm.slane %v3278, %v636
    %v3329 = vsel %vm638, %v3328, %v3327
    %v3330 = vperm.slane %v3281, %v634
    %v3331 = vperm.slane %v3284, %v636
    %v3332 = vsel %vm638, %v3331, %v3330
    %v3333 = vperm.slane %v3287, %v634
    %v3334 = vperm.slane %v3290, %v636
    %v3335 = vsel %vm638, %v3334, %v3333
    %v3336 = vperm.slane %v3293, %v634
    %v3337 = vperm.slane %v3296, %v636
    %v3338 = vsel %vm638, %v3337, %v3336
    %v3339 = vperm.slane %v3299, %v634
    %v3340 = vperm.slane %v3302, %v636
    %v3341 = vsel %vm638, %v3340, %v3339
    %v3342 = vperm.slane %v3305, %v634
    %v3343 = vperm.slane %v3308, %v636
    %v3344 = vsel %vm638, %v3343, %v3342
    %v3345 = vsel %vm673, %v3314, %v3311
    %v3346 = vsel %vm675, %v3317, %v3345
    %v3347 = vsel %vm677, %v3320, %v3346
    %v3348 = vsel %vm679, %v3323, %v3347
    %v3349 = vsel %vm681, %v3326, %v3348
    %v3350 = vsel %vm683, %v3329, %v3349
    %v3351 = vsel %vm685, %v3332, %v3350
    %v3352 = vsel %vm673, %v3338, %v3335
    %v3353 = vsel %vm675, %v3341, %v3352
    %v3354 = vsel %vm677, %v3344, %v3353
    %v3357 = vsel %vm692, %v3351, -inf
    %3358 = vmax.xlane.f32.xlu0 %v3357
    %v3359 = vpop.xlane.xlu0 %3358
    %v3360 = vsel %vm696, %v3354, -inf
    %3361 = vmax.xlane.f32.xlu0 %v3360
    %v3362 = vpop.xlane.xlu0 %3361
    %v3365 = vperm.slane %v3359, 0
    %v3366 = vperm.slane %v3359, 1
    %v3367 = vperm.slane %v3359, 2
    %v3368 = vperm.slane %v3359, 3
    %v3369 = vperm.slane %v3359, 4
    %v3370 = vperm.slane %v3359, 5
    %v3371 = vperm.slane %v3359, 6
    %v3372 = vperm.slane %v3359, 7
    %v3373 = vperm.slane %v3362, 0
    %v3374 = vperm.slane %v3362, 1
    %v3375 = vperm.slane %v3362, 2
    %v3376 = vperm.slane %v3362, 3
    %v3389 = vsub.f32 %v3189, %v3365
    %v3390 = vsub.f32 %v3190, %v3365
    %v3391 = vsub.f32 %v3191, %v3366
    %v3392 = vsub.f32 %v3192, %v3366
    %v3393 = vsub.f32 %v3193, %v3367
    %v3394 = vsub.f32 %v3194, %v3367
    %v3395 = vsub.f32 %v3195, %v3368
    %v3396 = vsub.f32 %v3196, %v3368
    %v3397 = vsub.f32 %v3197, %v3369
    %v3398 = vsub.f32 %v3198, %v3369
    %v3399 = vsub.f32 %v3199, %v3370
    %v3400 = vsub.f32 %v3200, %v3370
    %v3401 = vsub.f32 %v3201, %v3371
    %v3402 = vsub.f32 %v3202, %v3371
    %v3403 = vsub.f32 %v3203, %v3372
    %v3404 = vsub.f32 %v3204, %v3372
    %v3405 = vsub.f32 %v3205, %v3373
    %v3406 = vsub.f32 %v3206, %v3373
    %v3407 = vsub.f32 %v3207, %v3374
    %v3408 = vsub.f32 %v3208, %v3374
    %v3409 = vsub.f32 %v3209, %v3375
    %v3410 = vsub.f32 %v3210, %v3375
    %v3411 = vsub.f32 %v3211, %v3376
    %v3412 = vsub.f32 %v3212, %v3376
    %v3413 = vmul.f32 %v3389, 1.442695
    %v3414 = vpow.pop %v3413
    %v3415 = vmul.f32 %v3390, 1.442695
    %v3416 = vpow.pop %v3415
    %v3417 = vmul.f32 %v3391, 1.442695
    %v3418 = vpow.pop %v3417
    %v3419 = vmul.f32 %v3392, 1.442695
    %v3420 = vpow.pop %v3419
    %v3421 = vmul.f32 %v3393, 1.442695
    %v3422 = vpow.pop %v3421
    %v3423 = vmul.f32 %v3394, 1.442695
    %v3424 = vpow.pop %v3423
    %v3425 = vmul.f32 %v3395, 1.442695
    %v3426 = vpow.pop %v3425
    %v3427 = vmul.f32 %v3396, 1.442695
    %v3428 = vpow.pop %v3427
    %v3429 = vmul.f32 %v3397, 1.442695
    %v3430 = vpow.pop %v3429
    %v3431 = vmul.f32 %v3398, 1.442695
    %v3432 = vpow.pop %v3431
    %v3433 = vmul.f32 %v3399, 1.442695
    %v3434 = vpow.pop %v3433
    %v3435 = vmul.f32 %v3400, 1.442695
    %v3436 = vpow.pop %v3435
    %v3437 = vmul.f32 %v3401, 1.442695
    %v3438 = vpow.pop %v3437
    %v3439 = vmul.f32 %v3402, 1.442695
    %v3440 = vpow.pop %v3439
    %v3441 = vmul.f32 %v3403, 1.442695
    %v3442 = vpow.pop %v3441
    %v3443 = vmul.f32 %v3404, 1.442695
    %v3444 = vpow.pop %v3443
    %v3445 = vmul.f32 %v3405, 1.442695
    %v3446 = vpow.pop %v3445
    %v3447 = vmul.f32 %v3406, 1.442695
    %v3448 = vpow.pop %v3447
    %v3449 = vmul.f32 %v3407, 1.442695
    %v3450 = vpow.pop %v3449
    %v3451 = vmul.f32 %v3408, 1.442695
    %v3452 = vpow.pop %v3451
    %v3453 = vmul.f32 %v3409, 1.442695
    %v3454 = vpow.pop %v3453
    %v3455 = vmul.f32 %v3410, 1.442695
    %v3456 = vpow.pop %v3455
    %v3457 = vmul.f32 %v3411, 1.442695
    %v3458 = vpow.pop %v3457
    %v3459 = vmul.f32 %v3412, 1.442695
    %v3460 = vpow.pop %v3459
    %3485 = vset.pattern.permute.xlu0 0
    %3486 = vperm.xlu0 %3485, %v3414
    %v3487 = vpop.permute.xlu0 %3486
    %3488 = vset.pattern.permute.xlu0 0
    %3489 = vperm.xlu0 %3488, %v3416
    %v3490 = vpop.permute.xlu0 %3489
    %3491 = vset.pattern.permute.xlu0 0
    %3492 = vperm.xlu0 %3491, %v3418
    %v3493 = vpop.permute.xlu0 %3492
    %3494 = vset.pattern.permute.xlu0 0
    %3495 = vperm.xlu0 %3494, %v3420
    %v3496 = vpop.permute.xlu0 %3495
    %3497 = vset.pattern.permute.xlu0 0
    %3498 = vperm.xlu0 %3497, %v3422
    %v3499 = vpop.permute.xlu0 %3498
    %3500 = vset.pattern.permute.xlu0 0
    %3501 = vperm.xlu0 %3500, %v3424
    %v3502 = vpop.permute.xlu0 %3501
    %3503 = vset.pattern.permute.xlu0 0
    %3504 = vperm.xlu0 %3503, %v3426
    %v3505 = vpop.permute.xlu0 %3504
    %3506 = vset.pattern.permute.xlu0 0
    %3507 = vperm.xlu0 %3506, %v3428
    %v3508 = vpop.permute.xlu0 %3507
    %3509 = vset.pattern.permute.xlu0 0
    %3510 = vperm.xlu0 %3509, %v3430
    %v3511 = vpop.permute.xlu0 %3510
    %3512 = vset.pattern.permute.xlu0 0
    %3513 = vperm.xlu0 %3512, %v3432
    %v3514 = vpop.permute.xlu0 %3513
    %3515 = vset.pattern.permute.xlu0 0
    %3516 = vperm.xlu0 %3515, %v3434
    %v3517 = vpop.permute.xlu0 %3516
    %3518 = vset.pattern.permute.xlu0 0
    %3519 = vperm.xlu0 %3518, %v3436
    %v3520 = vpop.permute.xlu0 %3519
    %3521 = vset.pattern.permute.xlu0 0
    %3522 = vperm.xlu0 %3521, %v3438
    %v3523 = vpop.permute.xlu0 %3522
    %3524 = vset.pattern.permute.xlu0 0
    %3525 = vperm.xlu0 %3524, %v3440
    %v3526 = vpop.permute.xlu0 %3525
    %3527 = vset.pattern.permute.xlu0 0
    %3528 = vperm.xlu0 %3527, %v3442
    %v3529 = vpop.permute.xlu0 %3528
    %3530 = vset.pattern.permute.xlu0 0
    %3531 = vperm.xlu0 %3530, %v3444
    %v3532 = vpop.permute.xlu0 %3531
    %3533 = vset.pattern.permute.xlu0 0
    %3534 = vperm.xlu0 %3533, %v3446
    %v3535 = vpop.permute.xlu0 %3534
    %3536 = vset.pattern.permute.xlu0 0
    %3537 = vperm.xlu0 %3536, %v3448
    %v3538 = vpop.permute.xlu0 %3537
    %3539 = vset.pattern.permute.xlu0 0
    %3540 = vperm.xlu0 %3539, %v3450
    %v3541 = vpop.permute.xlu0 %3540
    %3542 = vset.pattern.permute.xlu0 0
    %3543 = vperm.xlu0 %3542, %v3452
    %v3544 = vpop.permute.xlu0 %3543
    %3545 = vset.pattern.permute.xlu0 0
    %3546 = vperm.xlu0 %3545, %v3454
    %v3547 = vpop.permute.xlu0 %3546
    %3548 = vset.pattern.permute.xlu0 0
    %3549 = vperm.xlu0 %3548, %v3456
    %v3550 = vpop.permute.xlu0 %3549
    %3551 = vset.pattern.permute.xlu0 0
    %3552 = vperm.xlu0 %3551, %v3458
    %v3553 = vpop.permute.xlu0 %3552
    %3554 = vset.pattern.permute.xlu0 0
    %3555 = vperm.xlu0 %3554, %v3460
    %v3556 = vpop.permute.xlu0 %3555
    %v3557 = vperm.slane %v3487, %v634
    %v3558 = vperm.slane %v3490, %v636
    %v3559 = vsel %vm638, %v3558, %v3557
    %v3560 = vperm.slane %v3493, %v634
    %v3561 = vperm.slane %v3496, %v636
    %v3562 = vsel %vm638, %v3561, %v3560
    %v3563 = vperm.slane %v3499, %v634
    %v3564 = vperm.slane %v3502, %v636
    %v3565 = vsel %vm638, %v3564, %v3563
    %v3566 = vperm.slane %v3505, %v634
    %v3567 = vperm.slane %v3508, %v636
    %v3568 = vsel %vm638, %v3567, %v3566
    %v3569 = vperm.slane %v3511, %v634
    %v3570 = vperm.slane %v3514, %v636
    %v3571 = vsel %vm638, %v3570, %v3569
    %v3572 = vperm.slane %v3517, %v634
    %v3573 = vperm.slane %v3520, %v636
    %v3574 = vsel %vm638, %v3573, %v3572
    %v3575 = vperm.slane %v3523, %v634
    %v3576 = vperm.slane %v3526, %v636
    %v3577 = vsel %vm638, %v3576, %v3575
    %v3578 = vperm.slane %v3529, %v634
    %v3579 = vperm.slane %v3532, %v636
    %v3580 = vsel %vm638, %v3579, %v3578
    %v3581 = vperm.slane %v3535, %v634
    %v3582 = vperm.slane %v3538, %v636
    %v3583 = vsel %vm638, %v3582, %v3581
    %v3584 = vperm.slane %v3541, %v634
    %v3585 = vperm.slane %v3544, %v636
    %v3586 = vsel %vm638, %v3585, %v3584
    %v3587 = vperm.slane %v3547, %v634
    %v3588 = vperm.slane %v3550, %v636
    %v3589 = vsel %vm638, %v3588, %v3587
    %v3590 = vperm.slane %v3553, %v634
    %v3591 = vperm.slane %v3556, %v636
    %v3592 = vsel %vm638, %v3591, %v3590
    %v3593 = vsel %vm673, %v3562, %v3559
    %v3594 = vsel %vm675, %v3565, %v3593
    %v3595 = vsel %vm677, %v3568, %v3594
    %v3596 = vsel %vm679, %v3571, %v3595
    %v3597 = vsel %vm681, %v3574, %v3596
    %v3598 = vsel %vm683, %v3577, %v3597
    %v3599 = vsel %vm685, %v3580, %v3598
    %v3600 = vsel %vm673, %v3586, %v3583
    %v3601 = vsel %vm675, %v3589, %v3600
    %v3602 = vsel %vm677, %v3592, %v3601
    %v3605 = vsel %vm21, %v3599, 0.0
    %v3606 = vsel %vm22, %v3602, 0.0
    %v3607 = vsel %vm692, %v3605, 0.0
    %3608 = vadd.xlane.f32.xlu0 %v3607
    %v3609 = vpop.xlane.xlu0 %3608
    %v3610 = vsel %vm696, %v3606, 0.0
    %3611 = vadd.xlane.f32.xlu0 %v3610
    %v3612 = vpop.xlane.xlu0 %3611
    %v3613 = vrcp.pop %v3609
    %v3614 = vrcp.pop %v3612
    %v3615 = vmul.f32 %v3605, %v3613
    %v3616 = vmul.f32 %v3606, %v3614
    %v3617 = vpack.c.bf16 %v3616, %v3615
    %3618 = vrot.lane.b32.xlu0 %v3000, 112
    %v3619 = vpop.permute.xlu0 %3618
    %v3621 = vsel %vm692, %v3617, 0
    %v3624 = vsel %vm963, %v3619, 0
    %3626 = vmatpush.bf16.msra.mxu0 0
    %3627 = vmatpush.bf16.msra.mxu0 0
    %3628 = vmatpush.bf16.msra.mxu0 0
    %3629 = vmatpush.bf16.msra.mxu0 0
    %3630 = vmatpush.bf16.msra.mxu0 0
    %3631 = vmatpush.bf16.msra.mxu0 0
    %3632 = vmatpush.bf16.msra.mxu0 0
    %3633 = vmatpush.bf16.msra.mxu0 %v3624
    %3634 = vmatmul.bf16.gmra.mxu0 %v3621
    %v3635 = vpop.f32.mrf.mxu0
    %v3636 = vadd.f32 0.0, %v3635
    %v3637 = vpop.f32.mrf.mxu0
    %v3638 = vadd.f32 0.0, %v3637
    %3639 = vdwg.mxu0
    %3640 = vrot.lane.b32.xlu0 %v2467, 96
    %v3641 = vpop.permute.xlu0 %3640
    %3642 = vrot.lane.b32.xlu0 %v2468, 96
    %v3643 = vpop.permute.xlu0 %3642
    %3644 = vrot.lane.b32.xlu0 %v2469, 96
    %v3645 = vpop.permute.xlu0 %3644
    %3646 = vrot.lane.b32.xlu0 %v2470, 96
    %v3647 = vpop.permute.xlu0 %3646
    %3648 = vrot.lane.b32.xlu0 %v2471, 96
    %v3649 = vpop.permute.xlu0 %3648
    %3650 = vrot.lane.b32.xlu0 %v2472, 96
    %v3651 = vpop.permute.xlu0 %3650
    %3652 = vrot.lane.b32.xlu0 %v2473, 96
    %v3653 = vpop.permute.xlu0 %3652
    %3654 = vrot.lane.b32.xlu0 %v2474, 96
    %v3655 = vpop.permute.xlu0 %3654
    %3656 = vrot.lane.b32.xlu0 %v2475, 96
    %v3657 = vpop.permute.xlu0 %3656
    %3658 = vrot.lane.b32.xlu0 %v2476, 96
    %v3659 = vpop.permute.xlu0 %3658
    %3660 = vrot.lane.b32.xlu0 %v2477, 96
    %v3661 = vpop.permute.xlu0 %3660
    %3662 = vrot.lane.b32.xlu0 %v2478, 96
    %v3663 = vpop.permute.xlu0 %3662
    %3664 = vrot.lane.b32.xlu0 %v2479, 96
    %v3665 = vpop.permute.xlu0 %3664
    %3666 = vrot.lane.b32.xlu0 %v2480, 96
    %v3667 = vpop.permute.xlu0 %3666
    %3668 = vrot.lane.b32.xlu0 %v2481, 96
    %v3669 = vpop.permute.xlu0 %3668
    %3670 = vrot.lane.b32.xlu0 %v2482, 96
    %v3671 = vpop.permute.xlu0 %3670
    %3672 = vrot.lane.b32.xlu0 %v2483, 96
    %v3673 = vpop.permute.xlu0 %3672
    %3674 = vrot.lane.b32.xlu0 %v2484, 96
    %v3675 = vpop.permute.xlu0 %3674
    %3676 = vrot.lane.b32.xlu0 %v2485, 96
    %v3677 = vpop.permute.xlu0 %3676
    %3678 = vrot.lane.b32.xlu0 %v2486, 96
    %v3679 = vpop.permute.xlu0 %3678
    %3680 = vrot.lane.b32.xlu0 %v2487, 96
    %v3681 = vpop.permute.xlu0 %3680
    %3682 = vrot.lane.b32.xlu0 %v2488, 96
    %v3683 = vpop.permute.xlu0 %3682
    %3684 = vrot.lane.b32.xlu0 %v2489, 96
    %v3685 = vpop.permute.xlu0 %3684
    %3686 = vrot.lane.b32.xlu0 %v2490, 96
    %v3687 = vpop.permute.xlu0 %3686
    %v3712 = vsel %vm2493, %v3641, 0.0
    %3713 = vadd.xlane.f32.xlu0 %v3712
    %v3714 = vpop.xlane.xlu0 %3713
    %v3715 = vsel %vm2497, %v3643, 0.0
    %3716 = vadd.xlane.f32.xlu0 %v3715
    %v3717 = vpop.xlane.xlu0 %3716
    %v3718 = vsel %vm2493, %v3645, 0.0
    %3719 = vadd.xlane.f32.xlu0 %v3718
    %v3720 = vpop.xlane.xlu0 %3719
    %v3721 = vsel %vm2497, %v3647, 0.0
    %3722 = vadd.xlane.f32.xlu0 %v3721
    %v3723 = vpop.xlane.xlu0 %3722
    %v3724 = vsel %vm2493, %v3649, 0.0
    %3725 = vadd.xlane.f32.xlu0 %v3724
    %v3726 = vpop.xlane.xlu0 %3725
    %v3727 = vsel %vm2497, %v3651, 0.0
    %3728 = vadd.xlane.f32.xlu0 %v3727
    %v3729 = vpop.xlane.xlu0 %3728
    %v3730 = vsel %vm2493, %v3653, 0.0
    %3731 = vadd.xlane.f32.xlu0 %v3730
    %v3732 = vpop.xlane.xlu0 %3731
    %v3733 = vsel %vm2497, %v3655, 0.0
    %3734 = vadd.xlane.f32.xlu0 %v3733
    %v3735 = vpop.xlane.xlu0 %3734
    %v3736 = vsel %vm2493, %v3657, 0.0
    %3737 = vadd.xlane.f32.xlu0 %v3736
    %v3738 = vpop.xlane.xlu0 %3737
    %v3739 = vsel %vm2497, %v3659, 0.0
    %3740 = vadd.xlane.f32.xlu0 %v3739
    %v3741 = vpop.xlane.xlu0 %3740
    %v3742 = vsel %vm2493, %v3661, 0.0
    %3743 = vadd.xlane.f32.xlu0 %v3742
    %v3744 = vpop.xlane.xlu0 %3743
    %v3745 = vsel %vm2497, %v3663, 0.0
    %3746 = vadd.xlane.f32.xlu0 %v3745
    %v3747 = vpop.xlane.xlu0 %3746
    %v3748 = vsel %vm2493, %v3665, 0.0
    %3749 = vadd.xlane.f32.xlu0 %v3748
    %v3750 = vpop.xlane.xlu0 %3749
    %v3751 = vsel %vm2497, %v3667, 0.0
    %3752 = vadd.xlane.f32.xlu0 %v3751
    %v3753 = vpop.xlane.xlu0 %3752
    %v3754 = vsel %vm2493, %v3669, 0.0
    %3755 = vadd.xlane.f32.xlu0 %v3754
    %v3756 = vpop.xlane.xlu0 %3755
    %v3757 = vsel %vm2497, %v3671, 0.0
    %3758 = vadd.xlane.f32.xlu0 %v3757
    %v3759 = vpop.xlane.xlu0 %3758
    %v3760 = vsel %vm2493, %v3673, 0.0
    %3761 = vadd.xlane.f32.xlu0 %v3760
    %v3762 = vpop.xlane.xlu0 %3761
    %v3763 = vsel %vm2497, %v3675, 0.0
    %3764 = vadd.xlane.f32.xlu0 %v3763
    %v3765 = vpop.xlane.xlu0 %3764
    %v3766 = vsel %vm2493, %v3677, 0.0
    %3767 = vadd.xlane.f32.xlu0 %v3766
    %v3768 = vpop.xlane.xlu0 %3767
    %v3769 = vsel %vm2497, %v3679, 0.0
    %3770 = vadd.xlane.f32.xlu0 %v3769
    %v3771 = vpop.xlane.xlu0 %3770
    %v3772 = vsel %vm2493, %v3681, 0.0
    %3773 = vadd.xlane.f32.xlu0 %v3772
    %v3774 = vpop.xlane.xlu0 %3773
    %v3775 = vsel %vm2497, %v3683, 0.0
    %3776 = vadd.xlane.f32.xlu0 %v3775
    %v3777 = vpop.xlane.xlu0 %3776
    %v3778 = vsel %vm2493, %v3685, 0.0
    %3779 = vadd.xlane.f32.xlu0 %v3778
    %v3780 = vpop.xlane.xlu0 %3779
    %v3781 = vsel %vm2497, %v3687, 0.0
    %3782 = vadd.xlane.f32.xlu0 %v3781
    %v3783 = vpop.xlane.xlu0 %3782
    %v3784 = vadd.f32 %v3714, %v339
    %v3785 = vadd.f32 %v3717, %v345
    %v3786 = vadd.f32 %v3720, %v352
    %v3787 = vadd.f32 %v3723, %v358
    %v3788 = vadd.f32 %v3726, %v365
    %v3789 = vadd.f32 %v3729, %v371
    %v3790 = vadd.f32 %v3732, %v378
    %v3791 = vadd.f32 %v3735, %v384
    %v3792 = vadd.f32 %v3738, %v391
    %v3793 = vadd.f32 %v3741, %v397
    %v3794 = vadd.f32 %v3744, %v404
    %v3795 = vadd.f32 %v3747, %v410
    %v3796 = vadd.f32 %v3750, %v417
    %v3797 = vadd.f32 %v3753, %v423
    %v3798 = vadd.f32 %v3756, %v430
    %v3799 = vadd.f32 %v3759, %v436
    %v3800 = vadd.f32 %v3762, %v443
    %v3801 = vadd.f32 %v3765, %v449
    %v3802 = vadd.f32 %v3768, %v456
    %v3803 = vadd.f32 %v3771, %v462
    %v3804 = vadd.f32 %v3774, %v469
    %v3805 = vadd.f32 %v3777, %v475
    %v3806 = vadd.f32 %v3780, %v482
    %v3807 = vadd.f32 %v3783, %v488
    %3832 = vset.pattern.permute.xlu0 0
    %3833 = vperm.xlu0 %3832, %v3784
    %v3834 = vpop.permute.xlu0 %3833
    %3835 = vset.pattern.permute.xlu0 0
    %3836 = vperm.xlu0 %3835, %v3785
    %v3837 = vpop.permute.xlu0 %3836
    %3838 = vset.pattern.permute.xlu0 0
    %3839 = vperm.xlu0 %3838, %v3786
    %v3840 = vpop.permute.xlu0 %3839
    %3841 = vset.pattern.permute.xlu0 0
    %3842 = vperm.xlu0 %3841, %v3787
    %v3843 = vpop.permute.xlu0 %3842
    %3844 = vset.pattern.permute.xlu0 0
    %3845 = vperm.xlu0 %3844, %v3788
    %v3846 = vpop.permute.xlu0 %3845
    %3847 = vset.pattern.permute.xlu0 0
    %3848 = vperm.xlu0 %3847, %v3789
    %v3849 = vpop.permute.xlu0 %3848
    %3850 = vset.pattern.permute.xlu0 0
    %3851 = vperm.xlu0 %3850, %v3790
    %v3852 = vpop.permute.xlu0 %3851
    %3853 = vset.pattern.permute.xlu0 0
    %3854 = vperm.xlu0 %3853, %v3791
    %v3855 = vpop.permute.xlu0 %3854
    %3856 = vset.pattern.permute.xlu0 0
    %3857 = vperm.xlu0 %3856, %v3792
    %v3858 = vpop.permute.xlu0 %3857
    %3859 = vset.pattern.permute.xlu0 0
    %3860 = vperm.xlu0 %3859, %v3793
    %v3861 = vpop.permute.xlu0 %3860
    %3862 = vset.pattern.permute.xlu0 0
    %3863 = vperm.xlu0 %3862, %v3794
    %v3864 = vpop.permute.xlu0 %3863
    %3865 = vset.pattern.permute.xlu0 0
    %3866 = vperm.xlu0 %3865, %v3795
    %v3867 = vpop.permute.xlu0 %3866
    %3868 = vset.pattern.permute.xlu0 0
    %3869 = vperm.xlu0 %3868, %v3796
    %v3870 = vpop.permute.xlu0 %3869
    %3871 = vset.pattern.permute.xlu0 0
    %3872 = vperm.xlu0 %3871, %v3797
    %v3873 = vpop.permute.xlu0 %3872
    %3874 = vset.pattern.permute.xlu0 0
    %3875 = vperm.xlu0 %3874, %v3798
    %v3876 = vpop.permute.xlu0 %3875
    %3877 = vset.pattern.permute.xlu0 0
    %3878 = vperm.xlu0 %3877, %v3799
    %v3879 = vpop.permute.xlu0 %3878
    %3880 = vset.pattern.permute.xlu0 0
    %3881 = vperm.xlu0 %3880, %v3800
    %v3882 = vpop.permute.xlu0 %3881
    %3883 = vset.pattern.permute.xlu0 0
    %3884 = vperm.xlu0 %3883, %v3801
    %v3885 = vpop.permute.xlu0 %3884
    %3886 = vset.pattern.permute.xlu0 0
    %3887 = vperm.xlu0 %3886, %v3802
    %v3888 = vpop.permute.xlu0 %3887
    %3889 = vset.pattern.permute.xlu0 0
    %3890 = vperm.xlu0 %3889, %v3803
    %v3891 = vpop.permute.xlu0 %3890
    %3892 = vset.pattern.permute.xlu0 0
    %3893 = vperm.xlu0 %3892, %v3804
    %v3894 = vpop.permute.xlu0 %3893
    %3895 = vset.pattern.permute.xlu0 0
    %3896 = vperm.xlu0 %3895, %v3805
    %v3897 = vpop.permute.xlu0 %3896
    %3898 = vset.pattern.permute.xlu0 0
    %3899 = vperm.xlu0 %3898, %v3806
    %v3900 = vpop.permute.xlu0 %3899
    %3901 = vset.pattern.permute.xlu0 0
    %3902 = vperm.xlu0 %3901, %v3807
    %v3903 = vpop.permute.xlu0 %3902
    %v3904 = vperm.slane %v3834, %v634
    %v3905 = vperm.slane %v3837, %v636
    %v3906 = vsel %vm638, %v3905, %v3904
    %v3907 = vperm.slane %v3840, %v634
    %v3908 = vperm.slane %v3843, %v636
    %v3909 = vsel %vm638, %v3908, %v3907
    %v3910 = vperm.slane %v3846, %v634
    %v3911 = vperm.slane %v3849, %v636
    %v3912 = vsel %vm638, %v3911, %v3910
    %v3913 = vperm.slane %v3852, %v634
    %v3914 = vperm.slane %v3855, %v636
    %v3915 = vsel %vm638, %v3914, %v3913
    %v3916 = vperm.slane %v3858, %v634
    %v3917 = vperm.slane %v3861, %v636
    %v3918 = vsel %vm638, %v3917, %v3916
    %v3919 = vperm.slane %v3864, %v634
    %v3920 = vperm.slane %v3867, %v636
    %v3921 = vsel %vm638, %v3920, %v3919
    %v3922 = vperm.slane %v3870, %v634
    %v3923 = vperm.slane %v3873, %v636
    %v3924 = vsel %vm638, %v3923, %v3922
    %v3925 = vperm.slane %v3876, %v634
    %v3926 = vperm.slane %v3879, %v636
    %v3927 = vsel %vm638, %v3926, %v3925
    %v3928 = vperm.slane %v3882, %v634
    %v3929 = vperm.slane %v3885, %v636
    %v3930 = vsel %vm638, %v3929, %v3928
    %v3931 = vperm.slane %v3888, %v634
    %v3932 = vperm.slane %v3891, %v636
    %v3933 = vsel %vm638, %v3932, %v3931
    %v3934 = vperm.slane %v3894, %v634
    %v3935 = vperm.slane %v3897, %v636
    %v3936 = vsel %vm638, %v3935, %v3934
    %v3937 = vperm.slane %v3900, %v634
    %v3938 = vperm.slane %v3903, %v636
    %v3939 = vsel %vm638, %v3938, %v3937
    %v3940 = vsel %vm673, %v3909, %v3906
    %v3941 = vsel %vm675, %v3912, %v3940
    %v3942 = vsel %vm677, %v3915, %v3941
    %v3943 = vsel %vm679, %v3918, %v3942
    %v3944 = vsel %vm681, %v3921, %v3943
    %v3945 = vsel %vm683, %v3924, %v3944
    %v3946 = vsel %vm685, %v3927, %v3945
    %v3947 = vsel %vm673, %v3933, %v3930
    %v3948 = vsel %vm675, %v3936, %v3947
    %v3949 = vsel %vm677, %v3939, %v3948
    %v3952 = vsel %vm692, %v3946, -inf
    %3953 = vmax.xlane.f32.xlu0 %v3952
    %v3954 = vpop.xlane.xlu0 %3953
    %v3955 = vsel %vm696, %v3949, -inf
    %3956 = vmax.xlane.f32.xlu0 %v3955
    %v3957 = vpop.xlane.xlu0 %3956
    %v3960 = vperm.slane %v3954, 0
    %v3961 = vperm.slane %v3954, 1
    %v3962 = vperm.slane %v3954, 2
    %v3963 = vperm.slane %v3954, 3
    %v3964 = vperm.slane %v3954, 4
    %v3965 = vperm.slane %v3954, 5
    %v3966 = vperm.slane %v3954, 6
    %v3967 = vperm.slane %v3954, 7
    %v3968 = vperm.slane %v3957, 0
    %v3969 = vperm.slane %v3957, 1
    %v3970 = vperm.slane %v3957, 2
    %v3971 = vperm.slane %v3957, 3
    %v3984 = vsub.f32 %v3784, %v3960
    %v3985 = vsub.f32 %v3785, %v3960
    %v3986 = vsub.f32 %v3786, %v3961
    %v3987 = vsub.f32 %v3787, %v3961
    %v3988 = vsub.f32 %v3788, %v3962
    %v3989 = vsub.f32 %v3789, %v3962
    %v3990 = vsub.f32 %v3790, %v3963
    %v3991 = vsub.f32 %v3791, %v3963
    %v3992 = vsub.f32 %v3792, %v3964
    %v3993 = vsub.f32 %v3793, %v3964
    %v3994 = vsub.f32 %v3794, %v3965
    %v3995 = vsub.f32 %v3795, %v3965
    %v3996 = vsub.f32 %v3796, %v3966
    %v3997 = vsub.f32 %v3797, %v3966
    %v3998 = vsub.f32 %v3798, %v3967
    %v3999 = vsub.f32 %v3799, %v3967
    %v4000 = vsub.f32 %v3800, %v3968
    %v4001 = vsub.f32 %v3801, %v3968
    %v4002 = vsub.f32 %v3802, %v3969
    %v4003 = vsub.f32 %v3803, %v3969
    %v4004 = vsub.f32 %v3804, %v3970
    %v4005 = vsub.f32 %v3805, %v3970
    %v4006 = vsub.f32 %v3806, %v3971
    %v4007 = vsub.f32 %v3807, %v3971
    %v4008 = vmul.f32 %v3984, 1.442695
    %v4009 = vpow.pop %v4008
    %v4010 = vmul.f32 %v3985, 1.442695
    %v4011 = vpow.pop %v4010
    %v4012 = vmul.f32 %v3986, 1.442695
    %v4013 = vpow.pop %v4012
    %v4014 = vmul.f32 %v3987, 1.442695
    %v4015 = vpow.pop %v4014
    %v4016 = vmul.f32 %v3988, 1.442695
    %v4017 = vpow.pop %v4016
    %v4018 = vmul.f32 %v3989, 1.442695
    %v4019 = vpow.pop %v4018
    %v4020 = vmul.f32 %v3990, 1.442695
    %v4021 = vpow.pop %v4020
    %v4022 = vmul.f32 %v3991, 1.442695
    %v4023 = vpow.pop %v4022
    %v4024 = vmul.f32 %v3992, 1.442695
    %v4025 = vpow.pop %v4024
    %v4026 = vmul.f32 %v3993, 1.442695
    %v4027 = vpow.pop %v4026
    %v4028 = vmul.f32 %v3994, 1.442695
    %v4029 = vpow.pop %v4028
    %v4030 = vmul.f32 %v3995, 1.442695
    %v4031 = vpow.pop %v4030
    %v4032 = vmul.f32 %v3996, 1.442695
    %v4033 = vpow.pop %v4032
    %v4034 = vmul.f32 %v3997, 1.442695
    %v4035 = vpow.pop %v4034
    %v4036 = vmul.f32 %v3998, 1.442695
    %v4037 = vpow.pop %v4036
    %v4038 = vmul.f32 %v3999, 1.442695
    %v4039 = vpow.pop %v4038
    %v4040 = vmul.f32 %v4000, 1.442695
    %v4041 = vpow.pop %v4040
    %v4042 = vmul.f32 %v4001, 1.442695
    %v4043 = vpow.pop %v4042
    %v4044 = vmul.f32 %v4002, 1.442695
    %v4045 = vpow.pop %v4044
    %v4046 = vmul.f32 %v4003, 1.442695
    %v4047 = vpow.pop %v4046
    %v4048 = vmul.f32 %v4004, 1.442695
    %v4049 = vpow.pop %v4048
    %v4050 = vmul.f32 %v4005, 1.442695
    %v4051 = vpow.pop %v4050
    %v4052 = vmul.f32 %v4006, 1.442695
    %v4053 = vpow.pop %v4052
    %v4054 = vmul.f32 %v4007, 1.442695
    %v4055 = vpow.pop %v4054
    %4080 = vset.pattern.permute.xlu0 0
    %4081 = vperm.xlu0 %4080, %v4009
    %v4082 = vpop.permute.xlu0 %4081
    %4083 = vset.pattern.permute.xlu0 0
    %4084 = vperm.xlu0 %4083, %v4011
    %v4085 = vpop.permute.xlu0 %4084
    %4086 = vset.pattern.permute.xlu0 0
    %4087 = vperm.xlu0 %4086, %v4013
    %v4088 = vpop.permute.xlu0 %4087
    %4089 = vset.pattern.permute.xlu0 0
    %4090 = vperm.xlu0 %4089, %v4015
    %v4091 = vpop.permute.xlu0 %4090
    %4092 = vset.pattern.permute.xlu0 0
    %4093 = vperm.xlu0 %4092, %v4017
    %v4094 = vpop.permute.xlu0 %4093
    %4095 = vset.pattern.permute.xlu0 0
    %4096 = vperm.xlu0 %4095, %v4019
    %v4097 = vpop.permute.xlu0 %4096
    %4098 = vset.pattern.permute.xlu0 0
    %4099 = vperm.xlu0 %4098, %v4021
    %v4100 = vpop.permute.xlu0 %4099
    %4101 = vset.pattern.permute.xlu0 0
    %4102 = vperm.xlu0 %4101, %v4023
    %v4103 = vpop.permute.xlu0 %4102
    %4104 = vset.pattern.permute.xlu0 0
    %4105 = vperm.xlu0 %4104, %v4025
    %v4106 = vpop.permute.xlu0 %4105
    %4107 = vset.pattern.permute.xlu0 0
    %4108 = vperm.xlu0 %4107, %v4027
    %v4109 = vpop.permute.xlu0 %4108
    %4110 = vset.pattern.permute.xlu0 0
    %4111 = vperm.xlu0 %4110, %v4029
    %v4112 = vpop.permute.xlu0 %4111
    %4113 = vset.pattern.permute.xlu0 0
    %4114 = vperm.xlu0 %4113, %v4031
    %v4115 = vpop.permute.xlu0 %4114
    %4116 = vset.pattern.permute.xlu0 0
    %4117 = vperm.xlu0 %4116, %v4033
    %v4118 = vpop.permute.xlu0 %4117
    %4119 = vset.pattern.permute.xlu0 0
    %4120 = vperm.xlu0 %4119, %v4035
    %v4121 = vpop.permute.xlu0 %4120
    %4122 = vset.pattern.permute.xlu0 0
    %4123 = vperm.xlu0 %4122, %v4037
    %v4124 = vpop.permute.xlu0 %4123
    %4125 = vset.pattern.permute.xlu0 0
    %4126 = vperm.xlu0 %4125, %v4039
    %v4127 = vpop.permute.xlu0 %4126
    %4128 = vset.pattern.permute.xlu0 0
    %4129 = vperm.xlu0 %4128, %v4041
    %v4130 = vpop.permute.xlu0 %4129
    %4131 = vset.pattern.permute.xlu0 0
    %4132 = vperm.xlu0 %4131, %v4043
    %v4133 = vpop.permute.xlu0 %4132
    %4134 = vset.pattern.permute.xlu0 0
    %4135 = vperm.xlu0 %4134, %v4045
    %v4136 = vpop.permute.xlu0 %4135
    %4137 = vset.pattern.permute.xlu0 0
    %4138 = vperm.xlu0 %4137, %v4047
    %v4139 = vpop.permute.xlu0 %4138
    %4140 = vset.pattern.permute.xlu0 0
    %4141 = vperm.xlu0 %4140, %v4049
    %v4142 = vpop.permute.xlu0 %4141
    %4143 = vset.pattern.permute.xlu0 0
    %4144 = vperm.xlu0 %4143, %v4051
    %v4145 = vpop.permute.xlu0 %4144
    %4146 = vset.pattern.permute.xlu0 0
    %4147 = vperm.xlu0 %4146, %v4053
    %v4148 = vpop.permute.xlu0 %4147
    %4149 = vset.pattern.permute.xlu0 0
    %4150 = vperm.xlu0 %4149, %v4055
    %v4151 = vpop.permute.xlu0 %4150
    %v4152 = vperm.slane %v4082, %v634
    %v4153 = vperm.slane %v4085, %v636
    %v4154 = vsel %vm638, %v4153, %v4152
    %v4155 = vperm.slane %v4088, %v634
    %v4156 = vperm.slane %v4091, %v636
    %v4157 = vsel %vm638, %v4156, %v4155
    %v4158 = vperm.slane %v4094, %v634
    %v4159 = vperm.slane %v4097, %v636
    %v4160 = vsel %vm638, %v4159, %v4158
    %v4161 = vperm.slane %v4100, %v634
    %v4162 = vperm.slane %v4103, %v636
    %v4163 = vsel %vm638, %v4162, %v4161
    %v4164 = vperm.slane %v4106, %v634
    %v4165 = vperm.slane %v4109, %v636
    %v4166 = vsel %vm638, %v4165, %v4164
    %v4167 = vperm.slane %v4112, %v634
    %v4168 = vperm.slane %v4115, %v636
    %v4169 = vsel %vm638, %v4168, %v4167
    %v4170 = vperm.slane %v4118, %v634
    %v4171 = vperm.slane %v4121, %v636
    %v4172 = vsel %vm638, %v4171, %v4170
    %v4173 = vperm.slane %v4124, %v634
    %v4174 = vperm.slane %v4127, %v636
    %v4175 = vsel %vm638, %v4174, %v4173
    %v4176 = vperm.slane %v4130, %v634
    %v4177 = vperm.slane %v4133, %v636
    %v4178 = vsel %vm638, %v4177, %v4176
    %v4179 = vperm.slane %v4136, %v634
    %v4180 = vperm.slane %v4139, %v636
    %v4181 = vsel %vm638, %v4180, %v4179
    %v4182 = vperm.slane %v4142, %v634
    %v4183 = vperm.slane %v4145, %v636
    %v4184 = vsel %vm638, %v4183, %v4182
    %v4185 = vperm.slane %v4148, %v634
    %v4186 = vperm.slane %v4151, %v636
    %v4187 = vsel %vm638, %v4186, %v4185
    %v4188 = vsel %vm673, %v4157, %v4154
    %v4189 = vsel %vm675, %v4160, %v4188
    %v4190 = vsel %vm677, %v4163, %v4189
    %v4191 = vsel %vm679, %v4166, %v4190
    %v4192 = vsel %vm681, %v4169, %v4191
    %v4193 = vsel %vm683, %v4172, %v4192
    %v4194 = vsel %vm685, %v4175, %v4193
    %v4195 = vsel %vm673, %v4181, %v4178
    %v4196 = vsel %vm675, %v4184, %v4195
    %v4197 = vsel %vm677, %v4187, %v4196
    %v4200 = vsel %vm21, %v4194, 0.0
    %v4201 = vsel %vm22, %v4197, 0.0
    %v4202 = vsel %vm692, %v4200, 0.0
    %4203 = vadd.xlane.f32.xlu0 %v4202
    %v4204 = vpop.xlane.xlu0 %4203
    %v4205 = vsel %vm696, %v4201, 0.0
    %4206 = vadd.xlane.f32.xlu0 %v4205
    %v4207 = vpop.xlane.xlu0 %4206
    %v4208 = vrcp.pop %v4204
    %v4209 = vrcp.pop %v4207
    %v4210 = vmul.f32 %v4200, %v4208
    %v4211 = vmul.f32 %v4201, %v4209
    %v4212 = vpack.c.bf16 %v4211, %v4210
    %4213 = vrot.lane.b32.xlu0 %v3000, 96
    %v4214 = vpop.permute.xlu0 %4213
    %v4216 = vsel %vm692, %v4212, 0
    %v4219 = vsel %vm963, %v4214, 0
    %4221 = vmatpush.bf16.msra.mxu0 0
    %4222 = vmatpush.bf16.msra.mxu0 0
    %4223 = vmatpush.bf16.msra.mxu0 0
    %4224 = vmatpush.bf16.msra.mxu0 0
    %4225 = vmatpush.bf16.msra.mxu0 0
    %4226 = vmatpush.bf16.msra.mxu0 0
    %4227 = vmatpush.bf16.msra.mxu0 0
    %4228 = vmatpush.bf16.msra.mxu0 %v4219
    %4229 = vmatmul.bf16.gmra.mxu0 %v4216
    %v4230 = vpop.f32.mrf.mxu0
    %v4231 = vadd.f32 0.0, %v4230
    %v4232 = vpop.f32.mrf.mxu0
    %v4233 = vadd.f32 0.0, %v4232
    %4234 = vdwg.mxu0
    %4237 = vrot.lane.b32.xlu0 %v3636, 16
    %v4238 = vpop.permute.xlu0 %4237
    %4239 = vrot.lane.b32.xlu0 %v3638, 16
    %v4240 = vpop.permute.xlu0 %4239
    %4245 = vrot.lane.b32.xlu0 %v4231, 32
    %v4246 = vpop.permute.xlu0 %4245
    %4247 = vrot.lane.b32.xlu0 %v4233, 32
    %v4248 = vpop.permute.xlu0 %4247
    %v4251 = vsel %vm2493, %v3017, %v4238
    %v4252 = vsel %vm2493, %v3019, %v4240
    %vm4253 = vcmask 261120
    %v4254 = vsel %vm4253, %v4251, %v4246
    %v4255 = vsel %vm4253, %v4252, %v4248
    %v4256 = vperm.slane %v2249, 0
    %v4257 = vmul.f32 %v4254, %v4256
    %v4258 = vmul.f32 %v4255, %v4256
    %v4259 = vperm.slane %v2250, 0
    %v4260 = vadd.f32 %v4257, %v4259
    %v4261 = vadd.f32 %v4258, %v4259
    %v4262 = vld [vmem:[%s2 + $0x60] sm:$0xf]
    %v4263 = vld [vmem:[%s2 + $0x64] sm:$0xf]
    %v4264 = vld [vmem:[%s2 + $0x68] sm:$0xf]
    %v4265 = vld [vmem:[%s2 + $0x6c] sm:$0xf]
    %v4266 = vld [vmem:[%s2 + $0x70] sm:$0xf]
    %v4267 = vld [vmem:[%s2 + $0x74] sm:$0xf]
    %v4268 = vld [vmem:[%s2 + $0x78] sm:$0xf]
    %v4269 = vld [vmem:[%s2 + $0x7c] sm:$0xf]
    %v4270 = vld [vmem:[%s2 + $0x80] sm:$0xf]
    %v4271 = vld [vmem:[%s2 + $0x84] sm:$0xf]
    %v4272 = vld [vmem:[%s2 + $0x88] sm:$0xf]
    %v4273 = vld [vmem:[%s2 + $0x8c] sm:$0xf]
    %v4274 = vld [vmem:[%s3 + $0x10] sm:$0x1]
    %v4275 = vld [vmem:[%s3 + $0x11] sm:$0x1]
    %v4276 = vld [vmem:[%s3 + $0x12] sm:$0x1]
    %v4277 = vld [vmem:[%s3 + $0x13] sm:$0x1]
    %v4278 = vld [vmem:[%s3 + $0x14] sm:$0x1]
    %v4279 = vpack.c.bf16 %v4261, %v4260
    %v4280 = vperm.slane %v4274, 0
    %v4287 = vunpack.c.l.b16 %v4262
    %v4288 = vunpack.c.l.b16 %v4263
    %v4289 = vunpack.c.l.b16 %v4264
    %v4290 = vunpack.c.l.b16 %v4265
    %v4291 = vunpack.c.l.b16 %v4266
    %v4292 = vunpack.c.l.b16 %v4267
    %v4293 = vpack.c.b16 %v4288, %v4287
    %v4294 = vpack.c.b16 %v4290, %v4289
    %v4295 = vpack.c.b16 %v4292, %v4291
    %vm4299 = vcmask 392192
    %v4301 = vsel %vm4299, %v4279, 0
    %4303 = vmatpush.bf16.msra.mxu0 0
    %4304 = vmatpush.bf16.msra.mxu0 0
    %4305 = vmatpush.bf16.msra.mxu0 0
    %4306 = vmatpush.bf16.msra.mxu0 0
    %4307 = vmatpush.bf16.msra.mxu0 0
    %4308 = vmatpush.bf16.msra.mxu0 %v4295
    %4309 = vmatpush.bf16.msra.mxu0 %v4294
    %4310 = vmatpush.bf16.msra.mxu0 %v4293
    %4311 = vmatmul.bf16.gmra.mxu0 %v4301
    %v4312 = vpop.f32.mrf.mxu0
    %v4313 = vadd.f32 %v4280, %v4312
    %v4314 = vpop.f32.mrf.mxu0
    %v4315 = vadd.f32 %v4280, %v4314
    %4316 = vdwg.mxu0
    %v4317 = vperm.slane %v4275, 0
    %v4324 = vunpack.c.l.b16 %v4268
    %v4325 = vunpack.c.l.b16 %v4269
    %v4326 = vunpack.c.l.b16 %v4270
    %v4327 = vunpack.c.l.b16 %v4271
    %v4328 = vunpack.c.l.b16 %v4272
    %v4329 = vunpack.c.l.b16 %v4273
    %v4330 = vpack.c.b16 %v4325, %v4324
    %v4331 = vpack.c.b16 %v4327, %v4326
    %v4332 = vpack.c.b16 %v4329, %v4328
    %4336 = vmatpush.bf16.msra.mxu0 0
    %4337 = vmatpush.bf16.msra.mxu0 0
    %4338 = vmatpush.bf16.msra.mxu0 0
    %4339 = vmatpush.bf16.msra.mxu0 0
    %4340 = vmatpush.bf16.msra.mxu0 0
    %4341 = vmatpush.bf16.msra.mxu0 %v4332
    %4342 = vmatpush.bf16.msra.mxu0 %v4331
    %4343 = vmatpush.bf16.msra.mxu0 %v4330
    %4344 = vmatmul.bf16.gmra.mxu0 %v4301
    %v4345 = vpop.f32.mrf.mxu0
    %v4346 = vadd.f32 %v4317, %v4345
    %v4347 = vpop.f32.mrf.mxu0
    %v4348 = vadd.f32 %v4317, %v4347
    %4349 = vdwg.mxu0
    %v4352 = vrot.slane %v4346, 1
    %v4353 = vrot.slane %v4346, 2
    %v4354 = vrot.slane %v4346, 3
    %v4355 = vrot.slane %v4346, 4
    %v4356 = vrot.slane %v4346, 5
    %v4357 = vrot.slane %v4346, 6
    %v4358 = vrot.slane %v4346, 7
    %v4359 = vrot.slane %v4348, 1
    %v4360 = vrot.slane %v4348, 2
    %v4361 = vrot.slane %v4348, 3
    %v4362 = vperm.slane %v4346, 0
    %v4363 = vperm.slane %v4352, 0
    %v4364 = vperm.slane %v4353, 0
    %v4365 = vperm.slane %v4354, 0
    %v4366 = vperm.slane %v4355, 0
    %v4367 = vperm.slane %v4356, 0
    %v4368 = vperm.slane %v4357, 0
    %v4369 = vperm.slane %v4358, 0
    %v4370 = vperm.slane %v4348, 0
    %v4371 = vperm.slane %v4359, 0
    %v4372 = vperm.slane %v4360, 0
    %v4373 = vperm.slane %v4361, 0
    %v4386 = vadd.f32 %v4313, %v4362
    %v4387 = vadd.f32 %v4315, %v4362
    %v4388 = vadd.f32 %v4313, %v4363
    %v4389 = vadd.f32 %v4315, %v4363
    %v4390 = vadd.f32 %v4313, %v4364
    %v4391 = vadd.f32 %v4315, %v4364
    %v4392 = vadd.f32 %v4313, %v4365
    %v4393 = vadd.f32 %v4315, %v4365
    %v4394 = vadd.f32 %v4313, %v4366
    %v4395 = vadd.f32 %v4315, %v4366
    %v4396 = vadd.f32 %v4313, %v4367
    %v4397 = vadd.f32 %v4315, %v4367
    %v4398 = vadd.f32 %v4313, %v4368
    %v4399 = vadd.f32 %v4315, %v4368
    %v4400 = vadd.f32 %v4313, %v4369
    %v4401 = vadd.f32 %v4315, %v4369
    %v4402 = vadd.f32 %v4313, %v4370
    %v4403 = vadd.f32 %v4315, %v4370
    %v4404 = vadd.f32 %v4313, %v4371
    %v4405 = vadd.f32 %v4315, %v4371
    %v4406 = vadd.f32 %v4313, %v4372
    %v4407 = vadd.f32 %v4315, %v4372
    %v4408 = vadd.f32 %v4313, %v4373
    %v4409 = vadd.f32 %v4315, %v4373
    %vm4410 = vcmp.gt.f32.partialorder %v4386, 0.0
    %vm4411 = vcmp.gt.f32.partialorder %v4387, 0.0
    %vm4412 = vcmp.gt.f32.partialorder %v4388, 0.0
    %vm4413 = vcmp.gt.f32.partialorder %v4389, 0.0
    %vm4414 = vcmp.gt.f32.partialorder %v4390, 0.0
    %vm4415 = vcmp.gt.f32.partialorder %v4391, 0.0
    %vm4416 = vcmp.gt.f32.partialorder %v4392, 0.0
    %vm4417 = vcmp.gt.f32.partialorder %v4393, 0.0
    %vm4418 = vcmp.gt.f32.partialorder %v4394, 0.0
    %vm4419 = vcmp.gt.f32.partialorder %v4395, 0.0
    %vm4420 = vcmp.gt.f32.partialorder %v4396, 0.0
    %vm4421 = vcmp.gt.f32.partialorder %v4397, 0.0
    %vm4422 = vcmp.gt.f32.partialorder %v4398, 0.0
    %vm4423 = vcmp.gt.f32.partialorder %v4399, 0.0
    %vm4424 = vcmp.gt.f32.partialorder %v4400, 0.0
    %vm4425 = vcmp.gt.f32.partialorder %v4401, 0.0
    %vm4426 = vcmp.gt.f32.partialorder %v4402, 0.0
    %vm4427 = vcmp.gt.f32.partialorder %v4403, 0.0
    %vm4428 = vcmp.gt.f32.partialorder %v4404, 0.0
    %vm4429 = vcmp.gt.f32.partialorder %v4405, 0.0
    %vm4430 = vcmp.gt.f32.partialorder %v4406, 0.0
    %vm4431 = vcmp.gt.f32.partialorder %v4407, 0.0
    %vm4432 = vcmp.gt.f32.partialorder %v4408, 0.0
    %vm4433 = vcmp.gt.f32.partialorder %v4409, 0.0
    %v4434 = vmul.f32 %v4386, 0.2
    %v4435 = vmul.f32 %v4387, 0.2
    %v4436 = vmul.f32 %v4388, 0.2
    %v4437 = vmul.f32 %v4389, 0.2
    %v4438 = vmul.f32 %v4390, 0.2
    %v4439 = vmul.f32 %v4391, 0.2
    %v4440 = vmul.f32 %v4392, 0.2
    %v4441 = vmul.f32 %v4393, 0.2
    %v4442 = vmul.f32 %v4394, 0.2
    %v4443 = vmul.f32 %v4395, 0.2
    %v4444 = vmul.f32 %v4396, 0.2
    %v4445 = vmul.f32 %v4397, 0.2
    %v4446 = vmul.f32 %v4398, 0.2
    %v4447 = vmul.f32 %v4399, 0.2
    %v4448 = vmul.f32 %v4400, 0.2
    %v4449 = vmul.f32 %v4401, 0.2
    %v4450 = vmul.f32 %v4402, 0.2
    %v4451 = vmul.f32 %v4403, 0.2
    %v4452 = vmul.f32 %v4404, 0.2
    %v4453 = vmul.f32 %v4405, 0.2
    %v4454 = vmul.f32 %v4406, 0.2
    %v4455 = vmul.f32 %v4407, 0.2
    %v4456 = vmul.f32 %v4408, 0.2
    %v4457 = vmul.f32 %v4409, 0.2
    %v4458 = vsel %vm4410, %v4386, %v4434
    %v4459 = vsel %vm4411, %v4387, %v4435
    %v4460 = vsel %vm4412, %v4388, %v4436
    %v4461 = vsel %vm4413, %v4389, %v4437
    %v4462 = vsel %vm4414, %v4390, %v4438
    %v4463 = vsel %vm4415, %v4391, %v4439
    %v4464 = vsel %vm4416, %v4392, %v4440
    %v4465 = vsel %vm4417, %v4393, %v4441
    %v4466 = vsel %vm4418, %v4394, %v4442
    %v4467 = vsel %vm4419, %v4395, %v4443
    %v4468 = vsel %vm4420, %v4396, %v4444
    %v4469 = vsel %vm4421, %v4397, %v4445
    %v4470 = vsel %vm4422, %v4398, %v4446
    %v4471 = vsel %vm4423, %v4399, %v4447
    %v4472 = vsel %vm4424, %v4400, %v4448
    %v4473 = vsel %vm4425, %v4401, %v4449
    %v4474 = vsel %vm4426, %v4402, %v4450
    %v4475 = vsel %vm4427, %v4403, %v4451
    %v4476 = vsel %vm4428, %v4404, %v4452
    %v4477 = vsel %vm4429, %v4405, %v4453
    %v4478 = vsel %vm4430, %v4406, %v4454
    %v4479 = vsel %vm4431, %v4407, %v4455
    %v4480 = vsel %vm4432, %v4408, %v4456
    %v4481 = vsel %vm4433, %v4409, %v4457
    %v4482 = vperm.slane %v4276, 0
    %v4483 = vmul.f32 %v4458, %v4482
    %v4484 = vmul.f32 %v4459, %v4482
    %v4485 = vmul.f32 %v4460, %v4482
    %v4486 = vmul.f32 %v4461, %v4482
    %v4487 = vmul.f32 %v4462, %v4482
    %v4488 = vmul.f32 %v4463, %v4482
    %v4489 = vmul.f32 %v4464, %v4482
    %v4490 = vmul.f32 %v4465, %v4482
    %v4491 = vmul.f32 %v4466, %v4482
    %v4492 = vmul.f32 %v4467, %v4482
    %v4493 = vmul.f32 %v4468, %v4482
    %v4494 = vmul.f32 %v4469, %v4482
    %v4495 = vmul.f32 %v4470, %v4482
    %v4496 = vmul.f32 %v4471, %v4482
    %v4497 = vmul.f32 %v4472, %v4482
    %v4498 = vmul.f32 %v4473, %v4482
    %v4499 = vmul.f32 %v4474, %v4482
    %v4500 = vmul.f32 %v4475, %v4482
    %v4501 = vmul.f32 %v4476, %v4482
    %v4502 = vmul.f32 %v4477, %v4482
    %v4503 = vmul.f32 %v4478, %v4482
    %v4504 = vmul.f32 %v4479, %v4482
    %v4505 = vmul.f32 %v4480, %v4482
    %v4506 = vmul.f32 %v4481, %v4482
    %v4507 = vpack.c.bf16 %v4313, %v4313
    %v4508 = vpack.c.bf16 %v4315, %v4315
    %vm4509 = vcmask 113664
    %v4510 = vsel %vm4509, %v4483, 0.0
    %4511 = vadd.xlane.f32.xlu0 %v4510
    %v4512 = vpop.xlane.xlu0 %4511
    %vm4513 = vcmask 109568
    %v4514 = vsel %vm4513, %v4484, 0.0
    %4515 = vadd.xlane.f32.xlu0 %v4514
    %v4516 = vpop.xlane.xlu0 %4515
    %v4517 = vsel %vm4509, %v4485, 0.0
    %4518 = vadd.xlane.f32.xlu0 %v4517
    %v4519 = vpop.xlane.xlu0 %4518
    %v4520 = vsel %vm4513, %v4486, 0.0
    %4521 = vadd.xlane.f32.xlu0 %v4520
    %v4522 = vpop.xlane.xlu0 %4521
    %v4523 = vsel %vm4509, %v4487, 0.0
    %4524 = vadd.xlane.f32.xlu0 %v4523
    %v4525 = vpop.xlane.xlu0 %4524
    %v4526 = vsel %vm4513, %v4488, 0.0
    %4527 = vadd.xlane.f32.xlu0 %v4526
    %v4528 = vpop.xlane.xlu0 %4527
    %v4529 = vsel %vm4509, %v4489, 0.0
    %4530 = vadd.xlane.f32.xlu0 %v4529
    %v4531 = vpop.xlane.xlu0 %4530
    %v4532 = vsel %vm4513, %v4490, 0.0
    %4533 = vadd.xlane.f32.xlu0 %v4532
    %v4534 = vpop.xlane.xlu0 %4533
    %v4535 = vsel %vm4509, %v4491, 0.0
    %4536 = vadd.xlane.f32.xlu0 %v4535
    %v4537 = vpop.xlane.xlu0 %4536
    %v4538 = vsel %vm4513, %v4492, 0.0
    %4539 = vadd.xlane.f32.xlu0 %v4538
    %v4540 = vpop.xlane.xlu0 %4539
    %v4541 = vsel %vm4509, %v4493, 0.0
    %4542 = vadd.xlane.f32.xlu0 %v4541
    %v4543 = vpop.xlane.xlu0 %4542
    %v4544 = vsel %vm4513, %v4494, 0.0
    %4545 = vadd.xlane.f32.xlu0 %v4544
    %v4546 = vpop.xlane.xlu0 %4545
    %v4547 = vsel %vm4509, %v4495, 0.0
    %4548 = vadd.xlane.f32.xlu0 %v4547
    %v4549 = vpop.xlane.xlu0 %4548
    %v4550 = vsel %vm4513, %v4496, 0.0
    %4551 = vadd.xlane.f32.xlu0 %v4550
    %v4552 = vpop.xlane.xlu0 %4551
    %v4553 = vsel %vm4509, %v4497, 0.0
    %4554 = vadd.xlane.f32.xlu0 %v4553
    %v4555 = vpop.xlane.xlu0 %4554
    %v4556 = vsel %vm4513, %v4498, 0.0
    %4557 = vadd.xlane.f32.xlu0 %v4556
    %v4558 = vpop.xlane.xlu0 %4557
    %v4559 = vsel %vm4509, %v4499, 0.0
    %4560 = vadd.xlane.f32.xlu0 %v4559
    %v4561 = vpop.xlane.xlu0 %4560
    %v4562 = vsel %vm4513, %v4500, 0.0
    %4563 = vadd.xlane.f32.xlu0 %v4562
    %v4564 = vpop.xlane.xlu0 %4563
    %v4565 = vsel %vm4509, %v4501, 0.0
    %4566 = vadd.xlane.f32.xlu0 %v4565
    %v4567 = vpop.xlane.xlu0 %4566
    %v4568 = vsel %vm4513, %v4502, 0.0
    %4569 = vadd.xlane.f32.xlu0 %v4568
    %v4570 = vpop.xlane.xlu0 %4569
    %v4571 = vsel %vm4509, %v4503, 0.0
    %4572 = vadd.xlane.f32.xlu0 %v4571
    %v4573 = vpop.xlane.xlu0 %4572
    %v4574 = vsel %vm4513, %v4504, 0.0
    %4575 = vadd.xlane.f32.xlu0 %v4574
    %v4576 = vpop.xlane.xlu0 %4575
    %v4577 = vsel %vm4509, %v4505, 0.0
    %4578 = vadd.xlane.f32.xlu0 %v4577
    %v4579 = vpop.xlane.xlu0 %4578
    %v4580 = vsel %vm4513, %v4506, 0.0
    %4581 = vadd.xlane.f32.xlu0 %v4580
    %v4582 = vpop.xlane.xlu0 %4581
    %v4583 = vadd.f32 %v4512, %v339
    %v4584 = vadd.f32 %v4516, %v345
    %v4585 = vadd.f32 %v4519, %v352
    %v4586 = vadd.f32 %v4522, %v358
    %v4587 = vadd.f32 %v4525, %v365
    %v4588 = vadd.f32 %v4528, %v371
    %v4589 = vadd.f32 %v4531, %v378
    %v4590 = vadd.f32 %v4534, %v384
    %v4591 = vadd.f32 %v4537, %v391
    %v4592 = vadd.f32 %v4540, %v397
    %v4593 = vadd.f32 %v4543, %v404
    %v4594 = vadd.f32 %v4546, %v410
    %v4595 = vadd.f32 %v4549, %v417
    %v4596 = vadd.f32 %v4552, %v423
    %v4597 = vadd.f32 %v4555, %v430
    %v4598 = vadd.f32 %v4558, %v436
    %v4599 = vadd.f32 %v4561, %v443
    %v4600 = vadd.f32 %v4564, %v449
    %v4601 = vadd.f32 %v4567, %v456
    %v4602 = vadd.f32 %v4570, %v462
    %v4603 = vadd.f32 %v4573, %v469
    %v4604 = vadd.f32 %v4576, %v475
    %v4605 = vadd.f32 %v4579, %v482
    %v4606 = vadd.f32 %v4582, %v488
    %4631 = vset.pattern.permute.xlu0 0
    %4632 = vperm.xlu0 %4631, %v4583
    %v4633 = vpop.permute.xlu0 %4632
    %4634 = vset.pattern.permute.xlu0 0
    %4635 = vperm.xlu0 %4634, %v4584
    %v4636 = vpop.permute.xlu0 %4635
    %4637 = vset.pattern.permute.xlu0 0
    %4638 = vperm.xlu0 %4637, %v4585
    %v4639 = vpop.permute.xlu0 %4638
    %4640 = vset.pattern.permute.xlu0 0
    %4641 = vperm.xlu0 %4640, %v4586
    %v4642 = vpop.permute.xlu0 %4641
    %4643 = vset.pattern.permute.xlu0 0
    %4644 = vperm.xlu0 %4643, %v4587
    %v4645 = vpop.permute.xlu0 %4644
    %4646 = vset.pattern.permute.xlu0 0
    %4647 = vperm.xlu0 %4646, %v4588
    %v4648 = vpop.permute.xlu0 %4647
    %4649 = vset.pattern.permute.xlu0 0
    %4650 = vperm.xlu0 %4649, %v4589
    %v4651 = vpop.permute.xlu0 %4650
    %4652 = vset.pattern.permute.xlu0 0
    %4653 = vperm.xlu0 %4652, %v4590
    %v4654 = vpop.permute.xlu0 %4653
    %4655 = vset.pattern.permute.xlu0 0
    %4656 = vperm.xlu0 %4655, %v4591
    %v4657 = vpop.permute.xlu0 %4656
    %4658 = vset.pattern.permute.xlu0 0
    %4659 = vperm.xlu0 %4658, %v4592
    %v4660 = vpop.permute.xlu0 %4659
    %4661 = vset.pattern.permute.xlu0 0
    %4662 = vperm.xlu0 %4661, %v4593
    %v4663 = vpop.permute.xlu0 %4662
    %4664 = vset.pattern.permute.xlu0 0
    %4665 = vperm.xlu0 %4664, %v4594
    %v4666 = vpop.permute.xlu0 %4665
    %4667 = vset.pattern.permute.xlu0 0
    %4668 = vperm.xlu0 %4667, %v4595
    %v4669 = vpop.permute.xlu0 %4668
    %4670 = vset.pattern.permute.xlu0 0
    %4671 = vperm.xlu0 %4670, %v4596
    %v4672 = vpop.permute.xlu0 %4671
    %4673 = vset.pattern.permute.xlu0 0
    %4674 = vperm.xlu0 %4673, %v4597
    %v4675 = vpop.permute.xlu0 %4674
    %4676 = vset.pattern.permute.xlu0 0
    %4677 = vperm.xlu0 %4676, %v4598
    %v4678 = vpop.permute.xlu0 %4677
    %4679 = vset.pattern.permute.xlu0 0
    %4680 = vperm.xlu0 %4679, %v4599
    %v4681 = vpop.permute.xlu0 %4680
    %4682 = vset.pattern.permute.xlu0 0
    %4683 = vperm.xlu0 %4682, %v4600
    %v4684 = vpop.permute.xlu0 %4683
    %4685 = vset.pattern.permute.xlu0 0
    %4686 = vperm.xlu0 %4685, %v4601
    %v4687 = vpop.permute.xlu0 %4686
    %4688 = vset.pattern.permute.xlu0 0
    %4689 = vperm.xlu0 %4688, %v4602
    %v4690 = vpop.permute.xlu0 %4689
    %4691 = vset.pattern.permute.xlu0 0
    %4692 = vperm.xlu0 %4691, %v4603
    %v4693 = vpop.permute.xlu0 %4692
    %4694 = vset.pattern.permute.xlu0 0
    %4695 = vperm.xlu0 %4694, %v4604
    %v4696 = vpop.permute.xlu0 %4695
    %4697 = vset.pattern.permute.xlu0 0
    %4698 = vperm.xlu0 %4697, %v4605
    %v4699 = vpop.permute.xlu0 %4698
    %4700 = vset.pattern.permute.xlu0 0
    %4701 = vperm.xlu0 %4700, %v4606
    %v4702 = vpop.permute.xlu0 %4701
    %v4703 = vperm.slane %v4633, %v634
    %v4704 = vperm.slane %v4636, %v636
    %v4705 = vsel %vm638, %v4704, %v4703
    %v4706 = vperm.slane %v4639, %v634
    %v4707 = vperm.slane %v4642, %v636
    %v4708 = vsel %vm638, %v4707, %v4706
    %v4709 = vperm.slane %v4645, %v634
    %v4710 = vperm.slane %v4648, %v636
    %v4711 = vsel %vm638, %v4710, %v4709
    %v4712 = vperm.slane %v4651, %v634
    %v4713 = vperm.slane %v4654, %v636
    %v4714 = vsel %vm638, %v4713, %v4712
    %v4715 = vperm.slane %v4657, %v634
    %v4716 = vperm.slane %v4660, %v636
    %v4717 = vsel %vm638, %v4716, %v4715
    %v4718 = vperm.slane %v4663, %v634
    %v4719 = vperm.slane %v4666, %v636
    %v4720 = vsel %vm638, %v4719, %v4718
    %v4721 = vperm.slane %v4669, %v634
    %v4722 = vperm.slane %v4672, %v636
    %v4723 = vsel %vm638, %v4722, %v4721
    %v4724 = vperm.slane %v4675, %v634
    %v4725 = vperm.slane %v4678, %v636
    %v4726 = vsel %vm638, %v4725, %v4724
    %v4727 = vperm.slane %v4681, %v634
    %v4728 = vperm.slane %v4684, %v636
    %v4729 = vsel %vm638, %v4728, %v4727
    %v4730 = vperm.slane %v4687, %v634
    %v4731 = vperm.slane %v4690, %v636
    %v4732 = vsel %vm638, %v4731, %v4730
    %v4733 = vperm.slane %v4693, %v634
    %v4734 = vperm.slane %v4696, %v636
    %v4735 = vsel %vm638, %v4734, %v4733
    %v4736 = vperm.slane %v4699, %v634
    %v4737 = vperm.slane %v4702, %v636
    %v4738 = vsel %vm638, %v4737, %v4736
    %v4739 = vsel %vm673, %v4708, %v4705
    %v4740 = vsel %vm675, %v4711, %v4739
    %v4741 = vsel %vm677, %v4714, %v4740
    %v4742 = vsel %vm679, %v4717, %v4741
    %v4743 = vsel %vm681, %v4720, %v4742
    %v4744 = vsel %vm683, %v4723, %v4743
    %v4745 = vsel %vm685, %v4726, %v4744
    %v4746 = vsel %vm673, %v4732, %v4729
    %v4747 = vsel %vm675, %v4735, %v4746
    %v4748 = vsel %vm677, %v4738, %v4747
    %v4751 = vsel %vm692, %v4745, -inf
    %4752 = vmax.xlane.f32.xlu0 %v4751
    %v4753 = vpop.xlane.xlu0 %4752
    %v4754 = vsel %vm696, %v4748, -inf
    %4755 = vmax.xlane.f32.xlu0 %v4754
    %v4756 = vpop.xlane.xlu0 %4755
    %v4759 = vperm.slane %v4753, 0
    %v4760 = vperm.slane %v4753, 1
    %v4761 = vperm.slane %v4753, 2
    %v4762 = vperm.slane %v4753, 3
    %v4763 = vperm.slane %v4753, 4
    %v4764 = vperm.slane %v4753, 5
    %v4765 = vperm.slane %v4753, 6
    %v4766 = vperm.slane %v4753, 7
    %v4767 = vperm.slane %v4756, 0
    %v4768 = vperm.slane %v4756, 1
    %v4769 = vperm.slane %v4756, 2
    %v4770 = vperm.slane %v4756, 3
    %v4783 = vsub.f32 %v4583, %v4759
    %v4784 = vsub.f32 %v4584, %v4759
    %v4785 = vsub.f32 %v4585, %v4760
    %v4786 = vsub.f32 %v4586, %v4760
    %v4787 = vsub.f32 %v4587, %v4761
    %v4788 = vsub.f32 %v4588, %v4761
    %v4789 = vsub.f32 %v4589, %v4762
    %v4790 = vsub.f32 %v4590, %v4762
    %v4791 = vsub.f32 %v4591, %v4763
    %v4792 = vsub.f32 %v4592, %v4763
    %v4793 = vsub.f32 %v4593, %v4764
    %v4794 = vsub.f32 %v4594, %v4764
    %v4795 = vsub.f32 %v4595, %v4765
    %v4796 = vsub.f32 %v4596, %v4765
    %v4797 = vsub.f32 %v4597, %v4766
    %v4798 = vsub.f32 %v4598, %v4766
    %v4799 = vsub.f32 %v4599, %v4767
    %v4800 = vsub.f32 %v4600, %v4767
    %v4801 = vsub.f32 %v4601, %v4768
    %v4802 = vsub.f32 %v4602, %v4768
    %v4803 = vsub.f32 %v4603, %v4769
    %v4804 = vsub.f32 %v4604, %v4769
    %v4805 = vsub.f32 %v4605, %v4770
    %v4806 = vsub.f32 %v4606, %v4770
    %v4807 = vmul.f32 %v4783, 1.442695
    %v4808 = vpow.pop %v4807
    %v4809 = vmul.f32 %v4784, 1.442695
    %v4810 = vpow.pop %v4809
    %v4811 = vmul.f32 %v4785, 1.442695
    %v4812 = vpow.pop %v4811
    %v4813 = vmul.f32 %v4786, 1.442695
    %v4814 = vpow.pop %v4813
    %v4815 = vmul.f32 %v4787, 1.442695
    %v4816 = vpow.pop %v4815
    %v4817 = vmul.f32 %v4788, 1.442695
    %v4818 = vpow.pop %v4817
    %v4819 = vmul.f32 %v4789, 1.442695
    %v4820 = vpow.pop %v4819
    %v4821 = vmul.f32 %v4790, 1.442695
    %v4822 = vpow.pop %v4821
    %v4823 = vmul.f32 %v4791, 1.442695
    %v4824 = vpow.pop %v4823
    %v4825 = vmul.f32 %v4792, 1.442695
    %v4826 = vpow.pop %v4825
    %v4827 = vmul.f32 %v4793, 1.442695
    %v4828 = vpow.pop %v4827
    %v4829 = vmul.f32 %v4794, 1.442695
    %v4830 = vpow.pop %v4829
    %v4831 = vmul.f32 %v4795, 1.442695
    %v4832 = vpow.pop %v4831
    %v4833 = vmul.f32 %v4796, 1.442695
    %v4834 = vpow.pop %v4833
    %v4835 = vmul.f32 %v4797, 1.442695
    %v4836 = vpow.pop %v4835
    %v4837 = vmul.f32 %v4798, 1.442695
    %v4838 = vpow.pop %v4837
    %v4839 = vmul.f32 %v4799, 1.442695
    %v4840 = vpow.pop %v4839
    %v4841 = vmul.f32 %v4800, 1.442695
    %v4842 = vpow.pop %v4841
    %v4843 = vmul.f32 %v4801, 1.442695
    %v4844 = vpow.pop %v4843
    %v4845 = vmul.f32 %v4802, 1.442695
    %v4846 = vpow.pop %v4845
    %v4847 = vmul.f32 %v4803, 1.442695
    %v4848 = vpow.pop %v4847
    %v4849 = vmul.f32 %v4804, 1.442695
    %v4850 = vpow.pop %v4849
    %v4851 = vmul.f32 %v4805, 1.442695
    %v4852 = vpow.pop %v4851
    %v4853 = vmul.f32 %v4806, 1.442695
    %v4854 = vpow.pop %v4853
    %4879 = vset.pattern.permute.xlu0 0
    %4880 = vperm.xlu0 %4879, %v4808
    %v4881 = vpop.permute.xlu0 %4880
    %4882 = vset.pattern.permute.xlu0 0
    %4883 = vperm.xlu0 %4882, %v4810
    %v4884 = vpop.permute.xlu0 %4883
    %4885 = vset.pattern.permute.xlu0 0
    %4886 = vperm.xlu0 %4885, %v4812
    %v4887 = vpop.permute.xlu0 %4886
    %4888 = vset.pattern.permute.xlu0 0
    %4889 = vperm.xlu0 %4888, %v4814
    %v4890 = vpop.permute.xlu0 %4889
    %4891 = vset.pattern.permute.xlu0 0
    %4892 = vperm.xlu0 %4891, %v4816
    %v4893 = vpop.permute.xlu0 %4892
    %4894 = vset.pattern.permute.xlu0 0
    %4895 = vperm.xlu0 %4894, %v4818
    %v4896 = vpop.permute.xlu0 %4895
    %4897 = vset.pattern.permute.xlu0 0
    %4898 = vperm.xlu0 %4897, %v4820
    %v4899 = vpop.permute.xlu0 %4898
    %4900 = vset.pattern.permute.xlu0 0
    %4901 = vperm.xlu0 %4900, %v4822
    %v4902 = vpop.permute.xlu0 %4901
    %4903 = vset.pattern.permute.xlu0 0
    %4904 = vperm.xlu0 %4903, %v4824
    %v4905 = vpop.permute.xlu0 %4904
    %4906 = vset.pattern.permute.xlu0 0
    %4907 = vperm.xlu0 %4906, %v4826
    %v4908 = vpop.permute.xlu0 %4907
    %4909 = vset.pattern.permute.xlu0 0
    %4910 = vperm.xlu0 %4909, %v4828
    %v4911 = vpop.permute.xlu0 %4910
    %4912 = vset.pattern.permute.xlu0 0
    %4913 = vperm.xlu0 %4912, %v4830
    %v4914 = vpop.permute.xlu0 %4913
    %4915 = vset.pattern.permute.xlu0 0
    %4916 = vperm.xlu0 %4915, %v4832
    %v4917 = vpop.permute.xlu0 %4916
    %4918 = vset.pattern.permute.xlu0 0
    %4919 = vperm.xlu0 %4918, %v4834
    %v4920 = vpop.permute.xlu0 %4919
    %4921 = vset.pattern.permute.xlu0 0
    %4922 = vperm.xlu0 %4921, %v4836
    %v4923 = vpop.permute.xlu0 %4922
    %4924 = vset.pattern.permute.xlu0 0
    %4925 = vperm.xlu0 %4924, %v4838
    %v4926 = vpop.permute.xlu0 %4925
    %4927 = vset.pattern.permute.xlu0 0
    %4928 = vperm.xlu0 %4927, %v4840
    %v4929 = vpop.permute.xlu0 %4928
    %4930 = vset.pattern.permute.xlu0 0
    %4931 = vperm.xlu0 %4930, %v4842
    %v4932 = vpop.permute.xlu0 %4931
    %4933 = vset.pattern.permute.xlu0 0
    %4934 = vperm.xlu0 %4933, %v4844
    %v4935 = vpop.permute.xlu0 %4934
    %4936 = vset.pattern.permute.xlu0 0
    %4937 = vperm.xlu0 %4936, %v4846
    %v4938 = vpop.permute.xlu0 %4937
    %4939 = vset.pattern.permute.xlu0 0
    %4940 = vperm.xlu0 %4939, %v4848
    %v4941 = vpop.permute.xlu0 %4940
    %4942 = vset.pattern.permute.xlu0 0
    %4943 = vperm.xlu0 %4942, %v4850
    %v4944 = vpop.permute.xlu0 %4943
    %4945 = vset.pattern.permute.xlu0 0
    %4946 = vperm.xlu0 %4945, %v4852
    %v4947 = vpop.permute.xlu0 %4946
    %4948 = vset.pattern.permute.xlu0 0
    %4949 = vperm.xlu0 %4948, %v4854
    %v4950 = vpop.permute.xlu0 %4949
    %v4951 = vperm.slane %v4881, %v634
    %v4952 = vperm.slane %v4884, %v636
    %v4953 = vsel %vm638, %v4952, %v4951
    %v4954 = vperm.slane %v4887, %v634
    %v4955 = vperm.slane %v4890, %v636
    %v4956 = vsel %vm638, %v4955, %v4954
    %v4957 = vperm.slane %v4893, %v634
    %v4958 = vperm.slane %v4896, %v636
    %v4959 = vsel %vm638, %v4958, %v4957
    %v4960 = vperm.slane %v4899, %v634
    %v4961 = vperm.slane %v4902, %v636
    %v4962 = vsel %vm638, %v4961, %v4960
    %v4963 = vperm.slane %v4905, %v634
    %v4964 = vperm.slane %v4908, %v636
    %v4965 = vsel %vm638, %v4964, %v4963
    %v4966 = vperm.slane %v4911, %v634
    %v4967 = vperm.slane %v4914, %v636
    %v4968 = vsel %vm638, %v4967, %v4966
    %v4969 = vperm.slane %v4917, %v634
    %v4970 = vperm.slane %v4920, %v636
    %v4971 = vsel %vm638, %v4970, %v4969
    %v4972 = vperm.slane %v4923, %v634
    %v4973 = vperm.slane %v4926, %v636
    %v4974 = vsel %vm638, %v4973, %v4972
    %v4975 = vperm.slane %v4929, %v634
    %v4976 = vperm.slane %v4932, %v636
    %v4977 = vsel %vm638, %v4976, %v4975
    %v4978 = vperm.slane %v4935, %v634
    %v4979 = vperm.slane %v4938, %v636
    %v4980 = vsel %vm638, %v4979, %v4978
    %v4981 = vperm.slane %v4941, %v634
    %v4982 = vperm.slane %v4944, %v636
    %v4983 = vsel %vm638, %v4982, %v4981
    %v4984 = vperm.slane %v4947, %v634
    %v4985 = vperm.slane %v4950, %v636
    %v4986 = vsel %vm638, %v4985, %v4984
    %v4987 = vsel %vm673, %v4956, %v4953
    %v4988 = vsel %vm675, %v4959, %v4987
    %v4989 = vsel %vm677, %v4962, %v4988
    %v4990 = vsel %vm679, %v4965, %v4989
    %v4991 = vsel %vm681, %v4968, %v4990
    %v4992 = vsel %vm683, %v4971, %v4991
    %v4993 = vsel %vm685, %v4974, %v4992
    %v4994 = vsel %vm673, %v4980, %v4977
    %v4995 = vsel %vm675, %v4983, %v4994
    %v4996 = vsel %vm677, %v4986, %v4995
    %v4999 = vsel %vm21, %v4993, 0.0
    %v5000 = vsel %vm22, %v4996, 0.0
    %v5001 = vsel %vm692, %v4999, 0.0
    %5002 = vadd.xlane.f32.xlu0 %v5001
    %v5003 = vpop.xlane.xlu0 %5002
    %v5004 = vsel %vm696, %v5000, 0.0
    %5005 = vadd.xlane.f32.xlu0 %v5004
    %v5006 = vpop.xlane.xlu0 %5005
    %v5007 = vrcp.pop %v5003
    %v5008 = vrcp.pop %v5006
    %v5009 = vmul.f32 %v4999, %v5007
    %v5010 = vmul.f32 %v5000, %v5008
    %v5011 = vpack.c.bf16 %v5010, %v5009
    %v5014 = vunpack.c.l.b16 %v4507
    %v5015 = vunpack.c.l.b16 %v4508
    %v5016 = vpack.c.b16 %v5015, %v5014
    %v5018 = vsel %vm692, %v5011, 0
    %v5021 = vsel %vm963, %v5016, 0
    %5023 = vmatpush.bf16.msra.mxu0 0
    %5024 = vmatpush.bf16.msra.mxu0 0
    %5025 = vmatpush.bf16.msra.mxu0 0
    %5026 = vmatpush.bf16.msra.mxu0 0
    %5027 = vmatpush.bf16.msra.mxu0 0
    %5028 = vmatpush.bf16.msra.mxu0 0
    %5029 = vmatpush.bf16.msra.mxu0 0
    %5030 = vmatpush.bf16.msra.mxu0 %v5021
    %5031 = vmatmul.bf16.gmra.mxu0 %v5018
    %v5032 = vpop.f32.mrf.mxu0
    %v5033 = vadd.f32 0.0, %v5032
    %v5034 = vpop.f32.mrf.mxu0
    %v5035 = vadd.f32 0.0, %v5034
    %5036 = vdwg.mxu0
    %5061 = vrot.lane.b32.xlu0 %v4483, 114
    %v5062 = vpop.permute.xlu0 %5061
    %5063 = vrot.lane.b32.xlu0 %v4484, 114
    %v5064 = vpop.permute.xlu0 %5063
    %5065 = vrot.lane.b32.xlu0 %v4485, 114
    %v5066 = vpop.permute.xlu0 %5065
    %5067 = vrot.lane.b32.xlu0 %v4486, 114
    %v5068 = vpop.permute.xlu0 %5067
    %5069 = vrot.lane.b32.xlu0 %v4487, 114
    %v5070 = vpop.permute.xlu0 %5069
    %5071 = vrot.lane.b32.xlu0 %v4488, 114
    %v5072 = vpop.permute.xlu0 %5071
    %5073 = vrot.lane.b32.xlu0 %v4489, 114
    %v5074 = vpop.permute.xlu0 %5073
    %5075 = vrot.lane.b32.xlu0 %v4490, 114
    %v5076 = vpop.permute.xlu0 %5075
    %5077 = vrot.lane.b32.xlu0 %v4491, 114
    %v5078 = vpop.permute.xlu0 %5077
    %5079 = vrot.lane.b32.xlu0 %v4492, 114
    %v5080 = vpop.permute.xlu0 %5079
    %5081 = vrot.lane.b32.xlu0 %v4493, 114
    %v5082 = vpop.permute.xlu0 %5081
    %5083 = vrot.lane.b32.xlu0 %v4494, 114
    %v5084 = vpop.permute.xlu0 %5083
    %5085 = vrot.lane.b32.xlu0 %v4495, 114
    %v5086 = vpop.permute.xlu0 %5085
    %5087 = vrot.lane.b32.xlu0 %v4496, 114
    %v5088 = vpop.permute.xlu0 %5087
    %5089 = vrot.lane.b32.xlu0 %v4497, 114
    %v5090 = vpop.permute.xlu0 %5089
    %5091 = vrot.lane.b32.xlu0 %v4498, 114
    %v5092 = vpop.permute.xlu0 %5091
    %5093 = vrot.lane.b32.xlu0 %v4499, 114
    %v5094 = vpop.permute.xlu0 %5093
    %5095 = vrot.lane.b32.xlu0 %v4500, 114
    %v5096 = vpop.permute.xlu0 %5095
    %5097 = vrot.lane.b32.xlu0 %v4501, 114
    %v5098 = vpop.permute.xlu0 %5097
    %5099 = vrot.lane.b32.xlu0 %v4502, 114
    %v5100 = vpop.permute.xlu0 %5099
    %5101 = vrot.lane.b32.xlu0 %v4503, 114
    %v5102 = vpop.permute.xlu0 %5101
    %5103 = vrot.lane.b32.xlu0 %v4504, 114
    %v5104 = vpop.permute.xlu0 %5103
    %5105 = vrot.lane.b32.xlu0 %v4505, 114
    %v5106 = vpop.permute.xlu0 %5105
    %5107 = vrot.lane.b32.xlu0 %v4506, 114
    %v5108 = vpop.permute.xlu0 %5107
    %v5133 = vsel %vm4509, %v5062, 0.0
    %5134 = vadd.xlane.f32.xlu0 %v5133
    %v5135 = vpop.xlane.xlu0 %5134
    %v5136 = vsel %vm4513, %v5064, 0.0
    %5137 = vadd.xlane.f32.xlu0 %v5136
    %v5138 = vpop.xlane.xlu0 %5137
    %v5139 = vsel %vm4509, %v5066, 0.0
    %5140 = vadd.xlane.f32.xlu0 %v5139
    %v5141 = vpop.xlane.xlu0 %5140
    %v5142 = vsel %vm4513, %v5068, 0.0
    %5143 = vadd.xlane.f32.xlu0 %v5142
    %v5144 = vpop.xlane.xlu0 %5143
    %v5145 = vsel %vm4509, %v5070, 0.0
    %5146 = vadd.xlane.f32.xlu0 %v5145
    %v5147 = vpop.xlane.xlu0 %5146
    %v5148 = vsel %vm4513, %v5072, 0.0
    %5149 = vadd.xlane.f32.xlu0 %v5148
    %v5150 = vpop.xlane.xlu0 %5149
    %v5151 = vsel %vm4509, %v5074, 0.0
    %5152 = vadd.xlane.f32.xlu0 %v5151
    %v5153 = vpop.xlane.xlu0 %5152
    %v5154 = vsel %vm4513, %v5076, 0.0
    %5155 = vadd.xlane.f32.xlu0 %v5154
    %v5156 = vpop.xlane.xlu0 %5155
    %v5157 = vsel %vm4509, %v5078, 0.0
    %5158 = vadd.xlane.f32.xlu0 %v5157
    %v5159 = vpop.xlane.xlu0 %5158
    %v5160 = vsel %vm4513, %v5080, 0.0
    %5161 = vadd.xlane.f32.xlu0 %v5160
    %v5162 = vpop.xlane.xlu0 %5161
    %v5163 = vsel %vm4509, %v5082, 0.0
    %5164 = vadd.xlane.f32.xlu0 %v5163
    %v5165 = vpop.xlane.xlu0 %5164
    %v5166 = vsel %vm4513, %v5084, 0.0
    %5167 = vadd.xlane.f32.xlu0 %v5166
    %v5168 = vpop.xlane.xlu0 %5167
    %v5169 = vsel %vm4509, %v5086, 0.0
    %5170 = vadd.xlane.f32.xlu0 %v5169
    %v5171 = vpop.xlane.xlu0 %5170
    %v5172 = vsel %vm4513, %v5088, 0.0
    %5173 = vadd.xlane.f32.xlu0 %v5172
    %v5174 = vpop.xlane.xlu0 %5173
    %v5175 = vsel %vm4509, %v5090, 0.0
    %5176 = vadd.xlane.f32.xlu0 %v5175
    %v5177 = vpop.xlane.xlu0 %5176
    %v5178 = vsel %vm4513, %v5092, 0.0
    %5179 = vadd.xlane.f32.xlu0 %v5178
    %v5180 = vpop.xlane.xlu0 %5179
    %v5181 = vsel %vm4509, %v5094, 0.0
    %5182 = vadd.xlane.f32.xlu0 %v5181
    %v5183 = vpop.xlane.xlu0 %5182
    %v5184 = vsel %vm4513, %v5096, 0.0
    %5185 = vadd.xlane.f32.xlu0 %v5184
    %v5186 = vpop.xlane.xlu0 %5185
    %v5187 = vsel %vm4509, %v5098, 0.0
    %5188 = vadd.xlane.f32.xlu0 %v5187
    %v5189 = vpop.xlane.xlu0 %5188
    %v5190 = vsel %vm4513, %v5100, 0.0
    %5191 = vadd.xlane.f32.xlu0 %v5190
    %v5192 = vpop.xlane.xlu0 %5191
    %v5193 = vsel %vm4509, %v5102, 0.0
    %5194 = vadd.xlane.f32.xlu0 %v5193
    %v5195 = vpop.xlane.xlu0 %5194
    %v5196 = vsel %vm4513, %v5104, 0.0
    %5197 = vadd.xlane.f32.xlu0 %v5196
    %v5198 = vpop.xlane.xlu0 %5197
    %v5199 = vsel %vm4509, %v5106, 0.0
    %5200 = vadd.xlane.f32.xlu0 %v5199
    %v5201 = vpop.xlane.xlu0 %5200
    %v5202 = vsel %vm4513, %v5108, 0.0
    %5203 = vadd.xlane.f32.xlu0 %v5202
    %v5204 = vpop.xlane.xlu0 %5203
    %v5205 = vadd.f32 %v5135, %v339
    %v5206 = vadd.f32 %v5138, %v345
    %v5207 = vadd.f32 %v5141, %v352
    %v5208 = vadd.f32 %v5144, %v358
    %v5209 = vadd.f32 %v5147, %v365
    %v5210 = vadd.f32 %v5150, %v371
    %v5211 = vadd.f32 %v5153, %v378
    %v5212 = vadd.f32 %v5156, %v384
    %v5213 = vadd.f32 %v5159, %v391
    %v5214 = vadd.f32 %v5162, %v397
    %v5215 = vadd.f32 %v5165, %v404
    %v5216 = vadd.f32 %v5168, %v410
    %v5217 = vadd.f32 %v5171, %v417
    %v5218 = vadd.f32 %v5174, %v423
    %v5219 = vadd.f32 %v5177, %v430
    %v5220 = vadd.f32 %v5180, %v436
    %v5221 = vadd.f32 %v5183, %v443
    %v5222 = vadd.f32 %v5186, %v449
    %v5223 = vadd.f32 %v5189, %v456
    %v5224 = vadd.f32 %v5192, %v462
    %v5225 = vadd.f32 %v5195, %v469
    %v5226 = vadd.f32 %v5198, %v475
    %v5227 = vadd.f32 %v5201, %v482
    %v5228 = vadd.f32 %v5204, %v488
    %5253 = vset.pattern.permute.xlu0 0
    %5254 = vperm.xlu0 %5253, %v5205
    %v5255 = vpop.permute.xlu0 %5254
    %5256 = vset.pattern.permute.xlu0 0
    %5257 = vperm.xlu0 %5256, %v5206
    %v5258 = vpop.permute.xlu0 %5257
    %5259 = vset.pattern.permute.xlu0 0
    %5260 = vperm.xlu0 %5259, %v5207
    %v5261 = vpop.permute.xlu0 %5260
    %5262 = vset.pattern.permute.xlu0 0
    %5263 = vperm.xlu0 %5262, %v5208
    %v5264 = vpop.permute.xlu0 %5263
    %5265 = vset.pattern.permute.xlu0 0
    %5266 = vperm.xlu0 %5265, %v5209
    %v5267 = vpop.permute.xlu0 %5266
    %5268 = vset.pattern.permute.xlu0 0
    %5269 = vperm.xlu0 %5268, %v5210
    %v5270 = vpop.permute.xlu0 %5269
    %5271 = vset.pattern.permute.xlu0 0
    %5272 = vperm.xlu0 %5271, %v5211
    %v5273 = vpop.permute.xlu0 %5272
    %5274 = vset.pattern.permute.xlu0 0
    %5275 = vperm.xlu0 %5274, %v5212
    %v5276 = vpop.permute.xlu0 %5275
    %5277 = vset.pattern.permute.xlu0 0
    %5278 = vperm.xlu0 %5277, %v5213
    %v5279 = vpop.permute.xlu0 %5278
    %5280 = vset.pattern.permute.xlu0 0
    %5281 = vperm.xlu0 %5280, %v5214
    %v5282 = vpop.permute.xlu0 %5281
    %5283 = vset.pattern.permute.xlu0 0
    %5284 = vperm.xlu0 %5283, %v5215
    %v5285 = vpop.permute.xlu0 %5284
    %5286 = vset.pattern.permute.xlu0 0
    %5287 = vperm.xlu0 %5286, %v5216
    %v5288 = vpop.permute.xlu0 %5287
    %5289 = vset.pattern.permute.xlu0 0
    %5290 = vperm.xlu0 %5289, %v5217
    %v5291 = vpop.permute.xlu0 %5290
    %5292 = vset.pattern.permute.xlu0 0
    %5293 = vperm.xlu0 %5292, %v5218
    %v5294 = vpop.permute.xlu0 %5293
    %5295 = vset.pattern.permute.xlu0 0
    %5296 = vperm.xlu0 %5295, %v5219
    %v5297 = vpop.permute.xlu0 %5296
    %5298 = vset.pattern.permute.xlu0 0
    %5299 = vperm.xlu0 %5298, %v5220
    %v5300 = vpop.permute.xlu0 %5299
    %5301 = vset.pattern.permute.xlu0 0
    %5302 = vperm.xlu0 %5301, %v5221
    %v5303 = vpop.permute.xlu0 %5302
    %5304 = vset.pattern.permute.xlu0 0
    %5305 = vperm.xlu0 %5304, %v5222
    %v5306 = vpop.permute.xlu0 %5305
    %5307 = vset.pattern.permute.xlu0 0
    %5308 = vperm.xlu0 %5307, %v5223
    %v5309 = vpop.permute.xlu0 %5308
    %5310 = vset.pattern.permute.xlu0 0
    %5311 = vperm.xlu0 %5310, %v5224
    %v5312 = vpop.permute.xlu0 %5311
    %5313 = vset.pattern.permute.xlu0 0
    %5314 = vperm.xlu0 %5313, %v5225
    %v5315 = vpop.permute.xlu0 %5314
    %5316 = vset.pattern.permute.xlu0 0
    %5317 = vperm.xlu0 %5316, %v5226
    %v5318 = vpop.permute.xlu0 %5317
    %5319 = vset.pattern.permute.xlu0 0
    %5320 = vperm.xlu0 %5319, %v5227
    %v5321 = vpop.permute.xlu0 %5320
    %5322 = vset.pattern.permute.xlu0 0
    %5323 = vperm.xlu0 %5322, %v5228
    %v5324 = vpop.permute.xlu0 %5323
    %v5325 = vperm.slane %v5255, %v634
    %v5326 = vperm.slane %v5258, %v636
    %v5327 = vsel %vm638, %v5326, %v5325
    %v5328 = vperm.slane %v5261, %v634
    %v5329 = vperm.slane %v5264, %v636
    %v5330 = vsel %vm638, %v5329, %v5328
    %v5331 = vperm.slane %v5267, %v634
    %v5332 = vperm.slane %v5270, %v636
    %v5333 = vsel %vm638, %v5332, %v5331
    %v5334 = vperm.slane %v5273, %v634
    %v5335 = vperm.slane %v5276, %v636
    %v5336 = vsel %vm638, %v5335, %v5334
    %v5337 = vperm.slane %v5279, %v634
    %v5338 = vperm.slane %v5282, %v636
    %v5339 = vsel %vm638, %v5338, %v5337
    %v5340 = vperm.slane %v5285, %v634
    %v5341 = vperm.slane %v5288, %v636
    %v5342 = vsel %vm638, %v5341, %v5340
    %v5343 = vperm.slane %v5291, %v634
    %v5344 = vperm.slane %v5294, %v636
    %v5345 = vsel %vm638, %v5344, %v5343
    %v5346 = vperm.slane %v5297, %v634
    %v5347 = vperm.slane %v5300, %v636
    %v5348 = vsel %vm638, %v5347, %v5346
    %v5349 = vperm.slane %v5303, %v634
    %v5350 = vperm.slane %v5306, %v636
    %v5351 = vsel %vm638, %v5350, %v5349
    %v5352 = vperm.slane %v5309, %v634
    %v5353 = vperm.slane %v5312, %v636
    %v5354 = vsel %vm638, %v5353, %v5352
    %v5355 = vperm.slane %v5315, %v634
    %v5356 = vperm.slane %v5318, %v636
    %v5357 = vsel %vm638, %v5356, %v5355
    %v5358 = vperm.slane %v5321, %v634
    %v5359 = vperm.slane %v5324, %v636
    %v5360 = vsel %vm638, %v5359, %v5358
    %v5361 = vsel %vm673, %v5330, %v5327
    %v5362 = vsel %vm675, %v5333, %v5361
    %v5363 = vsel %vm677, %v5336, %v5362
    %v5364 = vsel %vm679, %v5339, %v5363
    %v5365 = vsel %vm681, %v5342, %v5364
    %v5366 = vsel %vm683, %v5345, %v5365
    %v5367 = vsel %vm685, %v5348, %v5366
    %v5368 = vsel %vm673, %v5354, %v5351
    %v5369 = vsel %vm675, %v5357, %v5368
    %v5370 = vsel %vm677, %v5360, %v5369
    %v5373 = vsel %vm692, %v5367, -inf
    %5374 = vmax.xlane.f32.xlu0 %v5373
    %v5375 = vpop.xlane.xlu0 %5374
    %v5376 = vsel %vm696, %v5370, -inf
    %5377 = vmax.xlane.f32.xlu0 %v5376
    %v5378 = vpop.xlane.xlu0 %5377
    %v5381 = vperm.slane %v5375, 0
    %v5382 = vperm.slane %v5375, 1
    %v5383 = vperm.slane %v5375, 2
    %v5384 = vperm.slane %v5375, 3
    %v5385 = vperm.slane %v5375, 4
    %v5386 = vperm.slane %v5375, 5
    %v5387 = vperm.slane %v5375, 6
    %v5388 = vperm.slane %v5375, 7
    %v5389 = vperm.slane %v5378, 0
    %v5390 = vperm.slane %v5378, 1
    %v5391 = vperm.slane %v5378, 2
    %v5392 = vperm.slane %v5378, 3
    %v5405 = vsub.f32 %v5205, %v5381
    %v5406 = vsub.f32 %v5206, %v5381
    %v5407 = vsub.f32 %v5207, %v5382
    %v5408 = vsub.f32 %v5208, %v5382
    %v5409 = vsub.f32 %v5209, %v5383
    %v5410 = vsub.f32 %v5210, %v5383
    %v5411 = vsub.f32 %v5211, %v5384
    %v5412 = vsub.f32 %v5212, %v5384
    %v5413 = vsub.f32 %v5213, %v5385
    %v5414 = vsub.f32 %v5214, %v5385
    %v5415 = vsub.f32 %v5215, %v5386
    %v5416 = vsub.f32 %v5216, %v5386
    %v5417 = vsub.f32 %v5217, %v5387
    %v5418 = vsub.f32 %v5218, %v5387
    %v5419 = vsub.f32 %v5219, %v5388
    %v5420 = vsub.f32 %v5220, %v5388
    %v5421 = vsub.f32 %v5221, %v5389
    %v5422 = vsub.f32 %v5222, %v5389
    %v5423 = vsub.f32 %v5223, %v5390
    %v5424 = vsub.f32 %v5224, %v5390
    %v5425 = vsub.f32 %v5225, %v5391
    %v5426 = vsub.f32 %v5226, %v5391
    %v5427 = vsub.f32 %v5227, %v5392
    %v5428 = vsub.f32 %v5228, %v5392
    %v5429 = vmul.f32 %v5405, 1.442695
    %v5430 = vpow.pop %v5429
    %v5431 = vmul.f32 %v5406, 1.442695
    %v5432 = vpow.pop %v5431
    %v5433 = vmul.f32 %v5407, 1.442695
    %v5434 = vpow.pop %v5433
    %v5435 = vmul.f32 %v5408, 1.442695
    %v5436 = vpow.pop %v5435
    %v5437 = vmul.f32 %v5409, 1.442695
    %v5438 = vpow.pop %v5437
    %v5439 = vmul.f32 %v5410, 1.442695
    %v5440 = vpow.pop %v5439
    %v5441 = vmul.f32 %v5411, 1.442695
    %v5442 = vpow.pop %v5441
    %v5443 = vmul.f32 %v5412, 1.442695
    %v5444 = vpow.pop %v5443
    %v5445 = vmul.f32 %v5413, 1.442695
    %v5446 = vpow.pop %v5445
    %v5447 = vmul.f32 %v5414, 1.442695
    %v5448 = vpow.pop %v5447
    %v5449 = vmul.f32 %v5415, 1.442695
    %v5450 = vpow.pop %v5449
    %v5451 = vmul.f32 %v5416, 1.442695
    %v5452 = vpow.pop %v5451
    %v5453 = vmul.f32 %v5417, 1.442695
    %v5454 = vpow.pop %v5453
    %v5455 = vmul.f32 %v5418, 1.442695
    %v5456 = vpow.pop %v5455
    %v5457 = vmul.f32 %v5419, 1.442695
    %v5458 = vpow.pop %v5457
    %v5459 = vmul.f32 %v5420, 1.442695
    %v5460 = vpow.pop %v5459
    %v5461 = vmul.f32 %v5421, 1.442695
    %v5462 = vpow.pop %v5461
    %v5463 = vmul.f32 %v5422, 1.442695
    %v5464 = vpow.pop %v5463
    %v5465 = vmul.f32 %v5423, 1.442695
    %v5466 = vpow.pop %v5465
    %v5467 = vmul.f32 %v5424, 1.442695
    %v5468 = vpow.pop %v5467
    %v5469 = vmul.f32 %v5425, 1.442695
    %v5470 = vpow.pop %v5469
    %v5471 = vmul.f32 %v5426, 1.442695
    %v5472 = vpow.pop %v5471
    %v5473 = vmul.f32 %v5427, 1.442695
    %v5474 = vpow.pop %v5473
    %v5475 = vmul.f32 %v5428, 1.442695
    %v5476 = vpow.pop %v5475
    %5501 = vset.pattern.permute.xlu0 0
    %5502 = vperm.xlu0 %5501, %v5430
    %v5503 = vpop.permute.xlu0 %5502
    %5504 = vset.pattern.permute.xlu0 0
    %5505 = vperm.xlu0 %5504, %v5432
    %v5506 = vpop.permute.xlu0 %5505
    %5507 = vset.pattern.permute.xlu0 0
    %5508 = vperm.xlu0 %5507, %v5434
    %v5509 = vpop.permute.xlu0 %5508
    %5510 = vset.pattern.permute.xlu0 0
    %5511 = vperm.xlu0 %5510, %v5436
    %v5512 = vpop.permute.xlu0 %5511
    %5513 = vset.pattern.permute.xlu0 0
    %5514 = vperm.xlu0 %5513, %v5438
    %v5515 = vpop.permute.xlu0 %5514
    %5516 = vset.pattern.permute.xlu0 0
    %5517 = vperm.xlu0 %5516, %v5440
    %v5518 = vpop.permute.xlu0 %5517
    %5519 = vset.pattern.permute.xlu0 0
    %5520 = vperm.xlu0 %5519, %v5442
    %v5521 = vpop.permute.xlu0 %5520
    %5522 = vset.pattern.permute.xlu0 0
    %5523 = vperm.xlu0 %5522, %v5444
    %v5524 = vpop.permute.xlu0 %5523
    %5525 = vset.pattern.permute.xlu0 0
    %5526 = vperm.xlu0 %5525, %v5446
    %v5527 = vpop.permute.xlu0 %5526
    %5528 = vset.pattern.permute.xlu0 0
    %5529 = vperm.xlu0 %5528, %v5448
    %v5530 = vpop.permute.xlu0 %5529
    %5531 = vset.pattern.permute.xlu0 0
    %5532 = vperm.xlu0 %5531, %v5450
    %v5533 = vpop.permute.xlu0 %5532
    %5534 = vset.pattern.permute.xlu0 0
    %5535 = vperm.xlu0 %5534, %v5452
    %v5536 = vpop.permute.xlu0 %5535
    %5537 = vset.pattern.permute.xlu0 0
    %5538 = vperm.xlu0 %5537, %v5454
    %v5539 = vpop.permute.xlu0 %5538
    %5540 = vset.pattern.permute.xlu0 0
    %5541 = vperm.xlu0 %5540, %v5456
    %v5542 = vpop.permute.xlu0 %5541
    %5543 = vset.pattern.permute.xlu0 0
    %5544 = vperm.xlu0 %5543, %v5458
    %v5545 = vpop.permute.xlu0 %5544
    %5546 = vset.pattern.permute.xlu0 0
    %5547 = vperm.xlu0 %5546, %v5460
    %v5548 = vpop.permute.xlu0 %5547
    %5549 = vset.pattern.permute.xlu0 0
    %5550 = vperm.xlu0 %5549, %v5462
    %v5551 = vpop.permute.xlu0 %5550
    %5552 = vset.pattern.permute.xlu0 0
    %5553 = vperm.xlu0 %5552, %v5464
    %v5554 = vpop.permute.xlu0 %5553
    %5555 = vset.pattern.permute.xlu0 0
    %5556 = vperm.xlu0 %5555, %v5466
    %v5557 = vpop.permute.xlu0 %5556
    %5558 = vset.pattern.permute.xlu0 0
    %5559 = vperm.xlu0 %5558, %v5468
    %v5560 = vpop.permute.xlu0 %5559
    %5561 = vset.pattern.permute.xlu0 0
    %5562 = vperm.xlu0 %5561, %v5470
    %v5563 = vpop.permute.xlu0 %5562
    %5564 = vset.pattern.permute.xlu0 0
    %5565 = vperm.xlu0 %5564, %v5472
    %v5566 = vpop.permute.xlu0 %5565
    %5567 = vset.pattern.permute.xlu0 0
    %5568 = vperm.xlu0 %5567, %v5474
    %v5569 = vpop.permute.xlu0 %5568
    %5570 = vset.pattern.permute.xlu0 0
    %5571 = vperm.xlu0 %5570, %v5476
    %v5572 = vpop.permute.xlu0 %5571
    %v5573 = vperm.slane %v5503, %v634
    %v5574 = vperm.slane %v5506, %v636
    %v5575 = vsel %vm638, %v5574, %v5573
    %v5576 = vperm.slane %v5509, %v634
    %v5577 = vperm.slane %v5512, %v636
    %v5578 = vsel %vm638, %v5577, %v5576
    %v5579 = vperm.slane %v5515, %v634
    %v5580 = vperm.slane %v5518, %v636
    %v5581 = vsel %vm638, %v5580, %v5579
    %v5582 = vperm.slane %v5521, %v634
    %v5583 = vperm.slane %v5524, %v636
    %v5584 = vsel %vm638, %v5583, %v5582
    %v5585 = vperm.slane %v5527, %v634
    %v5586 = vperm.slane %v5530, %v636
    %v5587 = vsel %vm638, %v5586, %v5585
    %v5588 = vperm.slane %v5533, %v634
    %v5589 = vperm.slane %v5536, %v636
    %v5590 = vsel %vm638, %v5589, %v5588
    %v5591 = vperm.slane %v5539, %v634
    %v5592 = vperm.slane %v5542, %v636
    %v5593 = vsel %vm638, %v5592, %v5591
    %v5594 = vperm.slane %v5545, %v634
    %v5595 = vperm.slane %v5548, %v636
    %v5596 = vsel %vm638, %v5595, %v5594
    %v5597 = vperm.slane %v5551, %v634
    %v5598 = vperm.slane %v5554, %v636
    %v5599 = vsel %vm638, %v5598, %v5597
    %v5600 = vperm.slane %v5557, %v634
    %v5601 = vperm.slane %v5560, %v636
    %v5602 = vsel %vm638, %v5601, %v5600
    %v5603 = vperm.slane %v5563, %v634
    %v5604 = vperm.slane %v5566, %v636
    %v5605 = vsel %vm638, %v5604, %v5603
    %v5606 = vperm.slane %v5569, %v634
    %v5607 = vperm.slane %v5572, %v636
    %v5608 = vsel %vm638, %v5607, %v5606
    %v5609 = vsel %vm673, %v5578, %v5575
    %v5610 = vsel %vm675, %v5581, %v5609
    %v5611 = vsel %vm677, %v5584, %v5610
    %v5612 = vsel %vm679, %v5587, %v5611
    %v5613 = vsel %vm681, %v5590, %v5612
    %v5614 = vsel %vm683, %v5593, %v5613
    %v5615 = vsel %vm685, %v5596, %v5614
    %v5616 = vsel %vm673, %v5602, %v5599
    %v5617 = vsel %vm675, %v5605, %v5616
    %v5618 = vsel %vm677, %v5608, %v5617
    %v5621 = vsel %vm21, %v5615, 0.0
    %v5622 = vsel %vm22, %v5618, 0.0
    %v5623 = vsel %vm692, %v5621, 0.0
    %5624 = vadd.xlane.f32.xlu0 %v5623
    %v5625 = vpop.xlane.xlu0 %5624
    %v5626 = vsel %vm696, %v5622, 0.0
    %5627 = vadd.xlane.f32.xlu0 %v5626
    %v5628 = vpop.xlane.xlu0 %5627
    %v5629 = vrcp.pop %v5625
    %v5630 = vrcp.pop %v5628
    %v5631 = vmul.f32 %v5621, %v5629
    %v5632 = vmul.f32 %v5622, %v5630
    %v5633 = vpack.c.bf16 %v5632, %v5631
    %5634 = vrot.lane.b32.xlu0 %v5016, 114
    %v5635 = vpop.permute.xlu0 %5634
    %v5637 = vsel %vm692, %v5633, 0
    %v5640 = vsel %vm963, %v5635, 0
    %5642 = vmatpush.bf16.msra.mxu0 0
    %5643 = vmatpush.bf16.msra.mxu0 0
    %5644 = vmatpush.bf16.msra.mxu0 0
    %5645 = vmatpush.bf16.msra.mxu0 0
    %5646 = vmatpush.bf16.msra.mxu0 0
    %5647 = vmatpush.bf16.msra.mxu0 0
    %5648 = vmatpush.bf16.msra.mxu0 0
    %5649 = vmatpush.bf16.msra.mxu0 %v5640
    %5650 = vmatmul.bf16.gmra.mxu0 %v5637
    %v5651 = vpop.f32.mrf.mxu0
    %v5652 = vadd.f32 0.0, %v5651
    %v5653 = vpop.f32.mrf.mxu0
    %v5654 = vadd.f32 0.0, %v5653
    %5655 = vdwg.mxu0
    %5656 = vrot.lane.b32.xlu0 %v4483, 100
    %v5657 = vpop.permute.xlu0 %5656
    %5658 = vrot.lane.b32.xlu0 %v4484, 100
    %v5659 = vpop.permute.xlu0 %5658
    %5660 = vrot.lane.b32.xlu0 %v4485, 100
    %v5661 = vpop.permute.xlu0 %5660
    %5662 = vrot.lane.b32.xlu0 %v4486, 100
    %v5663 = vpop.permute.xlu0 %5662
    %5664 = vrot.lane.b32.xlu0 %v4487, 100
    %v5665 = vpop.permute.xlu0 %5664
    %5666 = vrot.lane.b32.xlu0 %v4488, 100
    %v5667 = vpop.permute.xlu0 %5666
    %5668 = vrot.lane.b32.xlu0 %v4489, 100
    %v5669 = vpop.permute.xlu0 %5668
    %5670 = vrot.lane.b32.xlu0 %v4490, 100
    %v5671 = vpop.permute.xlu0 %5670
    %5672 = vrot.lane.b32.xlu0 %v4491, 100
    %v5673 = vpop.permute.xlu0 %5672
    %5674 = vrot.lane.b32.xlu0 %v4492, 100
    %v5675 = vpop.permute.xlu0 %5674
    %5676 = vrot.lane.b32.xlu0 %v4493, 100
    %v5677 = vpop.permute.xlu0 %5676
    %5678 = vrot.lane.b32.xlu0 %v4494, 100
    %v5679 = vpop.permute.xlu0 %5678
    %5680 = vrot.lane.b32.xlu0 %v4495, 100
    %v5681 = vpop.permute.xlu0 %5680
    %5682 = vrot.lane.b32.xlu0 %v4496, 100
    %v5683 = vpop.permute.xlu0 %5682
    %5684 = vrot.lane.b32.xlu0 %v4497, 100
    %v5685 = vpop.permute.xlu0 %5684
    %5686 = vrot.lane.b32.xlu0 %v4498, 100
    %v5687 = vpop.permute.xlu0 %5686
    %5688 = vrot.lane.b32.xlu0 %v4499, 100
    %v5689 = vpop.permute.xlu0 %5688
    %5690 = vrot.lane.b32.xlu0 %v4500, 100
    %v5691 = vpop.permute.xlu0 %5690
    %5692 = vrot.lane.b32.xlu0 %v4501, 100
    %v5693 = vpop.permute.xlu0 %5692
    %5694 = vrot.lane.b32.xlu0 %v4502, 100
    %v5695 = vpop.permute.xlu0 %5694
    %5696 = vrot.lane.b32.xlu0 %v4503, 100
    %v5697 = vpop.permute.xlu0 %5696
    %5698 = vrot.lane.b32.xlu0 %v4504, 100
    %v5699 = vpop.permute.xlu0 %5698
    %5700 = vrot.lane.b32.xlu0 %v4505, 100
    %v5701 = vpop.permute.xlu0 %5700
    %5702 = vrot.lane.b32.xlu0 %v4506, 100
    %v5703 = vpop.permute.xlu0 %5702
    %v5728 = vsel %vm4509, %v5657, 0.0
    %5729 = vadd.xlane.f32.xlu0 %v5728
    %v5730 = vpop.xlane.xlu0 %5729
    %v5731 = vsel %vm4513, %v5659, 0.0
    %5732 = vadd.xlane.f32.xlu0 %v5731
    %v5733 = vpop.xlane.xlu0 %5732
    %v5734 = vsel %vm4509, %v5661, 0.0
    %5735 = vadd.xlane.f32.xlu0 %v5734
    %v5736 = vpop.xlane.xlu0 %5735
    %v5737 = vsel %vm4513, %v5663, 0.0
    %5738 = vadd.xlane.f32.xlu0 %v5737
    %v5739 = vpop.xlane.xlu0 %5738
    %v5740 = vsel %vm4509, %v5665, 0.0
    %5741 = vadd.xlane.f32.xlu0 %v5740
    %v5742 = vpop.xlane.xlu0 %5741
    %v5743 = vsel %vm4513, %v5667, 0.0
    %5744 = vadd.xlane.f32.xlu0 %v5743
    %v5745 = vpop.xlane.xlu0 %5744
    %v5746 = vsel %vm4509, %v5669, 0.0
    %5747 = vadd.xlane.f32.xlu0 %v5746
    %v5748 = vpop.xlane.xlu0 %5747
    %v5749 = vsel %vm4513, %v5671, 0.0
    %5750 = vadd.xlane.f32.xlu0 %v5749
    %v5751 = vpop.xlane.xlu0 %5750
    %v5752 = vsel %vm4509, %v5673, 0.0
    %5753 = vadd.xlane.f32.xlu0 %v5752
    %v5754 = vpop.xlane.xlu0 %5753
    %v5755 = vsel %vm4513, %v5675, 0.0
    %5756 = vadd.xlane.f32.xlu0 %v5755
    %v5757 = vpop.xlane.xlu0 %5756
    %v5758 = vsel %vm4509, %v5677, 0.0
    %5759 = vadd.xlane.f32.xlu0 %v5758
    %v5760 = vpop.xlane.xlu0 %5759
    %v5761 = vsel %vm4513, %v5679, 0.0
    %5762 = vadd.xlane.f32.xlu0 %v5761
    %v5763 = vpop.xlane.xlu0 %5762
    %v5764 = vsel %vm4509, %v5681, 0.0
    %5765 = vadd.xlane.f32.xlu0 %v5764
    %v5766 = vpop.xlane.xlu0 %5765
    %v5767 = vsel %vm4513, %v5683, 0.0
    %5768 = vadd.xlane.f32.xlu0 %v5767
    %v5769 = vpop.xlane.xlu0 %5768
    %v5770 = vsel %vm4509, %v5685, 0.0
    %5771 = vadd.xlane.f32.xlu0 %v5770
    %v5772 = vpop.xlane.xlu0 %5771
    %v5773 = vsel %vm4513, %v5687, 0.0
    %5774 = vadd.xlane.f32.xlu0 %v5773
    %v5775 = vpop.xlane.xlu0 %5774
    %v5776 = vsel %vm4509, %v5689, 0.0
    %5777 = vadd.xlane.f32.xlu0 %v5776
    %v5778 = vpop.xlane.xlu0 %5777
    %v5779 = vsel %vm4513, %v5691, 0.0
    %5780 = vadd.xlane.f32.xlu0 %v5779
    %v5781 = vpop.xlane.xlu0 %5780
    %v5782 = vsel %vm4509, %v5693, 0.0
    %5783 = vadd.xlane.f32.xlu0 %v5782
    %v5784 = vpop.xlane.xlu0 %5783
    %v5785 = vsel %vm4513, %v5695, 0.0
    %5786 = vadd.xlane.f32.xlu0 %v5785
    %v5787 = vpop.xlane.xlu0 %5786
    %v5788 = vsel %vm4509, %v5697, 0.0
    %5789 = vadd.xlane.f32.xlu0 %v5788
    %v5790 = vpop.xlane.xlu0 %5789
    %v5791 = vsel %vm4513, %v5699, 0.0
    %5792 = vadd.xlane.f32.xlu0 %v5791
    %v5793 = vpop.xlane.xlu0 %5792
    %v5794 = vsel %vm4509, %v5701, 0.0
    %5795 = vadd.xlane.f32.xlu0 %v5794
    %v5796 = vpop.xlane.xlu0 %5795
    %v5797 = vsel %vm4513, %v5703, 0.0
    %5798 = vadd.xlane.f32.xlu0 %v5797
    %v5799 = vpop.xlane.xlu0 %5798
    %v5800 = vadd.f32 %v5730, %v339
    %v5801 = vadd.f32 %v5733, %v345
    %v5802 = vadd.f32 %v5736, %v352
    %v5803 = vadd.f32 %v5739, %v358
    %v5804 = vadd.f32 %v5742, %v365
    %v5805 = vadd.f32 %v5745, %v371
    %v5806 = vadd.f32 %v5748, %v378
    %v5807 = vadd.f32 %v5751, %v384
    %v5808 = vadd.f32 %v5754, %v391
    %v5809 = vadd.f32 %v5757, %v397
    %v5810 = vadd.f32 %v5760, %v404
    %v5811 = vadd.f32 %v5763, %v410
    %v5812 = vadd.f32 %v5766, %v417
    %v5813 = vadd.f32 %v5769, %v423
    %v5814 = vadd.f32 %v5772, %v430
    %v5815 = vadd.f32 %v5775, %v436
    %v5816 = vadd.f32 %v5778, %v443
    %v5817 = vadd.f32 %v5781, %v449
    %v5818 = vadd.f32 %v5784, %v456
    %v5819 = vadd.f32 %v5787, %v462
    %v5820 = vadd.f32 %v5790, %v469
    %v5821 = vadd.f32 %v5793, %v475
    %v5822 = vadd.f32 %v5796, %v482
    %v5823 = vadd.f32 %v5799, %v488
    %5848 = vset.pattern.permute.xlu0 0
    %5849 = vperm.xlu0 %5848, %v5800
    %v5850 = vpop.permute.xlu0 %5849
    %5851 = vset.pattern.permute.xlu0 0
    %5852 = vperm.xlu0 %5851, %v5801
    %v5853 = vpop.permute.xlu0 %5852
    %5854 = vset.pattern.permute.xlu0 0
    %5855 = vperm.xlu0 %5854, %v5802
    %v5856 = vpop.permute.xlu0 %5855
    %5857 = vset.pattern.permute.xlu0 0
    %5858 = vperm.xlu0 %5857, %v5803
    %v5859 = vpop.permute.xlu0 %5858
    %5860 = vset.pattern.permute.xlu0 0
    %5861 = vperm.xlu0 %5860, %v5804
    %v5862 = vpop.permute.xlu0 %5861
    %5863 = vset.pattern.permute.xlu0 0
    %5864 = vperm.xlu0 %5863, %v5805
    %v5865 = vpop.permute.xlu0 %5864
    %5866 = vset.pattern.permute.xlu0 0
    %5867 = vperm.xlu0 %5866, %v5806
    %v5868 = vpop.permute.xlu0 %5867
    %5869 = vset.pattern.permute.xlu0 0
    %5870 = vperm.xlu0 %5869, %v5807
    %v5871 = vpop.permute.xlu0 %5870
    %5872 = vset.pattern.permute.xlu0 0
    %5873 = vperm.xlu0 %5872, %v5808
    %v5874 = vpop.permute.xlu0 %5873
    %5875 = vset.pattern.permute.xlu0 0
    %5876 = vperm.xlu0 %5875, %v5809
    %v5877 = vpop.permute.xlu0 %5876
    %5878 = vset.pattern.permute.xlu0 0
    %5879 = vperm.xlu0 %5878, %v5810
    %v5880 = vpop.permute.xlu0 %5879
    %5881 = vset.pattern.permute.xlu0 0
    %5882 = vperm.xlu0 %5881, %v5811
    %v5883 = vpop.permute.xlu0 %5882
    %5884 = vset.pattern.permute.xlu0 0
    %5885 = vperm.xlu0 %5884, %v5812
    %v5886 = vpop.permute.xlu0 %5885
    %5887 = vset.pattern.permute.xlu0 0
    %5888 = vperm.xlu0 %5887, %v5813
    %v5889 = vpop.permute.xlu0 %5888
    %5890 = vset.pattern.permute.xlu0 0
    %5891 = vperm.xlu0 %5890, %v5814
    %v5892 = vpop.permute.xlu0 %5891
    %5893 = vset.pattern.permute.xlu0 0
    %5894 = vperm.xlu0 %5893, %v5815
    %v5895 = vpop.permute.xlu0 %5894
    %5896 = vset.pattern.permute.xlu0 0
    %5897 = vperm.xlu0 %5896, %v5816
    %v5898 = vpop.permute.xlu0 %5897
    %5899 = vset.pattern.permute.xlu0 0
    %5900 = vperm.xlu0 %5899, %v5817
    %v5901 = vpop.permute.xlu0 %5900
    %5902 = vset.pattern.permute.xlu0 0
    %5903 = vperm.xlu0 %5902, %v5818
    %v5904 = vpop.permute.xlu0 %5903
    %5905 = vset.pattern.permute.xlu0 0
    %5906 = vperm.xlu0 %5905, %v5819
    %v5907 = vpop.permute.xlu0 %5906
    %5908 = vset.pattern.permute.xlu0 0
    %5909 = vperm.xlu0 %5908, %v5820
    %v5910 = vpop.permute.xlu0 %5909
    %5911 = vset.pattern.permute.xlu0 0
    %5912 = vperm.xlu0 %5911, %v5821
    %v5913 = vpop.permute.xlu0 %5912
    %5914 = vset.pattern.permute.xlu0 0
    %5915 = vperm.xlu0 %5914, %v5822
    %v5916 = vpop.permute.xlu0 %5915
    %5917 = vset.pattern.permute.xlu0 0
    %5918 = vperm.xlu0 %5917, %v5823
    %v5919 = vpop.permute.xlu0 %5918
    %v5920 = vperm.slane %v5850, %v634
    %v5921 = vperm.slane %v5853, %v636
    %v5922 = vsel %vm638, %v5921, %v5920
    %v5923 = vperm.slane %v5856, %v634
    %v5924 = vperm.slane %v5859, %v636
    %v5925 = vsel %vm638, %v5924, %v5923
    %v5926 = vperm.slane %v5862, %v634
    %v5927 = vperm.slane %v5865, %v636
    %v5928 = vsel %vm638, %v5927, %v5926
    %v5929 = vperm.slane %v5868, %v634
    %v5930 = vperm.slane %v5871, %v636
    %v5931 = vsel %vm638, %v5930, %v5929
    %v5932 = vperm.slane %v5874, %v634
    %v5933 = vperm.slane %v5877, %v636
    %v5934 = vsel %vm638, %v5933, %v5932
    %v5935 = vperm.slane %v5880, %v634
    %v5936 = vperm.slane %v5883, %v636
    %v5937 = vsel %vm638, %v5936, %v5935
    %v5938 = vperm.slane %v5886, %v634
    %v5939 = vperm.slane %v5889, %v636
    %v5940 = vsel %vm638, %v5939, %v5938
    %v5941 = vperm.slane %v5892, %v634
    %v5942 = vperm.slane %v5895, %v636
    %v5943 = vsel %vm638, %v5942, %v5941
    %v5944 = vperm.slane %v5898, %v634
    %v5945 = vperm.slane %v5901, %v636
    %v5946 = vsel %vm638, %v5945, %v5944
    %v5947 = vperm.slane %v5904, %v634
    %v5948 = vperm.slane %v5907, %v636
    %v5949 = vsel %vm638, %v5948, %v5947
    %v5950 = vperm.slane %v5910, %v634
    %v5951 = vperm.slane %v5913, %v636
    %v5952 = vsel %vm638, %v5951, %v5950
    %v5953 = vperm.slane %v5916, %v634
    %v5954 = vperm.slane %v5919, %v636
    %v5955 = vsel %vm638, %v5954, %v5953
    %v5956 = vsel %vm673, %v5925, %v5922
    %v5957 = vsel %vm675, %v5928, %v5956
    %v5958 = vsel %vm677, %v5931, %v5957
    %v5959 = vsel %vm679, %v5934, %v5958
    %v5960 = vsel %vm681, %v5937, %v5959
    %v5961 = vsel %vm683, %v5940, %v5960
    %v5962 = vsel %vm685, %v5943, %v5961
    %v5963 = vsel %vm673, %v5949, %v5946
    %v5964 = vsel %vm675, %v5952, %v5963
    %v5965 = vsel %vm677, %v5955, %v5964
    %v5968 = vsel %vm692, %v5962, -inf
    %5969 = vmax.xlane.f32.xlu0 %v5968
    %v5970 = vpop.xlane.xlu0 %5969
    %v5971 = vsel %vm696, %v5965, -inf
    %5972 = vmax.xlane.f32.xlu0 %v5971
    %v5973 = vpop.xlane.xlu0 %5972
    %v5976 = vperm.slane %v5970, 0
    %v5977 = vperm.slane %v5970, 1
    %v5978 = vperm.slane %v5970, 2
    %v5979 = vperm.slane %v5970, 3
    %v5980 = vperm.slane %v5970, 4
    %v5981 = vperm.slane %v5970, 5
    %v5982 = vperm.slane %v5970, 6
    %v5983 = vperm.slane %v5970, 7
    %v5984 = vperm.slane %v5973, 0
    %v5985 = vperm.slane %v5973, 1
    %v5986 = vperm.slane %v5973, 2
    %v5987 = vperm.slane %v5973, 3
    %v6000 = vsub.f32 %v5800, %v5976
    %v6001 = vsub.f32 %v5801, %v5976
    %v6002 = vsub.f32 %v5802, %v5977
    %v6003 = vsub.f32 %v5803, %v5977
    %v6004 = vsub.f32 %v5804, %v5978
    %v6005 = vsub.f32 %v5805, %v5978
    %v6006 = vsub.f32 %v5806, %v5979
    %v6007 = vsub.f32 %v5807, %v5979
    %v6008 = vsub.f32 %v5808, %v5980
    %v6009 = vsub.f32 %v5809, %v5980
    %v6010 = vsub.f32 %v5810, %v5981
    %v6011 = vsub.f32 %v5811, %v5981
    %v6012 = vsub.f32 %v5812, %v5982
    %v6013 = vsub.f32 %v5813, %v5982
    %v6014 = vsub.f32 %v5814, %v5983
    %v6015 = vsub.f32 %v5815, %v5983
    %v6016 = vsub.f32 %v5816, %v5984
    %v6017 = vsub.f32 %v5817, %v5984
    %v6018 = vsub.f32 %v5818, %v5985
    %v6019 = vsub.f32 %v5819, %v5985
    %v6020 = vsub.f32 %v5820, %v5986
    %v6021 = vsub.f32 %v5821, %v5986
    %v6022 = vsub.f32 %v5822, %v5987
    %v6023 = vsub.f32 %v5823, %v5987
    %v6024 = vmul.f32 %v6000, 1.442695
    %v6025 = vpow.pop %v6024
    %v6026 = vmul.f32 %v6001, 1.442695
    %v6027 = vpow.pop %v6026
    %v6028 = vmul.f32 %v6002, 1.442695
    %v6029 = vpow.pop %v6028
    %v6030 = vmul.f32 %v6003, 1.442695
    %v6031 = vpow.pop %v6030
    %v6032 = vmul.f32 %v6004, 1.442695
    %v6033 = vpow.pop %v6032
    %v6034 = vmul.f32 %v6005, 1.442695
    %v6035 = vpow.pop %v6034
    %v6036 = vmul.f32 %v6006, 1.442695
    %v6037 = vpow.pop %v6036
    %v6038 = vmul.f32 %v6007, 1.442695
    %v6039 = vpow.pop %v6038
    %v6040 = vmul.f32 %v6008, 1.442695
    %v6041 = vpow.pop %v6040
    %v6042 = vmul.f32 %v6009, 1.442695
    %v6043 = vpow.pop %v6042
    %v6044 = vmul.f32 %v6010, 1.442695
    %v6045 = vpow.pop %v6044
    %v6046 = vmul.f32 %v6011, 1.442695
    %v6047 = vpow.pop %v6046
    %v6048 = vmul.f32 %v6012, 1.442695
    %v6049 = vpow.pop %v6048
    %v6050 = vmul.f32 %v6013, 1.442695
    %v6051 = vpow.pop %v6050
    %v6052 = vmul.f32 %v6014, 1.442695
    %v6053 = vpow.pop %v6052
    %v6054 = vmul.f32 %v6015, 1.442695
    %v6055 = vpow.pop %v6054
    %v6056 = vmul.f32 %v6016, 1.442695
    %v6057 = vpow.pop %v6056
    %v6058 = vmul.f32 %v6017, 1.442695
    %v6059 = vpow.pop %v6058
    %v6060 = vmul.f32 %v6018, 1.442695
    %v6061 = vpow.pop %v6060
    %v6062 = vmul.f32 %v6019, 1.442695
    %v6063 = vpow.pop %v6062
    %v6064 = vmul.f32 %v6020, 1.442695
    %v6065 = vpow.pop %v6064
    %v6066 = vmul.f32 %v6021, 1.442695
    %v6067 = vpow.pop %v6066
    %v6068 = vmul.f32 %v6022, 1.442695
    %v6069 = vpow.pop %v6068
    %v6070 = vmul.f32 %v6023, 1.442695
    %v6071 = vpow.pop %v6070
    %6096 = vset.pattern.permute.xlu0 0
    %6097 = vperm.xlu0 %6096, %v6025
    %v6098 = vpop.permute.xlu0 %6097
    %6099 = vset.pattern.permute.xlu0 0
    %6100 = vperm.xlu0 %6099, %v6027
    %v6101 = vpop.permute.xlu0 %6100
    %6102 = vset.pattern.permute.xlu0 0
    %6103 = vperm.xlu0 %6102, %v6029
    %v6104 = vpop.permute.xlu0 %6103
    %6105 = vset.pattern.permute.xlu0 0
    %6106 = vperm.xlu0 %6105, %v6031
    %v6107 = vpop.permute.xlu0 %6106
    %6108 = vset.pattern.permute.xlu0 0
    %6109 = vperm.xlu0 %6108, %v6033
    %v6110 = vpop.permute.xlu0 %6109
    %6111 = vset.pattern.permute.xlu0 0
    %6112 = vperm.xlu0 %6111, %v6035
    %v6113 = vpop.permute.xlu0 %6112
    %6114 = vset.pattern.permute.xlu0 0
    %6115 = vperm.xlu0 %6114, %v6037
    %v6116 = vpop.permute.xlu0 %6115
    %6117 = vset.pattern.permute.xlu0 0
    %6118 = vperm.xlu0 %6117, %v6039
    %v6119 = vpop.permute.xlu0 %6118
    %6120 = vset.pattern.permute.xlu0 0
    %6121 = vperm.xlu0 %6120, %v6041
    %v6122 = vpop.permute.xlu0 %6121
    %6123 = vset.pattern.permute.xlu0 0
    %6124 = vperm.xlu0 %6123, %v6043
    %v6125 = vpop.permute.xlu0 %6124
    %6126 = vset.pattern.permute.xlu0 0
    %6127 = vperm.xlu0 %6126, %v6045
    %v6128 = vpop.permute.xlu0 %6127
    %6129 = vset.pattern.permute.xlu0 0
    %6130 = vperm.xlu0 %6129, %v6047
    %v6131 = vpop.permute.xlu0 %6130
    %6132 = vset.pattern.permute.xlu0 0
    %6133 = vperm.xlu0 %6132, %v6049
    %v6134 = vpop.permute.xlu0 %6133
    %6135 = vset.pattern.permute.xlu0 0
    %6136 = vperm.xlu0 %6135, %v6051
    %v6137 = vpop.permute.xlu0 %6136
    %6138 = vset.pattern.permute.xlu0 0
    %6139 = vperm.xlu0 %6138, %v6053
    %v6140 = vpop.permute.xlu0 %6139
    %6141 = vset.pattern.permute.xlu0 0
    %6142 = vperm.xlu0 %6141, %v6055
    %v6143 = vpop.permute.xlu0 %6142
    %6144 = vset.pattern.permute.xlu0 0
    %6145 = vperm.xlu0 %6144, %v6057
    %v6146 = vpop.permute.xlu0 %6145
    %6147 = vset.pattern.permute.xlu0 0
    %6148 = vperm.xlu0 %6147, %v6059
    %v6149 = vpop.permute.xlu0 %6148
    %6150 = vset.pattern.permute.xlu0 0
    %6151 = vperm.xlu0 %6150, %v6061
    %v6152 = vpop.permute.xlu0 %6151
    %6153 = vset.pattern.permute.xlu0 0
    %6154 = vperm.xlu0 %6153, %v6063
    %v6155 = vpop.permute.xlu0 %6154
    %6156 = vset.pattern.permute.xlu0 0
    %6157 = vperm.xlu0 %6156, %v6065
    %v6158 = vpop.permute.xlu0 %6157
    %6159 = vset.pattern.permute.xlu0 0
    %6160 = vperm.xlu0 %6159, %v6067
    %v6161 = vpop.permute.xlu0 %6160
    %6162 = vset.pattern.permute.xlu0 0
    %6163 = vperm.xlu0 %6162, %v6069
    %v6164 = vpop.permute.xlu0 %6163
    %6165 = vset.pattern.permute.xlu0 0
    %6166 = vperm.xlu0 %6165, %v6071
    %v6167 = vpop.permute.xlu0 %6166
    %v6168 = vperm.slane %v6098, %v634
    %v6169 = vperm.slane %v6101, %v636
    %v6170 = vsel %vm638, %v6169, %v6168
    %v6171 = vperm.slane %v6104, %v634
    %v6172 = vperm.slane %v6107, %v636
    %v6173 = vsel %vm638, %v6172, %v6171
    %v6174 = vperm.slane %v6110, %v634
    %v6175 = vperm.slane %v6113, %v636
    %v6176 = vsel %vm638, %v6175, %v6174
    %v6177 = vperm.slane %v6116, %v634
    %v6178 = vperm.slane %v6119, %v636
    %v6179 = vsel %vm638, %v6178, %v6177
    %v6180 = vperm.slane %v6122, %v634
    %v6181 = vperm.slane %v6125, %v636
    %v6182 = vsel %vm638, %v6181, %v6180
    %v6183 = vperm.slane %v6128, %v634
    %v6184 = vperm.slane %v6131, %v636
    %v6185 = vsel %vm638, %v6184, %v6183
    %v6186 = vperm.slane %v6134, %v634
    %v6187 = vperm.slane %v6137, %v636
    %v6188 = vsel %vm638, %v6187, %v6186
    %v6189 = vperm.slane %v6140, %v634
    %v6190 = vperm.slane %v6143, %v636
    %v6191 = vsel %vm638, %v6190, %v6189
    %v6192 = vperm.slane %v6146, %v634
    %v6193 = vperm.slane %v6149, %v636
    %v6194 = vsel %vm638, %v6193, %v6192
    %v6195 = vperm.slane %v6152, %v634
    %v6196 = vperm.slane %v6155, %v636
    %v6197 = vsel %vm638, %v6196, %v6195
    %v6198 = vperm.slane %v6158, %v634
    %v6199 = vperm.slane %v6161, %v636
    %v6200 = vsel %vm638, %v6199, %v6198
    %v6201 = vperm.slane %v6164, %v634
    %v6202 = vperm.slane %v6167, %v636
    %v6203 = vsel %vm638, %v6202, %v6201
    %v6204 = vsel %vm673, %v6173, %v6170
    %v6205 = vsel %vm675, %v6176, %v6204
    %v6206 = vsel %vm677, %v6179, %v6205
    %v6207 = vsel %vm679, %v6182, %v6206
    %v6208 = vsel %vm681, %v6185, %v6207
    %v6209 = vsel %vm683, %v6188, %v6208
    %v6210 = vsel %vm685, %v6191, %v6209
    %v6211 = vsel %vm673, %v6197, %v6194
    %v6212 = vsel %vm675, %v6200, %v6211
    %v6213 = vsel %vm677, %v6203, %v6212
    %v6216 = vsel %vm21, %v6210, 0.0
    %v6217 = vsel %vm22, %v6213, 0.0
    %v6218 = vsel %vm692, %v6216, 0.0
    %6219 = vadd.xlane.f32.xlu0 %v6218
    %v6220 = vpop.xlane.xlu0 %6219
    %v6221 = vsel %vm696, %v6217, 0.0
    %6222 = vadd.xlane.f32.xlu0 %v6221
    %v6223 = vpop.xlane.xlu0 %6222
    %v6224 = vrcp.pop %v6220
    %v6225 = vrcp.pop %v6223
    %v6226 = vmul.f32 %v6216, %v6224
    %v6227 = vmul.f32 %v6217, %v6225
    %v6228 = vpack.c.bf16 %v6227, %v6226
    %6229 = vrot.lane.b32.xlu0 %v5016, 100
    %v6230 = vpop.permute.xlu0 %6229
    %v6232 = vsel %vm692, %v6228, 0
    %v6235 = vsel %vm963, %v6230, 0
    %6237 = vmatpush.bf16.msra.mxu0 0
    %6238 = vmatpush.bf16.msra.mxu0 0
    %6239 = vmatpush.bf16.msra.mxu0 0
    %6240 = vmatpush.bf16.msra.mxu0 0
    %6241 = vmatpush.bf16.msra.mxu0 0
    %6242 = vmatpush.bf16.msra.mxu0 0
    %6243 = vmatpush.bf16.msra.mxu0 0
    %6244 = vmatpush.bf16.msra.mxu0 %v6235
    %6245 = vmatmul.bf16.gmra.mxu0 %v6232
    %v6246 = vpop.f32.mrf.mxu0
    %v6247 = vadd.f32 0.0, %v6246
    %v6248 = vpop.f32.mrf.mxu0
    %v6249 = vadd.f32 0.0, %v6248
    %6250 = vdwg.mxu0
    %6253 = vrot.lane.b32.xlu0 %v5652, 14
    %v6254 = vpop.permute.xlu0 %6253
    %6255 = vrot.lane.b32.xlu0 %v5654, 14
    %v6256 = vpop.permute.xlu0 %6255
    %6261 = vrot.lane.b32.xlu0 %v6247, 28
    %v6262 = vpop.permute.xlu0 %6261
    %6263 = vrot.lane.b32.xlu0 %v6249, 28
    %v6264 = vpop.permute.xlu0 %6263
    %v6267 = vsel %vm4509, %v5033, %v6254
    %v6268 = vsel %vm4509, %v5035, %v6256
    %vm6269 = vcmask 228352
    %v6270 = vsel %vm6269, %v6267, %v6262
    %v6271 = vsel %vm6269, %v6268, %v6264
    %v6272 = vperm.slane %v4277, 0
    %v6273 = vmul.f32 %v6270, %v6272
    %v6274 = vmul.f32 %v6271, %v6272
    %v6275 = vperm.slane %v4278, 0
    %v6276 = vadd.f32 %v6273, %v6275
    %v6277 = vadd.f32 %v6274, %v6275
    %v6278 = vld [vmem:[%s2 + $0x90] sm:$0xf]
    %v6279 = vld [vmem:[%s2 + $0x94] sm:$0xf]
    %v6280 = vld [vmem:[%s2 + $0x98] sm:$0xf]
    %v6281 = vld [vmem:[%s2 + $0x9c] sm:$0xf]
    %v6282 = vld [vmem:[%s2 + $0xa0] sm:$0xf]
    %v6283 = vld [vmem:[%s2 + $0xa4] sm:$0x1]
    %v6284 = vld [vmem:[%s2 + $0xa8] sm:$0xf]
    %v6285 = vld [vmem:[%s2 + $0xac] sm:$0xf]
    %v6286 = vld [vmem:[%s2 + $0xb0] sm:$0xf]
    %v6287 = vld [vmem:[%s2 + $0xb4] sm:$0xf]
    %v6288 = vld [vmem:[%s2 + $0xb8] sm:$0xf]
    %v6289 = vld [vmem:[%s2 + $0xbc] sm:$0x1]
    %v6290 = vld [vmem:[%s3 + $0x18] sm:$0x1]
    %v6291 = vld [vmem:[%s3 + $0x19] sm:$0x1]
    %v6292 = vld [vmem:[%s3 + $0x1a] sm:$0x1]
    %v6293 = vld [vmem:[%s3 + $0x1b] sm:$0x1]
    %v6294 = vld [vmem:[%s3 + $0x1c] sm:$0x1]
    %v6295 = vpack.c.bf16 %v6277, %v6276
    %v6296 = vperm.slane %v6290, 0
    %v6303 = vunpack.c.l.b16 %v6278
    %v6304 = vunpack.c.l.b16 %v6279
    %v6305 = vunpack.c.l.b16 %v6280
    %v6306 = vunpack.c.l.b16 %v6281
    %v6307 = vunpack.c.l.b16 %v6282
    %v6308 = vunpack.c.l.b16 %v6283
    %v6309 = vpack.c.b16 %v6304, %v6303
    %v6310 = vpack.c.b16 %v6306, %v6305
    %v6311 = vpack.c.b16 %v6308, %v6307
    %vm6314 = vcmask 343040
    %v6316 = vsel %vm6314, %v6295, 0
    %vm6318 = vcmask 1044480
    %v6320 = vsel %vm6318, %v6311, 0
    %6322 = vmatpush.bf16.msra.mxu0 0
    %6323 = vmatpush.bf16.msra.mxu0 0
    %6324 = vmatpush.bf16.msra.mxu0 0
    %6325 = vmatpush.bf16.msra.mxu0 0
    %6326 = vmatpush.bf16.msra.mxu0 0
    %6327 = vmatpush.bf16.msra.mxu0 %v6320
    %6328 = vmatpush.bf16.msra.mxu0 %v6310
    %6329 = vmatpush.bf16.msra.mxu0 %v6309
    %6330 = vmatmul.bf16.gmra.mxu0 %v6316
    %v6331 = vpop.f32.mrf.mxu0
    %v6332 = vadd.f32 %v6296, %v6331
    %v6333 = vpop.f32.mrf.mxu0
    %v6334 = vadd.f32 %v6296, %v6333
    %6335 = vdwg.mxu0
    %v6336 = vperm.slane %v6291, 0
    %v6343 = vunpack.c.l.b16 %v6284
    %v6344 = vunpack.c.l.b16 %v6285
    %v6345 = vunpack.c.l.b16 %v6286
    %v6346 = vunpack.c.l.b16 %v6287
    %v6347 = vunpack.c.l.b16 %v6288
    %v6348 = vunpack.c.l.b16 %v6289
    %v6349 = vpack.c.b16 %v6344, %v6343
    %v6350 = vpack.c.b16 %v6346, %v6345
    %v6351 = vpack.c.b16 %v6348, %v6347
    %v6355 = vsel %vm6318, %v6351, 0
    %6357 = vmatpush.bf16.msra.mxu0 0
    %6358 = vmatpush.bf16.msra.mxu0 0
    %6359 = vmatpush.bf16.msra.mxu0 0
    %6360 = vmatpush.bf16.msra.mxu0 0
    %6361 = vmatpush.bf16.msra.mxu0 0
    %6362 = vmatpush.bf16.msra.mxu0 %v6355
    %6363 = vmatpush.bf16.msra.mxu0 %v6350
    %6364 = vmatpush.bf16.msra.mxu0 %v6349
    %6365 = vmatmul.bf16.gmra.mxu0 %v6316
    %v6366 = vpop.f32.mrf.mxu0
    %v6367 = vadd.f32 %v6336, %v6366
    %v6368 = vpop.f32.mrf.mxu0
    %v6369 = vadd.f32 %v6336, %v6368
    %6370 = vdwg.mxu0
    %v6373 = vrot.slane %v6367, 1
    %v6374 = vrot.slane %v6367, 2
    %v6375 = vrot.slane %v6367, 3
    %v6376 = vrot.slane %v6367, 4
    %v6377 = vrot.slane %v6367, 5
    %v6378 = vrot.slane %v6367, 6
    %v6379 = vrot.slane %v6367, 7
    %v6380 = vrot.slane %v6369, 1
    %v6381 = vrot.slane %v6369, 2
    %v6382 = vrot.slane %v6369, 3
    %v6383 = vperm.slane %v6367, 0
    %v6384 = vperm.slane %v6373, 0
    %v6385 = vperm.slane %v6374, 0
    %v6386 = vperm.slane %v6375, 0
    %v6387 = vperm.slane %v6376, 0
    %v6388 = vperm.slane %v6377, 0
    %v6389 = vperm.slane %v6378, 0
    %v6390 = vperm.slane %v6379, 0
    %v6391 = vperm.slane %v6369, 0
    %v6392 = vperm.slane %v6380, 0
    %v6393 = vperm.slane %v6381, 0
    %v6394 = vperm.slane %v6382, 0
    %v6407 = vadd.f32 %v6332, %v6383
    %v6408 = vadd.f32 %v6334, %v6383
    %v6409 = vadd.f32 %v6332, %v6384
    %v6410 = vadd.f32 %v6334, %v6384
    %v6411 = vadd.f32 %v6332, %v6385
    %v6412 = vadd.f32 %v6334, %v6385
    %v6413 = vadd.f32 %v6332, %v6386
    %v6414 = vadd.f32 %v6334, %v6386
    %v6415 = vadd.f32 %v6332, %v6387
    %v6416 = vadd.f32 %v6334, %v6387
    %v6417 = vadd.f32 %v6332, %v6388
    %v6418 = vadd.f32 %v6334, %v6388
    %v6419 = vadd.f32 %v6332, %v6389
    %v6420 = vadd.f32 %v6334, %v6389
    %v6421 = vadd.f32 %v6332, %v6390
    %v6422 = vadd.f32 %v6334, %v6390
    %v6423 = vadd.f32 %v6332, %v6391
    %v6424 = vadd.f32 %v6334, %v6391
    %v6425 = vadd.f32 %v6332, %v6392
    %v6426 = vadd.f32 %v6334, %v6392
    %v6427 = vadd.f32 %v6332, %v6393
    %v6428 = vadd.f32 %v6334, %v6393
    %v6429 = vadd.f32 %v6332, %v6394
    %v6430 = vadd.f32 %v6334, %v6394
    %vm6431 = vcmp.gt.f32.partialorder %v6407, 0.0
    %vm6432 = vcmp.gt.f32.partialorder %v6408, 0.0
    %vm6433 = vcmp.gt.f32.partialorder %v6409, 0.0
    %vm6434 = vcmp.gt.f32.partialorder %v6410, 0.0
    %vm6435 = vcmp.gt.f32.partialorder %v6411, 0.0
    %vm6436 = vcmp.gt.f32.partialorder %v6412, 0.0
    %vm6437 = vcmp.gt.f32.partialorder %v6413, 0.0
    %vm6438 = vcmp.gt.f32.partialorder %v6414, 0.0
    %vm6439 = vcmp.gt.f32.partialorder %v6415, 0.0
    %vm6440 = vcmp.gt.f32.partialorder %v6416, 0.0
    %vm6441 = vcmp.gt.f32.partialorder %v6417, 0.0
    %vm6442 = vcmp.gt.f32.partialorder %v6418, 0.0
    %vm6443 = vcmp.gt.f32.partialorder %v6419, 0.0
    %vm6444 = vcmp.gt.f32.partialorder %v6420, 0.0
    %vm6445 = vcmp.gt.f32.partialorder %v6421, 0.0
    %vm6446 = vcmp.gt.f32.partialorder %v6422, 0.0
    %vm6447 = vcmp.gt.f32.partialorder %v6423, 0.0
    %vm6448 = vcmp.gt.f32.partialorder %v6424, 0.0
    %vm6449 = vcmp.gt.f32.partialorder %v6425, 0.0
    %vm6450 = vcmp.gt.f32.partialorder %v6426, 0.0
    %vm6451 = vcmp.gt.f32.partialorder %v6427, 0.0
    %vm6452 = vcmp.gt.f32.partialorder %v6428, 0.0
    %vm6453 = vcmp.gt.f32.partialorder %v6429, 0.0
    %vm6454 = vcmp.gt.f32.partialorder %v6430, 0.0
    %v6455 = vmul.f32 %v6407, 0.2
    %v6456 = vmul.f32 %v6408, 0.2
    %v6457 = vmul.f32 %v6409, 0.2
    %v6458 = vmul.f32 %v6410, 0.2
    %v6459 = vmul.f32 %v6411, 0.2
    %v6460 = vmul.f32 %v6412, 0.2
    %v6461 = vmul.f32 %v6413, 0.2
    %v6462 = vmul.f32 %v6414, 0.2
    %v6463 = vmul.f32 %v6415, 0.2
    %v6464 = vmul.f32 %v6416, 0.2
    %v6465 = vmul.f32 %v6417, 0.2
    %v6466 = vmul.f32 %v6418, 0.2
    %v6467 = vmul.f32 %v6419, 0.2
    %v6468 = vmul.f32 %v6420, 0.2
    %v6469 = vmul.f32 %v6421, 0.2
    %v6470 = vmul.f32 %v6422, 0.2
    %v6471 = vmul.f32 %v6423, 0.2
    %v6472 = vmul.f32 %v6424, 0.2
    %v6473 = vmul.f32 %v6425, 0.2
    %v6474 = vmul.f32 %v6426, 0.2
    %v6475 = vmul.f32 %v6427, 0.2
    %v6476 = vmul.f32 %v6428, 0.2
    %v6477 = vmul.f32 %v6429, 0.2
    %v6478 = vmul.f32 %v6430, 0.2
    %v6479 = vsel %vm6431, %v6407, %v6455
    %v6480 = vsel %vm6432, %v6408, %v6456
    %v6481 = vsel %vm6433, %v6409, %v6457
    %v6482 = vsel %vm6434, %v6410, %v6458
    %v6483 = vsel %vm6435, %v6411, %v6459
    %v6484 = vsel %vm6436, %v6412, %v6460
    %v6485 = vsel %vm6437, %v6413, %v6461
    %v6486 = vsel %vm6438, %v6414, %v6462
    %v6487 = vsel %vm6439, %v6415, %v6463
    %v6488 = vsel %vm6440, %v6416, %v6464
    %v6489 = vsel %vm6441, %v6417, %v6465
    %v6490 = vsel %vm6442, %v6418, %v6466
    %v6491 = vsel %vm6443, %v6419, %v6467
    %v6492 = vsel %vm6444, %v6420, %v6468
    %v6493 = vsel %vm6445, %v6421, %v6469
    %v6494 = vsel %vm6446, %v6422, %v6470
    %v6495 = vsel %vm6447, %v6423, %v6471
    %v6496 = vsel %vm6448, %v6424, %v6472
    %v6497 = vsel %vm6449, %v6425, %v6473
    %v6498 = vsel %vm6450, %v6426, %v6474
    %v6499 = vsel %vm6451, %v6427, %v6475
    %v6500 = vsel %vm6452, %v6428, %v6476
    %v6501 = vsel %vm6453, %v6429, %v6477
    %v6502 = vsel %vm6454, %v6430, %v6478
    %v6503 = vperm.slane %v6292, 0
    %v6504 = vmul.f32 %v6479, %v6503
    %v6505 = vmul.f32 %v6480, %v6503
    %v6506 = vmul.f32 %v6481, %v6503
    %v6507 = vmul.f32 %v6482, %v6503
    %v6508 = vmul.f32 %v6483, %v6503
    %v6509 = vmul.f32 %v6484, %v6503
    %v6510 = vmul.f32 %v6485, %v6503
    %v6511 = vmul.f32 %v6486, %v6503
    %v6512 = vmul.f32 %v6487, %v6503
    %v6513 = vmul.f32 %v6488, %v6503
    %v6514 = vmul.f32 %v6489, %v6503
    %v6515 = vmul.f32 %v6490, %v6503
    %v6516 = vmul.f32 %v6491, %v6503
    %v6517 = vmul.f32 %v6492, %v6503
    %v6518 = vmul.f32 %v6493, %v6503
    %v6519 = vmul.f32 %v6494, %v6503
    %v6520 = vmul.f32 %v6495, %v6503
    %v6521 = vmul.f32 %v6496, %v6503
    %v6522 = vmul.f32 %v6497, %v6503
    %v6523 = vmul.f32 %v6498, %v6503
    %v6524 = vmul.f32 %v6499, %v6503
    %v6525 = vmul.f32 %v6500, %v6503
    %v6526 = vmul.f32 %v6501, %v6503
    %v6527 = vmul.f32 %v6502, %v6503
    %v6528 = vpack.c.bf16 %v6332, %v6332
    %v6529 = vpack.c.bf16 %v6334, %v6334
    %vm6530 = vcmask 80896
    %v6531 = vsel %vm6530, %v6504, 0.0
    %6532 = vadd.xlane.f32.xlu0 %v6531
    %v6533 = vpop.xlane.xlu0 %6532
    %vm6534 = vcmask 76800
    %v6535 = vsel %vm6534, %v6505, 0.0
    %6536 = vadd.xlane.f32.xlu0 %v6535
    %v6537 = vpop.xlane.xlu0 %6536
    %v6538 = vsel %vm6530, %v6506, 0.0
    %6539 = vadd.xlane.f32.xlu0 %v6538
    %v6540 = vpop.xlane.xlu0 %6539
    %v6541 = vsel %vm6534, %v6507, 0.0
    %6542 = vadd.xlane.f32.xlu0 %v6541
    %v6543 = vpop.xlane.xlu0 %6542
    %v6544 = vsel %vm6530, %v6508, 0.0
    %6545 = vadd.xlane.f32.xlu0 %v6544
    %v6546 = vpop.xlane.xlu0 %6545
    %v6547 = vsel %vm6534, %v6509, 0.0
    %6548 = vadd.xlane.f32.xlu0 %v6547
    %v6549 = vpop.xlane.xlu0 %6548
    %v6550 = vsel %vm6530, %v6510, 0.0
    %6551 = vadd.xlane.f32.xlu0 %v6550
    %v6552 = vpop.xlane.xlu0 %6551
    %v6553 = vsel %vm6534, %v6511, 0.0
    %6554 = vadd.xlane.f32.xlu0 %v6553
    %v6555 = vpop.xlane.xlu0 %6554
    %v6556 = vsel %vm6530, %v6512, 0.0
    %6557 = vadd.xlane.f32.xlu0 %v6556
    %v6558 = vpop.xlane.xlu0 %6557
    %v6559 = vsel %vm6534, %v6513, 0.0
    %6560 = vadd.xlane.f32.xlu0 %v6559
    %v6561 = vpop.xlane.xlu0 %6560
    %v6562 = vsel %vm6530, %v6514, 0.0
    %6563 = vadd.xlane.f32.xlu0 %v6562
    %v6564 = vpop.xlane.xlu0 %6563
    %v6565 = vsel %vm6534, %v6515, 0.0
    %6566 = vadd.xlane.f32.xlu0 %v6565
    %v6567 = vpop.xlane.xlu0 %6566
    %v6568 = vsel %vm6530, %v6516, 0.0
    %6569 = vadd.xlane.f32.xlu0 %v6568
    %v6570 = vpop.xlane.xlu0 %6569
    %v6571 = vsel %vm6534, %v6517, 0.0
    %6572 = vadd.xlane.f32.xlu0 %v6571
    %v6573 = vpop.xlane.xlu0 %6572
    %v6574 = vsel %vm6530, %v6518, 0.0
    %6575 = vadd.xlane.f32.xlu0 %v6574
    %v6576 = vpop.xlane.xlu0 %6575
    %v6577 = vsel %vm6534, %v6519, 0.0
    %6578 = vadd.xlane.f32.xlu0 %v6577
    %v6579 = vpop.xlane.xlu0 %6578
    %v6580 = vsel %vm6530, %v6520, 0.0
    %6581 = vadd.xlane.f32.xlu0 %v6580
    %v6582 = vpop.xlane.xlu0 %6581
    %v6583 = vsel %vm6534, %v6521, 0.0
    %6584 = vadd.xlane.f32.xlu0 %v6583
    %v6585 = vpop.xlane.xlu0 %6584
    %v6586 = vsel %vm6530, %v6522, 0.0
    %6587 = vadd.xlane.f32.xlu0 %v6586
    %v6588 = vpop.xlane.xlu0 %6587
    %v6589 = vsel %vm6534, %v6523, 0.0
    %6590 = vadd.xlane.f32.xlu0 %v6589
    %v6591 = vpop.xlane.xlu0 %6590
    %v6592 = vsel %vm6530, %v6524, 0.0
    %6593 = vadd.xlane.f32.xlu0 %v6592
    %v6594 = vpop.xlane.xlu0 %6593
    %v6595 = vsel %vm6534, %v6525, 0.0
    %6596 = vadd.xlane.f32.xlu0 %v6595
    %v6597 = vpop.xlane.xlu0 %6596
    %v6598 = vsel %vm6530, %v6526, 0.0
    %6599 = vadd.xlane.f32.xlu0 %v6598
    %v6600 = vpop.xlane.xlu0 %6599
    %v6601 = vsel %vm6534, %v6527, 0.0
    %6602 = vadd.xlane.f32.xlu0 %v6601
    %v6603 = vpop.xlane.xlu0 %6602
    %v6604 = vadd.f32 %v6533, %v339
    %v6605 = vadd.f32 %v6537, %v345
    %v6606 = vadd.f32 %v6540, %v352
    %v6607 = vadd.f32 %v6543, %v358
    %v6608 = vadd.f32 %v6546, %v365
    %v6609 = vadd.f32 %v6549, %v371
    %v6610 = vadd.f32 %v6552, %v378
    %v6611 = vadd.f32 %v6555, %v384
    %v6612 = vadd.f32 %v6558, %v391
    %v6613 = vadd.f32 %v6561, %v397
    %v6614 = vadd.f32 %v6564, %v404
    %v6615 = vadd.f32 %v6567, %v410
    %v6616 = vadd.f32 %v6570, %v417
    %v6617 = vadd.f32 %v6573, %v423
    %v6618 = vadd.f32 %v6576, %v430
    %v6619 = vadd.f32 %v6579, %v436
    %v6620 = vadd.f32 %v6582, %v443
    %v6621 = vadd.f32 %v6585, %v449
    %v6622 = vadd.f32 %v6588, %v456
    %v6623 = vadd.f32 %v6591, %v462
    %v6624 = vadd.f32 %v6594, %v469
    %v6625 = vadd.f32 %v6597, %v475
    %v6626 = vadd.f32 %v6600, %v482
    %v6627 = vadd.f32 %v6603, %v488
    %6652 = vset.pattern.permute.xlu0 0
    %6653 = vperm.xlu0 %6652, %v6604
    %v6654 = vpop.permute.xlu0 %6653
    %6655 = vset.pattern.permute.xlu0 0
    %6656 = vperm.xlu0 %6655, %v6605
    %v6657 = vpop.permute.xlu0 %6656
    %6658 = vset.pattern.permute.xlu0 0
    %6659 = vperm.xlu0 %6658, %v6606
    %v6660 = vpop.permute.xlu0 %6659
    %6661 = vset.pattern.permute.xlu0 0
    %6662 = vperm.xlu0 %6661, %v6607
    %v6663 = vpop.permute.xlu0 %6662
    %6664 = vset.pattern.permute.xlu0 0
    %6665 = vperm.xlu0 %6664, %v6608
    %v6666 = vpop.permute.xlu0 %6665
    %6667 = vset.pattern.permute.xlu0 0
    %6668 = vperm.xlu0 %6667, %v6609
    %v6669 = vpop.permute.xlu0 %6668
    %6670 = vset.pattern.permute.xlu0 0
    %6671 = vperm.xlu0 %6670, %v6610
    %v6672 = vpop.permute.xlu0 %6671
    %6673 = vset.pattern.permute.xlu0 0
    %6674 = vperm.xlu0 %6673, %v6611
    %v6675 = vpop.permute.xlu0 %6674
    %6676 = vset.pattern.permute.xlu0 0
    %6677 = vperm.xlu0 %6676, %v6612
    %v6678 = vpop.permute.xlu0 %6677
    %6679 = vset.pattern.permute.xlu0 0
    %6680 = vperm.xlu0 %6679, %v6613
    %v6681 = vpop.permute.xlu0 %6680
    %6682 = vset.pattern.permute.xlu0 0
    %6683 = vperm.xlu0 %6682, %v6614
    %v6684 = vpop.permute.xlu0 %6683
    %6685 = vset.pattern.permute.xlu0 0
    %6686 = vperm.xlu0 %6685, %v6615
    %v6687 = vpop.permute.xlu0 %6686
    %6688 = vset.pattern.permute.xlu0 0
    %6689 = vperm.xlu0 %6688, %v6616
    %v6690 = vpop.permute.xlu0 %6689
    %6691 = vset.pattern.permute.xlu0 0
    %6692 = vperm.xlu0 %6691, %v6617
    %v6693 = vpop.permute.xlu0 %6692
    %6694 = vset.pattern.permute.xlu0 0
    %6695 = vperm.xlu0 %6694, %v6618
    %v6696 = vpop.permute.xlu0 %6695
    %6697 = vset.pattern.permute.xlu0 0
    %6698 = vperm.xlu0 %6697, %v6619
    %v6699 = vpop.permute.xlu0 %6698
    %6700 = vset.pattern.permute.xlu0 0
    %6701 = vperm.xlu0 %6700, %v6620
    %v6702 = vpop.permute.xlu0 %6701
    %6703 = vset.pattern.permute.xlu0 0
    %6704 = vperm.xlu0 %6703, %v6621
    %v6705 = vpop.permute.xlu0 %6704
    %6706 = vset.pattern.permute.xlu0 0
    %6707 = vperm.xlu0 %6706, %v6622
    %v6708 = vpop.permute.xlu0 %6707
    %6709 = vset.pattern.permute.xlu0 0
    %6710 = vperm.xlu0 %6709, %v6623
    %v6711 = vpop.permute.xlu0 %6710
    %6712 = vset.pattern.permute.xlu0 0
    %6713 = vperm.xlu0 %6712, %v6624
    %v6714 = vpop.permute.xlu0 %6713
    %6715 = vset.pattern.permute.xlu0 0
    %6716 = vperm.xlu0 %6715, %v6625
    %v6717 = vpop.permute.xlu0 %6716
    %6718 = vset.pattern.permute.xlu0 0
    %6719 = vperm.xlu0 %6718, %v6626
    %v6720 = vpop.permute.xlu0 %6719
    %6721 = vset.pattern.permute.xlu0 0
    %6722 = vperm.xlu0 %6721, %v6627
    %v6723 = vpop.permute.xlu0 %6722
    %v6724 = vperm.slane %v6654, %v634
    %v6725 = vperm.slane %v6657, %v636
    %v6726 = vsel %vm638, %v6725, %v6724
    %v6727 = vperm.slane %v6660, %v634
    %v6728 = vperm.slane %v6663, %v636
    %v6729 = vsel %vm638, %v6728, %v6727
    %v6730 = vperm.slane %v6666, %v634
    %v6731 = vperm.slane %v6669, %v636
    %v6732 = vsel %vm638, %v6731, %v6730
    %v6733 = vperm.slane %v6672, %v634
    %v6734 = vperm.slane %v6675, %v636
    %v6735 = vsel %vm638, %v6734, %v6733
    %v6736 = vperm.slane %v6678, %v634
    %v6737 = vperm.slane %v6681, %v636
    %v6738 = vsel %vm638, %v6737, %v6736
    %v6739 = vperm.slane %v6684, %v634
    %v6740 = vperm.slane %v6687, %v636
    %v6741 = vsel %vm638, %v6740, %v6739
    %v6742 = vperm.slane %v6690, %v634
    %v6743 = vperm.slane %v6693, %v636
    %v6744 = vsel %vm638, %v6743, %v6742
    %v6745 = vperm.slane %v6696, %v634
    %v6746 = vperm.slane %v6699, %v636
    %v6747 = vsel %vm638, %v6746, %v6745
    %v6748 = vperm.slane %v6702, %v634
    %v6749 = vperm.slane %v6705, %v636
    %v6750 = vsel %vm638, %v6749, %v6748
    %v6751 = vperm.slane %v6708, %v634
    %v6752 = vperm.slane %v6711, %v636
    %v6753 = vsel %vm638, %v6752, %v6751
    %v6754 = vperm.slane %v6714, %v634
    %v6755 = vperm.slane %v6717, %v636
    %v6756 = vsel %vm638, %v6755, %v6754
    %v6757 = vperm.slane %v6720, %v634
    %v6758 = vperm.slane %v6723, %v636
    %v6759 = vsel %vm638, %v6758, %v6757
    %v6760 = vsel %vm673, %v6729, %v6726
    %v6761 = vsel %vm675, %v6732, %v6760
    %v6762 = vsel %vm677, %v6735, %v6761
    %v6763 = vsel %vm679, %v6738, %v6762
    %v6764 = vsel %vm681, %v6741, %v6763
    %v6765 = vsel %vm683, %v6744, %v6764
    %v6766 = vsel %vm685, %v6747, %v6765
    %v6767 = vsel %vm673, %v6753, %v6750
    %v6768 = vsel %vm675, %v6756, %v6767
    %v6769 = vsel %vm677, %v6759, %v6768
    %v6772 = vsel %vm692, %v6766, -inf
    %6773 = vmax.xlane.f32.xlu0 %v6772
    %v6774 = vpop.xlane.xlu0 %6773
    %v6775 = vsel %vm696, %v6769, -inf
    %6776 = vmax.xlane.f32.xlu0 %v6775
    %v6777 = vpop.xlane.xlu0 %6776
    %v6780 = vperm.slane %v6774, 0
    %v6781 = vperm.slane %v6774, 1
    %v6782 = vperm.slane %v6774, 2
    %v6783 = vperm.slane %v6774, 3
    %v6784 = vperm.slane %v6774, 4
    %v6785 = vperm.slane %v6774, 5
    %v6786 = vperm.slane %v6774, 6
    %v6787 = vperm.slane %v6774, 7
    %v6788 = vperm.slane %v6777, 0
    %v6789 = vperm.slane %v6777, 1
    %v6790 = vperm.slane %v6777, 2
    %v6791 = vperm.slane %v6777, 3
    %v6804 = vsub.f32 %v6604, %v6780
    %v6805 = vsub.f32 %v6605, %v6780
    %v6806 = vsub.f32 %v6606, %v6781
    %v6807 = vsub.f32 %v6607, %v6781
    %v6808 = vsub.f32 %v6608, %v6782
    %v6809 = vsub.f32 %v6609, %v6782
    %v6810 = vsub.f32 %v6610, %v6783
    %v6811 = vsub.f32 %v6611, %v6783
    %v6812 = vsub.f32 %v6612, %v6784
    %v6813 = vsub.f32 %v6613, %v6784
    %v6814 = vsub.f32 %v6614, %v6785
    %v6815 = vsub.f32 %v6615, %v6785
    %v6816 = vsub.f32 %v6616, %v6786
    %v6817 = vsub.f32 %v6617, %v6786
    %v6818 = vsub.f32 %v6618, %v6787
    %v6819 = vsub.f32 %v6619, %v6787
    %v6820 = vsub.f32 %v6620, %v6788
    %v6821 = vsub.f32 %v6621, %v6788
    %v6822 = vsub.f32 %v6622, %v6789
    %v6823 = vsub.f32 %v6623, %v6789
    %v6824 = vsub.f32 %v6624, %v6790
    %v6825 = vsub.f32 %v6625, %v6790
    %v6826 = vsub.f32 %v6626, %v6791
    %v6827 = vsub.f32 %v6627, %v6791
    %v6828 = vmul.f32 %v6804, 1.442695
    %v6829 = vpow.pop %v6828
    %v6830 = vmul.f32 %v6805, 1.442695
    %v6831 = vpow.pop %v6830
    %v6832 = vmul.f32 %v6806, 1.442695
    %v6833 = vpow.pop %v6832
    %v6834 = vmul.f32 %v6807, 1.442695
    %v6835 = vpow.pop %v6834
    %v6836 = vmul.f32 %v6808, 1.442695
    %v6837 = vpow.pop %v6836
    %v6838 = vmul.f32 %v6809, 1.442695
    %v6839 = vpow.pop %v6838
    %v6840 = vmul.f32 %v6810, 1.442695
    %v6841 = vpow.pop %v6840
    %v6842 = vmul.f32 %v6811, 1.442695
    %v6843 = vpow.pop %v6842
    %v6844 = vmul.f32 %v6812, 1.442695
    %v6845 = vpow.pop %v6844
    %v6846 = vmul.f32 %v6813, 1.442695
    %v6847 = vpow.pop %v6846
    %v6848 = vmul.f32 %v6814, 1.442695
    %v6849 = vpow.pop %v6848
    %v6850 = vmul.f32 %v6815, 1.442695
    %v6851 = vpow.pop %v6850
    %v6852 = vmul.f32 %v6816, 1.442695
    %v6853 = vpow.pop %v6852
    %v6854 = vmul.f32 %v6817, 1.442695
    %v6855 = vpow.pop %v6854
    %v6856 = vmul.f32 %v6818, 1.442695
    %v6857 = vpow.pop %v6856
    %v6858 = vmul.f32 %v6819, 1.442695
    %v6859 = vpow.pop %v6858
    %v6860 = vmul.f32 %v6820, 1.442695
    %v6861 = vpow.pop %v6860
    %v6862 = vmul.f32 %v6821, 1.442695
    %v6863 = vpow.pop %v6862
    %v6864 = vmul.f32 %v6822, 1.442695
    %v6865 = vpow.pop %v6864
    %v6866 = vmul.f32 %v6823, 1.442695
    %v6867 = vpow.pop %v6866
    %v6868 = vmul.f32 %v6824, 1.442695
    %v6869 = vpow.pop %v6868
    %v6870 = vmul.f32 %v6825, 1.442695
    %v6871 = vpow.pop %v6870
    %v6872 = vmul.f32 %v6826, 1.442695
    %v6873 = vpow.pop %v6872
    %v6874 = vmul.f32 %v6827, 1.442695
    %v6875 = vpow.pop %v6874
    %6900 = vset.pattern.permute.xlu0 0
    %6901 = vperm.xlu0 %6900, %v6829
    %v6902 = vpop.permute.xlu0 %6901
    %6903 = vset.pattern.permute.xlu0 0
    %6904 = vperm.xlu0 %6903, %v6831
    %v6905 = vpop.permute.xlu0 %6904
    %6906 = vset.pattern.permute.xlu0 0
    %6907 = vperm.xlu0 %6906, %v6833
    %v6908 = vpop.permute.xlu0 %6907
    %6909 = vset.pattern.permute.xlu0 0
    %6910 = vperm.xlu0 %6909, %v6835
    %v6911 = vpop.permute.xlu0 %6910
    %6912 = vset.pattern.permute.xlu0 0
    %6913 = vperm.xlu0 %6912, %v6837
    %v6914 = vpop.permute.xlu0 %6913
    %6915 = vset.pattern.permute.xlu0 0
    %6916 = vperm.xlu0 %6915, %v6839
    %v6917 = vpop.permute.xlu0 %6916
    %6918 = vset.pattern.permute.xlu0 0
    %6919 = vperm.xlu0 %6918, %v6841
    %v6920 = vpop.permute.xlu0 %6919
    %6921 = vset.pattern.permute.xlu0 0
    %6922 = vperm.xlu0 %6921, %v6843
    %v6923 = vpop.permute.xlu0 %6922
    %6924 = vset.pattern.permute.xlu0 0
    %6925 = vperm.xlu0 %6924, %v6845
    %v6926 = vpop.permute.xlu0 %6925
    %6927 = vset.pattern.permute.xlu0 0
    %6928 = vperm.xlu0 %6927, %v6847
    %v6929 = vpop.permute.xlu0 %6928
    %6930 = vset.pattern.permute.xlu0 0
    %6931 = vperm.xlu0 %6930, %v6849
    %v6932 = vpop.permute.xlu0 %6931
    %6933 = vset.pattern.permute.xlu0 0
    %6934 = vperm.xlu0 %6933, %v6851
    %v6935 = vpop.permute.xlu0 %6934
    %6936 = vset.pattern.permute.xlu0 0
    %6937 = vperm.xlu0 %6936, %v6853
    %v6938 = vpop.permute.xlu0 %6937
    %6939 = vset.pattern.permute.xlu0 0
    %6940 = vperm.xlu0 %6939, %v6855
    %v6941 = vpop.permute.xlu0 %6940
    %6942 = vset.pattern.permute.xlu0 0
    %6943 = vperm.xlu0 %6942, %v6857
    %v6944 = vpop.permute.xlu0 %6943
    %6945 = vset.pattern.permute.xlu0 0
    %6946 = vperm.xlu0 %6945, %v6859
    %v6947 = vpop.permute.xlu0 %6946
    %6948 = vset.pattern.permute.xlu0 0
    %6949 = vperm.xlu0 %6948, %v6861
    %v6950 = vpop.permute.xlu0 %6949
    %6951 = vset.pattern.permute.xlu0 0
    %6952 = vperm.xlu0 %6951, %v6863
    %v6953 = vpop.permute.xlu0 %6952
    %6954 = vset.pattern.permute.xlu0 0
    %6955 = vperm.xlu0 %6954, %v6865
    %v6956 = vpop.permute.xlu0 %6955
    %6957 = vset.pattern.permute.xlu0 0
    %6958 = vperm.xlu0 %6957, %v6867
    %v6959 = vpop.permute.xlu0 %6958
    %6960 = vset.pattern.permute.xlu0 0
    %6961 = vperm.xlu0 %6960, %v6869
    %v6962 = vpop.permute.xlu0 %6961
    %6963 = vset.pattern.permute.xlu0 0
    %6964 = vperm.xlu0 %6963, %v6871
    %v6965 = vpop.permute.xlu0 %6964
    %6966 = vset.pattern.permute.xlu0 0
    %6967 = vperm.xlu0 %6966, %v6873
    %v6968 = vpop.permute.xlu0 %6967
    %6969 = vset.pattern.permute.xlu0 0
    %6970 = vperm.xlu0 %6969, %v6875
    %v6971 = vpop.permute.xlu0 %6970
    %v6972 = vperm.slane %v6902, %v634
    %v6973 = vperm.slane %v6905, %v636
    %v6974 = vsel %vm638, %v6973, %v6972
    %v6975 = vperm.slane %v6908, %v634
    %v6976 = vperm.slane %v6911, %v636
    %v6977 = vsel %vm638, %v6976, %v6975
    %v6978 = vperm.slane %v6914, %v634
    %v6979 = vperm.slane %v6917, %v636
    %v6980 = vsel %vm638, %v6979, %v6978
    %v6981 = vperm.slane %v6920, %v634
    %v6982 = vperm.slane %v6923, %v636
    %v6983 = vsel %vm638, %v6982, %v6981
    %v6984 = vperm.slane %v6926, %v634
    %v6985 = vperm.slane %v6929, %v636
    %v6986 = vsel %vm638, %v6985, %v6984
    %v6987 = vperm.slane %v6932, %v634
    %v6988 = vperm.slane %v6935, %v636
    %v6989 = vsel %vm638, %v6988, %v6987
    %v6990 = vperm.slane %v6938, %v634
    %v6991 = vperm.slane %v6941, %v636
    %v6992 = vsel %vm638, %v6991, %v6990
    %v6993 = vperm.slane %v6944, %v634
    %v6994 = vperm.slane %v6947, %v636
    %v6995 = vsel %vm638, %v6994, %v6993
    %v6996 = vperm.slane %v6950, %v634
    %v6997 = vperm.slane %v6953, %v636
    %v6998 = vsel %vm638, %v6997, %v6996
    %v6999 = vperm.slane %v6956, %v634
    %v7000 = vperm.slane %v6959, %v636
    %v7001 = vsel %vm638, %v7000, %v6999
    %v7002 = vperm.slane %v6962, %v634
    %v7003 = vperm.slane %v6965, %v636
    %v7004 = vsel %vm638, %v7003, %v7002
    %v7005 = vperm.slane %v6968, %v634
    %v7006 = vperm.slane %v6971, %v636
    %v7007 = vsel %vm638, %v7006, %v7005
    %v7008 = vsel %vm673, %v6977, %v6974
    %v7009 = vsel %vm675, %v6980, %v7008
    %v7010 = vsel %vm677, %v6983, %v7009
    %v7011 = vsel %vm679, %v6986, %v7010
    %v7012 = vsel %vm681, %v6989, %v7011
    %v7013 = vsel %vm683, %v6992, %v7012
    %v7014 = vsel %vm685, %v6995, %v7013
    %v7015 = vsel %vm673, %v7001, %v6998
    %v7016 = vsel %vm675, %v7004, %v7015
    %v7017 = vsel %vm677, %v7007, %v7016
    %v7020 = vsel %vm21, %v7014, 0.0
    %v7021 = vsel %vm22, %v7017, 0.0
    %v7022 = vsel %vm692, %v7020, 0.0
    %7023 = vadd.xlane.f32.xlu0 %v7022
    %v7024 = vpop.xlane.xlu0 %7023
    %v7025 = vsel %vm696, %v7021, 0.0
    %7026 = vadd.xlane.f32.xlu0 %v7025
    %v7027 = vpop.xlane.xlu0 %7026
    %v7028 = vrcp.pop %v7024
    %v7029 = vrcp.pop %v7027
    %v7030 = vmul.f32 %v7020, %v7028
    %v7031 = vmul.f32 %v7021, %v7029
    %v7032 = vpack.c.bf16 %v7031, %v7030
    %7057 = vrot.lane.b32.xlu0 %v6504, 118
    %v7058 = vpop.permute.xlu0 %7057
    %7059 = vrot.lane.b32.xlu0 %v6505, 118
    %v7060 = vpop.permute.xlu0 %7059
    %7061 = vrot.lane.b32.xlu0 %v6506, 118
    %v7062 = vpop.permute.xlu0 %7061
    %7063 = vrot.lane.b32.xlu0 %v6507, 118
    %v7064 = vpop.permute.xlu0 %7063
    %7065 = vrot.lane.b32.xlu0 %v6508, 118
    %v7066 = vpop.permute.xlu0 %7065
    %7067 = vrot.lane.b32.xlu0 %v6509, 118
    %v7068 = vpop.permute.xlu0 %7067
    %7069 = vrot.lane.b32.xlu0 %v6510, 118
    %v7070 = vpop.permute.xlu0 %7069
    %7071 = vrot.lane.b32.xlu0 %v6511, 118
    %v7072 = vpop.permute.xlu0 %7071
    %7073 = vrot.lane.b32.xlu0 %v6512, 118
    %v7074 = vpop.permute.xlu0 %7073
    %7075 = vrot.lane.b32.xlu0 %v6513, 118
    %v7076 = vpop.permute.xlu0 %7075
    %7077 = vrot.lane.b32.xlu0 %v6514, 118
    %v7078 = vpop.permute.xlu0 %7077
    %7079 = vrot.lane.b32.xlu0 %v6515, 118
    %v7080 = vpop.permute.xlu0 %7079
    %7081 = vrot.lane.b32.xlu0 %v6516, 118
    %v7082 = vpop.permute.xlu0 %7081
    %7083 = vrot.lane.b32.xlu0 %v6517, 118
    %v7084 = vpop.permute.xlu0 %7083
    %7085 = vrot.lane.b32.xlu0 %v6518, 118
    %v7086 = vpop.permute.xlu0 %7085
    %7087 = vrot.lane.b32.xlu0 %v6519, 118
    %v7088 = vpop.permute.xlu0 %7087
    %7089 = vrot.lane.b32.xlu0 %v6520, 118
    %v7090 = vpop.permute.xlu0 %7089
    %7091 = vrot.lane.b32.xlu0 %v6521, 118
    %v7092 = vpop.permute.xlu0 %7091
    %7093 = vrot.lane.b32.xlu0 %v6522, 118
    %v7094 = vpop.permute.xlu0 %7093
    %7095 = vrot.lane.b32.xlu0 %v6523, 118
    %v7096 = vpop.permute.xlu0 %7095
    %7097 = vrot.lane.b32.xlu0 %v6524, 118
    %v7098 = vpop.permute.xlu0 %7097
    %7099 = vrot.lane.b32.xlu0 %v6525, 118
    %v7100 = vpop.permute.xlu0 %7099
    %7101 = vrot.lane.b32.xlu0 %v6526, 118
    %v7102 = vpop.permute.xlu0 %7101
    %7103 = vrot.lane.b32.xlu0 %v6527, 118
    %v7104 = vpop.permute.xlu0 %7103
    %v7129 = vsel %vm6530, %v7058, 0.0
    %7130 = vadd.xlane.f32.xlu0 %v7129
    %v7131 = vpop.xlane.xlu0 %7130
    %v7132 = vsel %vm6534, %v7060, 0.0
    %7133 = vadd.xlane.f32.xlu0 %v7132
    %v7134 = vpop.xlane.xlu0 %7133
    %v7135 = vsel %vm6530, %v7062, 0.0
    %7136 = vadd.xlane.f32.xlu0 %v7135
    %v7137 = vpop.xlane.xlu0 %7136
    %v7138 = vsel %vm6534, %v7064, 0.0
    %7139 = vadd.xlane.f32.xlu0 %v7138
    %v7140 = vpop.xlane.xlu0 %7139
    %v7141 = vsel %vm6530, %v7066, 0.0
    %7142 = vadd.xlane.f32.xlu0 %v7141
    %v7143 = vpop.xlane.xlu0 %7142
    %v7144 = vsel %vm6534, %v7068, 0.0
    %7145 = vadd.xlane.f32.xlu0 %v7144
    %v7146 = vpop.xlane.xlu0 %7145
    %v7147 = vsel %vm6530, %v7070, 0.0
    %7148 = vadd.xlane.f32.xlu0 %v7147
    %v7149 = vpop.xlane.xlu0 %7148
    %v7150 = vsel %vm6534, %v7072, 0.0
    %7151 = vadd.xlane.f32.xlu0 %v7150
    %v7152 = vpop.xlane.xlu0 %7151
    %v7153 = vsel %vm6530, %v7074, 0.0
    %7154 = vadd.xlane.f32.xlu0 %v7153
    %v7155 = vpop.xlane.xlu0 %7154
    %v7156 = vsel %vm6534, %v7076, 0.0
    %7157 = vadd.xlane.f32.xlu0 %v7156
    %v7158 = vpop.xlane.xlu0 %7157
    %v7159 = vsel %vm6530, %v7078, 0.0
    %7160 = vadd.xlane.f32.xlu0 %v7159
    %v7161 = vpop.xlane.xlu0 %7160
    %v7162 = vsel %vm6534, %v7080, 0.0
    %7163 = vadd.xlane.f32.xlu0 %v7162
    %v7164 = vpop.xlane.xlu0 %7163
    %v7165 = vsel %vm6530, %v7082, 0.0
    %7166 = vadd.xlane.f32.xlu0 %v7165
    %v7167 = vpop.xlane.xlu0 %7166
    %v7168 = vsel %vm6534, %v7084, 0.0
    %7169 = vadd.xlane.f32.xlu0 %v7168
    %v7170 = vpop.xlane.xlu0 %7169
    %v7171 = vsel %vm6530, %v7086, 0.0
    %7172 = vadd.xlane.f32.xlu0 %v7171
    %v7173 = vpop.xlane.xlu0 %7172
    %v7174 = vsel %vm6534, %v7088, 0.0
    %7175 = vadd.xlane.f32.xlu0 %v7174
    %v7176 = vpop.xlane.xlu0 %7175
    %v7177 = vsel %vm6530, %v7090, 0.0
    %7178 = vadd.xlane.f32.xlu0 %v7177
    %v7179 = vpop.xlane.xlu0 %7178
    %v7180 = vsel %vm6534, %v7092, 0.0
    %7181 = vadd.xlane.f32.xlu0 %v7180
    %v7182 = vpop.xlane.xlu0 %7181
    %v7183 = vsel %vm6530, %v7094, 0.0
    %7184 = vadd.xlane.f32.xlu0 %v7183
    %v7185 = vpop.xlane.xlu0 %7184
    %v7186 = vsel %vm6534, %v7096, 0.0
    %7187 = vadd.xlane.f32.xlu0 %v7186
    %v7188 = vpop.xlane.xlu0 %7187
    %v7189 = vsel %vm6530, %v7098, 0.0
    %7190 = vadd.xlane.f32.xlu0 %v7189
    %v7191 = vpop.xlane.xlu0 %7190
    %v7192 = vsel %vm6534, %v7100, 0.0
    %7193 = vadd.xlane.f32.xlu0 %v7192
    %v7194 = vpop.xlane.xlu0 %7193
    %v7195 = vsel %vm6530, %v7102, 0.0
    %7196 = vadd.xlane.f32.xlu0 %v7195
    %v7197 = vpop.xlane.xlu0 %7196
    %v7198 = vsel %vm6534, %v7104, 0.0
    %7199 = vadd.xlane.f32.xlu0 %v7198
    %v7200 = vpop.xlane.xlu0 %7199
    %v7201 = vadd.f32 %v7131, %v339
    %v7202 = vadd.f32 %v7134, %v345
    %v7203 = vadd.f32 %v7137, %v352
    %v7204 = vadd.f32 %v7140, %v358
    %v7205 = vadd.f32 %v7143, %v365
    %v7206 = vadd.f32 %v7146, %v371
    %v7207 = vadd.f32 %v7149, %v378
    %v7208 = vadd.f32 %v7152, %v384
    %v7209 = vadd.f32 %v7155, %v391
    %v7210 = vadd.f32 %v7158, %v397
    %v7211 = vadd.f32 %v7161, %v404
    %v7212 = vadd.f32 %v7164, %v410
    %v7213 = vadd.f32 %v7167, %v417
    %v7214 = vadd.f32 %v7170, %v423
    %v7215 = vadd.f32 %v7173, %v430
    %v7216 = vadd.f32 %v7176, %v436
    %v7217 = vadd.f32 %v7179, %v443
    %v7218 = vadd.f32 %v7182, %v449
    %v7219 = vadd.f32 %v7185, %v456
    %v7220 = vadd.f32 %v7188, %v462
    %v7221 = vadd.f32 %v7191, %v469
    %v7222 = vadd.f32 %v7194, %v475
    %v7223 = vadd.f32 %v7197, %v482
    %v7224 = vadd.f32 %v7200, %v488
    %7249 = vset.pattern.permute.xlu0 0
    %7250 = vperm.xlu0 %7249, %v7201
    %v7251 = vpop.permute.xlu0 %7250
    %7252 = vset.pattern.permute.xlu0 0
    %7253 = vperm.xlu0 %7252, %v7202
    %v7254 = vpop.permute.xlu0 %7253
    %7255 = vset.pattern.permute.xlu0 0
    %7256 = vperm.xlu0 %7255, %v7203
    %v7257 = vpop.permute.xlu0 %7256
    %7258 = vset.pattern.permute.xlu0 0
    %7259 = vperm.xlu0 %7258, %v7204
    %v7260 = vpop.permute.xlu0 %7259
    %7261 = vset.pattern.permute.xlu0 0
    %7262 = vperm.xlu0 %7261, %v7205
    %v7263 = vpop.permute.xlu0 %7262
    %7264 = vset.pattern.permute.xlu0 0
    %7265 = vperm.xlu0 %7264, %v7206
    %v7266 = vpop.permute.xlu0 %7265
    %7267 = vset.pattern.permute.xlu0 0
    %7268 = vperm.xlu0 %7267, %v7207
    %v7269 = vpop.permute.xlu0 %7268
    %7270 = vset.pattern.permute.xlu0 0
    %7271 = vperm.xlu0 %7270, %v7208
    %v7272 = vpop.permute.xlu0 %7271
    %7273 = vset.pattern.permute.xlu0 0
    %7274 = vperm.xlu0 %7273, %v7209
    %v7275 = vpop.permute.xlu0 %7274
    %7276 = vset.pattern.permute.xlu0 0
    %7277 = vperm.xlu0 %7276, %v7210
    %v7278 = vpop.permute.xlu0 %7277
    %7279 = vset.pattern.permute.xlu0 0
    %7280 = vperm.xlu0 %7279, %v7211
    %v7281 = vpop.permute.xlu0 %7280
    %7282 = vset.pattern.permute.xlu0 0
    %7283 = vperm.xlu0 %7282, %v7212
    %v7284 = vpop.permute.xlu0 %7283
    %7285 = vset.pattern.permute.xlu0 0
    %7286 = vperm.xlu0 %7285, %v7213
    %v7287 = vpop.permute.xlu0 %7286
    %7288 = vset.pattern.permute.xlu0 0
    %7289 = vperm.xlu0 %7288, %v7214
    %v7290 = vpop.permute.xlu0 %7289
    %7291 = vset.pattern.permute.xlu0 0
    %7292 = vperm.xlu0 %7291, %v7215
    %v7293 = vpop.permute.xlu0 %7292
    %7294 = vset.pattern.permute.xlu0 0
    %7295 = vperm.xlu0 %7294, %v7216
    %v7296 = vpop.permute.xlu0 %7295
    %7297 = vset.pattern.permute.xlu0 0
    %7298 = vperm.xlu0 %7297, %v7217
    %v7299 = vpop.permute.xlu0 %7298
    %7300 = vset.pattern.permute.xlu0 0
    %7301 = vperm.xlu0 %7300, %v7218
    %v7302 = vpop.permute.xlu0 %7301
    %7303 = vset.pattern.permute.xlu0 0
    %7304 = vperm.xlu0 %7303, %v7219
    %v7305 = vpop.permute.xlu0 %7304
    %7306 = vset.pattern.permute.xlu0 0
    %7307 = vperm.xlu0 %7306, %v7220
    %v7308 = vpop.permute.xlu0 %7307
    %7309 = vset.pattern.permute.xlu0 0
    %7310 = vperm.xlu0 %7309, %v7221
    %v7311 = vpop.permute.xlu0 %7310
    %7312 = vset.pattern.permute.xlu0 0
    %7313 = vperm.xlu0 %7312, %v7222
    %v7314 = vpop.permute.xlu0 %7313
    %7315 = vset.pattern.permute.xlu0 0
    %7316 = vperm.xlu0 %7315, %v7223
    %v7317 = vpop.permute.xlu0 %7316
    %7318 = vset.pattern.permute.xlu0 0
    %7319 = vperm.xlu0 %7318, %v7224
    %v7320 = vpop.permute.xlu0 %7319
    %v7321 = vperm.slane %v7251, %v634
    %v7322 = vperm.slane %v7254, %v636
    %v7323 = vsel %vm638, %v7322, %v7321
    %v7324 = vperm.slane %v7257, %v634
    %v7325 = vperm.slane %v7260, %v636
    %v7326 = vsel %vm638, %v7325, %v7324
    %v7327 = vperm.slane %v7263, %v634
    %v7328 = vperm.slane %v7266, %v636
    %v7329 = vsel %vm638, %v7328, %v7327
    %v7330 = vperm.slane %v7269, %v634
    %v7331 = vperm.slane %v7272, %v636
    %v7332 = vsel %vm638, %v7331, %v7330
    %v7333 = vperm.slane %v7275, %v634
    %v7334 = vperm.slane %v7278, %v636
    %v7335 = vsel %vm638, %v7334, %v7333
    %v7336 = vperm.slane %v7281, %v634
    %v7337 = vperm.slane %v7284, %v636
    %v7338 = vsel %vm638, %v7337, %v7336
    %v7339 = vperm.slane %v7287, %v634
    %v7340 = vperm.slane %v7290, %v636
    %v7341 = vsel %vm638, %v7340, %v7339
    %v7342 = vperm.slane %v7293, %v634
    %v7343 = vperm.slane %v7296, %v636
    %v7344 = vsel %vm638, %v7343, %v7342
    %v7345 = vperm.slane %v7299, %v634
    %v7346 = vperm.slane %v7302, %v636
    %v7347 = vsel %vm638, %v7346, %v7345
    %v7348 = vperm.slane %v7305, %v634
    %v7349 = vperm.slane %v7308, %v636
    %v7350 = vsel %vm638, %v7349, %v7348
    %v7351 = vperm.slane %v7311, %v634
    %v7352 = vperm.slane %v7314, %v636
    %v7353 = vsel %vm638, %v7352, %v7351
    %v7354 = vperm.slane %v7317, %v634
    %v7355 = vperm.slane %v7320, %v636
    %v7356 = vsel %vm638, %v7355, %v7354
    %v7357 = vsel %vm673, %v7326, %v7323
    %v7358 = vsel %vm675, %v7329, %v7357
    %v7359 = vsel %vm677, %v7332, %v7358
    %v7360 = vsel %vm679, %v7335, %v7359
    %v7361 = vsel %vm681, %v7338, %v7360
    %v7362 = vsel %vm683, %v7341, %v7361
    %v7363 = vsel %vm685, %v7344, %v7362
    %v7364 = vsel %vm673, %v7350, %v7347
    %v7365 = vsel %vm675, %v7353, %v7364
    %v7366 = vsel %vm677, %v7356, %v7365
    %v7369 = vsel %vm692, %v7363, -inf
    %7370 = vmax.xlane.f32.xlu0 %v7369
    %v7371 = vpop.xlane.xlu0 %7370
    %v7372 = vsel %vm696, %v7366, -inf
    %7373 = vmax.xlane.f32.xlu0 %v7372
    %v7374 = vpop.xlane.xlu0 %7373
    %v7377 = vperm.slane %v7371, 0
    %v7378 = vperm.slane %v7371, 1
    %v7379 = vperm.slane %v7371, 2
    %v7380 = vperm.slane %v7371, 3
    %v7381 = vperm.slane %v7371, 4
    %v7382 = vperm.slane %v7371, 5
    %v7383 = vperm.slane %v7371, 6
    %v7384 = vperm.slane %v7371, 7
    %v7385 = vperm.slane %v7374, 0
    %v7386 = vperm.slane %v7374, 1
    %v7387 = vperm.slane %v7374, 2
    %v7388 = vperm.slane %v7374, 3
    %v7401 = vsub.f32 %v7201, %v7377
    %v7402 = vsub.f32 %v7202, %v7377
    %v7403 = vsub.f32 %v7203, %v7378
    %v7404 = vsub.f32 %v7204, %v7378
    %v7405 = vsub.f32 %v7205, %v7379
    %v7406 = vsub.f32 %v7206, %v7379
    %v7407 = vsub.f32 %v7207, %v7380
    %v7408 = vsub.f32 %v7208, %v7380
    %v7409 = vsub.f32 %v7209, %v7381
    %v7410 = vsub.f32 %v7210, %v7381
    %v7411 = vsub.f32 %v7211, %v7382
    %v7412 = vsub.f32 %v7212, %v7382
    %v7413 = vsub.f32 %v7213, %v7383
    %v7414 = vsub.f32 %v7214, %v7383
    %v7415 = vsub.f32 %v7215, %v7384
    %v7416 = vsub.f32 %v7216, %v7384
    %v7417 = vsub.f32 %v7217, %v7385
    %v7418 = vsub.f32 %v7218, %v7385
    %v7419 = vsub.f32 %v7219, %v7386
    %v7420 = vsub.f32 %v7220, %v7386
    %v7421 = vsub.f32 %v7221, %v7387
    %v7422 = vsub.f32 %v7222, %v7387
    %v7423 = vsub.f32 %v7223, %v7388
    %v7424 = vsub.f32 %v7224, %v7388
    %v7425 = vmul.f32 %v7401, 1.442695
    %v7426 = vpow.pop %v7425
    %v7427 = vmul.f32 %v7402, 1.442695
    %v7428 = vpow.pop %v7427
    %v7429 = vmul.f32 %v7403, 1.442695
    %v7430 = vpow.pop %v7429
    %v7431 = vmul.f32 %v7404, 1.442695
    %v7432 = vpow.pop %v7431
    %v7433 = vmul.f32 %v7405, 1.442695
    %v7434 = vpow.pop %v7433
    %v7435 = vmul.f32 %v7406, 1.442695
    %v7436 = vpow.pop %v7435
    %v7437 = vmul.f32 %v7407, 1.442695
    %v7438 = vpow.pop %v7437
    %v7439 = vmul.f32 %v7408, 1.442695
    %v7440 = vpow.pop %v7439
    %v7441 = vmul.f32 %v7409, 1.442695
    %v7442 = vpow.pop %v7441
    %v7443 = vmul.f32 %v7410, 1.442695
    %v7444 = vpow.pop %v7443
    %v7445 = vmul.f32 %v7411, 1.442695
    %v7446 = vpow.pop %v7445
    %v7447 = vmul.f32 %v7412, 1.442695
    %v7448 = vpow.pop %v7447
    %v7449 = vmul.f32 %v7413, 1.442695
    %v7450 = vpow.pop %v7449
    %v7451 = vmul.f32 %v7414, 1.442695
    %v7452 = vpow.pop %v7451
    %v7453 = vmul.f32 %v7415, 1.442695
    %v7454 = vpow.pop %v7453
    %v7455 = vmul.f32 %v7416, 1.442695
    %v7456 = vpow.pop %v7455
    %v7457 = vmul.f32 %v7417, 1.442695
    %v7458 = vpow.pop %v7457
    %v7459 = vmul.f32 %v7418, 1.442695
    %v7460 = vpow.pop %v7459
    %v7461 = vmul.f32 %v7419, 1.442695
    %v7462 = vpow.pop %v7461
    %v7463 = vmul.f32 %v7420, 1.442695
    %v7464 = vpow.pop %v7463
    %v7465 = vmul.f32 %v7421, 1.442695
    %v7466 = vpow.pop %v7465
    %v7467 = vmul.f32 %v7422, 1.442695
    %v7468 = vpow.pop %v7467
    %v7469 = vmul.f32 %v7423, 1.442695
    %v7470 = vpow.pop %v7469
    %v7471 = vmul.f32 %v7424, 1.442695
    %v7472 = vpow.pop %v7471
    %7497 = vset.pattern.permute.xlu0 0
    %7498 = vperm.xlu0 %7497, %v7426
    %v7499 = vpop.permute.xlu0 %7498
    %7500 = vset.pattern.permute.xlu0 0
    %7501 = vperm.xlu0 %7500, %v7428
    %v7502 = vpop.permute.xlu0 %7501
    %7503 = vset.pattern.permute.xlu0 0
    %7504 = vperm.xlu0 %7503, %v7430
    %v7505 = vpop.permute.xlu0 %7504
    %7506 = vset.pattern.permute.xlu0 0
    %7507 = vperm.xlu0 %7506, %v7432
    %v7508 = vpop.permute.xlu0 %7507
    %7509 = vset.pattern.permute.xlu0 0
    %7510 = vperm.xlu0 %7509, %v7434
    %v7511 = vpop.permute.xlu0 %7510
    %7512 = vset.pattern.permute.xlu0 0
    %7513 = vperm.xlu0 %7512, %v7436
    %v7514 = vpop.permute.xlu0 %7513
    %7515 = vset.pattern.permute.xlu0 0
    %7516 = vperm.xlu0 %7515, %v7438
    %v7517 = vpop.permute.xlu0 %7516
    %7518 = vset.pattern.permute.xlu0 0
    %7519 = vperm.xlu0 %7518, %v7440
    %v7520 = vpop.permute.xlu0 %7519
    %7521 = vset.pattern.permute.xlu0 0
    %7522 = vperm.xlu0 %7521, %v7442
    %v7523 = vpop.permute.xlu0 %7522
    %7524 = vset.pattern.permute.xlu0 0
    %7525 = vperm.xlu0 %7524, %v7444
    %v7526 = vpop.permute.xlu0 %7525
    %7527 = vset.pattern.permute.xlu0 0
    %7528 = vperm.xlu0 %7527, %v7446
    %v7529 = vpop.permute.xlu0 %7528
    %7530 = vset.pattern.permute.xlu0 0
    %7531 = vperm.xlu0 %7530, %v7448
    %v7532 = vpop.permute.xlu0 %7531
    %7533 = vset.pattern.permute.xlu0 0
    %7534 = vperm.xlu0 %7533, %v7450
    %v7535 = vpop.permute.xlu0 %7534
    %7536 = vset.pattern.permute.xlu0 0
    %7537 = vperm.xlu0 %7536, %v7452
    %v7538 = vpop.permute.xlu0 %7537
    %7539 = vset.pattern.permute.xlu0 0
    %7540 = vperm.xlu0 %7539, %v7454
    %v7541 = vpop.permute.xlu0 %7540
    %7542 = vset.pattern.permute.xlu0 0
    %7543 = vperm.xlu0 %7542, %v7456
    %v7544 = vpop.permute.xlu0 %7543
    %7545 = vset.pattern.permute.xlu0 0
    %7546 = vperm.xlu0 %7545, %v7458
    %v7547 = vpop.permute.xlu0 %7546
    %7548 = vset.pattern.permute.xlu0 0
    %7549 = vperm.xlu0 %7548, %v7460
    %v7550 = vpop.permute.xlu0 %7549
    %7551 = vset.pattern.permute.xlu0 0
    %7552 = vperm.xlu0 %7551, %v7462
    %v7553 = vpop.permute.xlu0 %7552
    %7554 = vset.pattern.permute.xlu0 0
    %7555 = vperm.xlu0 %7554, %v7464
    %v7556 = vpop.permute.xlu0 %7555
    %7557 = vset.pattern.permute.xlu0 0
    %7558 = vperm.xlu0 %7557, %v7466
    %v7559 = vpop.permute.xlu0 %7558
    %7560 = vset.pattern.permute.xlu0 0
    %7561 = vperm.xlu0 %7560, %v7468
    %v7562 = vpop.permute.xlu0 %7561
    %7563 = vset.pattern.permute.xlu0 0
    %7564 = vperm.xlu0 %7563, %v7470
    %v7565 = vpop.permute.xlu0 %7564
    %7566 = vset.pattern.permute.xlu0 0
    %7567 = vperm.xlu0 %7566, %v7472
    %v7568 = vpop.permute.xlu0 %7567
    %v7569 = vperm.slane %v7499, %v634
    %v7570 = vperm.slane %v7502, %v636
    %v7571 = vsel %vm638, %v7570, %v7569
    %v7572 = vperm.slane %v7505, %v634
    %v7573 = vperm.slane %v7508, %v636
    %v7574 = vsel %vm638, %v7573, %v7572
    %v7575 = vperm.slane %v7511, %v634
    %v7576 = vperm.slane %v7514, %v636
    %v7577 = vsel %vm638, %v7576, %v7575
    %v7578 = vperm.slane %v7517, %v634
    %v7579 = vperm.slane %v7520, %v636
    %v7580 = vsel %vm638, %v7579, %v7578
    %v7581 = vperm.slane %v7523, %v634
    %v7582 = vperm.slane %v7526, %v636
    %v7583 = vsel %vm638, %v7582, %v7581
    %v7584 = vperm.slane %v7529, %v634
    %v7585 = vperm.slane %v7532, %v636
    %v7586 = vsel %vm638, %v7585, %v7584
    %v7587 = vperm.slane %v7535, %v634
    %v7588 = vperm.slane %v7538, %v636
    %v7589 = vsel %vm638, %v7588, %v7587
    %v7590 = vperm.slane %v7541, %v634
    %v7591 = vperm.slane %v7544, %v636
    %v7592 = vsel %vm638, %v7591, %v7590
    %v7593 = vperm.slane %v7547, %v634
    %v7594 = vperm.slane %v7550, %v636
    %v7595 = vsel %vm638, %v7594, %v7593
    %v7596 = vperm.slane %v7553, %v634
    %v7597 = vperm.slane %v7556, %v636
    %v7598 = vsel %vm638, %v7597, %v7596
    %v7599 = vperm.slane %v7559, %v634
    %v7600 = vperm.slane %v7562, %v636
    %v7601 = vsel %vm638, %v7600, %v7599
    %v7602 = vperm.slane %v7565, %v634
    %v7603 = vperm.slane %v7568, %v636
    %v7604 = vsel %vm638, %v7603, %v7602
    %v7605 = vsel %vm673, %v7574, %v7571
    %v7606 = vsel %vm675, %v7577, %v7605
    %v7607 = vsel %vm677, %v7580, %v7606
    %v7608 = vsel %vm679, %v7583, %v7607
    %v7609 = vsel %vm681, %v7586, %v7608
    %v7610 = vsel %vm683, %v7589, %v7609
    %v7611 = vsel %vm685, %v7592, %v7610
    %v7612 = vsel %vm673, %v7598, %v7595
    %v7613 = vsel %vm675, %v7601, %v7612
    %v7614 = vsel %vm677, %v7604, %v7613
    %v7617 = vsel %vm21, %v7611, 0.0
    %v7618 = vsel %vm22, %v7614, 0.0
    %v7619 = vsel %vm692, %v7617, 0.0
    %7620 = vadd.xlane.f32.xlu0 %v7619
    %v7621 = vpop.xlane.xlu0 %7620
    %v7622 = vsel %vm696, %v7618, 0.0
    %7623 = vadd.xlane.f32.xlu0 %v7622
    %v7624 = vpop.xlane.xlu0 %7623
    %v7625 = vrcp.pop %v7621
    %v7626 = vrcp.pop %v7624
    %v7627 = vmul.f32 %v7617, %v7625
    %v7628 = vmul.f32 %v7618, %v7626
    %v7629 = vpack.c.bf16 %v7628, %v7627
    %v7632 = vunpack.c.l.b16 %v6528
    %v7633 = vunpack.c.l.b16 %v6529
    %v7634 = vpack.c.b16 %v7633, %v7632
    %7635 = vrot.lane.b32.xlu0 %v7634, 118
    %v7636 = vpop.permute.xlu0 %7635
    %v7638 = vsel %vm692, %v7629, 0
    %v7641 = vsel %vm963, %v7636, 0
    %7643 = vmatpush.bf16.msra.mxu0 0
    %7644 = vmatpush.bf16.msra.mxu0 0
    %7645 = vmatpush.bf16.msra.mxu0 0
    %7646 = vmatpush.bf16.msra.mxu0 0
    %7647 = vmatpush.bf16.msra.mxu0 0
    %7648 = vmatpush.bf16.msra.mxu0 0
    %7649 = vmatpush.bf16.msra.mxu0 0
    %7650 = vmatpush.bf16.msra.mxu0 %v7641
    %7651 = vmatmul.bf16.gmra.mxu0 %v7638
    %v7652 = vpop.f32.mrf.mxu0
    %v7653 = vadd.f32 0.0, %v7652
    %v7654 = vpop.f32.mrf.mxu0
    %v7655 = vadd.f32 0.0, %v7654
    %7656 = vdwg.mxu0
    %7657 = vrot.lane.b32.xlu0 %v6504, 108
    %v7658 = vpop.permute.xlu0 %7657
    %7659 = vrot.lane.b32.xlu0 %v6505, 108
    %v7660 = vpop.permute.xlu0 %7659
    %7661 = vrot.lane.b32.xlu0 %v6506, 108
    %v7662 = vpop.permute.xlu0 %7661
    %7663 = vrot.lane.b32.xlu0 %v6507, 108
    %v7664 = vpop.permute.xlu0 %7663
    %7665 = vrot.lane.b32.xlu0 %v6508, 108
    %v7666 = vpop.permute.xlu0 %7665
    %7667 = vrot.lane.b32.xlu0 %v6509, 108
    %v7668 = vpop.permute.xlu0 %7667
    %7669 = vrot.lane.b32.xlu0 %v6510, 108
    %v7670 = vpop.permute.xlu0 %7669
    %7671 = vrot.lane.b32.xlu0 %v6511, 108
    %v7672 = vpop.permute.xlu0 %7671
    %7673 = vrot.lane.b32.xlu0 %v6512, 108
    %v7674 = vpop.permute.xlu0 %7673
    %7675 = vrot.lane.b32.xlu0 %v6513, 108
    %v7676 = vpop.permute.xlu0 %7675
    %7677 = vrot.lane.b32.xlu0 %v6514, 108
    %v7678 = vpop.permute.xlu0 %7677
    %7679 = vrot.lane.b32.xlu0 %v6515, 108
    %v7680 = vpop.permute.xlu0 %7679
    %7681 = vrot.lane.b32.xlu0 %v6516, 108
    %v7682 = vpop.permute.xlu0 %7681
    %7683 = vrot.lane.b32.xlu0 %v6517, 108
    %v7684 = vpop.permute.xlu0 %7683
    %7685 = vrot.lane.b32.xlu0 %v6518, 108
    %v7686 = vpop.permute.xlu0 %7685
    %7687 = vrot.lane.b32.xlu0 %v6519, 108
    %v7688 = vpop.permute.xlu0 %7687
    %7689 = vrot.lane.b32.xlu0 %v6520, 108
    %v7690 = vpop.permute.xlu0 %7689
    %7691 = vrot.lane.b32.xlu0 %v6521, 108
    %v7692 = vpop.permute.xlu0 %7691
    %7693 = vrot.lane.b32.xlu0 %v6522, 108
    %v7694 = vpop.permute.xlu0 %7693
    %7695 = vrot.lane.b32.xlu0 %v6523, 108
    %v7696 = vpop.permute.xlu0 %7695
    %7697 = vrot.lane.b32.xlu0 %v6524, 108
    %v7698 = vpop.permute.xlu0 %7697
    %7699 = vrot.lane.b32.xlu0 %v6525, 108
    %v7700 = vpop.permute.xlu0 %7699
    %7701 = vrot.lane.b32.xlu0 %v6526, 108
    %v7702 = vpop.permute.xlu0 %7701
    %7703 = vrot.lane.b32.xlu0 %v6527, 108
    %v7704 = vpop.permute.xlu0 %7703
    %v7729 = vsel %vm6530, %v7658, 0.0
    %7730 = vadd.xlane.f32.xlu0 %v7729
    %v7731 = vpop.xlane.xlu0 %7730
    %v7732 = vsel %vm6534, %v7660, 0.0
    %7733 = vadd.xlane.f32.xlu0 %v7732
    %v7734 = vpop.xlane.xlu0 %7733
    %v7735 = vsel %vm6530, %v7662, 0.0
    %7736 = vadd.xlane.f32.xlu0 %v7735
    %v7737 = vpop.xlane.xlu0 %7736
    %v7738 = vsel %vm6534, %v7664, 0.0
    %7739 = vadd.xlane.f32.xlu0 %v7738
    %v7740 = vpop.xlane.xlu0 %7739
    %v7741 = vsel %vm6530, %v7666, 0.0
    %7742 = vadd.xlane.f32.xlu0 %v7741
    %v7743 = vpop.xlane.xlu0 %7742
    %v7744 = vsel %vm6534, %v7668, 0.0
    %7745 = vadd.xlane.f32.xlu0 %v7744
    %v7746 = vpop.xlane.xlu0 %7745
    %v7747 = vsel %vm6530, %v7670, 0.0
    %7748 = vadd.xlane.f32.xlu0 %v7747
    %v7749 = vpop.xlane.xlu0 %7748
    %v7750 = vsel %vm6534, %v7672, 0.0
    %7751 = vadd.xlane.f32.xlu0 %v7750
    %v7752 = vpop.xlane.xlu0 %7751
    %v7753 = vsel %vm6530, %v7674, 0.0
    %7754 = vadd.xlane.f32.xlu0 %v7753
    %v7755 = vpop.xlane.xlu0 %7754
    %v7756 = vsel %vm6534, %v7676, 0.0
    %7757 = vadd.xlane.f32.xlu0 %v7756
    %v7758 = vpop.xlane.xlu0 %7757
    %v7759 = vsel %vm6530, %v7678, 0.0
    %7760 = vadd.xlane.f32.xlu0 %v7759
    %v7761 = vpop.xlane.xlu0 %7760
    %v7762 = vsel %vm6534, %v7680, 0.0
    %7763 = vadd.xlane.f32.xlu0 %v7762
    %v7764 = vpop.xlane.xlu0 %7763
    %v7765 = vsel %vm6530, %v7682, 0.0
    %7766 = vadd.xlane.f32.xlu0 %v7765
    %v7767 = vpop.xlane.xlu0 %7766
    %v7768 = vsel %vm6534, %v7684, 0.0
    %7769 = vadd.xlane.f32.xlu0 %v7768
    %v7770 = vpop.xlane.xlu0 %7769
    %v7771 = vsel %vm6530, %v7686, 0.0
    %7772 = vadd.xlane.f32.xlu0 %v7771
    %v7773 = vpop.xlane.xlu0 %7772
    %v7774 = vsel %vm6534, %v7688, 0.0
    %7775 = vadd.xlane.f32.xlu0 %v7774
    %v7776 = vpop.xlane.xlu0 %7775
    %v7777 = vsel %vm6530, %v7690, 0.0
    %7778 = vadd.xlane.f32.xlu0 %v7777
    %v7779 = vpop.xlane.xlu0 %7778
    %v7780 = vsel %vm6534, %v7692, 0.0
    %7781 = vadd.xlane.f32.xlu0 %v7780
    %v7782 = vpop.xlane.xlu0 %7781
    %v7783 = vsel %vm6530, %v7694, 0.0
    %7784 = vadd.xlane.f32.xlu0 %v7783
    %v7785 = vpop.xlane.xlu0 %7784
    %v7786 = vsel %vm6534, %v7696, 0.0
    %7787 = vadd.xlane.f32.xlu0 %v7786
    %v7788 = vpop.xlane.xlu0 %7787
    %v7789 = vsel %vm6530, %v7698, 0.0
    %7790 = vadd.xlane.f32.xlu0 %v7789
    %v7791 = vpop.xlane.xlu0 %7790
    %v7792 = vsel %vm6534, %v7700, 0.0
    %7793 = vadd.xlane.f32.xlu0 %v7792
    %v7794 = vpop.xlane.xlu0 %7793
    %v7795 = vsel %vm6530, %v7702, 0.0
    %7796 = vadd.xlane.f32.xlu0 %v7795
    %v7797 = vpop.xlane.xlu0 %7796
    %v7798 = vsel %vm6534, %v7704, 0.0
    %7799 = vadd.xlane.f32.xlu0 %v7798
    %v7800 = vpop.xlane.xlu0 %7799
    %v7801 = vadd.f32 %v7731, %v339
    %v7802 = vadd.f32 %v7734, %v345
    %v7803 = vadd.f32 %v7737, %v352
    %v7804 = vadd.f32 %v7740, %v358
    %v7805 = vadd.f32 %v7743, %v365
    %v7806 = vadd.f32 %v7746, %v371
    %v7807 = vadd.f32 %v7749, %v378
    %v7808 = vadd.f32 %v7752, %v384
    %v7809 = vadd.f32 %v7755, %v391
    %v7810 = vadd.f32 %v7758, %v397
    %v7811 = vadd.f32 %v7761, %v404
    %v7812 = vadd.f32 %v7764, %v410
    %v7813 = vadd.f32 %v7767, %v417
    %v7814 = vadd.f32 %v7770, %v423
    %v7815 = vadd.f32 %v7773, %v430
    %v7816 = vadd.f32 %v7776, %v436
    %v7817 = vadd.f32 %v7779, %v443
    %v7818 = vadd.f32 %v7782, %v449
    %v7819 = vadd.f32 %v7785, %v456
    %v7820 = vadd.f32 %v7788, %v462
    %v7821 = vadd.f32 %v7791, %v469
    %v7822 = vadd.f32 %v7794, %v475
    %v7823 = vadd.f32 %v7797, %v482
    %v7824 = vadd.f32 %v7800, %v488
    %7849 = vset.pattern.permute.xlu0 0
    %7850 = vperm.xlu0 %7849, %v7801
    %v7851 = vpop.permute.xlu0 %7850
    %7852 = vset.pattern.permute.xlu0 0
    %7853 = vperm.xlu0 %7852, %v7802
    %v7854 = vpop.permute.xlu0 %7853
    %7855 = vset.pattern.permute.xlu0 0
    %7856 = vperm.xlu0 %7855, %v7803
    %v7857 = vpop.permute.xlu0 %7856
    %7858 = vset.pattern.permute.xlu0 0
    %7859 = vperm.xlu0 %7858, %v7804
    %v7860 = vpop.permute.xlu0 %7859
    %7861 = vset.pattern.permute.xlu0 0
    %7862 = vperm.xlu0 %7861, %v7805
    %v7863 = vpop.permute.xlu0 %7862
    %7864 = vset.pattern.permute.xlu0 0
    %7865 = vperm.xlu0 %7864, %v7806
    %v7866 = vpop.permute.xlu0 %7865
    %7867 = vset.pattern.permute.xlu0 0
    %7868 = vperm.xlu0 %7867, %v7807
    %v7869 = vpop.permute.xlu0 %7868
    %7870 = vset.pattern.permute.xlu0 0
    %7871 = vperm.xlu0 %7870, %v7808
    %v7872 = vpop.permute.xlu0 %7871
    %7873 = vset.pattern.permute.xlu0 0
    %7874 = vperm.xlu0 %7873, %v7809
    %v7875 = vpop.permute.xlu0 %7874
    %7876 = vset.pattern.permute.xlu0 0
    %7877 = vperm.xlu0 %7876, %v7810
    %v7878 = vpop.permute.xlu0 %7877
    %7879 = vset.pattern.permute.xlu0 0
    %7880 = vperm.xlu0 %7879, %v7811
    %v7881 = vpop.permute.xlu0 %7880
    %7882 = vset.pattern.permute.xlu0 0
    %7883 = vperm.xlu0 %7882, %v7812
    %v7884 = vpop.permute.xlu0 %7883
    %7885 = vset.pattern.permute.xlu0 0
    %7886 = vperm.xlu0 %7885, %v7813
    %v7887 = vpop.permute.xlu0 %7886
    %7888 = vset.pattern.permute.xlu0 0
    %7889 = vperm.xlu0 %7888, %v7814
    %v7890 = vpop.permute.xlu0 %7889
    %7891 = vset.pattern.permute.xlu0 0
    %7892 = vperm.xlu0 %7891, %v7815
    %v7893 = vpop.permute.xlu0 %7892
    %7894 = vset.pattern.permute.xlu0 0
    %7895 = vperm.xlu0 %7894, %v7816
    %v7896 = vpop.permute.xlu0 %7895
    %7897 = vset.pattern.permute.xlu0 0
    %7898 = vperm.xlu0 %7897, %v7817
    %v7899 = vpop.permute.xlu0 %7898
    %7900 = vset.pattern.permute.xlu0 0
    %7901 = vperm.xlu0 %7900, %v7818
    %v7902 = vpop.permute.xlu0 %7901
    %7903 = vset.pattern.permute.xlu0 0
    %7904 = vperm.xlu0 %7903, %v7819
    %v7905 = vpop.permute.xlu0 %7904
    %7906 = vset.pattern.permute.xlu0 0
    %7907 = vperm.xlu0 %7906, %v7820
    %v7908 = vpop.permute.xlu0 %7907
    %7909 = vset.pattern.permute.xlu0 0
    %7910 = vperm.xlu0 %7909, %v7821
    %v7911 = vpop.permute.xlu0 %7910
    %7912 = vset.pattern.permute.xlu0 0
    %7913 = vperm.xlu0 %7912, %v7822
    %v7914 = vpop.permute.xlu0 %7913
    %7915 = vset.pattern.permute.xlu0 0
    %7916 = vperm.xlu0 %7915, %v7823
    %v7917 = vpop.permute.xlu0 %7916
    %7918 = vset.pattern.permute.xlu0 0
    %7919 = vperm.xlu0 %7918, %v7824
    %v7920 = vpop.permute.xlu0 %7919
    %v7921 = vperm.slane %v7851, %v634
    %v7922 = vperm.slane %v7854, %v636
    %v7923 = vsel %vm638, %v7922, %v7921
    %v7924 = vperm.slane %v7857, %v634
    %v7925 = vperm.slane %v7860, %v636
    %v7926 = vsel %vm638, %v7925, %v7924
    %v7927 = vperm.slane %v7863, %v634
    %v7928 = vperm.slane %v7866, %v636
    %v7929 = vsel %vm638, %v7928, %v7927
    %v7930 = vperm.slane %v7869, %v634
    %v7931 = vperm.slane %v7872, %v636
    %v7932 = vsel %vm638, %v7931, %v7930
    %v7933 = vperm.slane %v7875, %v634
    %v7934 = vperm.slane %v7878, %v636
    %v7935 = vsel %vm638, %v7934, %v7933
    %v7936 = vperm.slane %v7881, %v634
    %v7937 = vperm.slane %v7884, %v636
    %v7938 = vsel %vm638, %v7937, %v7936
    %v7939 = vperm.slane %v7887, %v634
    %v7940 = vperm.slane %v7890, %v636
    %v7941 = vsel %vm638, %v7940, %v7939
    %v7942 = vperm.slane %v7893, %v634
    %v7943 = vperm.slane %v7896, %v636
    %v7944 = vsel %vm638, %v7943, %v7942
    %v7945 = vperm.slane %v7899, %v634
    %v7946 = vperm.slane %v7902, %v636
    %v7947 = vsel %vm638, %v7946, %v7945
    %v7948 = vperm.slane %v7905, %v634
    %v7949 = vperm.slane %v7908, %v636
    %v7950 = vsel %vm638, %v7949, %v7948
    %v7951 = vperm.slane %v7911, %v634
    %v7952 = vperm.slane %v7914, %v636
    %v7953 = vsel %vm638, %v7952, %v7951
    %v7954 = vperm.slane %v7917, %v634
    %v7955 = vperm.slane %v7920, %v636
    %v7956 = vsel %vm638, %v7955, %v7954
    %v7957 = vsel %vm673, %v7926, %v7923
    %v7958 = vsel %vm675, %v7929, %v7957
    %v7959 = vsel %vm677, %v7932, %v7958
    %v7960 = vsel %vm679, %v7935, %v7959
    %v7961 = vsel %vm681, %v7938, %v7960
    %v7962 = vsel %vm683, %v7941, %v7961
    %v7963 = vsel %vm685, %v7944, %v7962
    %v7964 = vsel %vm673, %v7950, %v7947
    %v7965 = vsel %vm675, %v7953, %v7964
    %v7966 = vsel %vm677, %v7956, %v7965
    %v7969 = vsel %vm692, %v7963, -inf
    %7970 = vmax.xlane.f32.xlu0 %v7969
    %v7971 = vpop.xlane.xlu0 %7970
    %v7972 = vsel %vm696, %v7966, -inf
    %7973 = vmax.xlane.f32.xlu0 %v7972
    %v7974 = vpop.xlane.xlu0 %7973
    %v7977 = vperm.slane %v7971, 0
    %v7978 = vperm.slane %v7971, 1
    %v7979 = vperm.slane %v7971, 2
    %v7980 = vperm.slane %v7971, 3
    %v7981 = vperm.slane %v7971, 4
    %v7982 = vperm.slane %v7971, 5
    %v7983 = vperm.slane %v7971, 6
    %v7984 = vperm.slane %v7971, 7
    %v7985 = vperm.slane %v7974, 0
    %v7986 = vperm.slane %v7974, 1
    %v7987 = vperm.slane %v7974, 2
    %v7988 = vperm.slane %v7974, 3
    %v8001 = vsub.f32 %v7801, %v7977
    %v8002 = vsub.f32 %v7802, %v7977
    %v8003 = vsub.f32 %v7803, %v7978
    %v8004 = vsub.f32 %v7804, %v7978
    %v8005 = vsub.f32 %v7805, %v7979
    %v8006 = vsub.f32 %v7806, %v7979
    %v8007 = vsub.f32 %v7807, %v7980
    %v8008 = vsub.f32 %v7808, %v7980
    %v8009 = vsub.f32 %v7809, %v7981
    %v8010 = vsub.f32 %v7810, %v7981
    %v8011 = vsub.f32 %v7811, %v7982
    %v8012 = vsub.f32 %v7812, %v7982
    %v8013 = vsub.f32 %v7813, %v7983
    %v8014 = vsub.f32 %v7814, %v7983
    %v8015 = vsub.f32 %v7815, %v7984
    %v8016 = vsub.f32 %v7816, %v7984
    %v8017 = vsub.f32 %v7817, %v7985
    %v8018 = vsub.f32 %v7818, %v7985
    %v8019 = vsub.f32 %v7819, %v7986
    %v8020 = vsub.f32 %v7820, %v7986
    %v8021 = vsub.f32 %v7821, %v7987
    %v8022 = vsub.f32 %v7822, %v7987
    %v8023 = vsub.f32 %v7823, %v7988
    %v8024 = vsub.f32 %v7824, %v7988
    %v8025 = vmul.f32 %v8001, 1.442695
    %v8026 = vpow.pop %v8025
    %v8027 = vmul.f32 %v8002, 1.442695
    %v8028 = vpow.pop %v8027
    %v8029 = vmul.f32 %v8003, 1.442695
    %v8030 = vpow.pop %v8029
    %v8031 = vmul.f32 %v8004, 1.442695
    %v8032 = vpow.pop %v8031
    %v8033 = vmul.f32 %v8005, 1.442695
    %v8034 = vpow.pop %v8033
    %v8035 = vmul.f32 %v8006, 1.442695
    %v8036 = vpow.pop %v8035
    %v8037 = vmul.f32 %v8007, 1.442695
    %v8038 = vpow.pop %v8037
    %v8039 = vmul.f32 %v8008, 1.442695
    %v8040 = vpow.pop %v8039
    %v8041 = vmul.f32 %v8009, 1.442695
    %v8042 = vpow.pop %v8041
    %v8043 = vmul.f32 %v8010, 1.442695
    %v8044 = vpow.pop %v8043
    %v8045 = vmul.f32 %v8011, 1.442695
    %v8046 = vpow.pop %v8045
    %v8047 = vmul.f32 %v8012, 1.442695
    %v8048 = vpow.pop %v8047
    %v8049 = vmul.f32 %v8013, 1.442695
    %v8050 = vpow.pop %v8049
    %v8051 = vmul.f32 %v8014, 1.442695
    %v8052 = vpow.pop %v8051
    %v8053 = vmul.f32 %v8015, 1.442695
    %v8054 = vpow.pop %v8053
    %v8055 = vmul.f32 %v8016, 1.442695
    %v8056 = vpow.pop %v8055
    %v8057 = vmul.f32 %v8017, 1.442695
    %v8058 = vpow.pop %v8057
    %v8059 = vmul.f32 %v8018, 1.442695
    %v8060 = vpow.pop %v8059
    %v8061 = vmul.f32 %v8019, 1.442695
    %v8062 = vpow.pop %v8061
    %v8063 = vmul.f32 %v8020, 1.442695
    %v8064 = vpow.pop %v8063
    %v8065 = vmul.f32 %v8021, 1.442695
    %v8066 = vpow.pop %v8065
    %v8067 = vmul.f32 %v8022, 1.442695
    %v8068 = vpow.pop %v8067
    %v8069 = vmul.f32 %v8023, 1.442695
    %v8070 = vpow.pop %v8069
    %v8071 = vmul.f32 %v8024, 1.442695
    %v8072 = vpow.pop %v8071
    %8097 = vset.pattern.permute.xlu0 0
    %8098 = vperm.xlu0 %8097, %v8026
    %v8099 = vpop.permute.xlu0 %8098
    %8100 = vset.pattern.permute.xlu0 0
    %8101 = vperm.xlu0 %8100, %v8028
    %v8102 = vpop.permute.xlu0 %8101
    %8103 = vset.pattern.permute.xlu0 0
    %8104 = vperm.xlu0 %8103, %v8030
    %v8105 = vpop.permute.xlu0 %8104
    %8106 = vset.pattern.permute.xlu0 0
    %8107 = vperm.xlu0 %8106, %v8032
    %v8108 = vpop.permute.xlu0 %8107
    %8109 = vset.pattern.permute.xlu0 0
    %8110 = vperm.xlu0 %8109, %v8034
    %v8111 = vpop.permute.xlu0 %8110
    %8112 = vset.pattern.permute.xlu0 0
    %8113 = vperm.xlu0 %8112, %v8036
    %v8114 = vpop.permute.xlu0 %8113
    %8115 = vset.pattern.permute.xlu0 0
    %8116 = vperm.xlu0 %8115, %v8038
    %v8117 = vpop.permute.xlu0 %8116
    %8118 = vset.pattern.permute.xlu0 0
    %8119 = vperm.xlu0 %8118, %v8040
    %v8120 = vpop.permute.xlu0 %8119
    %8121 = vset.pattern.permute.xlu0 0
    %8122 = vperm.xlu0 %8121, %v8042
    %v8123 = vpop.permute.xlu0 %8122
    %8124 = vset.pattern.permute.xlu0 0
    %8125 = vperm.xlu0 %8124, %v8044
    %v8126 = vpop.permute.xlu0 %8125
    %8127 = vset.pattern.permute.xlu0 0
    %8128 = vperm.xlu0 %8127, %v8046
    %v8129 = vpop.permute.xlu0 %8128
    %8130 = vset.pattern.permute.xlu0 0
    %8131 = vperm.xlu0 %8130, %v8048
    %v8132 = vpop.permute.xlu0 %8131
    %8133 = vset.pattern.permute.xlu0 0
    %8134 = vperm.xlu0 %8133, %v8050
    %v8135 = vpop.permute.xlu0 %8134
    %8136 = vset.pattern.permute.xlu0 0
    %8137 = vperm.xlu0 %8136, %v8052
    %v8138 = vpop.permute.xlu0 %8137
    %8139 = vset.pattern.permute.xlu0 0
    %8140 = vperm.xlu0 %8139, %v8054
    %v8141 = vpop.permute.xlu0 %8140
    %8142 = vset.pattern.permute.xlu0 0
    %8143 = vperm.xlu0 %8142, %v8056
    %v8144 = vpop.permute.xlu0 %8143
    %8145 = vset.pattern.permute.xlu0 0
    %8146 = vperm.xlu0 %8145, %v8058
    %v8147 = vpop.permute.xlu0 %8146
    %8148 = vset.pattern.permute.xlu0 0
    %8149 = vperm.xlu0 %8148, %v8060
    %v8150 = vpop.permute.xlu0 %8149
    %8151 = vset.pattern.permute.xlu0 0
    %8152 = vperm.xlu0 %8151, %v8062
    %v8153 = vpop.permute.xlu0 %8152
    %8154 = vset.pattern.permute.xlu0 0
    %8155 = vperm.xlu0 %8154, %v8064
    %v8156 = vpop.permute.xlu0 %8155
    %8157 = vset.pattern.permute.xlu0 0
    %8158 = vperm.xlu0 %8157, %v8066
    %v8159 = vpop.permute.xlu0 %8158
    %8160 = vset.pattern.permute.xlu0 0
    %8161 = vperm.xlu0 %8160, %v8068
    %v8162 = vpop.permute.xlu0 %8161
    %8163 = vset.pattern.permute.xlu0 0
    %8164 = vperm.xlu0 %8163, %v8070
    %v8165 = vpop.permute.xlu0 %8164
    %8166 = vset.pattern.permute.xlu0 0
    %8167 = vperm.xlu0 %8166, %v8072
    %v8168 = vpop.permute.xlu0 %8167
    %v8169 = vperm.slane %v8099, %v634
    %v8170 = vperm.slane %v8102, %v636
    %v8171 = vsel %vm638, %v8170, %v8169
    %v8172 = vperm.slane %v8105, %v634
    %v8173 = vperm.slane %v8108, %v636
    %v8174 = vsel %vm638, %v8173, %v8172
    %v8175 = vperm.slane %v8111, %v634
    %v8176 = vperm.slane %v8114, %v636
    %v8177 = vsel %vm638, %v8176, %v8175
    %v8178 = vperm.slane %v8117, %v634
    %v8179 = vperm.slane %v8120, %v636
    %v8180 = vsel %vm638, %v8179, %v8178
    %v8181 = vperm.slane %v8123, %v634
    %v8182 = vperm.slane %v8126, %v636
    %v8183 = vsel %vm638, %v8182, %v8181
    %v8184 = vperm.slane %v8129, %v634
    %v8185 = vperm.slane %v8132, %v636
    %v8186 = vsel %vm638, %v8185, %v8184
    %v8187 = vperm.slane %v8135, %v634
    %v8188 = vperm.slane %v8138, %v636
    %v8189 = vsel %vm638, %v8188, %v8187
    %v8190 = vperm.slane %v8141, %v634
    %v8191 = vperm.slane %v8144, %v636
    %v8192 = vsel %vm638, %v8191, %v8190
    %v8193 = vperm.slane %v8147, %v634
    %v8194 = vperm.slane %v8150, %v636
    %v8195 = vsel %vm638, %v8194, %v8193
    %v8196 = vperm.slane %v8153, %v634
    %v8197 = vperm.slane %v8156, %v636
    %v8198 = vsel %vm638, %v8197, %v8196
    %v8199 = vperm.slane %v8159, %v634
    %v8200 = vperm.slane %v8162, %v636
    %v8201 = vsel %vm638, %v8200, %v8199
    %v8202 = vperm.slane %v8165, %v634
    %v8203 = vperm.slane %v8168, %v636
    %v8204 = vsel %vm638, %v8203, %v8202
    %v8205 = vsel %vm673, %v8174, %v8171
    %v8206 = vsel %vm675, %v8177, %v8205
    %v8207 = vsel %vm677, %v8180, %v8206
    %v8208 = vsel %vm679, %v8183, %v8207
    %v8209 = vsel %vm681, %v8186, %v8208
    %v8210 = vsel %vm683, %v8189, %v8209
    %v8211 = vsel %vm685, %v8192, %v8210
    %v8212 = vsel %vm673, %v8198, %v8195
    %v8213 = vsel %vm675, %v8201, %v8212
    %v8214 = vsel %vm677, %v8204, %v8213
    %v8217 = vsel %vm21, %v8211, 0.0
    %v8218 = vsel %vm22, %v8214, 0.0
    %v8219 = vsel %vm692, %v8217, 0.0
    %8220 = vadd.xlane.f32.xlu0 %v8219
    %v8221 = vpop.xlane.xlu0 %8220
    %v8222 = vsel %vm696, %v8218, 0.0
    %8223 = vadd.xlane.f32.xlu0 %v8222
    %v8224 = vpop.xlane.xlu0 %8223
    %v8225 = vrcp.pop %v8221
    %v8226 = vrcp.pop %v8224
    %v8227 = vmul.f32 %v8217, %v8225
    %v8228 = vmul.f32 %v8218, %v8226
    %v8229 = vpack.c.bf16 %v8228, %v8227
    %8230 = vrot.lane.b32.xlu0 %v7634, 108
    %v8231 = vpop.permute.xlu0 %8230
    %v8233 = vsel %vm692, %v8229, 0
    %v8236 = vsel %vm963, %v8231, 0
    %8238 = vmatpush.bf16.msra.mxu0 0
    %8239 = vmatpush.bf16.msra.mxu0 0
    %8240 = vmatpush.bf16.msra.mxu0 0
    %8241 = vmatpush.bf16.msra.mxu0 0
    %8242 = vmatpush.bf16.msra.mxu0 0
    %8243 = vmatpush.bf16.msra.mxu0 0
    %8244 = vmatpush.bf16.msra.mxu0 0
    %8245 = vmatpush.bf16.msra.mxu0 %v8236
    %8246 = vmatmul.bf16.gmra.mxu0 %v8233
    %v8247 = vpop.f32.mrf.mxu0
    %v8248 = vadd.f32 0.0, %v8247
    %v8249 = vpop.f32.mrf.mxu0
    %v8250 = vadd.f32 0.0, %v8249
    %8251 = vdwg.mxu0
    %8252 = vrot.lane.b32.xlu0 %v6504, 98
    %v8253 = vpop.permute.xlu0 %8252
    %8254 = vrot.lane.b32.xlu0 %v6505, 98
    %v8255 = vpop.permute.xlu0 %8254
    %8256 = vrot.lane.b32.xlu0 %v6506, 98
    %v8257 = vpop.permute.xlu0 %8256
    %8258 = vrot.lane.b32.xlu0 %v6507, 98
    %v8259 = vpop.permute.xlu0 %8258
    %8260 = vrot.lane.b32.xlu0 %v6508, 98
    %v8261 = vpop.permute.xlu0 %8260
    %8262 = vrot.lane.b32.xlu0 %v6509, 98
    %v8263 = vpop.permute.xlu0 %8262
    %8264 = vrot.lane.b32.xlu0 %v6510, 98
    %v8265 = vpop.permute.xlu0 %8264
    %8266 = vrot.lane.b32.xlu0 %v6511, 98
    %v8267 = vpop.permute.xlu0 %8266
    %8268 = vrot.lane.b32.xlu0 %v6512, 98
    %v8269 = vpop.permute.xlu0 %8268
    %8270 = vrot.lane.b32.xlu0 %v6513, 98
    %v8271 = vpop.permute.xlu0 %8270
    %8272 = vrot.lane.b32.xlu0 %v6514, 98
    %v8273 = vpop.permute.xlu0 %8272
    %8274 = vrot.lane.b32.xlu0 %v6515, 98
    %v8275 = vpop.permute.xlu0 %8274
    %8276 = vrot.lane.b32.xlu0 %v6516, 98
    %v8277 = vpop.permute.xlu0 %8276
    %8278 = vrot.lane.b32.xlu0 %v6517, 98
    %v8279 = vpop.permute.xlu0 %8278
    %8280 = vrot.lane.b32.xlu0 %v6518, 98
    %v8281 = vpop.permute.xlu0 %8280
    %8282 = vrot.lane.b32.xlu0 %v6519, 98
    %v8283 = vpop.permute.xlu0 %8282
    %8284 = vrot.lane.b32.xlu0 %v6520, 98
    %v8285 = vpop.permute.xlu0 %8284
    %8286 = vrot.lane.b32.xlu0 %v6521, 98
    %v8287 = vpop.permute.xlu0 %8286
    %8288 = vrot.lane.b32.xlu0 %v6522, 98
    %v8289 = vpop.permute.xlu0 %8288
    %8290 = vrot.lane.b32.xlu0 %v6523, 98
    %v8291 = vpop.permute.xlu0 %8290
    %8292 = vrot.lane.b32.xlu0 %v6524, 98
    %v8293 = vpop.permute.xlu0 %8292
    %8294 = vrot.lane.b32.xlu0 %v6525, 98
    %v8295 = vpop.permute.xlu0 %8294
    %8296 = vrot.lane.b32.xlu0 %v6526, 98
    %v8297 = vpop.permute.xlu0 %8296
    %8298 = vrot.lane.b32.xlu0 %v6527, 98
    %v8299 = vpop.permute.xlu0 %8298
    %v8324 = vsel %vm6530, %v8253, 0.0
    %8325 = vadd.xlane.f32.xlu0 %v8324
    %v8326 = vpop.xlane.xlu0 %8325
    %v8327 = vsel %vm6534, %v8255, 0.0
    %8328 = vadd.xlane.f32.xlu0 %v8327
    %v8329 = vpop.xlane.xlu0 %8328
    %v8330 = vsel %vm6530, %v8257, 0.0
    %8331 = vadd.xlane.f32.xlu0 %v8330
    %v8332 = vpop.xlane.xlu0 %8331
    %v8333 = vsel %vm6534, %v8259, 0.0
    %8334 = vadd.xlane.f32.xlu0 %v8333
    %v8335 = vpop.xlane.xlu0 %8334
    %v8336 = vsel %vm6530, %v8261, 0.0
    %8337 = vadd.xlane.f32.xlu0 %v8336
    %v8338 = vpop.xlane.xlu0 %8337
    %v8339 = vsel %vm6534, %v8263, 0.0
    %8340 = vadd.xlane.f32.xlu0 %v8339
    %v8341 = vpop.xlane.xlu0 %8340
    %v8342 = vsel %vm6530, %v8265, 0.0
    %8343 = vadd.xlane.f32.xlu0 %v8342
    %v8344 = vpop.xlane.xlu0 %8343
    %v8345 = vsel %vm6534, %v8267, 0.0
    %8346 = vadd.xlane.f32.xlu0 %v8345
    %v8347 = vpop.xlane.xlu0 %8346
    %v8348 = vsel %vm6530, %v8269, 0.0
    %8349 = vadd.xlane.f32.xlu0 %v8348
    %v8350 = vpop.xlane.xlu0 %8349
    %v8351 = vsel %vm6534, %v8271, 0.0
    %8352 = vadd.xlane.f32.xlu0 %v8351
    %v8353 = vpop.xlane.xlu0 %8352
    %v8354 = vsel %vm6530, %v8273, 0.0
    %8355 = vadd.xlane.f32.xlu0 %v8354
    %v8356 = vpop.xlane.xlu0 %8355
    %v8357 = vsel %vm6534, %v8275, 0.0
    %8358 = vadd.xlane.f32.xlu0 %v8357
    %v8359 = vpop.xlane.xlu0 %8358
    %v8360 = vsel %vm6530, %v8277, 0.0
    %8361 = vadd.xlane.f32.xlu0 %v8360
    %v8362 = vpop.xlane.xlu0 %8361
    %v8363 = vsel %vm6534, %v8279, 0.0
    %8364 = vadd.xlane.f32.xlu0 %v8363
    %v8365 = vpop.xlane.xlu0 %8364
    %v8366 = vsel %vm6530, %v8281, 0.0
    %8367 = vadd.xlane.f32.xlu0 %v8366
    %v8368 = vpop.xlane.xlu0 %8367
    %v8369 = vsel %vm6534, %v8283, 0.0
    %8370 = vadd.xlane.f32.xlu0 %v8369
    %v8371 = vpop.xlane.xlu0 %8370
    %v8372 = vsel %vm6530, %v8285, 0.0
    %8373 = vadd.xlane.f32.xlu0 %v8372
    %v8374 = vpop.xlane.xlu0 %8373
    %v8375 = vsel %vm6534, %v8287, 0.0
    %8376 = vadd.xlane.f32.xlu0 %v8375
    %v8377 = vpop.xlane.xlu0 %8376
    %v8378 = vsel %vm6530, %v8289, 0.0
    %8379 = vadd.xlane.f32.xlu0 %v8378
    %v8380 = vpop.xlane.xlu0 %8379
    %v8381 = vsel %vm6534, %v8291, 0.0
    %8382 = vadd.xlane.f32.xlu0 %v8381
    %v8383 = vpop.xlane.xlu0 %8382
    %v8384 = vsel %vm6530, %v8293, 0.0
    %8385 = vadd.xlane.f32.xlu0 %v8384
    %v8386 = vpop.xlane.xlu0 %8385
    %v8387 = vsel %vm6534, %v8295, 0.0
    %8388 = vadd.xlane.f32.xlu0 %v8387
    %v8389 = vpop.xlane.xlu0 %8388
    %v8390 = vsel %vm6530, %v8297, 0.0
    %8391 = vadd.xlane.f32.xlu0 %v8390
    %v8392 = vpop.xlane.xlu0 %8391
    %v8393 = vsel %vm6534, %v8299, 0.0
    %8394 = vadd.xlane.f32.xlu0 %v8393
    %v8395 = vpop.xlane.xlu0 %8394
    %v8396 = vadd.f32 %v8326, %v339
    %v8397 = vadd.f32 %v8329, %v345
    %v8398 = vadd.f32 %v8332, %v352
    %v8399 = vadd.f32 %v8335, %v358
    %v8400 = vadd.f32 %v8338, %v365
    %v8401 = vadd.f32 %v8341, %v371
    %v8402 = vadd.f32 %v8344, %v378
    %v8403 = vadd.f32 %v8347, %v384
    %v8404 = vadd.f32 %v8350, %v391
    %v8405 = vadd.f32 %v8353, %v397
    %v8406 = vadd.f32 %v8356, %v404
    %v8407 = vadd.f32 %v8359, %v410
    %v8408 = vadd.f32 %v8362, %v417
    %v8409 = vadd.f32 %v8365, %v423
    %v8410 = vadd.f32 %v8368, %v430
    %v8411 = vadd.f32 %v8371, %v436
    %v8412 = vadd.f32 %v8374, %v443
    %v8413 = vadd.f32 %v8377, %v449
    %v8414 = vadd.f32 %v8380, %v456
    %v8415 = vadd.f32 %v8383, %v462
    %v8416 = vadd.f32 %v8386, %v469
    %v8417 = vadd.f32 %v8389, %v475
    %v8418 = vadd.f32 %v8392, %v482
    %v8419 = vadd.f32 %v8395, %v488
    %8444 = vset.pattern.permute.xlu0 0
    %8445 = vperm.xlu0 %8444, %v8396
    %v8446 = vpop.permute.xlu0 %8445
    %8447 = vset.pattern.permute.xlu0 0
    %8448 = vperm.xlu0 %8447, %v8397
    %v8449 = vpop.permute.xlu0 %8448
    %8450 = vset.pattern.permute.xlu0 0
    %8451 = vperm.xlu0 %8450, %v8398
    %v8452 = vpop.permute.xlu0 %8451
    %8453 = vset.pattern.permute.xlu0 0
    %8454 = vperm.xlu0 %8453, %v8399
    %v8455 = vpop.permute.xlu0 %8454
    %8456 = vset.pattern.permute.xlu0 0
    %8457 = vperm.xlu0 %8456, %v8400
    %v8458 = vpop.permute.xlu0 %8457
    %8459 = vset.pattern.permute.xlu0 0
    %8460 = vperm.xlu0 %8459, %v8401
    %v8461 = vpop.permute.xlu0 %8460
    %8462 = vset.pattern.permute.xlu0 0
    %8463 = vperm.xlu0 %8462, %v8402
    %v8464 = vpop.permute.xlu0 %8463
    %8465 = vset.pattern.permute.xlu0 0
    %8466 = vperm.xlu0 %8465, %v8403
    %v8467 = vpop.permute.xlu0 %8466
    %8468 = vset.pattern.permute.xlu0 0
    %8469 = vperm.xlu0 %8468, %v8404
    %v8470 = vpop.permute.xlu0 %8469
    %8471 = vset.pattern.permute.xlu0 0
    %8472 = vperm.xlu0 %8471, %v8405
    %v8473 = vpop.permute.xlu0 %8472
    %8474 = vset.pattern.permute.xlu0 0
    %8475 = vperm.xlu0 %8474, %v8406
    %v8476 = vpop.permute.xlu0 %8475
    %8477 = vset.pattern.permute.xlu0 0
    %8478 = vperm.xlu0 %8477, %v8407
    %v8479 = vpop.permute.xlu0 %8478
    %8480 = vset.pattern.permute.xlu0 0
    %8481 = vperm.xlu0 %8480, %v8408
    %v8482 = vpop.permute.xlu0 %8481
    %8483 = vset.pattern.permute.xlu0 0
    %8484 = vperm.xlu0 %8483, %v8409
    %v8485 = vpop.permute.xlu0 %8484
    %8486 = vset.pattern.permute.xlu0 0
    %8487 = vperm.xlu0 %8486, %v8410
    %v8488 = vpop.permute.xlu0 %8487
    %8489 = vset.pattern.permute.xlu0 0
    %8490 = vperm.xlu0 %8489, %v8411
    %v8491 = vpop.permute.xlu0 %8490
    %8492 = vset.pattern.permute.xlu0 0
    %8493 = vperm.xlu0 %8492, %v8412
    %v8494 = vpop.permute.xlu0 %8493
    %8495 = vset.pattern.permute.xlu0 0
    %8496 = vperm.xlu0 %8495, %v8413
    %v8497 = vpop.permute.xlu0 %8496
    %8498 = vset.pattern.permute.xlu0 0
    %8499 = vperm.xlu0 %8498, %v8414
    %v8500 = vpop.permute.xlu0 %8499
    %8501 = vset.pattern.permute.xlu0 0
    %8502 = vperm.xlu0 %8501, %v8415
    %v8503 = vpop.permute.xlu0 %8502
    %8504 = vset.pattern.permute.xlu0 0
    %8505 = vperm.xlu0 %8504, %v8416
    %v8506 = vpop.permute.xlu0 %8505
    %8507 = vset.pattern.permute.xlu0 0
    %8508 = vperm.xlu0 %8507, %v8417
    %v8509 = vpop.permute.xlu0 %8508
    %8510 = vset.pattern.permute.xlu0 0
    %8511 = vperm.xlu0 %8510, %v8418
    %v8512 = vpop.permute.xlu0 %8511
    %8513 = vset.pattern.permute.xlu0 0
    %8514 = vperm.xlu0 %8513, %v8419
    %v8515 = vpop.permute.xlu0 %8514
    %v8516 = vperm.slane %v8446, %v634
    %v8517 = vperm.slane %v8449, %v636
    %v8518 = vsel %vm638, %v8517, %v8516
    %v8519 = vperm.slane %v8452, %v634
    %v8520 = vperm.slane %v8455, %v636
    %v8521 = vsel %vm638, %v8520, %v8519
    %v8522 = vperm.slane %v8458, %v634
    %v8523 = vperm.slane %v8461, %v636
    %v8524 = vsel %vm638, %v8523, %v8522
    %v8525 = vperm.slane %v8464, %v634
    %v8526 = vperm.slane %v8467, %v636
    %v8527 = vsel %vm638, %v8526, %v8525
    %v8528 = vperm.slane %v8470, %v634
    %v8529 = vperm.slane %v8473, %v636
    %v8530 = vsel %vm638, %v8529, %v8528
    %v8531 = vperm.slane %v8476, %v634
    %v8532 = vperm.slane %v8479, %v636
    %v8533 = vsel %vm638, %v8532, %v8531
    %v8534 = vperm.slane %v8482, %v634
    %v8535 = vperm.slane %v8485, %v636
    %v8536 = vsel %vm638, %v8535, %v8534
    %v8537 = vperm.slane %v8488, %v634
    %v8538 = vperm.slane %v8491, %v636
    %v8539 = vsel %vm638, %v8538, %v8537
    %v8540 = vperm.slane %v8494, %v634
    %v8541 = vperm.slane %v8497, %v636
    %v8542 = vsel %vm638, %v8541, %v8540
    %v8543 = vperm.slane %v8500, %v634
    %v8544 = vperm.slane %v8503, %v636
    %v8545 = vsel %vm638, %v8544, %v8543
    %v8546 = vperm.slane %v8506, %v634
    %v8547 = vperm.slane %v8509, %v636
    %v8548 = vsel %vm638, %v8547, %v8546
    %v8549 = vperm.slane %v8512, %v634
    %v8550 = vperm.slane %v8515, %v636
    %v8551 = vsel %vm638, %v8550, %v8549
    %v8552 = vsel %vm673, %v8521, %v8518
    %v8553 = vsel %vm675, %v8524, %v8552
    %v8554 = vsel %vm677, %v8527, %v8553
    %v8555 = vsel %vm679, %v8530, %v8554
    %v8556 = vsel %vm681, %v8533, %v8555
    %v8557 = vsel %vm683, %v8536, %v8556
    %v8558 = vsel %vm685, %v8539, %v8557
    %v8559 = vsel %vm673, %v8545, %v8542
    %v8560 = vsel %vm675, %v8548, %v8559
    %v8561 = vsel %vm677, %v8551, %v8560
    %v8564 = vsel %vm692, %v8558, -inf
    %8565 = vmax.xlane.f32.xlu0 %v8564
    %v8566 = vpop.xlane.xlu0 %8565
    %v8567 = vsel %vm696, %v8561, -inf
    %8568 = vmax.xlane.f32.xlu0 %v8567
    %v8569 = vpop.xlane.xlu0 %8568
    %v8572 = vperm.slane %v8566, 0
    %v8573 = vperm.slane %v8566, 1
    %v8574 = vperm.slane %v8566, 2
    %v8575 = vperm.slane %v8566, 3
    %v8576 = vperm.slane %v8566, 4
    %v8577 = vperm.slane %v8566, 5
    %v8578 = vperm.slane %v8566, 6
    %v8579 = vperm.slane %v8566, 7
    %v8580 = vperm.slane %v8569, 0
    %v8581 = vperm.slane %v8569, 1
    %v8582 = vperm.slane %v8569, 2
    %v8583 = vperm.slane %v8569, 3
    %v8596 = vsub.f32 %v8396, %v8572
    %v8597 = vsub.f32 %v8397, %v8572
    %v8598 = vsub.f32 %v8398, %v8573
    %v8599 = vsub.f32 %v8399, %v8573
    %v8600 = vsub.f32 %v8400, %v8574
    %v8601 = vsub.f32 %v8401, %v8574
    %v8602 = vsub.f32 %v8402, %v8575
    %v8603 = vsub.f32 %v8403, %v8575
    %v8604 = vsub.f32 %v8404, %v8576
    %v8605 = vsub.f32 %v8405, %v8576
    %v8606 = vsub.f32 %v8406, %v8577
    %v8607 = vsub.f32 %v8407, %v8577
    %v8608 = vsub.f32 %v8408, %v8578
    %v8609 = vsub.f32 %v8409, %v8578
    %v8610 = vsub.f32 %v8410, %v8579
    %v8611 = vsub.f32 %v8411, %v8579
    %v8612 = vsub.f32 %v8412, %v8580
    %v8613 = vsub.f32 %v8413, %v8580
    %v8614 = vsub.f32 %v8414, %v8581
    %v8615 = vsub.f32 %v8415, %v8581
    %v8616 = vsub.f32 %v8416, %v8582
    %v8617 = vsub.f32 %v8417, %v8582
    %v8618 = vsub.f32 %v8418, %v8583
    %v8619 = vsub.f32 %v8419, %v8583
    %v8620 = vmul.f32 %v8596, 1.442695
    %v8621 = vpow.pop %v8620
    %v8622 = vmul.f32 %v8597, 1.442695
    %v8623 = vpow.pop %v8622
    %v8624 = vmul.f32 %v8598, 1.442695
    %v8625 = vpow.pop %v8624
    %v8626 = vmul.f32 %v8599, 1.442695
    %v8627 = vpow.pop %v8626
    %v8628 = vmul.f32 %v8600, 1.442695
    %v8629 = vpow.pop %v8628
    %v8630 = vmul.f32 %v8601, 1.442695
    %v8631 = vpow.pop %v8630
    %v8632 = vmul.f32 %v8602, 1.442695
    %v8633 = vpow.pop %v8632
    %v8634 = vmul.f32 %v8603, 1.442695
    %v8635 = vpow.pop %v8634
    %v8636 = vmul.f32 %v8604, 1.442695
    %v8637 = vpow.pop %v8636
    %v8638 = vmul.f32 %v8605, 1.442695
    %v8639 = vpow.pop %v8638
    %v8640 = vmul.f32 %v8606, 1.442695
    %v8641 = vpow.pop %v8640
    %v8642 = vmul.f32 %v8607, 1.442695
    %v8643 = vpow.pop %v8642
    %v8644 = vmul.f32 %v8608, 1.442695
    %v8645 = vpow.pop %v8644
    %v8646 = vmul.f32 %v8609, 1.442695
    %v8647 = vpow.pop %v8646
    %v8648 = vmul.f32 %v8610, 1.442695
    %v8649 = vpow.pop %v8648
    %v8650 = vmul.f32 %v8611, 1.442695
    %v8651 = vpow.pop %v8650
    %v8652 = vmul.f32 %v8612, 1.442695
    %v8653 = vpow.pop %v8652
    %v8654 = vmul.f32 %v8613, 1.442695
    %v8655 = vpow.pop %v8654
    %v8656 = vmul.f32 %v8614, 1.442695
    %v8657 = vpow.pop %v8656
    %v8658 = vmul.f32 %v8615, 1.442695
    %v8659 = vpow.pop %v8658
    %v8660 = vmul.f32 %v8616, 1.442695
    %v8661 = vpow.pop %v8660
    %v8662 = vmul.f32 %v8617, 1.442695
    %v8663 = vpow.pop %v8662
    %v8664 = vmul.f32 %v8618, 1.442695
    %v8665 = vpow.pop %v8664
    %v8666 = vmul.f32 %v8619, 1.442695
    %v8667 = vpow.pop %v8666
    %8692 = vset.pattern.permute.xlu0 0
    %8693 = vperm.xlu0 %8692, %v8621
    %v8694 = vpop.permute.xlu0 %8693
    %8695 = vset.pattern.permute.xlu0 0
    %8696 = vperm.xlu0 %8695, %v8623
    %v8697 = vpop.permute.xlu0 %8696
    %8698 = vset.pattern.permute.xlu0 0
    %8699 = vperm.xlu0 %8698, %v8625
    %v8700 = vpop.permute.xlu0 %8699
    %8701 = vset.pattern.permute.xlu0 0
    %8702 = vperm.xlu0 %8701, %v8627
    %v8703 = vpop.permute.xlu0 %8702
    %8704 = vset.pattern.permute.xlu0 0
    %8705 = vperm.xlu0 %8704, %v8629
    %v8706 = vpop.permute.xlu0 %8705
    %8707 = vset.pattern.permute.xlu0 0
    %8708 = vperm.xlu0 %8707, %v8631
    %v8709 = vpop.permute.xlu0 %8708
    %8710 = vset.pattern.permute.xlu0 0
    %8711 = vperm.xlu0 %8710, %v8633
    %v8712 = vpop.permute.xlu0 %8711
    %8713 = vset.pattern.permute.xlu0 0
    %8714 = vperm.xlu0 %8713, %v8635
    %v8715 = vpop.permute.xlu0 %8714
    %8716 = vset.pattern.permute.xlu0 0
    %8717 = vperm.xlu0 %8716, %v8637
    %v8718 = vpop.permute.xlu0 %8717
    %8719 = vset.pattern.permute.xlu0 0
    %8720 = vperm.xlu0 %8719, %v8639
    %v8721 = vpop.permute.xlu0 %8720
    %8722 = vset.pattern.permute.xlu0 0
    %8723 = vperm.xlu0 %8722, %v8641
    %v8724 = vpop.permute.xlu0 %8723
    %8725 = vset.pattern.permute.xlu0 0
    %8726 = vperm.xlu0 %8725, %v8643
    %v8727 = vpop.permute.xlu0 %8726
    %8728 = vset.pattern.permute.xlu0 0
    %8729 = vperm.xlu0 %8728, %v8645
    %v8730 = vpop.permute.xlu0 %8729
    %8731 = vset.pattern.permute.xlu0 0
    %8732 = vperm.xlu0 %8731, %v8647
    %v8733 = vpop.permute.xlu0 %8732
    %8734 = vset.pattern.permute.xlu0 0
    %8735 = vperm.xlu0 %8734, %v8649
    %v8736 = vpop.permute.xlu0 %8735
    %8737 = vset.pattern.permute.xlu0 0
    %8738 = vperm.xlu0 %8737, %v8651
    %v8739 = vpop.permute.xlu0 %8738
    %8740 = vset.pattern.permute.xlu0 0
    %8741 = vperm.xlu0 %8740, %v8653
    %v8742 = vpop.permute.xlu0 %8741
    %8743 = vset.pattern.permute.xlu0 0
    %8744 = vperm.xlu0 %8743, %v8655
    %v8745 = vpop.permute.xlu0 %8744
    %8746 = vset.pattern.permute.xlu0 0
    %8747 = vperm.xlu0 %8746, %v8657
    %v8748 = vpop.permute.xlu0 %8747
    %8749 = vset.pattern.permute.xlu0 0
    %8750 = vperm.xlu0 %8749, %v8659
    %v8751 = vpop.permute.xlu0 %8750
    %8752 = vset.pattern.permute.xlu0 0
    %8753 = vperm.xlu0 %8752, %v8661
    %v8754 = vpop.permute.xlu0 %8753
    %8755 = vset.pattern.permute.xlu0 0
    %8756 = vperm.xlu0 %8755, %v8663
    %v8757 = vpop.permute.xlu0 %8756
    %8758 = vset.pattern.permute.xlu0 0
    %8759 = vperm.xlu0 %8758, %v8665
    %v8760 = vpop.permute.xlu0 %8759
    %8761 = vset.pattern.permute.xlu0 0
    %8762 = vperm.xlu0 %8761, %v8667
    %v8763 = vpop.permute.xlu0 %8762
    %v8764 = vperm.slane %v8694, %v634
    %v8765 = vperm.slane %v8697, %v636
    %v8766 = vsel %vm638, %v8765, %v8764
    %v8767 = vperm.slane %v8700, %v634
    %v8768 = vperm.slane %v8703, %v636
    %v8769 = vsel %vm638, %v8768, %v8767
    %v8770 = vperm.slane %v8706, %v634
    %v8771 = vperm.slane %v8709, %v636
    %v8772 = vsel %vm638, %v8771, %v8770
    %v8773 = vperm.slane %v8712, %v634
    %v8774 = vperm.slane %v8715, %v636
    %v8775 = vsel %vm638, %v8774, %v8773
    %v8776 = vperm.slane %v8718, %v634
    %v8777 = vperm.slane %v8721, %v636
    %v8778 = vsel %vm638, %v8777, %v8776
    %v8779 = vperm.slane %v8724, %v634
    %v8780 = vperm.slane %v8727, %v636
    %v8781 = vsel %vm638, %v8780, %v8779
    %v8782 = vperm.slane %v8730, %v634
    %v8783 = vperm.slane %v8733, %v636
    %v8784 = vsel %vm638, %v8783, %v8782
    %v8785 = vperm.slane %v8736, %v634
    %v8786 = vperm.slane %v8739, %v636
    %v8787 = vsel %vm638, %v8786, %v8785
    %v8788 = vperm.slane %v8742, %v634
    %v8789 = vperm.slane %v8745, %v636
    %v8790 = vsel %vm638, %v8789, %v8788
    %v8791 = vperm.slane %v8748, %v634
    %v8792 = vperm.slane %v8751, %v636
    %v8793 = vsel %vm638, %v8792, %v8791
    %v8794 = vperm.slane %v8754, %v634
    %v8795 = vperm.slane %v8757, %v636
    %v8796 = vsel %vm638, %v8795, %v8794
    %v8797 = vperm.slane %v8760, %v634
    %v8798 = vperm.slane %v8763, %v636
    %v8799 = vsel %vm638, %v8798, %v8797
    %v8800 = vsel %vm673, %v8769, %v8766
    %v8801 = vsel %vm675, %v8772, %v8800
    %v8802 = vsel %vm677, %v8775, %v8801
    %v8803 = vsel %vm679, %v8778, %v8802
    %v8804 = vsel %vm681, %v8781, %v8803
    %v8805 = vsel %vm683, %v8784, %v8804
    %v8806 = vsel %vm685, %v8787, %v8805
    %v8807 = vsel %vm673, %v8793, %v8790
    %v8808 = vsel %vm675, %v8796, %v8807
    %v8809 = vsel %vm677, %v8799, %v8808
    %v8812 = vsel %vm21, %v8806, 0.0
    %v8813 = vsel %vm22, %v8809, 0.0
    %v8814 = vsel %vm692, %v8812, 0.0
    %8815 = vadd.xlane.f32.xlu0 %v8814
    %v8816 = vpop.xlane.xlu0 %8815
    %v8817 = vsel %vm696, %v8813, 0.0
    %8818 = vadd.xlane.f32.xlu0 %v8817
    %v8819 = vpop.xlane.xlu0 %8818
    %v8820 = vrcp.pop %v8816
    %v8821 = vrcp.pop %v8819
    %v8822 = vmul.f32 %v8812, %v8820
    %v8823 = vmul.f32 %v8813, %v8821
    %v8824 = vpack.c.bf16 %v8823, %v8822
    %8825 = vrot.lane.b32.xlu0 %v7634, 98
    %v8826 = vpop.permute.xlu0 %8825
    %v8828 = vsel %vm692, %v8824, 0
    %v8831 = vsel %vm963, %v8826, 0
    %8833 = vmatpush.bf16.msra.mxu0 0
    %8834 = vmatpush.bf16.msra.mxu0 0
    %8835 = vmatpush.bf16.msra.mxu0 0
    %8836 = vmatpush.bf16.msra.mxu0 0
    %8837 = vmatpush.bf16.msra.mxu0 0
    %8838 = vmatpush.bf16.msra.mxu0 0
    %8839 = vmatpush.bf16.msra.mxu0 0
    %8840 = vmatpush.bf16.msra.mxu0 %v8831
    %8841 = vmatmul.bf16.gmra.mxu0 %v8828
    %v8842 = vpop.f32.mrf.mxu0
    %v8843 = vadd.f32 0.0, %v8842
    %v8844 = vpop.f32.mrf.mxu0
    %v8845 = vadd.f32 0.0, %v8844
    %8846 = vdwg.mxu0
    %8847 = vrot.lane.b32.xlu0 %v6504, 88
    %v8848 = vpop.permute.xlu0 %8847
    %8849 = vrot.lane.b32.xlu0 %v6505, 88
    %v8850 = vpop.permute.xlu0 %8849
    %8851 = vrot.lane.b32.xlu0 %v6506, 88
    %v8852 = vpop.permute.xlu0 %8851
    %8853 = vrot.lane.b32.xlu0 %v6507, 88
    %v8854 = vpop.permute.xlu0 %8853
    %8855 = vrot.lane.b32.xlu0 %v6508, 88
    %v8856 = vpop.permute.xlu0 %8855
    %8857 = vrot.lane.b32.xlu0 %v6509, 88
    %v8858 = vpop.permute.xlu0 %8857
    %8859 = vrot.lane.b32.xlu0 %v6510, 88
    %v8860 = vpop.permute.xlu0 %8859
    %8861 = vrot.lane.b32.xlu0 %v6511, 88
    %v8862 = vpop.permute.xlu0 %8861
    %8863 = vrot.lane.b32.xlu0 %v6512, 88
    %v8864 = vpop.permute.xlu0 %8863
    %8865 = vrot.lane.b32.xlu0 %v6513, 88
    %v8866 = vpop.permute.xlu0 %8865
    %8867 = vrot.lane.b32.xlu0 %v6514, 88
    %v8868 = vpop.permute.xlu0 %8867
    %8869 = vrot.lane.b32.xlu0 %v6515, 88
    %v8870 = vpop.permute.xlu0 %8869
    %8871 = vrot.lane.b32.xlu0 %v6516, 88
    %v8872 = vpop.permute.xlu0 %8871
    %8873 = vrot.lane.b32.xlu0 %v6517, 88
    %v8874 = vpop.permute.xlu0 %8873
    %8875 = vrot.lane.b32.xlu0 %v6518, 88
    %v8876 = vpop.permute.xlu0 %8875
    %8877 = vrot.lane.b32.xlu0 %v6519, 88
    %v8878 = vpop.permute.xlu0 %8877
    %8879 = vrot.lane.b32.xlu0 %v6520, 88
    %v8880 = vpop.permute.xlu0 %8879
    %8881 = vrot.lane.b32.xlu0 %v6521, 88
    %v8882 = vpop.permute.xlu0 %8881
    %8883 = vrot.lane.b32.xlu0 %v6522, 88
    %v8884 = vpop.permute.xlu0 %8883
    %8885 = vrot.lane.b32.xlu0 %v6523, 88
    %v8886 = vpop.permute.xlu0 %8885
    %8887 = vrot.lane.b32.xlu0 %v6524, 88
    %v8888 = vpop.permute.xlu0 %8887
    %8889 = vrot.lane.b32.xlu0 %v6525, 88
    %v8890 = vpop.permute.xlu0 %8889
    %8891 = vrot.lane.b32.xlu0 %v6526, 88
    %v8892 = vpop.permute.xlu0 %8891
    %8893 = vrot.lane.b32.xlu0 %v6527, 88
    %v8894 = vpop.permute.xlu0 %8893
    %v8919 = vsel %vm6530, %v8848, 0.0
    %8920 = vadd.xlane.f32.xlu0 %v8919
    %v8921 = vpop.xlane.xlu0 %8920
    %v8922 = vsel %vm6534, %v8850, 0.0
    %8923 = vadd.xlane.f32.xlu0 %v8922
    %v8924 = vpop.xlane.xlu0 %8923
    %v8925 = vsel %vm6530, %v8852, 0.0
    %8926 = vadd.xlane.f32.xlu0 %v8925
    %v8927 = vpop.xlane.xlu0 %8926
    %v8928 = vsel %vm6534, %v8854, 0.0
    %8929 = vadd.xlane.f32.xlu0 %v8928
    %v8930 = vpop.xlane.xlu0 %8929
    %v8931 = vsel %vm6530, %v8856, 0.0
    %8932 = vadd.xlane.f32.xlu0 %v8931
    %v8933 = vpop.xlane.xlu0 %8932
    %v8934 = vsel %vm6534, %v8858, 0.0
    %8935 = vadd.xlane.f32.xlu0 %v8934
    %v8936 = vpop.xlane.xlu0 %8935
    %v8937 = vsel %vm6530, %v8860, 0.0
    %8938 = vadd.xlane.f32.xlu0 %v8937
    %v8939 = vpop.xlane.xlu0 %8938
    %v8940 = vsel %vm6534, %v8862, 0.0
    %8941 = vadd.xlane.f32.xlu0 %v8940
    %v8942 = vpop.xlane.xlu0 %8941
    %v8943 = vsel %vm6530, %v8864, 0.0
    %8944 = vadd.xlane.f32.xlu0 %v8943
    %v8945 = vpop.xlane.xlu0 %8944
    %v8946 = vsel %vm6534, %v8866, 0.0
    %8947 = vadd.xlane.f32.xlu0 %v8946
    %v8948 = vpop.xlane.xlu0 %8947
    %v8949 = vsel %vm6530, %v8868, 0.0
    %8950 = vadd.xlane.f32.xlu0 %v8949
    %v8951 = vpop.xlane.xlu0 %8950
    %v8952 = vsel %vm6534, %v8870, 0.0
    %8953 = vadd.xlane.f32.xlu0 %v8952
    %v8954 = vpop.xlane.xlu0 %8953
    %v8955 = vsel %vm6530, %v8872, 0.0
    %8956 = vadd.xlane.f32.xlu0 %v8955
    %v8957 = vpop.xlane.xlu0 %8956
    %v8958 = vsel %vm6534, %v8874, 0.0
    %8959 = vadd.xlane.f32.xlu0 %v8958
    %v8960 = vpop.xlane.xlu0 %8959
    %v8961 = vsel %vm6530, %v8876, 0.0
    %8962 = vadd.xlane.f32.xlu0 %v8961
    %v8963 = vpop.xlane.xlu0 %8962
    %v8964 = vsel %vm6534, %v8878, 0.0
    %8965 = vadd.xlane.f32.xlu0 %v8964
    %v8966 = vpop.xlane.xlu0 %8965
    %v8967 = vsel %vm6530, %v8880, 0.0
    %8968 = vadd.xlane.f32.xlu0 %v8967
    %v8969 = vpop.xlane.xlu0 %8968
    %v8970 = vsel %vm6534, %v8882, 0.0
    %8971 = vadd.xlane.f32.xlu0 %v8970
    %v8972 = vpop.xlane.xlu0 %8971
    %v8973 = vsel %vm6530, %v8884, 0.0
    %8974 = vadd.xlane.f32.xlu0 %v8973
    %v8975 = vpop.xlane.xlu0 %8974
    %v8976 = vsel %vm6534, %v8886, 0.0
    %8977 = vadd.xlane.f32.xlu0 %v8976
    %v8978 = vpop.xlane.xlu0 %8977
    %v8979 = vsel %vm6530, %v8888, 0.0
    %8980 = vadd.xlane.f32.xlu0 %v8979
    %v8981 = vpop.xlane.xlu0 %8980
    %v8982 = vsel %vm6534, %v8890, 0.0
    %8983 = vadd.xlane.f32.xlu0 %v8982
    %v8984 = vpop.xlane.xlu0 %8983
    %v8985 = vsel %vm6530, %v8892, 0.0
    %8986 = vadd.xlane.f32.xlu0 %v8985
    %v8987 = vpop.xlane.xlu0 %8986
    %v8988 = vsel %vm6534, %v8894, 0.0
    %8989 = vadd.xlane.f32.xlu0 %v8988
    %v8990 = vpop.xlane.xlu0 %8989
    %v8991 = vadd.f32 %v8921, %v339
    %v8992 = vadd.f32 %v8924, %v345
    %v8993 = vadd.f32 %v8927, %v352
    %v8994 = vadd.f32 %v8930, %v358
    %v8995 = vadd.f32 %v8933, %v365
    %v8996 = vadd.f32 %v8936, %v371
    %v8997 = vadd.f32 %v8939, %v378
    %v8998 = vadd.f32 %v8942, %v384
    %v8999 = vadd.f32 %v8945, %v391
    %v9000 = vadd.f32 %v8948, %v397
    %v9001 = vadd.f32 %v8951, %v404
    %v9002 = vadd.f32 %v8954, %v410
    %v9003 = vadd.f32 %v8957, %v417
    %v9004 = vadd.f32 %v8960, %v423
    %v9005 = vadd.f32 %v8963, %v430
    %v9006 = vadd.f32 %v8966, %v436
    %v9007 = vadd.f32 %v8969, %v443
    %v9008 = vadd.f32 %v8972, %v449
    %v9009 = vadd.f32 %v8975, %v456
    %v9010 = vadd.f32 %v8978, %v462
    %v9011 = vadd.f32 %v8981, %v469
    %v9012 = vadd.f32 %v8984, %v475
    %v9013 = vadd.f32 %v8987, %v482
    %v9014 = vadd.f32 %v8990, %v488
    %9039 = vset.pattern.permute.xlu0 0
    %9040 = vperm.xlu0 %9039, %v8991
    %v9041 = vpop.permute.xlu0 %9040
    %9042 = vset.pattern.permute.xlu0 0
    %9043 = vperm.xlu0 %9042, %v8992
    %v9044 = vpop.permute.xlu0 %9043
    %9045 = vset.pattern.permute.xlu0 0
    %9046 = vperm.xlu0 %9045, %v8993
    %v9047 = vpop.permute.xlu0 %9046
    %9048 = vset.pattern.permute.xlu0 0
    %9049 = vperm.xlu0 %9048, %v8994
    %v9050 = vpop.permute.xlu0 %9049
    %9051 = vset.pattern.permute.xlu0 0
    %9052 = vperm.xlu0 %9051, %v8995
    %v9053 = vpop.permute.xlu0 %9052
    %9054 = vset.pattern.permute.xlu0 0
    %9055 = vperm.xlu0 %9054, %v8996
    %v9056 = vpop.permute.xlu0 %9055
    %9057 = vset.pattern.permute.xlu0 0
    %9058 = vperm.xlu0 %9057, %v8997
    %v9059 = vpop.permute.xlu0 %9058
    %9060 = vset.pattern.permute.xlu0 0
    %9061 = vperm.xlu0 %9060, %v8998
    %v9062 = vpop.permute.xlu0 %9061
    %9063 = vset.pattern.permute.xlu0 0
    %9064 = vperm.xlu0 %9063, %v8999
    %v9065 = vpop.permute.xlu0 %9064
    %9066 = vset.pattern.permute.xlu0 0
    %9067 = vperm.xlu0 %9066, %v9000
    %v9068 = vpop.permute.xlu0 %9067
    %9069 = vset.pattern.permute.xlu0 0
    %9070 = vperm.xlu0 %9069, %v9001
    %v9071 = vpop.permute.xlu0 %9070
    %9072 = vset.pattern.permute.xlu0 0
    %9073 = vperm.xlu0 %9072, %v9002
    %v9074 = vpop.permute.xlu0 %9073
    %9075 = vset.pattern.permute.xlu0 0
    %9076 = vperm.xlu0 %9075, %v9003
    %v9077 = vpop.permute.xlu0 %9076
    %9078 = vset.pattern.permute.xlu0 0
    %9079 = vperm.xlu0 %9078, %v9004
    %v9080 = vpop.permute.xlu0 %9079
    %9081 = vset.pattern.permute.xlu0 0
    %9082 = vperm.xlu0 %9081, %v9005
    %v9083 = vpop.permute.xlu0 %9082
    %9084 = vset.pattern.permute.xlu0 0
    %9085 = vperm.xlu0 %9084, %v9006
    %v9086 = vpop.permute.xlu0 %9085
    %9087 = vset.pattern.permute.xlu0 0
    %9088 = vperm.xlu0 %9087, %v9007
    %v9089 = vpop.permute.xlu0 %9088
    %9090 = vset.pattern.permute.xlu0 0
    %9091 = vperm.xlu0 %9090, %v9008
    %v9092 = vpop.permute.xlu0 %9091
    %9093 = vset.pattern.permute.xlu0 0
    %9094 = vperm.xlu0 %9093, %v9009
    %v9095 = vpop.permute.xlu0 %9094
    %9096 = vset.pattern.permute.xlu0 0
    %9097 = vperm.xlu0 %9096, %v9010
    %v9098 = vpop.permute.xlu0 %9097
    %9099 = vset.pattern.permute.xlu0 0
    %9100 = vperm.xlu0 %9099, %v9011
    %v9101 = vpop.permute.xlu0 %9100
    %9102 = vset.pattern.permute.xlu0 0
    %9103 = vperm.xlu0 %9102, %v9012
    %v9104 = vpop.permute.xlu0 %9103
    %9105 = vset.pattern.permute.xlu0 0
    %9106 = vperm.xlu0 %9105, %v9013
    %v9107 = vpop.permute.xlu0 %9106
    %9108 = vset.pattern.permute.xlu0 0
    %9109 = vperm.xlu0 %9108, %v9014
    %v9110 = vpop.permute.xlu0 %9109
    %v9111 = vperm.slane %v9041, %v634
    %v9112 = vperm.slane %v9044, %v636
    %v9113 = vsel %vm638, %v9112, %v9111
    %v9114 = vperm.slane %v9047, %v634
    %v9115 = vperm.slane %v9050, %v636
    %v9116 = vsel %vm638, %v9115, %v9114
    %v9117 = vperm.slane %v9053, %v634
    %v9118 = vperm.slane %v9056, %v636
    %v9119 = vsel %vm638, %v9118, %v9117
    %v9120 = vperm.slane %v9059, %v634
    %v9121 = vperm.slane %v9062, %v636
    %v9122 = vsel %vm638, %v9121, %v9120
    %v9123 = vperm.slane %v9065, %v634
    %v9124 = vperm.slane %v9068, %v636
    %v9125 = vsel %vm638, %v9124, %v9123
    %v9126 = vperm.slane %v9071, %v634
    %v9127 = vperm.slane %v9074, %v636
    %v9128 = vsel %vm638, %v9127, %v9126
    %v9129 = vperm.slane %v9077, %v634
    %v9130 = vperm.slane %v9080, %v636
    %v9131 = vsel %vm638, %v9130, %v9129
    %v9132 = vperm.slane %v9083, %v634
    %v9133 = vperm.slane %v9086, %v636
    %v9134 = vsel %vm638, %v9133, %v9132
    %v9135 = vperm.slane %v9089, %v634
    %v9136 = vperm.slane %v9092, %v636
    %v9137 = vsel %vm638, %v9136, %v9135
    %v9138 = vperm.slane %v9095, %v634
    %v9139 = vperm.slane %v9098, %v636
    %v9140 = vsel %vm638, %v9139, %v9138
    %v9141 = vperm.slane %v9101, %v634
    %v9142 = vperm.slane %v9104, %v636
    %v9143 = vsel %vm638, %v9142, %v9141
    %v9144 = vperm.slane %v9107, %v634
    %v9145 = vperm.slane %v9110, %v636
    %v9146 = vsel %vm638, %v9145, %v9144
    %v9147 = vsel %vm673, %v9116, %v9113
    %v9148 = vsel %vm675, %v9119, %v9147
    %v9149 = vsel %vm677, %v9122, %v9148
    %v9150 = vsel %vm679, %v9125, %v9149
    %v9151 = vsel %vm681, %v9128, %v9150
    %v9152 = vsel %vm683, %v9131, %v9151
    %v9153 = vsel %vm685, %v9134, %v9152
    %v9154 = vsel %vm673, %v9140, %v9137
    %v9155 = vsel %vm675, %v9143, %v9154
    %v9156 = vsel %vm677, %v9146, %v9155
    %v9159 = vsel %vm692, %v9153, -inf
    %9160 = vmax.xlane.f32.xlu0 %v9159
    %v9161 = vpop.xlane.xlu0 %9160
    %v9162 = vsel %vm696, %v9156, -inf
    %9163 = vmax.xlane.f32.xlu0 %v9162
    %v9164 = vpop.xlane.xlu0 %9163
    %v9167 = vperm.slane %v9161, 0
    %v9168 = vperm.slane %v9161, 1
    %v9169 = vperm.slane %v9161, 2
    %v9170 = vperm.slane %v9161, 3
    %v9171 = vperm.slane %v9161, 4
    %v9172 = vperm.slane %v9161, 5
    %v9173 = vperm.slane %v9161, 6
    %v9174 = vperm.slane %v9161, 7
    %v9175 = vperm.slane %v9164, 0
    %v9176 = vperm.slane %v9164, 1
    %v9177 = vperm.slane %v9164, 2
    %v9178 = vperm.slane %v9164, 3
    %v9191 = vsub.f32 %v8991, %v9167
    %v9192 = vsub.f32 %v8992, %v9167
    %v9193 = vsub.f32 %v8993, %v9168
    %v9194 = vsub.f32 %v8994, %v9168
    %v9195 = vsub.f32 %v8995, %v9169
    %v9196 = vsub.f32 %v8996, %v9169
    %v9197 = vsub.f32 %v8997, %v9170
    %v9198 = vsub.f32 %v8998, %v9170
    %v9199 = vsub.f32 %v8999, %v9171
    %v9200 = vsub.f32 %v9000, %v9171
    %v9201 = vsub.f32 %v9001, %v9172
    %v9202 = vsub.f32 %v9002, %v9172
    %v9203 = vsub.f32 %v9003, %v9173
    %v9204 = vsub.f32 %v9004, %v9173
    %v9205 = vsub.f32 %v9005, %v9174
    %v9206 = vsub.f32 %v9006, %v9174
    %v9207 = vsub.f32 %v9007, %v9175
    %v9208 = vsub.f32 %v9008, %v9175
    %v9209 = vsub.f32 %v9009, %v9176
    %v9210 = vsub.f32 %v9010, %v9176
    %v9211 = vsub.f32 %v9011, %v9177
    %v9212 = vsub.f32 %v9012, %v9177
    %v9213 = vsub.f32 %v9013, %v9178
    %v9214 = vsub.f32 %v9014, %v9178
    %v9215 = vmul.f32 %v9191, 1.442695
    %v9216 = vpow.pop %v9215
    %v9217 = vmul.f32 %v9192, 1.442695
    %v9218 = vpow.pop %v9217
    %v9219 = vmul.f32 %v9193, 1.442695
    %v9220 = vpow.pop %v9219
    %v9221 = vmul.f32 %v9194, 1.442695
    %v9222 = vpow.pop %v9221
    %v9223 = vmul.f32 %v9195, 1.442695
    %v9224 = vpow.pop %v9223
    %v9225 = vmul.f32 %v9196, 1.442695
    %v9226 = vpow.pop %v9225
    %v9227 = vmul.f32 %v9197, 1.442695
    %v9228 = vpow.pop %v9227
    %v9229 = vmul.f32 %v9198, 1.442695
    %v9230 = vpow.pop %v9229
    %v9231 = vmul.f32 %v9199, 1.442695
    %v9232 = vpow.pop %v9231
    %v9233 = vmul.f32 %v9200, 1.442695
    %v9234 = vpow.pop %v9233
    %v9235 = vmul.f32 %v9201, 1.442695
    %v9236 = vpow.pop %v9235
    %v9237 = vmul.f32 %v9202, 1.442695
    %v9238 = vpow.pop %v9237
    %v9239 = vmul.f32 %v9203, 1.442695
    %v9240 = vpow.pop %v9239
    %v9241 = vmul.f32 %v9204, 1.442695
    %v9242 = vpow.pop %v9241
    %v9243 = vmul.f32 %v9205, 1.442695
    %v9244 = vpow.pop %v9243
    %v9245 = vmul.f32 %v9206, 1.442695
    %v9246 = vpow.pop %v9245
    %v9247 = vmul.f32 %v9207, 1.442695
    %v9248 = vpow.pop %v9247
    %v9249 = vmul.f32 %v9208, 1.442695
    %v9250 = vpow.pop %v9249
    %v9251 = vmul.f32 %v9209, 1.442695
    %v9252 = vpow.pop %v9251
    %v9253 = vmul.f32 %v9210, 1.442695
    %v9254 = vpow.pop %v9253
    %v9255 = vmul.f32 %v9211, 1.442695
    %v9256 = vpow.pop %v9255
    %v9257 = vmul.f32 %v9212, 1.442695
    %v9258 = vpow.pop %v9257
    %v9259 = vmul.f32 %v9213, 1.442695
    %v9260 = vpow.pop %v9259
    %v9261 = vmul.f32 %v9214, 1.442695
    %v9262 = vpow.pop %v9261
    %9287 = vset.pattern.permute.xlu0 0
    %9288 = vperm.xlu0 %9287, %v9216
    %v9289 = vpop.permute.xlu0 %9288
    %9290 = vset.pattern.permute.xlu0 0
    %9291 = vperm.xlu0 %9290, %v9218
    %v9292 = vpop.permute.xlu0 %9291
    %9293 = vset.pattern.permute.xlu0 0
    %9294 = vperm.xlu0 %9293, %v9220
    %v9295 = vpop.permute.xlu0 %9294
    %9296 = vset.pattern.permute.xlu0 0
    %9297 = vperm.xlu0 %9296, %v9222
    %v9298 = vpop.permute.xlu0 %9297
    %9299 = vset.pattern.permute.xlu0 0
    %9300 = vperm.xlu0 %9299, %v9224
    %v9301 = vpop.permute.xlu0 %9300
    %9302 = vset.pattern.permute.xlu0 0
    %9303 = vperm.xlu0 %9302, %v9226
    %v9304 = vpop.permute.xlu0 %9303
    %9305 = vset.pattern.permute.xlu0 0
    %9306 = vperm.xlu0 %9305, %v9228
    %v9307 = vpop.permute.xlu0 %9306
    %9308 = vset.pattern.permute.xlu0 0
    %9309 = vperm.xlu0 %9308, %v9230
    %v9310 = vpop.permute.xlu0 %9309
    %9311 = vset.pattern.permute.xlu0 0
    %9312 = vperm.xlu0 %9311, %v9232
    %v9313 = vpop.permute.xlu0 %9312
    %9314 = vset.pattern.permute.xlu0 0
    %9315 = vperm.xlu0 %9314, %v9234
    %v9316 = vpop.permute.xlu0 %9315
    %9317 = vset.pattern.permute.xlu0 0
    %9318 = vperm.xlu0 %9317, %v9236
    %v9319 = vpop.permute.xlu0 %9318
    %9320 = vset.pattern.permute.xlu0 0
    %9321 = vperm.xlu0 %9320, %v9238
    %v9322 = vpop.permute.xlu0 %9321
    %9323 = vset.pattern.permute.xlu0 0
    %9324 = vperm.xlu0 %9323, %v9240
    %v9325 = vpop.permute.xlu0 %9324
    %9326 = vset.pattern.permute.xlu0 0
    %9327 = vperm.xlu0 %9326, %v9242
    %v9328 = vpop.permute.xlu0 %9327
    %9329 = vset.pattern.permute.xlu0 0
    %9330 = vperm.xlu0 %9329, %v9244
    %v9331 = vpop.permute.xlu0 %9330
    %9332 = vset.pattern.permute.xlu0 0
    %9333 = vperm.xlu0 %9332, %v9246
    %v9334 = vpop.permute.xlu0 %9333
    %9335 = vset.pattern.permute.xlu0 0
    %9336 = vperm.xlu0 %9335, %v9248
    %v9337 = vpop.permute.xlu0 %9336
    %9338 = vset.pattern.permute.xlu0 0
    %9339 = vperm.xlu0 %9338, %v9250
    %v9340 = vpop.permute.xlu0 %9339
    %9341 = vset.pattern.permute.xlu0 0
    %9342 = vperm.xlu0 %9341, %v9252
    %v9343 = vpop.permute.xlu0 %9342
    %9344 = vset.pattern.permute.xlu0 0
    %9345 = vperm.xlu0 %9344, %v9254
    %v9346 = vpop.permute.xlu0 %9345
    %9347 = vset.pattern.permute.xlu0 0
    %9348 = vperm.xlu0 %9347, %v9256
    %v9349 = vpop.permute.xlu0 %9348
    %9350 = vset.pattern.permute.xlu0 0
    %9351 = vperm.xlu0 %9350, %v9258
    %v9352 = vpop.permute.xlu0 %9351
    %9353 = vset.pattern.permute.xlu0 0
    %9354 = vperm.xlu0 %9353, %v9260
    %v9355 = vpop.permute.xlu0 %9354
    %9356 = vset.pattern.permute.xlu0 0
    %9357 = vperm.xlu0 %9356, %v9262
    %v9358 = vpop.permute.xlu0 %9357
    %v9359 = vperm.slane %v9289, %v634
    %v9360 = vperm.slane %v9292, %v636
    %v9361 = vsel %vm638, %v9360, %v9359
    %v9362 = vperm.slane %v9295, %v634
    %v9363 = vperm.slane %v9298, %v636
    %v9364 = vsel %vm638, %v9363, %v9362
    %v9365 = vperm.slane %v9301, %v634
    %v9366 = vperm.slane %v9304, %v636
    %v9367 = vsel %vm638, %v9366, %v9365
    %v9368 = vperm.slane %v9307, %v634
    %v9369 = vperm.slane %v9310, %v636
    %v9370 = vsel %vm638, %v9369, %v9368
    %v9371 = vperm.slane %v9313, %v634
    %v9372 = vperm.slane %v9316, %v636
    %v9373 = vsel %vm638, %v9372, %v9371
    %v9374 = vperm.slane %v9319, %v634
    %v9375 = vperm.slane %v9322, %v636
    %v9376 = vsel %vm638, %v9375, %v9374
    %v9377 = vperm.slane %v9325, %v634
    %v9378 = vperm.slane %v9328, %v636
    %v9379 = vsel %vm638, %v9378, %v9377
    %v9380 = vperm.slane %v9331, %v634
    %v9381 = vperm.slane %v9334, %v636
    %v9382 = vsel %vm638, %v9381, %v9380
    %v9383 = vperm.slane %v9337, %v634
    %v9384 = vperm.slane %v9340, %v636
    %v9385 = vsel %vm638, %v9384, %v9383
    %v9386 = vperm.slane %v9343, %v634
    %v9387 = vperm.slane %v9346, %v636
    %v9388 = vsel %vm638, %v9387, %v9386
    %v9389 = vperm.slane %v9349, %v634
    %v9390 = vperm.slane %v9352, %v636
    %v9391 = vsel %vm638, %v9390, %v9389
    %v9392 = vperm.slane %v9355, %v634
    %v9393 = vperm.slane %v9358, %v636
    %v9394 = vsel %vm638, %v9393, %v9392
    %v9395 = vsel %vm673, %v9364, %v9361
    %v9396 = vsel %vm675, %v9367, %v9395
    %v9397 = vsel %vm677, %v9370, %v9396
    %v9398 = vsel %vm679, %v9373, %v9397
    %v9399 = vsel %vm681, %v9376, %v9398
    %v9400 = vsel %vm683, %v9379, %v9399
    %v9401 = vsel %vm685, %v9382, %v9400
    %v9402 = vsel %vm673, %v9388, %v9385
    %v9403 = vsel %vm675, %v9391, %v9402
    %v9404 = vsel %vm677, %v9394, %v9403
    %v9407 = vsel %vm21, %v9401, 0.0
    %v9408 = vsel %vm22, %v9404, 0.0
    %v9409 = vsel %vm692, %v9407, 0.0
    %9410 = vadd.xlane.f32.xlu0 %v9409
    %v9411 = vpop.xlane.xlu0 %9410
    %v9412 = vsel %vm696, %v9408, 0.0
    %9413 = vadd.xlane.f32.xlu0 %v9412
    %v9414 = vpop.xlane.xlu0 %9413
    %v9415 = vrcp.pop %v9411
    %v9416 = vrcp.pop %v9414
    %v9417 = vmul.f32 %v9407, %v9415
    %v9418 = vmul.f32 %v9408, %v9416
    %v9419 = vpack.c.bf16 %v9418, %v9417
    %9420 = vrot.lane.b32.xlu0 %v7634, 88
    %v9421 = vpop.permute.xlu0 %9420
    %v9423 = vsel %vm692, %v9419, 0
    %v9426 = vsel %vm963, %v9421, 0
    %9428 = vmatpush.bf16.msra.mxu0 0
    %9429 = vmatpush.bf16.msra.mxu0 0
    %9430 = vmatpush.bf16.msra.mxu0 0
    %9431 = vmatpush.bf16.msra.mxu0 0
    %9432 = vmatpush.bf16.msra.mxu0 0
    %9433 = vmatpush.bf16.msra.mxu0 0
    %9434 = vmatpush.bf16.msra.mxu0 0
    %9435 = vmatpush.bf16.msra.mxu0 %v9426
    %9436 = vmatmul.bf16.gmra.mxu0 %v9423
    %v9437 = vpop.f32.mrf.mxu0
    %v9438 = vadd.f32 0.0, %v9437
    %v9439 = vpop.f32.mrf.mxu0
    %v9440 = vadd.f32 0.0, %v9439
    %9441 = vdwg.mxu0
    %v9443 = vsel %vm692, %v7032, 0
    %v9446 = vsel %vm963, %v7634, 0
    %9448 = vmatpush.bf16.msra.mxu0 0
    %9449 = vmatpush.bf16.msra.mxu0 0
    %9450 = vmatpush.bf16.msra.mxu0 0
    %9451 = vmatpush.bf16.msra.mxu0 0
    %9452 = vmatpush.bf16.msra.mxu0 0
    %9453 = vmatpush.bf16.msra.mxu0 0
    %9454 = vmatpush.bf16.msra.mxu0 0
    %9455 = vmatpush.bf16.msra.mxu0 %v9446
    %9456 = vmatmul.bf16.gmra.mxu0 %v9443
    %v9457 = vpop.f32.mrf.mxu0
    %v9458 = vadd.f32 %v7653, %v9457
    %v9459 = vpop.f32.mrf.mxu0
    %v9460 = vadd.f32 %v7655, %v9459
    %9461 = vdwg.mxu0
    %v9462 = vadd.f32 %v9458, %v8248
    %v9463 = vadd.f32 %v9460, %v8250
    %v9464 = vadd.f32 %v9462, %v8843
    %v9465 = vadd.f32 %v9463, %v8845
    %v9466 = vadd.f32 %v9464, %v9438
    %v9467 = vadd.f32 %v9465, %v9440
    %v9468 = vmul.f32 %v9466, 0.2
    %v9469 = vmul.f32 %v9467, 0.2
    %v9470 = vperm.slane %v6293, 0
    %v9471 = vmul.f32 %v9468, %v9470
    %v9472 = vmul.f32 %v9469, %v9470
    %v9473 = vperm.slane %v6294, 0
    %v9474 = vadd.f32 %v9471, %v9473
    %v9475 = vadd.f32 %v9472, %v9473
    %9476 = vst.msk [vmem:[#allocation2] sm:$0xff] %vm6530, %v9474
    %9477 = vst.msk [vmem:[#allocation2 + $0x8] sm:$0xf] %vm6534, %v9475
    // Predicated region
    $region18: #{tpu_custom_call.1} parent=1 // pred_check
      _
    $region19: #{tpu_custom_call.1} parent=1 // pred_check_branch
      %9479 = sbr.rel (0) target = $region21
    $region20: #{tpu_custom_call.1} parent=1 // pred_region
      %9481 = vsyncadd [#allocation3], 0
      %s9482 = sshll.u32 [#allocation2], 4
      %s9483 = int_to_ptr.vmem [resolvable:$true] %s9482
      %s9484 = sshll.u32 %s4, 4
      %s9485 = int_to_ptr.hbm [resolvable:$true] %s9484
      %9490 = dma.vmem_to_hbm [thread:$0]  %s9483, 256, %s9485, [#allocation3], 128, 128, 8
    $region21: #{tpu_custom_call.1} parent=1 // pred_fallthru
      _
    // Predicated region
    $region22: #{tpu_custom_call.1} parent=1 // pred_check
      _
    $region23: #{tpu_custom_call.1} parent=1 // pred_check_branch
      %9492 = sbr.rel (0) target = $region25
    $region24: #{tpu_custom_call.1} parent=1 // pred_region
      %9494 = dma.done [#allocation3], 256
    $region25: #{tpu_custom_call.1} parent=1 // pred_fallthru
      _
    %9495 = vsyncpa [#allocation3], 1

</llo_original>
